<compile_context>
chip_gen: v6e
topology: v6e:2x2x1
jax: 0.10.0
libtpu: 0.0.40
codegen_flags: <defaults>
</compile_context>

<pallas_src>
import functools

import jax
import jax.numpy as jnp
from jax.experimental import pallas as pl
from jax.experimental.pallas import tpu as pltpu


# ----------------------------------------------------------------------------
# Fused kernel: conv1+bn+relu -> conv2+bn+relu (-> repeat) -> maxpool 2x2
# ----------------------------------------------------------------------------
def _conv_block_kernel(x_ref, w1_ref, w2_ref, s_ref, t1_ref, t2_ref, o_ref,
                       a_pad, b_pad, *, repeat):
    """One batch element per grid step; everything stays in VMEM.

    x_ref : (1, H, W, Cin)         bf16 input tile
    w1_ref: (9, Cin,  Cout)        bf16 per-tap conv_1 weights (tap = ky*3+kx)
    w2_ref: (9, Cout, Cout)        bf16 per-tap conv_2 weights
    s_ref : (1, Cout)              f32  fused BN scale  = gamma / sqrt(var+eps)
    t*_ref: (1, Cout)              f32  fused shift     = (bias - mean)*s + beta
    o_ref : (1, Ho, Wo*Cout)       bf16 pooled output (lane-dense last dim)
    a_pad : VMEM (H+2, W+2, Cin)   bf16 zero-padded input buffer
    b_pad : VMEM (H+2, W+2, Cout)  bf16 zero-padded activation buffer (reused)
    """
    H = x_ref.shape[1]
    W = x_ref.shape[2]
    Cout = w1_ref.shape[2]
    Ho, Wo = H // 2, W // 2

    def zero_border(pad_ref):
        # Zero only the 1-pixel halo; the interior is fully overwritten below,
        # so no full-slab zero store is needed (saves 2-3 full slabs of vst
        # traffic per step vs the previous version).
        c = pad_ref.shape[2]
        pad_ref[0:1, :, :] = jnp.zeros((1, W + 2, c), pad_ref.dtype)
        pad_ref[H + 1:H + 2, :, :] = jnp.zeros((1, W + 2, c), pad_ref.dtype)
        pad_ref[:, 0:1, :] = jnp.zeros((H + 2, 1, c), pad_ref.dtype)
        pad_ref[:, W + 1:W + 2, :] = jnp.zeros((H + 2, 1, c), pad_ref.dtype)

    zero_border(a_pad)
    zero_border(b_pad)

    # Stage the input into the padded VMEM halo buffer (padding=1 handled
    # in-kernel; no wrapper-side jnp.pad / HBM copy).
    a_pad[1:H + 1, 1:W + 1, :] = x_ref[0]

    def conv_bn_relu(src_pad, w_ref, t_ref):
        # 3x3 conv as 9 accumulating shifted MXU matmuls straight out of the
        # padded activation buffer (no materialized im2col scratch).
        acc = None
        c = src_pad.shape[2]
        for dy in range(3):
            for dx in range(3):
                lhs = src_pad[dy:dy + H, dx:dx + W, :].reshape(H * W, c)
                part = jnp.dot(lhs, w_ref[dy * 3 + dx],
                               preferred_element_type=jnp.float32)
                acc = part if acc is None else acc + part
        # Fused BatchNorm (eval running stats) + conv bias + ReLU, in f32.
        return jnp.maximum(acc * s_ref[0] + t_ref[0], 0.0)

    def store_padded(dst_pad, y):
        # Activation back into the (already zero-bordered) padded buffer so it
        # is ready to be the next conv's input.  Interior only.
        dst_pad[1:H + 1, 1:W + 1, :] = (
            y.astype(dst_pad.dtype).reshape(H, W, Cout))

    # conv_1 -> bn -> relu
    y = conv_bn_relu(a_pad, w1_ref, t1_ref)
    store_padded(b_pad, y)
    # conv_2 -> bn -> relu
    y = conv_bn_relu(b_pad, w2_ref, t2_ref)
    if repeat:
        # Reuse b_pad (y is fully materialized before the overwrite).
        store_padded(b_pad, y)
        y = conv_bn_relu(b_pad, w2_ref, t2_ref)

    # Fused MaxPool2d(kernel=2, stride=2): reshape + max (no strided loads).
    y = y.reshape(H, W, Cout)
    y = y.reshape(Ho, 2, W, Cout)
    y = jnp.maximum(y[:, 0], y[:, 1])              # pool rows    -> (Ho, W, Cout)
    y = y.reshape(Ho, Wo, 2, Cout)
    y = jnp.maximum(y[:, :, 0], y[:, :, 1])        # pool columns -> (Ho, Wo, Cout)

    # Lane-dense bf16 store: Ho on sublanes, Wo*Cout on lanes.
    o_ref[0] = y.reshape(Ho, Wo * Cout).astype(o_ref.dtype)


# ----------------------------------------------------------------------------
# Wrapper
# ----------------------------------------------------------------------------
def conv_block_forward(x_nchw, params, repeat=False, eps=1e-5):
    """Pallas implementation of Conv_block.forward (NCHW in, NCHW out)."""
    N, Cin, H, W = x_nchw.shape
    Cout = params["w1"].shape[0]
    assert H % 2 == 0 and W % 2 == 0, "maxpool2x2 requires even H and W"
    Ho, Wo = H // 2, W // 2

    gamma, beta, mean, var = (params["bn_gamma"], params["bn_beta"],
                              params["bn_mean"], params["bn_var"])
    s = gamma / jnp.sqrt(var + eps)
    scale = s.reshape(1, Cout).astype(jnp.float32)
    shift1 = ((params["b1"] - mean) * s + beta).reshape(1, Cout).astype(jnp.float32)
    shift2 = ((params["b2"] - mean) * s + beta).reshape(1, Cout).astype(jnp.float32)

    # PyTorch OIHW -> (ky*3+kx, I, O), bf16 for the MXU.  The (ky, kx) tap
    # order matches the (dy, dx) loop in the kernel.
    w1 = jnp.transpose(params["w1"], (2, 3, 1, 0)).reshape(9, Cin, Cout)
    w2 = jnp.transpose(params["w2"], (2, 3, 1, 0)).reshape(9, Cout, Cout)
    w1 = w1.astype(jnp.bfloat16)
    w2 = w2.astype(jnp.bfloat16)

    # NCHW -> NHWC, bf16 activations (halves HBM read + VMEM footprint).
    x = jnp.transpose(x_nchw, (0, 2, 3, 1)).astype(jnp.bfloat16)

    kernel = functools.partial(_conv_block_kernel, repeat=repeat)
    out = pl.pallas_call(
        kernel,
        out_shape=jax.ShapeDtypeStruct((N, Ho, Wo * Cout), jnp.bfloat16),
        grid=(N,),
        in_specs=[
            pl.BlockSpec((1, H, W, Cin), lambda n: (n, 0, 0, 0)),
            pl.BlockSpec((9, Cin, Cout), lambda n: (0, 0, 0)),
            pl.BlockSpec((9, Cout, Cout), lambda n: (0, 0, 0)),
            pl.BlockSpec((1, Cout), lambda n: (0, 0)),
            pl.BlockSpec((1, Cout), lambda n: (0, 0)),
            pl.BlockSpec((1, Cout), lambda n: (0, 0)),
        ],
        out_specs=pl.BlockSpec((1, Ho, Wo * Cout), lambda n: (n, 0, 0)),
        scratch_shapes=[
            pltpu.VMEM((H + 2, W + 2, Cin), jnp.bfloat16),   # padded input
            pltpu.VMEM((H + 2, W + 2, Cout), jnp.bfloat16),  # padded act (reused)
        ],
        compiler_params=pltpu.CompilerParams(
            dimension_semantics=("parallel",),
            vmem_limit_bytes=48 * 1024 * 1024),
    )(x, w1, w2, scale, shift1, shift2)

    out = out.reshape(N, Ho, Wo, Cout).astype(jnp.float32)
    return jnp.transpose(out, (0, 3, 1, 2))                  # NHWC -> NCHW


# ----------------------------------------------------------------------------
# Pure-JAX reference (f32, for verification only)
# ----------------------------------------------------------------------------
def _reference_forward(x, params, repeat=False, eps=1e-5):
    def conv(x, w, b):
        y = jax.lax.conv_general_dilated(
            x, w, window_strides=(1, 1), padding=((1, 1), (1, 1)),
            dimension_numbers=("NCHW", "OIHW", "NCHW"))
        return y + b[None, :, None, None]

    def bn_relu(x):
        g, bt, m, v = (params["bn_gamma"], params["bn_beta"],
                       params["bn_mean"], params["bn_var"])
        y = (x - m[None, :, None, None]) / jnp.sqrt(v + eps)[None, :, None, None]
        y = y * g[None, :, None, None] + bt[None, :, None, None]
        return jnp.maximum(y, 0.0)

    x = bn_relu(conv(x, params["w1"], params["b1"]))
    x = bn_relu(conv(x, params["w2"], params["b2"]))
    if repeat:
        x = bn_relu(conv(x, params["w2"], params["b2"]))
    N, C, H, W = x.shape
    return x.reshape(N, C, H // 2, 2, W // 2, 2).max(axis=(3, 5))


# ----------------------------------------------------------------------------
# Main
# ----------------------------------------------------------------------------
if __name__ == "__main__":
    key = jax.random.PRNGKey(0)
    N, Cin, Cout, H, W = 2, 4, 8, 16, 16
    k = jax.random.split(key, 8)

    params = {
        "w1": 0.1 * jax.random.normal(k[0], (Cout, Cin, 3, 3), jnp.float32),
        "b1": 0.1 * jax.random.normal(k[1], (Cout,), jnp.float32),
        "w2": 0.1 * jax.random.normal(k[2], (Cout, Cout, 3, 3), jnp.float32),
        "b2": 0.1 * jax.random.normal(k[3], (Cout,), jnp.float32),
        "bn_gamma": 1.0 + 0.1 * jax.random.normal(k[4], (Cout,), jnp.float32),
        "bn_beta": 0.1 * jax.random.normal(k[5], (Cout,), jnp.float32),
        "bn_mean": 0.1 * jax.random.normal(k[6], (Cout,), jnp.float32),
        "bn_var": jnp.abs(jax.random.normal(k[7], (Cout,), jnp.float32)) + 0.5,
    }
    x = jax.random.normal(key, (N, Cin, H, W), jnp.float32)

    # repeat=False path
    out = jax.block_until_ready(conv_block_forward(x, params, repeat=False))
    ref = _reference_forward(x, params, repeat=False)
    assert out.shape == (N, Cout, H // 2, W // 2), out.shape
    # Kernel runs convs with bf16 MXU inputs (f32 accumulation) and a bf16
    # output store, so compare against the f32 reference with bf16 tolerance.
    assert jnp.allclose(out, ref, rtol=5e-2, atol=5e-2), (
        float(jnp.max(jnp.abs(out - ref))))

    # repeat=True path (three chained bf16 convs -> slightly looser tolerance)
    out_r = jax.block_until_ready(conv_block_forward(x, params, repeat=True))
    ref_r = _reference_forward(x, params, repeat=True)
    assert out_r.shape == (N, Cout, H // 2, W // 2), out_r.shape
    assert jnp.allclose(out_r, ref_r, rtol=1e-1, atol=1e-1), (
        float(jnp.max(jnp.abs(out_r - ref_r))))

    print("KERNEL_OK")
</pallas_src>

<mosaic_0001>
module attributes {stable_mosaic.version = 11 : i64} {
  func.func @_conv_block_kernel(%arg0: i32, %arg1: memref<1x16x16x4xbf16, #tpu.memory_space<vmem>>, %arg2: memref<9x4x8xbf16, #tpu.memory_space<vmem>>, %arg3: memref<9x8x8xbf16, #tpu.memory_space<vmem>>, %arg4: memref<1x8xf32, #tpu.memory_space<vmem>>, %arg5: memref<1x8xf32, #tpu.memory_space<vmem>>, %arg6: memref<1x8xf32, #tpu.memory_space<vmem>>, %arg7: memref<1x8x64xbf16, #tpu.memory_space<vmem>>, %arg8: memref<18x18x4xbf16, #tpu.memory_space<vmem>>, %arg9: memref<18x18x8xbf16, #tpu.memory_space<vmem>>) attributes {dimension_semantics = [#tpu.dimension_semantics<parallel>], iteration_bounds = array<i64: 2>, scalar_prefetch = 0 : i64, scratch_operands = 2 : i64, tpu.core_type = #tpu.core_type<tc>, window_params = [{transform_indices = @transform_0, window_bounds = array<i64: 1, 16, 16, 4>}, {pipeline_mode = #tpu.pipeline_mode<synchronous>, transform_indices = @transform_1, window_bounds = array<i64: 9, 4, 8>}, {pipeline_mode = #tpu.pipeline_mode<synchronous>, transform_indices = @transform_2, window_bounds = array<i64: 9, 8, 8>}, {pipeline_mode = #tpu.pipeline_mode<synchronous>, transform_indices = @transform_3, window_bounds = array<i64: 1, 8>}, {pipeline_mode = #tpu.pipeline_mode<synchronous>, transform_indices = @transform_4, window_bounds = array<i64: 1, 8>}, {pipeline_mode = #tpu.pipeline_mode<synchronous>, transform_indices = @transform_5, window_bounds = array<i64: 1, 8>}, {transform_indices = @transform_6, window_bounds = array<i64: 1, 8, 64>}]} {
    %cst = arith.constant 0.000000e+00 : bf16
    %0 = vector.broadcast %cst : bf16 to vector<1x18x4xbf16>
    %c0 = arith.constant 0 : index
    %c0_0 = arith.constant 0 : index
    %c0_1 = arith.constant 0 : index
    %1 = vector.load %arg8[%c0, %c0_0, %c0_1] : memref<18x18x4xbf16, #tpu.memory_space<vmem>>, vector<1x18x4xbf16>
    tpu.vector_store %arg8[%c0, %c0_0, %c0_1], %0 {strides = array<i32>} : memref<18x18x4xbf16, #tpu.memory_space<vmem>>, vector<1x18x4xbf16>,
    %cst_2 = arith.constant 0.000000e+00 : bf16
    %2 = vector.broadcast %cst_2 : bf16 to vector<1x18x4xbf16>
    %c17 = arith.constant 17 : index
    %c0_3 = arith.constant 0 : index
    %c0_4 = arith.constant 0 : index
    %3 = vector.load %arg8[%c17, %c0_3, %c0_4] : memref<18x18x4xbf16, #tpu.memory_space<vmem>>, vector<1x18x4xbf16>
    tpu.vector_store %arg8[%c17, %c0_3, %c0_4], %2 {strides = array<i32>} : memref<18x18x4xbf16, #tpu.memory_space<vmem>>, vector<1x18x4xbf16>,
    %cst_5 = arith.constant 0.000000e+00 : bf16
    %4 = vector.broadcast %cst_5 : bf16 to vector<18x1x4xbf16>
    %c0_6 = arith.constant 0 : index
    %c0_7 = arith.constant 0 : index
    %c0_8 = arith.constant 0 : index
    %5 = vector.load %arg8[%c0_6, %c0_7, %c0_8] : memref<18x18x4xbf16, #tpu.memory_space<vmem>>, vector<18x1x4xbf16>
    tpu.vector_store %arg8[%c0_6, %c0_7, %c0_8], %4 {strides = array<i32>} : memref<18x18x4xbf16, #tpu.memory_space<vmem>>, vector<18x1x4xbf16>,
    %cst_9 = arith.constant 0.000000e+00 : bf16
    %6 = vector.broadcast %cst_9 : bf16 to vector<18x1x4xbf16>
    %c0_10 = arith.constant 0 : index
    %c17_11 = arith.constant 17 : index
    %c0_12 = arith.constant 0 : index
    %7 = vector.load %arg8[%c0_10, %c17_11, %c0_12] : memref<18x18x4xbf16, #tpu.memory_space<vmem>>, vector<18x1x4xbf16>
    tpu.vector_store %arg8[%c0_10, %c17_11, %c0_12], %6 {strides = array<i32>} : memref<18x18x4xbf16, #tpu.memory_space<vmem>>, vector<18x1x4xbf16>,
    %cst_13 = arith.constant 0.000000e+00 : bf16
    %8 = vector.broadcast %cst_13 : bf16 to vector<1x18x8xbf16>
    %c0_14 = arith.constant 0 : index
    %c0_15 = arith.constant 0 : index
    %c0_16 = arith.constant 0 : index
    %9 = vector.load %arg9[%c0_14, %c0_15, %c0_16] : memref<18x18x8xbf16, #tpu.memory_space<vmem>>, vector<1x18x8xbf16>
    tpu.vector_store %arg9[%c0_14, %c0_15, %c0_16], %8 {strides = array<i32>} : memref<18x18x8xbf16, #tpu.memory_space<vmem>>, vector<1x18x8xbf16>,
    %cst_17 = arith.constant 0.000000e+00 : bf16
    %10 = vector.broadcast %cst_17 : bf16 to vector<1x18x8xbf16>
    %c17_18 = arith.constant 17 : index
    %c0_19 = arith.constant 0 : index
    %c0_20 = arith.constant 0 : index
    %11 = vector.load %arg9[%c17_18, %c0_19, %c0_20] : memref<18x18x8xbf16, #tpu.memory_space<vmem>>, vector<1x18x8xbf16>
    tpu.vector_store %arg9[%c17_18, %c0_19, %c0_20], %10 {strides = array<i32>} : memref<18x18x8xbf16, #tpu.memory_space<vmem>>, vector<1x18x8xbf16>,
    %cst_21 = arith.constant 0.000000e+00 : bf16
    %12 = vector.broadcast %cst_21 : bf16 to vector<18x1x8xbf16>
    %c0_22 = arith.constant 0 : index
    %c0_23 = arith.constant 0 : index
    %c0_24 = arith.constant 0 : index
    %13 = vector.load %arg9[%c0_22, %c0_23, %c0_24] : memref<18x18x8xbf16, #tpu.memory_space<vmem>>, vector<18x1x8xbf16>
    tpu.vector_store %arg9[%c0_22, %c0_23, %c0_24], %12 {strides = array<i32>} : memref<18x18x8xbf16, #tpu.memory_space<vmem>>, vector<18x1x8xbf16>,
    %cst_25 = arith.constant 0.000000e+00 : bf16
    %14 = vector.broadcast %cst_25 : bf16 to vector<18x1x8xbf16>
    %c0_26 = arith.constant 0 : index
    %c17_27 = arith.constant 17 : index
    %c0_28 = arith.constant 0 : index
    %15 = vector.load %arg9[%c0_26, %c17_27, %c0_28] : memref<18x18x8xbf16, #tpu.memory_space<vmem>>, vector<18x1x8xbf16>
    tpu.vector_store %arg9[%c0_26, %c17_27, %c0_28], %14 {strides = array<i32>} : memref<18x18x8xbf16, #tpu.memory_space<vmem>>, vector<18x1x8xbf16>,
    %c0_29 = arith.constant 0 : index
    %c0_30 = arith.constant 0 : index
    %c0_31 = arith.constant 0 : index
    %c0_32 = arith.constant 0 : index
    %16 = vector.load %arg1[%c0_29, %c0_30, %c0_31, %c0_32] : memref<1x16x16x4xbf16, #tpu.memory_space<vmem>>, vector<1x16x16x4xbf16>
    %17 = vector.shape_cast %16 : vector<1x16x16x4xbf16> to vector<16x16x4xbf16>
    %c1 = arith.constant 1 : index
    %c1_33 = arith.constant 1 : index
    %c0_34 = arith.constant 0 : index
    %18 = vector.load %arg8[%c1, %c1_33, %c0_34] : memref<18x18x4xbf16, #tpu.memory_space<vmem>>, vector<16x16x4xbf16>
    tpu.vector_store %arg8[%c1, %c1_33, %c0_34], %17 {strides = array<i32>} : memref<18x18x4xbf16, #tpu.memory_space<vmem>>, vector<16x16x4xbf16>,
    %c0_35 = arith.constant 0 : index
    %c0_36 = arith.constant 0 : index
    %c0_37 = arith.constant 0 : index
    %19 = vector.load %arg8[%c0_35, %c0_36, %c0_37] : memref<18x18x4xbf16, #tpu.memory_space<vmem>>, vector<16x16x4xbf16>
    %20 = vector.shape_cast %19 : vector<16x16x4xbf16> to vector<256x4xbf16>
    %c0_38 = arith.constant 0 : index
    %c0_39 = arith.constant 0 : index
    %c0_40 = arith.constant 0 : index
    %21 = vector.load %arg2[%c0_38, %c0_39, %c0_40] : memref<9x4x8xbf16, #tpu.memory_space<vmem>>, vector<1x4x8xbf16>
    %22 = vector.shape_cast %21 : vector<1x4x8xbf16> to vector<4x8xbf16>
    %cst_41 = arith.constant dense<0.000000e+00> : vector<256x8xf32>
    %23 = tpu.matmul %20, %22, %cst_41 {dimension_numbers = #tpu.dot_dimension_numbers<[1], [0], [0], [1], [0, 0, 1, 1], [], []>} : vector<256x4xbf16>, vector<4x8xbf16>, vector<256x8xf32> -> vector<256x8xf32>
    %c0_42 = arith.constant 0 : index
    %c1_43 = arith.constant 1 : index
    %c0_44 = arith.constant 0 : index
    %24 = vector.load %arg8[%c0_42, %c1_43, %c0_44] : memref<18x18x4xbf16, #tpu.memory_space<vmem>>, vector<16x16x4xbf16>
    %25 = vector.shape_cast %24 : vector<16x16x4xbf16> to vector<256x4xbf16>
    %c1_45 = arith.constant 1 : index
    %c0_46 = arith.constant 0 : index
    %c0_47 = arith.constant 0 : index
    %26 = vector.load %arg2[%c1_45, %c0_46, %c0_47] : memref<9x4x8xbf16, #tpu.memory_space<vmem>>, vector<1x4x8xbf16>
    %27 = vector.shape_cast %26 : vector<1x4x8xbf16> to vector<4x8xbf16>
    %cst_48 = arith.constant dense<0.000000e+00> : vector<256x8xf32>
    %28 = tpu.matmul %25, %27, %cst_48 {dimension_numbers = #tpu.dot_dimension_numbers<[1], [0], [0], [1], [0, 0, 1, 1], [], []>} : vector<256x4xbf16>, vector<4x8xbf16>, vector<256x8xf32> -> vector<256x8xf32>
    %29 = arith.addf %23, %28 : vector<256x8xf32>
    %c0_49 = arith.constant 0 : index
    %c2 = arith.constant 2 : index
    %c0_50 = arith.constant 0 : index
    %30 = vector.load %arg8[%c0_49, %c2, %c0_50] : memref<18x18x4xbf16, #tpu.memory_space<vmem>>, vector<16x16x4xbf16>
    %31 = vector.shape_cast %30 : vector<16x16x4xbf16> to vector<256x4xbf16>
    %c2_51 = arith.constant 2 : index
    %c0_52 = arith.constant 0 : index
    %c0_53 = arith.constant 0 : index
    %32 = vector.load %arg2[%c2_51, %c0_52, %c0_53] : memref<9x4x8xbf16, #tpu.memory_space<vmem>>, vector<1x4x8xbf16>
    %33 = vector.shape_cast %32 : vector<1x4x8xbf16> to vector<4x8xbf16>
    %cst_54 = arith.constant dense<0.000000e+00> : vector<256x8xf32>
    %34 = tpu.matmul %31, %33, %cst_54 {dimension_numbers = #tpu.dot_dimension_numbers<[1], [0], [0], [1], [0, 0, 1, 1], [], []>} : vector<256x4xbf16>, vector<4x8xbf16>, vector<256x8xf32> -> vector<256x8xf32>
    %35 = arith.addf %29, %34 : vector<256x8xf32>
    %c1_55 = arith.constant 1 : index
    %c0_56 = arith.constant 0 : index
    %c0_57 = arith.constant 0 : index
    %36 = vector.load %arg8[%c1_55, %c0_56, %c0_57] : memref<18x18x4xbf16, #tpu.memory_space<vmem>>, vector<16x16x4xbf16>
    %37 = vector.shape_cast %36 : vector<16x16x4xbf16> to vector<256x4xbf16>
    %c3 = arith.constant 3 : index
    %c0_58 = arith.constant 0 : index
    %c0_59 = arith.constant 0 : index
    %38 = vector.load %arg2[%c3, %c0_58, %c0_59] : memref<9x4x8xbf16, #tpu.memory_space<vmem>>, vector<1x4x8xbf16>
    %39 = vector.shape_cast %38 : vector<1x4x8xbf16> to vector<4x8xbf16>
    %cst_60 = arith.constant dense<0.000000e+00> : vector<256x8xf32>
    %40 = tpu.matmul %37, %39, %cst_60 {dimension_numbers = #tpu.dot_dimension_numbers<[1], [0], [0], [1], [0, 0, 1, 1], [], []>} : vector<256x4xbf16>, vector<4x8xbf16>, vector<256x8xf32> -> vector<256x8xf32>
    %41 = arith.addf %35, %40 : vector<256x8xf32>
    %c1_61 = arith.constant 1 : index
    %c1_62 = arith.constant 1 : index
    %c0_63 = arith.constant 0 : index
    %42 = vector.load %arg8[%c1_61, %c1_62, %c0_63] : memref<18x18x4xbf16, #tpu.memory_space<vmem>>, vector<16x16x4xbf16>
    %43 = vector.shape_cast %42 : vector<16x16x4xbf16> to vector<256x4xbf16>
    %c4 = arith.constant 4 : index
    %c0_64 = arith.constant 0 : index
    %c0_65 = arith.constant 0 : index
    %44 = vector.load %arg2[%c4, %c0_64, %c0_65] : memref<9x4x8xbf16, #tpu.memory_space<vmem>>, vector<1x4x8xbf16>
    %45 = vector.shape_cast %44 : vector<1x4x8xbf16> to vector<4x8xbf16>
    %cst_66 = arith.constant dense<0.000000e+00> : vector<256x8xf32>
    %46 = tpu.matmul %43, %45, %cst_66 {dimension_numbers = #tpu.dot_dimension_numbers<[1], [0], [0], [1], [0, 0, 1, 1], [], []>} : vector<256x4xbf16>, vector<4x8xbf16>, vector<256x8xf32> -> vector<256x8xf32>
    %47 = arith.addf %41, %46 : vector<256x8xf32>
    %c1_67 = arith.constant 1 : index
    %c2_68 = arith.constant 2 : index
    %c0_69 = arith.constant 0 : index
    %48 = vector.load %arg8[%c1_67, %c2_68, %c0_69] : memref<18x18x4xbf16, #tpu.memory_space<vmem>>, vector<16x16x4xbf16>
    %49 = vector.shape_cast %48 : vector<16x16x4xbf16> to vector<256x4xbf16>
    %c5 = arith.constant 5 : index
    %c0_70 = arith.constant 0 : index
    %c0_71 = arith.constant 0 : index
    %50 = vector.load %arg2[%c5, %c0_70, %c0_71] : memref<9x4x8xbf16, #tpu.memory_space<vmem>>, vector<1x4x8xbf16>
    %51 = vector.shape_cast %50 : vector<1x4x8xbf16> to vector<4x8xbf16>
    %cst_72 = arith.constant dense<0.000000e+00> : vector<256x8xf32>
    %52 = tpu.matmul %49, %51, %cst_72 {dimension_numbers = #tpu.dot_dimension_numbers<[1], [0], [0], [1], [0, 0, 1, 1], [], []>} : vector<256x4xbf16>, vector<4x8xbf16>, vector<256x8xf32> -> vector<256x8xf32>
    %53 = arith.addf %47, %52 : vector<256x8xf32>
    %c2_73 = arith.constant 2 : index
    %c0_74 = arith.constant 0 : index
    %c0_75 = arith.constant 0 : index
    %54 = vector.load %arg8[%c2_73, %c0_74, %c0_75] : memref<18x18x4xbf16, #tpu.memory_space<vmem>>, vector<16x16x4xbf16>
    %55 = vector.shape_cast %54 : vector<16x16x4xbf16> to vector<256x4xbf16>
    %c6 = arith.constant 6 : index
    %c0_76 = arith.constant 0 : index
    %c0_77 = arith.constant 0 : index
    %56 = vector.load %arg2[%c6, %c0_76, %c0_77] : memref<9x4x8xbf16, #tpu.memory_space<vmem>>, vector<1x4x8xbf16>
    %57 = vector.shape_cast %56 : vector<1x4x8xbf16> to vector<4x8xbf16>
    %cst_78 = arith.constant dense<0.000000e+00> : vector<256x8xf32>
    %58 = tpu.matmul %55, %57, %cst_78 {dimension_numbers = #tpu.dot_dimension_numbers<[1], [0], [0], [1], [0, 0, 1, 1], [], []>} : vector<256x4xbf16>, vector<4x8xbf16>, vector<256x8xf32> -> vector<256x8xf32>
    %59 = arith.addf %53, %58 : vector<256x8xf32>
    %c2_79 = arith.constant 2 : index
    %c1_80 = arith.constant 1 : index
    %c0_81 = arith.constant 0 : index
    %60 = vector.load %arg8[%c2_79, %c1_80, %c0_81] : memref<18x18x4xbf16, #tpu.memory_space<vmem>>, vector<16x16x4xbf16>
    %61 = vector.shape_cast %60 : vector<16x16x4xbf16> to vector<256x4xbf16>
    %c7 = arith.constant 7 : index
    %c0_82 = arith.constant 0 : index
    %c0_83 = arith.constant 0 : index
    %62 = vector.load %arg2[%c7, %c0_82, %c0_83] : memref<9x4x8xbf16, #tpu.memory_space<vmem>>, vector<1x4x8xbf16>
    %63 = vector.shape_cast %62 : vector<1x4x8xbf16> to vector<4x8xbf16>
    %cst_84 = arith.constant dense<0.000000e+00> : vector<256x8xf32>
    %64 = tpu.matmul %61, %63, %cst_84 {dimension_numbers = #tpu.dot_dimension_numbers<[1], [0], [0], [1], [0, 0, 1, 1], [], []>} : vector<256x4xbf16>, vector<4x8xbf16>, vector<256x8xf32> -> vector<256x8xf32>
    %65 = arith.addf %59, %64 : vector<256x8xf32>
    %c2_85 = arith.constant 2 : index
    %c2_86 = arith.constant 2 : index
    %c0_87 = arith.constant 0 : index
    %66 = vector.load %arg8[%c2_85, %c2_86, %c0_87] : memref<18x18x4xbf16, #tpu.memory_space<vmem>>, vector<16x16x4xbf16>
    %67 = vector.shape_cast %66 : vector<16x16x4xbf16> to vector<256x4xbf16>
    %c8 = arith.constant 8 : index
    %c0_88 = arith.constant 0 : index
    %c0_89 = arith.constant 0 : index
    %68 = vector.load %arg2[%c8, %c0_88, %c0_89] : memref<9x4x8xbf16, #tpu.memory_space<vmem>>, vector<1x4x8xbf16>
    %69 = vector.shape_cast %68 : vector<1x4x8xbf16> to vector<4x8xbf16>
    %cst_90 = arith.constant dense<0.000000e+00> : vector<256x8xf32>
    %70 = tpu.matmul %67, %69, %cst_90 {dimension_numbers = #tpu.dot_dimension_numbers<[1], [0], [0], [1], [0, 0, 1, 1], [], []>} : vector<256x4xbf16>, vector<4x8xbf16>, vector<256x8xf32> -> vector<256x8xf32>
    %71 = arith.addf %65, %70 : vector<256x8xf32>
    %c0_91 = arith.constant 0 : index
    %c0_92 = arith.constant 0 : index
    %72 = vector.load %arg4[%c0_91, %c0_92] : memref<1x8xf32, #tpu.memory_space<vmem>>, vector<1x8xf32>
    %73 = vector.shape_cast %72 : vector<1x8xf32> to vector<8xf32>
    %74 = vector.shape_cast %73 : vector<8xf32> to vector<1x8xf32>
    %75 = vector.broadcast %74 : vector<1x8xf32> to vector<256x8xf32>
    %76 = arith.mulf %71, %75 : vector<256x8xf32>
    %c0_93 = arith.constant 0 : index
    %c0_94 = arith.constant 0 : index
    %77 = vector.load %arg5[%c0_93, %c0_94] : memref<1x8xf32, #tpu.memory_space<vmem>>, vector<1x8xf32>
    %78 = vector.shape_cast %77 : vector<1x8xf32> to vector<8xf32>
    %79 = vector.shape_cast %78 : vector<8xf32> to vector<1x8xf32>
    %80 = vector.broadcast %79 : vector<1x8xf32> to vector<256x8xf32>
    %81 = arith.addf %76, %80 : vector<256x8xf32>
    %cst_95 = arith.constant 0.000000e+00 : f32
    %82 = vector.broadcast %cst_95 : f32 to vector<256x8xf32>
    %83 = arith.maximumf %81, %82 : vector<256x8xf32>
    %84 = arith.truncf %83 : vector<256x8xf32> to vector<256x8xbf16>
    %85 = vector.shape_cast %84 : vector<256x8xbf16> to vector<16x16x8xbf16>
    %c1_96 = arith.constant 1 : index
    %c1_97 = arith.constant 1 : index
    %c0_98 = arith.constant 0 : index
    %86 = vector.load %arg9[%c1_96, %c1_97, %c0_98] : memref<18x18x8xbf16, #tpu.memory_space<vmem>>, vector<16x16x8xbf16>
    tpu.vector_store %arg9[%c1_96, %c1_97, %c0_98], %85 {strides = array<i32>} : memref<18x18x8xbf16, #tpu.memory_space<vmem>>, vector<16x16x8xbf16>,
    %c0_99 = arith.constant 0 : index
    %c0_100 = arith.constant 0 : index
    %c0_101 = arith.constant 0 : index
    %87 = vector.load %arg9[%c0_99, %c0_100, %c0_101] : memref<18x18x8xbf16, #tpu.memory_space<vmem>>, vector<16x16x8xbf16>
    %88 = vector.shape_cast %87 : vector<16x16x8xbf16> to vector<256x8xbf16>
    %c0_102 = arith.constant 0 : index
    %c0_103 = arith.constant 0 : index
    %c0_104 = arith.constant 0 : index
    %89 = vector.load %arg3[%c0_102, %c0_103, %c0_104] : memref<9x8x8xbf16, #tpu.memory_space<vmem>>, vector<1x8x8xbf16>
    %90 = vector.shape_cast %89 : vector<1x8x8xbf16> to vector<8x8xbf16>
    %cst_105 = arith.constant dense<0.000000e+00> : vector<256x8xf32>
    %91 = tpu.matmul %88, %90, %cst_105 {dimension_numbers = #tpu.dot_dimension_numbers<[1], [0], [0], [1], [0, 0, 1, 1], [], []>} : vector<256x8xbf16>, vector<8x8xbf16>, vector<256x8xf32> -> vector<256x8xf32>
    %c0_106 = arith.constant 0 : index
    %c1_107 = arith.constant 1 : index
    %c0_108 = arith.constant 0 : index
    %92 = vector.load %arg9[%c0_106, %c1_107, %c0_108] : memref<18x18x8xbf16, #tpu.memory_space<vmem>>, vector<16x16x8xbf16>
    %93 = vector.shape_cast %92 : vector<16x16x8xbf16> to vector<256x8xbf16>
    %c1_109 = arith.constant 1 : index
    %c0_110 = arith.constant 0 : index
    %c0_111 = arith.constant 0 : index
    %94 = vector.load %arg3[%c1_109, %c0_110, %c0_111] : memref<9x8x8xbf16, #tpu.memory_space<vmem>>, vector<1x8x8xbf16>
    %95 = vector.shape_cast %94 : vector<1x8x8xbf16> to vector<8x8xbf16>
    %cst_112 = arith.constant dense<0.000000e+00> : vector<256x8xf32>
    %96 = tpu.matmul %93, %95, %cst_112 {dimension_numbers = #tpu.dot_dimension_numbers<[1], [0], [0], [1], [0, 0, 1, 1], [], []>} : vector<256x8xbf16>, vector<8x8xbf16>, vector<256x8xf32> -> vector<256x8xf32>
    %97 = arith.addf %91, %96 : vector<256x8xf32>
    %c0_113 = arith.constant 0 : index
    %c2_114 = arith.constant 2 : index
    %c0_115 = arith.constant 0 : index
    %98 = vector.load %arg9[%c0_113, %c2_114, %c0_115] : memref<18x18x8xbf16, #tpu.memory_space<vmem>>, vector<16x16x8xbf16>
    %99 = vector.shape_cast %98 : vector<16x16x8xbf16> to vector<256x8xbf16>
    %c2_116 = arith.constant 2 : index
    %c0_117 = arith.constant 0 : index
    %c0_118 = arith.constant 0 : index
    %100 = vector.load %arg3[%c2_116, %c0_117, %c0_118] : memref<9x8x8xbf16, #tpu.memory_space<vmem>>, vector<1x8x8xbf16>
    %101 = vector.shape_cast %100 : vector<1x8x8xbf16> to vector<8x8xbf16>
    %cst_119 = arith.constant dense<0.000000e+00> : vector<256x8xf32>
    %102 = tpu.matmul %99, %101, %cst_119 {dimension_numbers = #tpu.dot_dimension_numbers<[1], [0], [0], [1], [0, 0, 1, 1], [], []>} : vector<256x8xbf16>, vector<8x8xbf16>, vector<256x8xf32> -> vector<256x8xf32>
    %103 = arith.addf %97, %102 : vector<256x8xf32>
    %c1_120 = arith.constant 1 : index
    %c0_121 = arith.constant 0 : index
    %c0_122 = arith.constant 0 : index
    %104 = vector.load %arg9[%c1_120, %c0_121, %c0_122] : memref<18x18x8xbf16, #tpu.memory_space<vmem>>, vector<16x16x8xbf16>
    %105 = vector.shape_cast %104 : vector<16x16x8xbf16> to vector<256x8xbf16>
    %c3_123 = arith.constant 3 : index
    %c0_124 = arith.constant 0 : index
    %c0_125 = arith.constant 0 : index
    %106 = vector.load %arg3[%c3_123, %c0_124, %c0_125] : memref<9x8x8xbf16, #tpu.memory_space<vmem>>, vector<1x8x8xbf16>
    %107 = vector.shape_cast %106 : vector<1x8x8xbf16> to vector<8x8xbf16>
    %cst_126 = arith.constant dense<0.000000e+00> : vector<256x8xf32>
    %108 = tpu.matmul %105, %107, %cst_126 {dimension_numbers = #tpu.dot_dimension_numbers<[1], [0], [0], [1], [0, 0, 1, 1], [], []>} : vector<256x8xbf16>, vector<8x8xbf16>, vector<256x8xf32> -> vector<256x8xf32>
    %109 = arith.addf %103, %108 : vector<256x8xf32>
    %c1_127 = arith.constant 1 : index
    %c1_128 = arith.constant 1 : index
    %c0_129 = arith.constant 0 : index
    %110 = vector.load %arg9[%c1_127, %c1_128, %c0_129] : memref<18x18x8xbf16, #tpu.memory_space<vmem>>, vector<16x16x8xbf16>
    %111 = vector.shape_cast %110 : vector<16x16x8xbf16> to vector<256x8xbf16>
    %c4_130 = arith.constant 4 : index
    %c0_131 = arith.constant 0 : index
    %c0_132 = arith.constant 0 : index
    %112 = vector.load %arg3[%c4_130, %c0_131, %c0_132] : memref<9x8x8xbf16, #tpu.memory_space<vmem>>, vector<1x8x8xbf16>
    %113 = vector.shape_cast %112 : vector<1x8x8xbf16> to vector<8x8xbf16>
    %cst_133 = arith.constant dense<0.000000e+00> : vector<256x8xf32>
    %114 = tpu.matmul %111, %113, %cst_133 {dimension_numbers = #tpu.dot_dimension_numbers<[1], [0], [0], [1], [0, 0, 1, 1], [], []>} : vector<256x8xbf16>, vector<8x8xbf16>, vector<256x8xf32> -> vector<256x8xf32>
    %115 = arith.addf %109, %114 : vector<256x8xf32>
    %c1_134 = arith.constant 1 : index
    %c2_135 = arith.constant 2 : index
    %c0_136 = arith.constant 0 : index
    %116 = vector.load %arg9[%c1_134, %c2_135, %c0_136] : memref<18x18x8xbf16, #tpu.memory_space<vmem>>, vector<16x16x8xbf16>
    %117 = vector.shape_cast %116 : vector<16x16x8xbf16> to vector<256x8xbf16>
    %c5_137 = arith.constant 5 : index
    %c0_138 = arith.constant 0 : index
    %c0_139 = arith.constant 0 : index
    %118 = vector.load %arg3[%c5_137, %c0_138, %c0_139] : memref<9x8x8xbf16, #tpu.memory_space<vmem>>, vector<1x8x8xbf16>
    %119 = vector.shape_cast %118 : vector<1x8x8xbf16> to vector<8x8xbf16>
    %cst_140 = arith.constant dense<0.000000e+00> : vector<256x8xf32>
    %120 = tpu.matmul %117, %119, %cst_140 {dimension_numbers = #tpu.dot_dimension_numbers<[1], [0], [0], [1], [0, 0, 1, 1], [], []>} : vector<256x8xbf16>, vector<8x8xbf16>, vector<256x8xf32> -> vector<256x8xf32>
    %121 = arith.addf %115, %120 : vector<256x8xf32>
    %c2_141 = arith.constant 2 : index
    %c0_142 = arith.constant 0 : index
    %c0_143 = arith.constant 0 : index
    %122 = vector.load %arg9[%c2_141, %c0_142, %c0_143] : memref<18x18x8xbf16, #tpu.memory_space<vmem>>, vector<16x16x8xbf16>
    %123 = vector.shape_cast %122 : vector<16x16x8xbf16> to vector<256x8xbf16>
    %c6_144 = arith.constant 6 : index
    %c0_145 = arith.constant 0 : index
    %c0_146 = arith.constant 0 : index
    %124 = vector.load %arg3[%c6_144, %c0_145, %c0_146] : memref<9x8x8xbf16, #tpu.memory_space<vmem>>, vector<1x8x8xbf16>
    %125 = vector.shape_cast %124 : vector<1x8x8xbf16> to vector<8x8xbf16>
    %cst_147 = arith.constant dense<0.000000e+00> : vector<256x8xf32>
    %126 = tpu.matmul %123, %125, %cst_147 {dimension_numbers = #tpu.dot_dimension_numbers<[1], [0], [0], [1], [0, 0, 1, 1], [], []>} : vector<256x8xbf16>, vector<8x8xbf16>, vector<256x8xf32> -> vector<256x8xf32>
    %127 = arith.addf %121, %126 : vector<256x8xf32>
    %c2_148 = arith.constant 2 : index
    %c1_149 = arith.constant 1 : index
    %c0_150 = arith.constant 0 : index
    %128 = vector.load %arg9[%c2_148, %c1_149, %c0_150] : memref<18x18x8xbf16, #tpu.memory_space<vmem>>, vector<16x16x8xbf16>
    %129 = vector.shape_cast %128 : vector<16x16x8xbf16> to vector<256x8xbf16>
    %c7_151 = arith.constant 7 : index
    %c0_152 = arith.constant 0 : index
    %c0_153 = arith.constant 0 : index
    %130 = vector.load %arg3[%c7_151, %c0_152, %c0_153] : memref<9x8x8xbf16, #tpu.memory_space<vmem>>, vector<1x8x8xbf16>
    %131 = vector.shape_cast %130 : vector<1x8x8xbf16> to vector<8x8xbf16>
    %cst_154 = arith.constant dense<0.000000e+00> : vector<256x8xf32>
    %132 = tpu.matmul %129, %131, %cst_154 {dimension_numbers = #tpu.dot_dimension_numbers<[1], [0], [0], [1], [0, 0, 1, 1], [], []>} : vector<256x8xbf16>, vector<8x8xbf16>, vector<256x8xf32> -> vector<256x8xf32>
    %133 = arith.addf %127, %132 : vector<256x8xf32>
    %c2_155 = arith.constant 2 : index
    %c2_156 = arith.constant 2 : index
    %c0_157 = arith.constant 0 : index
    %134 = vector.load %arg9[%c2_155, %c2_156, %c0_157] : memref<18x18x8xbf16, #tpu.memory_space<vmem>>, vector<16x16x8xbf16>
    %135 = vector.shape_cast %134 : vector<16x16x8xbf16> to vector<256x8xbf16>
    %c8_158 = arith.constant 8 : index
    %c0_159 = arith.constant 0 : index
    %c0_160 = arith.constant 0 : index
    %136 = vector.load %arg3[%c8_158, %c0_159, %c0_160] : memref<9x8x8xbf16, #tpu.memory_space<vmem>>, vector<1x8x8xbf16>
    %137 = vector.shape_cast %136 : vector<1x8x8xbf16> to vector<8x8xbf16>
    %cst_161 = arith.constant dense<0.000000e+00> : vector<256x8xf32>
    %138 = tpu.matmul %135, %137, %cst_161 {dimension_numbers = #tpu.dot_dimension_numbers<[1], [0], [0], [1], [0, 0, 1, 1], [], []>} : vector<256x8xbf16>, vector<8x8xbf16>, vector<256x8xf32> -> vector<256x8xf32>
    %139 = arith.addf %133, %138 : vector<256x8xf32>
    %c0_162 = arith.constant 0 : index
    %c0_163 = arith.constant 0 : index
    %140 = vector.load %arg4[%c0_162, %c0_163] : memref<1x8xf32, #tpu.memory_space<vmem>>, vector<1x8xf32>
    %141 = vector.shape_cast %140 : vector<1x8xf32> to vector<8xf32>
    %142 = vector.shape_cast %141 : vector<8xf32> to vector<1x8xf32>
    %143 = vector.broadcast %142 : vector<1x8xf32> to vector<256x8xf32>
    %144 = arith.mulf %139, %143 : vector<256x8xf32>
    %c0_164 = arith.constant 0 : index
    %c0_165 = arith.constant 0 : index
    %145 = vector.load %arg6[%c0_164, %c0_165] : memref<1x8xf32, #tpu.memory_space<vmem>>, vector<1x8xf32>
    %146 = vector.shape_cast %145 : vector<1x8xf32> to vector<8xf32>
    %147 = vector.shape_cast %146 : vector<8xf32> to vector<1x8xf32>
    %148 = vector.broadcast %147 : vector<1x8xf32> to vector<256x8xf32>
    %149 = arith.addf %144, %148 : vector<256x8xf32>
    %cst_166 = arith.constant 0.000000e+00 : f32
    %150 = vector.broadcast %cst_166 : f32 to vector<256x8xf32>
    %151 = arith.maximumf %149, %150 : vector<256x8xf32>
    %152 = vector.shape_cast %151 : vector<256x8xf32> to vector<16x16x8xf32>
    %153 = vector.shape_cast %152 : vector<16x16x8xf32> to vector<8x2x16x8xf32>
    %154 = vector.extract_strided_slice %153 {offsets = [0, 0, 0, 0], sizes = [8, 1, 16, 8], strides = [1, 1, 1, 1]} : vector<8x2x16x8xf32> to vector<8x1x16x8xf32>
    %155 = vector.shape_cast %154 : vector<8x1x16x8xf32> to vector<8x16x8xf32>
    %156 = vector.extract_strided_slice %153 {offsets = [0, 1, 0, 0], sizes = [8, 1, 16, 8], strides = [1, 1, 1, 1]} : vector<8x2x16x8xf32> to vector<8x1x16x8xf32>
    %157 = vector.shape_cast %156 : vector<8x1x16x8xf32> to vector<8x16x8xf32>
    %158 = arith.maximumf %155, %157 : vector<8x16x8xf32>
    %159 = vector.shape_cast %158 : vector<8x16x8xf32> to vector<8x8x2x8xf32>
    %160 = vector.extract_strided_slice %159 {offsets = [0, 0, 0, 0], sizes = [8, 8, 1, 8], strides = [1, 1, 1, 1]} : vector<8x8x2x8xf32> to vector<8x8x1x8xf32>
    %161 = vector.shape_cast %160 : vector<8x8x1x8xf32> to vector<8x8x8xf32>
    %162 = vector.extract_strided_slice %159 {offsets = [0, 0, 1, 0], sizes = [8, 8, 1, 8], strides = [1, 1, 1, 1]} : vector<8x8x2x8xf32> to vector<8x8x1x8xf32>
    %163 = vector.shape_cast %162 : vector<8x8x1x8xf32> to vector<8x8x8xf32>
    %164 = arith.maximumf %161, %163 : vector<8x8x8xf32>
    %165 = vector.shape_cast %164 : vector<8x8x8xf32> to vector<8x64xf32>
    %166 = arith.truncf %165 : vector<8x64xf32> to vector<8x64xbf16>
    %c0_167 = arith.constant 0 : index
    %c0_168 = arith.constant 0 : index
    %c0_169 = arith.constant 0 : index
    %167 = vector.load %arg7[%c0_167, %c0_168, %c0_169] : memref<1x8x64xbf16, #tpu.memory_space<vmem>>, vector<1x8x64xbf16>
    %168 = vector.shape_cast %167 : vector<1x8x64xbf16> to vector<8x64xbf16>
    %169 = vector.shape_cast %166 : vector<8x64xbf16> to vector<1x8x64xbf16>
    tpu.vector_store %arg7[%c0_167, %c0_168, %c0_169], %169 {strides = array<i32>} : memref<1x8x64xbf16, #tpu.memory_space<vmem>>, vector<1x8x64xbf16>,
    return
  }
  func.func @transform_0(%arg0: i32) -> (i32, i32, i32, i32) {
    %c0_i32 = arith.constant 0 : i32
    %c0_i32_0 = arith.constant 0 : i32
    %c0_i32_1 = arith.constant 0 : i32
    %c0_i32_2 = arith.constant 0 : i32
    return %arg0, %c0_i32, %c0_i32_0, %c0_i32_1 : i32, i32, i32, i32
  }
  func.func @transform_1(%arg0: i32) -> (i32, i32, i32) {
    %c0_i32 = arith.constant 0 : i32
    %c0_i32_0 = arith.constant 0 : i32
    %c0_i32_1 = arith.constant 0 : i32
    %c0_i32_2 = arith.constant 0 : i32
    return %c0_i32, %c0_i32_0, %c0_i32_1 : i32, i32, i32
  }
  func.func @transform_2(%arg0: i32) -> (i32, i32, i32) {
    %c0_i32 = arith.constant 0 : i32
    %c0_i32_0 = arith.constant 0 : i32
    %c0_i32_1 = arith.constant 0 : i32
    %c0_i32_2 = arith.constant 0 : i32
    return %c0_i32, %c0_i32_0, %c0_i32_1 : i32, i32, i32
  }
  func.func @transform_3(%arg0: i32) -> (i32, i32) {
    %c0_i32 = arith.constant 0 : i32
    %c0_i32_0 = arith.constant 0 : i32
    %c0_i32_1 = arith.constant 0 : i32
    return %c0_i32, %c0_i32_0 : i32, i32
  }
  func.func @transform_4(%arg0: i32) -> (i32, i32) {
    %c0_i32 = arith.constant 0 : i32
    %c0_i32_0 = arith.constant 0 : i32
    %c0_i32_1 = arith.constant 0 : i32
    return %c0_i32, %c0_i32_0 : i32, i32
  }
  func.func @transform_5(%arg0: i32) -> (i32, i32) {
    %c0_i32 = arith.constant 0 : i32
    %c0_i32_0 = arith.constant 0 : i32
    %c0_i32_1 = arith.constant 0 : i32
    return %c0_i32, %c0_i32_0 : i32, i32
  }
  func.func @transform_6(%arg0: i32) -> (i32, i32, i32) {
    %c0_i32 = arith.constant 0 : i32
    %c0_i32_0 = arith.constant 0 : i32
    %c0_i32_1 = arith.constant 0 : i32
    return %arg0, %c0_i32, %c0_i32_0 : i32, i32, i32
  }
}

</mosaic_0001>

<llo_original>
// kernel: tpu_custom_call.1
$region0: #{tpu_custom_call.1}
  #allocation0 [shape = 'u32[]', space=smem, size = 0x4, offset = 0x4, fixed_abs, tag = 'smem constant byte address 0x4 - core index']
  #allocation1 [shape = 'u32[144,128]{1,0:T(1,128)}', space=vmem, size = 0x12000, scoped, tag = 'internal scratch']
  #allocation2 [shape = 'bf16[18,18,4]{2,1,0:T(8,128)(2,1)}', space=vmem, size = 0x1b000, scoped, tag = 'scratch operand']
  #allocation3 [shape = 'bf16[18,18,8]{2,1,0:T(8,128)(2,1)}', space=vmem, size = 0x1b000, scoped, tag = 'scratch operand']
  %s0 = inlined_call_operand.vmem [shape: bf16[2,16,16,4], index: 0, kind: input, shape index: {}]
  %s1 = inlined_call_operand.vmem [shape: bf16[9,4,8], index: 1, kind: input, shape index: {}]
  %s2 = inlined_call_operand.vmem [shape: bf16[9,8,8], index: 2, kind: input, shape index: {}]
  %s3 = inlined_call_operand.vmem [shape: f32[1,8], index: 3, kind: input, shape index: {}]
  %s4 = inlined_call_operand.vmem [shape: f32[1,8], index: 4, kind: input, shape index: {}]
  %s5 = inlined_call_operand.vmem [shape: f32[1,8], index: 5, kind: input, shape index: {}]
  %s6 = inlined_call_operand.hbm [shape: bf16[2,8,64], index: 6, kind: output, shape index: {}]
  %s7 = sld [smem:[#allocation0]]
  $region57: #{tpu_custom_call.1} parent=0
    _
  %s9 = ssub.s32 1, %s7
  %s10 = scalar_select 0, %s9, %s7
  $region1: #{tpu_custom_call.1} parent=0
    #allocation4 [shape = 'u8[4096]{0}', space=vmem, size = 0x1000, scoped, tag = 'output window, operand 0']
    #allocation5 [shape = 's32[2]{0}', space=sflag, size = 0x8, scoped, tag = 'scoped memory for tpu_custom_call.1']
    %11 = vsyncpa [#allocation5], 0
    %s12 = scalar_lea.sflag [#allocation5], 1
    %13 = vsyncpa %s12, 0
    loop: start=0, step=1, limit=4
    $region2: #{tpu_custom_call.1} parent=1 // loop_pre_header
      _
    $region3: #{tpu_custom_call.1} parent=1 // loop_header
      %s15 = sphi 0, %s19
      %p16 = scmp.ge.s32.totalorder %s15, 4
      %s25 = sphi 0, %s27
      %s28 = sphi 0, %s25
      %s29 = sphi 0, %s28
      %s45 = sphi 0, %s29
      %s49 = sphi 0, %s49
      %s51 = sphi 0, %s49
      %s52 = sphi 0, %s51
      %s66 = sphi 0, %s52
      %s70 = sphi 0, %s70
      %s72 = sphi 0, %s70
      %s73 = sphi 0, %s72
      %s87 = sphi 0, %s73
      %s91 = sphi 0, %s91
      %s93 = sphi 0, %s91
      %s94 = sphi 0, %s93
      %s108 = sphi 0, %s94
      %s112 = sphi 0, %s112
      %s114 = sphi 0, %s112
      %s115 = sphi 0, %s114
      %s129 = sphi 0, %s115
      %s133 = sphi 0, %s133
      %s135 = sphi 0, %s133
      %s136 = sphi 0, %s135
      %s150 = sphi 0, %s136
      %s156 = sphi 0, %s158
      %s159 = sphi 0, %s156
      %s160 = sphi 0, %s159
      %s176 = sphi 0, %s160
    $region4: #{tpu_custom_call.1} parent=1 // loop_header_branch
      %18 = sbr.rel (%p16) target = $region8
    $region5: #{tpu_custom_call.1} parent=1 // loop_body
      %s20 = ssub.s32 %s15, 1
      %s21 = ssub.s32 %s15, 2
      %s22 = sadd.s32 %s15, 1
      %s23 = ssub.s32 %s15, %s22
      %p24 = scmp.eq.s32.totalorder %s23, 0
      %s26 = sadd.s32 %s25, 1
      %s27 = scalar_select %p24, %s25, %s26
      %p30 = pneg %p24
      %p31 = scmp.eq.s32.totalorder %s15, 1
      %p32 = por %p30, %p31
      %p33 = scmp.ne.s32.totalorder %s25, %s28
      %p34 = scmp.eq.s32.totalorder %s15, 0
      %p35 = por %p33, %p34
      %p36 = scmp.ne.s32.totalorder %s25, %s28
      %p37 = scmp.eq.s32.totalorder %s20, 1
      %p38 = por %p36, %p37
      %p39 = scmp.ne.s32.totalorder %s28, %s29
      %p40 = scmp.eq.s32.totalorder %s20, 0
      %p41 = por %p39, %p40
      %p42 = scmp.ne.s32.totalorder %s28, %s29
      %p43 = scmp.eq.s32.totalorder %s21, 1
      %p44 = por %p42, %p43
      %p46 = scmp.ne.s32.totalorder %s29, %s45
      %p47 = scmp.eq.s32.totalorder %s21, 0
      %p48 = por %p46, %p47
      %s50 = sadd.s32 %s49, 1
      %p53 = scmp.eq.s32.totalorder %s15, 1
      %p54 = scmp.ne.s32.totalorder %s49, %s51
      %p55 = scmp.eq.s32.totalorder %s15, 0
      %p56 = por %p54, %p55
      %p57 = scmp.ne.s32.totalorder %s49, %s51
      %p58 = scmp.eq.s32.totalorder %s20, 1
      %p59 = por %p57, %p58
      %p60 = scmp.ne.s32.totalorder %s51, %s52
      %p61 = scmp.eq.s32.totalorder %s20, 0
      %p62 = por %p60, %p61
      %p63 = scmp.ne.s32.totalorder %s51, %s52
      %p64 = scmp.eq.s32.totalorder %s21, 1
      %p65 = por %p63, %p64
      %p67 = scmp.ne.s32.totalorder %s52, %s66
      %p68 = scmp.eq.s32.totalorder %s21, 0
      %p69 = por %p67, %p68
      %s71 = sadd.s32 %s70, 1
      %p74 = scmp.eq.s32.totalorder %s15, 1
      %p75 = scmp.ne.s32.totalorder %s70, %s72
      %p76 = scmp.eq.s32.totalorder %s15, 0
      %p77 = por %p75, %p76
      %p78 = scmp.ne.s32.totalorder %s70, %s72
      %p79 = scmp.eq.s32.totalorder %s20, 1
      %p80 = por %p78, %p79
      %p81 = scmp.ne.s32.totalorder %s72, %s73
      %p82 = scmp.eq.s32.totalorder %s20, 0
      %p83 = por %p81, %p82
      %p84 = scmp.ne.s32.totalorder %s72, %s73
      %p85 = scmp.eq.s32.totalorder %s21, 1
      %p86 = por %p84, %p85
      %p88 = scmp.ne.s32.totalorder %s73, %s87
      %p89 = scmp.eq.s32.totalorder %s21, 0
      %p90 = por %p88, %p89
      %s92 = sadd.s32 %s91, 1
      %p95 = scmp.eq.s32.totalorder %s15, 1
      %p96 = scmp.ne.s32.totalorder %s91, %s93
      %p97 = scmp.eq.s32.totalorder %s15, 0
      %p98 = por %p96, %p97
      %p99 = scmp.ne.s32.totalorder %s91, %s93
      %p100 = scmp.eq.s32.totalorder %s20, 1
      %p101 = por %p99, %p100
      %p102 = scmp.ne.s32.totalorder %s93, %s94
      %p103 = scmp.eq.s32.totalorder %s20, 0
      %p104 = por %p102, %p103
      %p105 = scmp.ne.s32.totalorder %s93, %s94
      %p106 = scmp.eq.s32.totalorder %s21, 1
      %p107 = por %p105, %p106
      %p109 = scmp.ne.s32.totalorder %s94, %s108
      %p110 = scmp.eq.s32.totalorder %s21, 0
      %p111 = por %p109, %p110
      %s113 = sadd.s32 %s112, 1
      %p116 = scmp.eq.s32.totalorder %s15, 1
      %p117 = scmp.ne.s32.totalorder %s112, %s114
      %p118 = scmp.eq.s32.totalorder %s15, 0
      %p119 = por %p117, %p118
      %p120 = scmp.ne.s32.totalorder %s112, %s114
      %p121 = scmp.eq.s32.totalorder %s20, 1
      %p122 = por %p120, %p121
      %p123 = scmp.ne.s32.totalorder %s114, %s115
      %p124 = scmp.eq.s32.totalorder %s20, 0
      %p125 = por %p123, %p124
      %p126 = scmp.ne.s32.totalorder %s114, %s115
      %p127 = scmp.eq.s32.totalorder %s21, 1
      %p128 = por %p126, %p127
      %p130 = scmp.ne.s32.totalorder %s115, %s129
      %p131 = scmp.eq.s32.totalorder %s21, 0
      %p132 = por %p130, %p131
      %s134 = sadd.s32 %s133, 1
      %p137 = scmp.eq.s32.totalorder %s15, 1
      %p138 = scmp.ne.s32.totalorder %s133, %s135
      %p139 = scmp.eq.s32.totalorder %s15, 0
      %p140 = por %p138, %p139
      %p141 = scmp.ne.s32.totalorder %s133, %s135
      %p142 = scmp.eq.s32.totalorder %s20, 1
      %p143 = por %p141, %p142
      %p144 = scmp.ne.s32.totalorder %s135, %s136
      %p145 = scmp.eq.s32.totalorder %s20, 0
      %p146 = por %p144, %p145
      %p147 = scmp.ne.s32.totalorder %s135, %s136
      %p148 = scmp.eq.s32.totalorder %s21, 1
      %p149 = por %p147, %p148
      %p151 = scmp.ne.s32.totalorder %s136, %s150
      %p152 = scmp.eq.s32.totalorder %s21, 0
      %p153 = por %p151, %p152
      %s154 = ssub.s32 %s15, %s22
      %p155 = scmp.eq.s32.totalorder %s154, 0
      %s157 = sadd.s32 %s156, 1
      %s158 = scalar_select %p155, %s156, %s157
      %p161 = pneg %p155
      %p162 = scmp.eq.s32.totalorder %s15, 1
      %p163 = por %p161, %p162
      %p164 = scmp.ne.s32.totalorder %s156, %s159
      %p165 = scmp.eq.s32.totalorder %s15, 0
      %p166 = por %p164, %p165
      %p167 = scmp.ne.s32.totalorder %s156, %s159
      %p168 = scmp.eq.s32.totalorder %s20, 1
      %p169 = por %p167, %p168
      %p170 = scmp.ne.s32.totalorder %s159, %s160
      %p171 = scmp.eq.s32.totalorder %s20, 0
      %p172 = por %p170, %p171
      %p173 = scmp.ne.s32.totalorder %s159, %s160
      %p174 = scmp.eq.s32.totalorder %s21, 1
      %p175 = por %p173, %p174
      %p177 = scmp.ne.s32.totalorder %s160, %s176
      %p178 = scmp.eq.s32.totalorder %s21, 0
      %p179 = por %p177, %p178
      %p180 = scmp.le.s32.totalorder 1, %s15
      %p181 = scmp.lt.s32.totalorder %s15, 3
      %p182 = pnand %p180, %p181
      %p183 = pneg %p182
      // Predicated region
      $region9: #{tpu_custom_call.1} parent=5 // pred_check
        _
      $region10: #{tpu_custom_call.1} parent=5 // pred_check_branch
        %185 = sbr.rel (%p182) target = $region12
      $region11: #{tpu_custom_call.1} parent=5 // pred_region
        %s186 = ssub.s32 %s15, 1
        // Predicated region
        $region13: #{tpu_custom_call.1} parent=11 // pred_check
          %p187 = pneg %p62
        $region14: #{tpu_custom_call.1} parent=11 // pred_check_branch
          %189 = sbr.rel (%p187) target = $region16
        $region15: #{tpu_custom_call.1} parent=11 // pred_region
          _
        $region16: #{tpu_custom_call.1} parent=11 // pred_fallthru
          _
        // Predicated region
        $region17: #{tpu_custom_call.1} parent=11 // pred_check
          %p190 = pneg %p83
        $region18: #{tpu_custom_call.1} parent=11 // pred_check_branch
          %192 = sbr.rel (%p190) target = $region20
        $region19: #{tpu_custom_call.1} parent=11 // pred_region
          _
        $region20: #{tpu_custom_call.1} parent=11 // pred_fallthru
          _
        // Predicated region
        $region21: #{tpu_custom_call.1} parent=11 // pred_check
          %p193 = pneg %p104
        $region22: #{tpu_custom_call.1} parent=11 // pred_check_branch
          %195 = sbr.rel (%p193) target = $region24
        $region23: #{tpu_custom_call.1} parent=11 // pred_region
          _
        $region24: #{tpu_custom_call.1} parent=11 // pred_fallthru
          _
        // Predicated region
        $region25: #{tpu_custom_call.1} parent=11 // pred_check
          %p196 = pneg %p125
        $region26: #{tpu_custom_call.1} parent=11 // pred_check_branch
          %198 = sbr.rel (%p196) target = $region28
        $region27: #{tpu_custom_call.1} parent=11 // pred_region
          _
        $region28: #{tpu_custom_call.1} parent=11 // pred_fallthru
          _
        // Predicated region
        $region29: #{tpu_custom_call.1} parent=11 // pred_check
          %p199 = pneg %p146
        $region30: #{tpu_custom_call.1} parent=11 // pred_check_branch
          %201 = sbr.rel (%p199) target = $region32
        $region31: #{tpu_custom_call.1} parent=11 // pred_region
          _
        $region32: #{tpu_custom_call.1} parent=11 // pred_fallthru
          _
      $region12: #{tpu_custom_call.1} parent=5 // pred_fallthru
        _
      %p202 = scmp.lt.s32.totalorder %s15, 2
      // Predicated region
      $region33: #{tpu_custom_call.1} parent=5 // pred_check
        %p203 = pneg %p202
      $region34: #{tpu_custom_call.1} parent=5 // pred_check_branch
        %205 = sbr.rel (%p203) target = $region36
      $region35: #{tpu_custom_call.1} parent=5 // pred_region
        // Predicated region
        $region37: #{tpu_custom_call.1} parent=35 // pred_check
          %p206 = pneg %p35
        $region38: #{tpu_custom_call.1} parent=35 // pred_check_branch
          %208 = sbr.rel (%p206) target = $region40
        $region39: #{tpu_custom_call.1} parent=35 // pred_region
          %p209 = scmp.lt.s32.totalorder %s15, 1
          %s210 = scalar_select %p209, %s15, 1
          %s211 = smul.addr %s210, 32
          %s212 = smul.addr %s211, 4
          %s213 = scalar_lea.vmem %s0, %s212
        $region40: #{tpu_custom_call.1} parent=35 // pred_fallthru
          _
      $region36: #{tpu_custom_call.1} parent=5 // pred_fallthru
        _
      %p214 = scmp.le.s32.totalorder 1, %s15
      %p215 = scmp.lt.s32.totalorder %s15, 3
      %p216 = pnand %p214, %p215
      %p217 = pneg %p216
      // Predicated region
      $region41: #{tpu_custom_call.1} parent=5 // pred_check
        _
      $region42: #{tpu_custom_call.1} parent=5 // pred_check_branch
        %219 = sbr.rel (%p216) target = $region44
      $region43: #{tpu_custom_call.1} parent=5 // pred_region
        %s220 = ssub.s32 %s15, 1
        %p221 = scmp.lt.s32.totalorder %s20, 1
        %s222 = scalar_select %p221, %s20, 1
        %s223 = smul.addr %s222, 32
        %s224 = smul.addr %s223, 4
        %s225 = scalar_lea.vmem %s0, %s224
        %p226 = pneg %p41
        %p227 = pneg %p38
        %p228 = pneg %p62
        %p229 = pneg %p59
        %p230 = pneg %p83
        %p231 = pneg %p80
        %p232 = pneg %p104
        %p233 = pneg %p101
        %p234 = pneg %p125
        %p235 = pneg %p122
        %p236 = pneg %p146
        %p237 = pneg %p143
        %p238 = pneg %p172
        %p239 = pneg %p169
        %s240 = sand.u32 %s159, 1
        %s241 = scalar_lea.sflag [#allocation5], %s240
        %s242 = sand.u32 %s159, 1
        %s243 = smul.addr %s242, 4
        %s244 = scalar_lea.vmem [#allocation4], %s243
        %p245 = scmp.lt.s32.totalorder %s20, 1
        %s246 = scalar_select %p245, %s20, 1
        %s247 = smul.addr %s246, 32
        %s248 = smul.addr %s247, 4
        %s249 = scalar_lea.vmem %s0, %s248
        %vm251 = vcmask 27648
        %252 = vst.msk [vmem:[#allocation2] sm:$0xf] %vm251, 0
        %253 = vst.msk [vmem:[#allocation2 + $0x4] sm:$0xf] %vm251, 0
        %vm254 = vcmask 24576
        %255 = vst.msk [vmem:[#allocation2 + $0x8] sm:$0x1] %vm254, 0
        %s256 = scalar_lea.vmem [#allocation2], 204
        %257 = vst.msk [vmem:[%s256] sm:$0xf] %vm251, 0
        %258 = vst.msk [vmem:[%s256 + $0x4] sm:$0xf] %vm251, 0
        %259 = vst.msk [vmem:[%s256 + $0x8] sm:$0x1] %vm254, 0
        %vm260 = vcmask 24576
        %vm261 = vsmask.f32 256
        %vm262 = vmand %vm260, %vm261
        %v263 = vld [vmem:[#allocation2] sm:$0x1]
        %v264 = vsel %vm262, 0, %v263
        %265 = vst [vmem:[#allocation2] sm:$0x1] %v264
        %v266 = vld [vmem:[#allocation2 + $0xc] sm:$0x1]
        %v267 = vsel %vm262, 0, %v266
        %268 = vst [vmem:[#allocation2 + $0xc] sm:$0x1] %v267
        %v269 = vld [vmem:[#allocation2 + $0x18] sm:$0x1]
        %v270 = vsel %vm262, 0, %v269
        %271 = vst [vmem:[#allocation2 + $0x18] sm:$0x1] %v270
        %v272 = vld [vmem:[#allocation2 + $0x24] sm:$0x1]
        %v273 = vsel %vm262, 0, %v272
        %274 = vst [vmem:[#allocation2 + $0x24] sm:$0x1] %v273
        %v275 = vld [vmem:[#allocation2 + $0x30] sm:$0x1]
        %v276 = vsel %vm262, 0, %v275
        %277 = vst [vmem:[#allocation2 + $0x30] sm:$0x1] %v276
        %v278 = vld [vmem:[#allocation2 + $0x3c] sm:$0x1]
        %v279 = vsel %vm262, 0, %v278
        %280 = vst [vmem:[#allocation2 + $0x3c] sm:$0x1] %v279
        %v281 = vld [vmem:[#allocation2 + $0x48] sm:$0x1]
        %v282 = vsel %vm262, 0, %v281
        %283 = vst [vmem:[#allocation2 + $0x48] sm:$0x1] %v282
        %v284 = vld [vmem:[#allocation2 + $0x54] sm:$0x1]
        %v285 = vsel %vm262, 0, %v284
        %286 = vst [vmem:[#allocation2 + $0x54] sm:$0x1] %v285
        %v287 = vld [vmem:[#allocation2 + $0x60] sm:$0x1]
        %v288 = vsel %vm262, 0, %v287
        %289 = vst [vmem:[#allocation2 + $0x60] sm:$0x1] %v288
        %v290 = vld [vmem:[#allocation2 + $0x6c] sm:$0x1]
        %v291 = vsel %vm262, 0, %v290
        %292 = vst [vmem:[#allocation2 + $0x6c] sm:$0x1] %v291
        %v293 = vld [vmem:[#allocation2 + $0x78] sm:$0x1]
        %v294 = vsel %vm262, 0, %v293
        %295 = vst [vmem:[#allocation2 + $0x78] sm:$0x1] %v294
        %v296 = vld [vmem:[#allocation2 + $0x84] sm:$0x1]
        %v297 = vsel %vm262, 0, %v296
        %298 = vst [vmem:[#allocation2 + $0x84] sm:$0x1] %v297
        %v299 = vld [vmem:[#allocation2 + $0x90] sm:$0x1]
        %v300 = vsel %vm262, 0, %v299
        %301 = vst [vmem:[#allocation2 + $0x90] sm:$0x1] %v300
        %v302 = vld [vmem:[#allocation2 + $0x9c] sm:$0x1]
        %v303 = vsel %vm262, 0, %v302
        %304 = vst [vmem:[#allocation2 + $0x9c] sm:$0x1] %v303
        %v305 = vld [vmem:[#allocation2 + $0xa8] sm:$0x1]
        %v306 = vsel %vm262, 0, %v305
        %307 = vst [vmem:[#allocation2 + $0xa8] sm:$0x1] %v306
        %v308 = vld [vmem:[#allocation2 + $0xb4] sm:$0x1]
        %v309 = vsel %vm262, 0, %v308
        %310 = vst [vmem:[#allocation2 + $0xb4] sm:$0x1] %v309
        %v311 = vld [vmem:[#allocation2 + $0xc0] sm:$0x1]
        %v312 = vsel %vm262, 0, %v311
        %313 = vst [vmem:[#allocation2 + $0xc0] sm:$0x1] %v312
        %v314 = vld [vmem:[#allocation2 + $0xcc] sm:$0x1]
        %v315 = vsel %vm262, 0, %v314
        %316 = vst [vmem:[#allocation2 + $0xcc] sm:$0x1] %v315
        %vm317 = vsmask.f32 7938
        %vm318 = vmand %vm260, %vm317
        %v319 = vld [vmem:[#allocation2 + $0x8] sm:$0x1]
        %v320 = vsel %vm318, 0, %v319
        %321 = vst [vmem:[#allocation2 + $0x8] sm:$0x1] %v320
        %v322 = vld [vmem:[#allocation2 + $0x14] sm:$0x1]
        %v323 = vsel %vm318, 0, %v322
        %324 = vst [vmem:[#allocation2 + $0x14] sm:$0x1] %v323
        %v325 = vld [vmem:[#allocation2 + $0x20] sm:$0x1]
        %v326 = vsel %vm318, 0, %v325
        %327 = vst [vmem:[#allocation2 + $0x20] sm:$0x1] %v326
        %v328 = vld [vmem:[#allocation2 + $0x2c] sm:$0x1]
        %v329 = vsel %vm318, 0, %v328
        %330 = vst [vmem:[#allocation2 + $0x2c] sm:$0x1] %v329
        %v331 = vld [vmem:[#allocation2 + $0x38] sm:$0x1]
        %v332 = vsel %vm318, 0, %v331
        %333 = vst [vmem:[#allocation2 + $0x38] sm:$0x1] %v332
        %v334 = vld [vmem:[#allocation2 + $0x44] sm:$0x1]
        %v335 = vsel %vm318, 0, %v334
        %336 = vst [vmem:[#allocation2 + $0x44] sm:$0x1] %v335
        %v337 = vld [vmem:[#allocation2 + $0x50] sm:$0x1]
        %v338 = vsel %vm318, 0, %v337
        %339 = vst [vmem:[#allocation2 + $0x50] sm:$0x1] %v338
        %v340 = vld [vmem:[#allocation2 + $0x5c] sm:$0x1]
        %v341 = vsel %vm318, 0, %v340
        %342 = vst [vmem:[#allocation2 + $0x5c] sm:$0x1] %v341
        %v343 = vld [vmem:[#allocation2 + $0x68] sm:$0x1]
        %v344 = vsel %vm318, 0, %v343
        %345 = vst [vmem:[#allocation2 + $0x68] sm:$0x1] %v344
        %v346 = vld [vmem:[#allocation2 + $0x74] sm:$0x1]
        %v347 = vsel %vm318, 0, %v346
        %348 = vst [vmem:[#allocation2 + $0x74] sm:$0x1] %v347
        %v349 = vld [vmem:[#allocation2 + $0x80] sm:$0x1]
        %v350 = vsel %vm318, 0, %v349
        %351 = vst [vmem:[#allocation2 + $0x80] sm:$0x1] %v350
        %v352 = vld [vmem:[#allocation2 + $0x8c] sm:$0x1]
        %v353 = vsel %vm318, 0, %v352
        %354 = vst [vmem:[#allocation2 + $0x8c] sm:$0x1] %v353
        %v355 = vld [vmem:[#allocation2 + $0x98] sm:$0x1]
        %v356 = vsel %vm318, 0, %v355
        %357 = vst [vmem:[#allocation2 + $0x98] sm:$0x1] %v356
        %v358 = vld [vmem:[#allocation2 + $0xa4] sm:$0x1]
        %v359 = vsel %vm318, 0, %v358
        %360 = vst [vmem:[#allocation2 + $0xa4] sm:$0x1] %v359
        %v361 = vld [vmem:[#allocation2 + $0xb0] sm:$0x1]
        %v362 = vsel %vm318, 0, %v361
        %363 = vst [vmem:[#allocation2 + $0xb0] sm:$0x1] %v362
        %v364 = vld [vmem:[#allocation2 + $0xbc] sm:$0x1]
        %v365 = vsel %vm318, 0, %v364
        %366 = vst [vmem:[#allocation2 + $0xbc] sm:$0x1] %v365
        %v367 = vld [vmem:[#allocation2 + $0xc8] sm:$0x1]
        %v368 = vsel %vm318, 0, %v367
        %369 = vst [vmem:[#allocation2 + $0xc8] sm:$0x1] %v368
        %v370 = vld [vmem:[#allocation2 + $0xd4] sm:$0x1]
        %v371 = vsel %vm318, 0, %v370
        %372 = vst [vmem:[#allocation2 + $0xd4] sm:$0x1] %v371
        %vm373 = vcmask 60416
        %374 = vst.msk [vmem:[#allocation3] sm:$0xf] %vm373, 0
        %375 = vst.msk [vmem:[#allocation3 + $0x4] sm:$0xf] %vm373, 0
        %vm376 = vcmask 57344
        %377 = vst.msk [vmem:[#allocation3 + $0x8] sm:$0x1] %vm376, 0
        %s378 = scalar_lea.vmem [#allocation3], 204
        %379 = vst.msk [vmem:[%s378] sm:$0xf] %vm373, 0
        %380 = vst.msk [vmem:[%s378 + $0x4] sm:$0xf] %vm373, 0
        %381 = vst.msk [vmem:[%s378 + $0x8] sm:$0x1] %vm376, 0
        %vm382 = vcmask 57344
        %vm383 = vmand %vm382, %vm261
        %v384 = vld [vmem:[#allocation3] sm:$0x1]
        %v385 = vsel %vm383, 0, %v384
        %386 = vst [vmem:[#allocation3] sm:$0x1] %v385
        %v387 = vld [vmem:[#allocation3 + $0xc] sm:$0x1]
        %v388 = vsel %vm383, 0, %v387
        %389 = vst [vmem:[#allocation3 + $0xc] sm:$0x1] %v388
        %v390 = vld [vmem:[#allocation3 + $0x18] sm:$0x1]
        %v391 = vsel %vm383, 0, %v390
        %392 = vst [vmem:[#allocation3 + $0x18] sm:$0x1] %v391
        %v393 = vld [vmem:[#allocation3 + $0x24] sm:$0x1]
        %v394 = vsel %vm383, 0, %v393
        %395 = vst [vmem:[#allocation3 + $0x24] sm:$0x1] %v394
        %v396 = vld [vmem:[#allocation3 + $0x30] sm:$0x1]
        %v397 = vsel %vm383, 0, %v396
        %398 = vst [vmem:[#allocation3 + $0x30] sm:$0x1] %v397
        %v399 = vld [vmem:[#allocation3 + $0x3c] sm:$0x1]
        %v400 = vsel %vm383, 0, %v399
        %401 = vst [vmem:[#allocation3 + $0x3c] sm:$0x1] %v400
        %v402 = vld [vmem:[#allocation3 + $0x48] sm:$0x1]
        %v403 = vsel %vm383, 0, %v402
        %404 = vst [vmem:[#allocation3 + $0x48] sm:$0x1] %v403
        %v405 = vld [vmem:[#allocation3 + $0x54] sm:$0x1]
        %v406 = vsel %vm383, 0, %v405
        %407 = vst [vmem:[#allocation3 + $0x54] sm:$0x1] %v406
        %v408 = vld [vmem:[#allocation3 + $0x60] sm:$0x1]
        %v409 = vsel %vm383, 0, %v408
        %410 = vst [vmem:[#allocation3 + $0x60] sm:$0x1] %v409
        %v411 = vld [vmem:[#allocation3 + $0x6c] sm:$0x1]
        %v412 = vsel %vm383, 0, %v411
        %413 = vst [vmem:[#allocation3 + $0x6c] sm:$0x1] %v412
        %v414 = vld [vmem:[#allocation3 + $0x78] sm:$0x1]
        %v415 = vsel %vm383, 0, %v414
        %416 = vst [vmem:[#allocation3 + $0x78] sm:$0x1] %v415
        %v417 = vld [vmem:[#allocation3 + $0x84] sm:$0x1]
        %v418 = vsel %vm383, 0, %v417
        %419 = vst [vmem:[#allocation3 + $0x84] sm:$0x1] %v418
        %v420 = vld [vmem:[#allocation3 + $0x90] sm:$0x1]
        %v421 = vsel %vm383, 0, %v420
        %422 = vst [vmem:[#allocation3 + $0x90] sm:$0x1] %v421
        %v423 = vld [vmem:[#allocation3 + $0x9c] sm:$0x1]
        %v424 = vsel %vm383, 0, %v423
        %425 = vst [vmem:[#allocation3 + $0x9c] sm:$0x1] %v424
        %v426 = vld [vmem:[#allocation3 + $0xa8] sm:$0x1]
        %v427 = vsel %vm383, 0, %v426
        %428 = vst [vmem:[#allocation3 + $0xa8] sm:$0x1] %v427
        %v429 = vld [vmem:[#allocation3 + $0xb4] sm:$0x1]
        %v430 = vsel %vm383, 0, %v429
        %431 = vst [vmem:[#allocation3 + $0xb4] sm:$0x1] %v430
        %v432 = vld [vmem:[#allocation3 + $0xc0] sm:$0x1]
        %v433 = vsel %vm383, 0, %v432
        %434 = vst [vmem:[#allocation3 + $0xc0] sm:$0x1] %v433
        %v435 = vld [vmem:[#allocation3 + $0xcc] sm:$0x1]
        %v436 = vsel %vm383, 0, %v435
        %437 = vst [vmem:[#allocation3 + $0xcc] sm:$0x1] %v436
        %vm438 = vmand %vm382, %vm317
        %v439 = vld [vmem:[#allocation3 + $0x8] sm:$0x1]
        %v440 = vsel %vm438, 0, %v439
        %441 = vst [vmem:[#allocation3 + $0x8] sm:$0x1] %v440
        %v442 = vld [vmem:[#allocation3 + $0x14] sm:$0x1]
        %v443 = vsel %vm438, 0, %v442
        %444 = vst [vmem:[#allocation3 + $0x14] sm:$0x1] %v443
        %v445 = vld [vmem:[#allocation3 + $0x20] sm:$0x1]
        %v446 = vsel %vm438, 0, %v445
        %447 = vst [vmem:[#allocation3 + $0x20] sm:$0x1] %v446
        %v448 = vld [vmem:[#allocation3 + $0x2c] sm:$0x1]
        %v449 = vsel %vm438, 0, %v448
        %450 = vst [vmem:[#allocation3 + $0x2c] sm:$0x1] %v449
        %v451 = vld [vmem:[#allocation3 + $0x38] sm:$0x1]
        %v452 = vsel %vm438, 0, %v451
        %453 = vst [vmem:[#allocation3 + $0x38] sm:$0x1] %v452
        %v454 = vld [vmem:[#allocation3 + $0x44] sm:$0x1]
        %v455 = vsel %vm438, 0, %v454
        %456 = vst [vmem:[#allocation3 + $0x44] sm:$0x1] %v455
        %v457 = vld [vmem:[#allocation3 + $0x50] sm:$0x1]
        %v458 = vsel %vm438, 0, %v457
        %459 = vst [vmem:[#allocation3 + $0x50] sm:$0x1] %v458
        %v460 = vld [vmem:[#allocation3 + $0x5c] sm:$0x1]
        %v461 = vsel %vm438, 0, %v460
        %462 = vst [vmem:[#allocation3 + $0x5c] sm:$0x1] %v461
        %v463 = vld [vmem:[#allocation3 + $0x68] sm:$0x1]
        %v464 = vsel %vm438, 0, %v463
        %465 = vst [vmem:[#allocation3 + $0x68] sm:$0x1] %v464
        %v466 = vld [vmem:[#allocation3 + $0x74] sm:$0x1]
        %v467 = vsel %vm438, 0, %v466
        %468 = vst [vmem:[#allocation3 + $0x74] sm:$0x1] %v467
        %v469 = vld [vmem:[#allocation3 + $0x80] sm:$0x1]
        %v470 = vsel %vm438, 0, %v469
        %471 = vst [vmem:[#allocation3 + $0x80] sm:$0x1] %v470
        %v472 = vld [vmem:[#allocation3 + $0x8c] sm:$0x1]
        %v473 = vsel %vm438, 0, %v472
        %474 = vst [vmem:[#allocation3 + $0x8c] sm:$0x1] %v473
        %v475 = vld [vmem:[#allocation3 + $0x98] sm:$0x1]
        %v476 = vsel %vm438, 0, %v475
        %477 = vst [vmem:[#allocation3 + $0x98] sm:$0x1] %v476
        %v478 = vld [vmem:[#allocation3 + $0xa4] sm:$0x1]
        %v479 = vsel %vm438, 0, %v478
        %480 = vst [vmem:[#allocation3 + $0xa4] sm:$0x1] %v479
        %v481 = vld [vmem:[#allocation3 + $0xb0] sm:$0x1]
        %v482 = vsel %vm438, 0, %v481
        %483 = vst [vmem:[#allocation3 + $0xb0] sm:$0x1] %v482
        %v484 = vld [vmem:[#allocation3 + $0xbc] sm:$0x1]
        %v485 = vsel %vm438, 0, %v484
        %486 = vst [vmem:[#allocation3 + $0xbc] sm:$0x1] %v485
        %v487 = vld [vmem:[#allocation3 + $0xc8] sm:$0x1]
        %v488 = vsel %vm438, 0, %v487
        %489 = vst [vmem:[#allocation3 + $0xc8] sm:$0x1] %v488
        %v490 = vld [vmem:[#allocation3 + $0xd4] sm:$0x1]
        %v491 = vsel %vm438, 0, %v490
        %492 = vst [vmem:[#allocation3 + $0xd4] sm:$0x1] %v491
        %v493 = vld [vmem:[%s249] sm:$0xf]
        %v494 = vld [vmem:[%s249 + $0x4] sm:$0xf]
        %v495 = vld [vmem:[%s249 + $0x8] sm:$0xf]
        %v496 = vld [vmem:[%s249 + $0xc] sm:$0xf]
        %v497 = vld [vmem:[%s249 + $0x10] sm:$0xf]
        %v498 = vld [vmem:[%s249 + $0x14] sm:$0xf]
        %v499 = vld [vmem:[%s249 + $0x18] sm:$0xf]
        %v500 = vld [vmem:[%s249 + $0x1c] sm:$0xf]
        %v501 = vld [vmem:[%s249 + $0x20] sm:$0xf]
        %v502 = vld [vmem:[%s249 + $0x24] sm:$0xf]
        %v503 = vld [vmem:[%s249 + $0x28] sm:$0xf]
        %v504 = vld [vmem:[%s249 + $0x2c] sm:$0xf]
        %v505 = vld [vmem:[%s249 + $0x30] sm:$0xf]
        %v506 = vld [vmem:[%s249 + $0x34] sm:$0xf]
        %v507 = vld [vmem:[%s249 + $0x38] sm:$0xf]
        %v508 = vld [vmem:[%s249 + $0x3c] sm:$0xf]
        %v509 = vld [vmem:[%s249 + $0x40] sm:$0xf]
        %v510 = vld [vmem:[%s249 + $0x44] sm:$0xf]
        %v511 = vld [vmem:[%s249 + $0x48] sm:$0xf]
        %v512 = vld [vmem:[%s249 + $0x4c] sm:$0xf]
        %v513 = vld [vmem:[%s249 + $0x50] sm:$0xf]
        %v514 = vld [vmem:[%s249 + $0x54] sm:$0xf]
        %v515 = vld [vmem:[%s249 + $0x58] sm:$0xf]
        %v516 = vld [vmem:[%s249 + $0x5c] sm:$0xf]
        %v517 = vld [vmem:[%s249 + $0x60] sm:$0xf]
        %v518 = vld [vmem:[%s249 + $0x64] sm:$0xf]
        %v519 = vld [vmem:[%s249 + $0x68] sm:$0xf]
        %v520 = vld [vmem:[%s249 + $0x6c] sm:$0xf]
        %v521 = vld [vmem:[%s249 + $0x70] sm:$0xf]
        %v522 = vld [vmem:[%s249 + $0x74] sm:$0xf]
        %v523 = vld [vmem:[%s249 + $0x78] sm:$0xf]
        %v524 = vld [vmem:[%s249 + $0x7c] sm:$0xf]
        %vm525 = vsmask.f32 4368
        %vm526 = vmor %vm261, %vm525
        %v528 = vshrl.u32 %v493, 16
        %v530 = vrot.slane %v528, 7
        %v531 = vshll.u32 %v493, 16
        %v533 = vor.u32 %v530, %v531
        %v534 = vrot.slane %v530, 4
        %v536 = vshrl.u32 %v494, 16
        %v538 = vrot.slane %v536, 7
        %v539 = vshll.u32 %v494, 16
        %v541 = vor.u32 %v538, %v539
        %v542 = vsel %vm526, %v534, %v541
        %v543 = vrot.slane %v538, 4
        %v545 = vshrl.u32 %v495, 16
        %v547 = vrot.slane %v545, 7
        %v548 = vshll.u32 %v495, 16
        %v550 = vor.u32 %v547, %v548
        %v551 = vrot.slane %v547, 4
        %v553 = vshrl.u32 %v496, 16
        %v555 = vrot.slane %v553, 7
        %v556 = vshll.u32 %v496, 16
        %v558 = vor.u32 %v555, %v556
        %v559 = vsel %vm526, %v551, %v558
        %v560 = vrot.slane %v555, 4
        %v562 = vshrl.u32 %v497, 16
        %v564 = vrot.slane %v562, 7
        %v565 = vshll.u32 %v497, 16
        %v567 = vor.u32 %v564, %v565
        %v568 = vrot.slane %v564, 4
        %v570 = vshrl.u32 %v498, 16
        %v572 = vrot.slane %v570, 7
        %v573 = vshll.u32 %v498, 16
        %v575 = vor.u32 %v572, %v573
        %v576 = vsel %vm526, %v568, %v575
        %v577 = vrot.slane %v572, 4
        %v579 = vshrl.u32 %v499, 16
        %v581 = vrot.slane %v579, 7
        %v582 = vshll.u32 %v499, 16
        %v584 = vor.u32 %v581, %v582
        %v585 = vrot.slane %v581, 4
        %v587 = vshrl.u32 %v500, 16
        %v589 = vrot.slane %v587, 7
        %v590 = vshll.u32 %v500, 16
        %v592 = vor.u32 %v589, %v590
        %v593 = vsel %vm526, %v585, %v592
        %v594 = vrot.slane %v589, 4
        %v596 = vshrl.u32 %v501, 16
        %v598 = vrot.slane %v596, 7
        %v599 = vshll.u32 %v501, 16
        %v601 = vor.u32 %v598, %v599
        %v602 = vrot.slane %v598, 4
        %v604 = vshrl.u32 %v502, 16
        %v606 = vrot.slane %v604, 7
        %v607 = vshll.u32 %v502, 16
        %v609 = vor.u32 %v606, %v607
        %v610 = vsel %vm526, %v602, %v609
        %v611 = vrot.slane %v606, 4
        %v613 = vshrl.u32 %v503, 16
        %v615 = vrot.slane %v613, 7
        %v616 = vshll.u32 %v503, 16
        %v618 = vor.u32 %v615, %v616
        %v619 = vrot.slane %v615, 4
        %v621 = vshrl.u32 %v504, 16
        %v623 = vrot.slane %v621, 7
        %v624 = vshll.u32 %v504, 16
        %v626 = vor.u32 %v623, %v624
        %v627 = vsel %vm526, %v619, %v626
        %v628 = vrot.slane %v623, 4
        %v630 = vshrl.u32 %v505, 16
        %v632 = vrot.slane %v630, 7
        %v633 = vshll.u32 %v505, 16
        %v635 = vor.u32 %v632, %v633
        %v636 = vrot.slane %v632, 4
        %v638 = vshrl.u32 %v506, 16
        %v640 = vrot.slane %v638, 7
        %v641 = vshll.u32 %v506, 16
        %v643 = vor.u32 %v640, %v641
        %v644 = vsel %vm526, %v636, %v643
        %v645 = vrot.slane %v640, 4
        %v647 = vshrl.u32 %v507, 16
        %v649 = vrot.slane %v647, 7
        %v650 = vshll.u32 %v507, 16
        %v652 = vor.u32 %v649, %v650
        %v653 = vrot.slane %v649, 4
        %v655 = vshrl.u32 %v508, 16
        %v657 = vrot.slane %v655, 7
        %v658 = vshll.u32 %v508, 16
        %v660 = vor.u32 %v657, %v658
        %v661 = vsel %vm526, %v653, %v660
        %v662 = vrot.slane %v657, 4
        %v664 = vshrl.u32 %v509, 16
        %v666 = vrot.slane %v664, 7
        %v667 = vshll.u32 %v509, 16
        %v669 = vor.u32 %v666, %v667
        %v670 = vrot.slane %v666, 4
        %v672 = vshrl.u32 %v510, 16
        %v674 = vrot.slane %v672, 7
        %v675 = vshll.u32 %v510, 16
        %v677 = vor.u32 %v674, %v675
        %v678 = vsel %vm526, %v670, %v677
        %v679 = vrot.slane %v674, 4
        %v681 = vshrl.u32 %v511, 16
        %v683 = vrot.slane %v681, 7
        %v684 = vshll.u32 %v511, 16
        %v686 = vor.u32 %v683, %v684
        %v687 = vrot.slane %v683, 4
        %v689 = vshrl.u32 %v512, 16
        %v691 = vrot.slane %v689, 7
        %v692 = vshll.u32 %v512, 16
        %v694 = vor.u32 %v691, %v692
        %v695 = vsel %vm526, %v687, %v694
        %v696 = vrot.slane %v691, 4
        %v698 = vshrl.u32 %v513, 16
        %v700 = vrot.slane %v698, 7
        %v701 = vshll.u32 %v513, 16
        %v703 = vor.u32 %v700, %v701
        %v704 = vrot.slane %v700, 4
        %v706 = vshrl.u32 %v514, 16
        %v708 = vrot.slane %v706, 7
        %v709 = vshll.u32 %v514, 16
        %v711 = vor.u32 %v708, %v709
        %v712 = vsel %vm526, %v704, %v711
        %v713 = vrot.slane %v708, 4
        %v715 = vshrl.u32 %v515, 16
        %v717 = vrot.slane %v715, 7
        %v718 = vshll.u32 %v515, 16
        %v720 = vor.u32 %v717, %v718
        %v721 = vrot.slane %v717, 4
        %v723 = vshrl.u32 %v516, 16
        %v725 = vrot.slane %v723, 7
        %v726 = vshll.u32 %v516, 16
        %v728 = vor.u32 %v725, %v726
        %v729 = vsel %vm526, %v721, %v728
        %v730 = vrot.slane %v725, 4
        %v732 = vshrl.u32 %v517, 16
        %v734 = vrot.slane %v732, 7
        %v735 = vshll.u32 %v517, 16
        %v737 = vor.u32 %v734, %v735
        %v738 = vrot.slane %v734, 4
        %v740 = vshrl.u32 %v518, 16
        %v742 = vrot.slane %v740, 7
        %v743 = vshll.u32 %v518, 16
        %v745 = vor.u32 %v742, %v743
        %v746 = vsel %vm526, %v738, %v745
        %v747 = vrot.slane %v742, 4
        %v749 = vshrl.u32 %v519, 16
        %v751 = vrot.slane %v749, 7
        %v752 = vshll.u32 %v519, 16
        %v754 = vor.u32 %v751, %v752
        %v755 = vrot.slane %v751, 4
        %v757 = vshrl.u32 %v520, 16
        %v759 = vrot.slane %v757, 7
        %v760 = vshll.u32 %v520, 16
        %v762 = vor.u32 %v759, %v760
        %v763 = vsel %vm526, %v755, %v762
        %v764 = vrot.slane %v759, 4
        %v766 = vshrl.u32 %v521, 16
        %v768 = vrot.slane %v766, 7
        %v769 = vshll.u32 %v521, 16
        %v771 = vor.u32 %v768, %v769
        %v772 = vrot.slane %v768, 4
        %v774 = vshrl.u32 %v522, 16
        %v776 = vrot.slane %v774, 7
        %v777 = vshll.u32 %v522, 16
        %v779 = vor.u32 %v776, %v777
        %v780 = vsel %vm526, %v772, %v779
        %v781 = vrot.slane %v776, 4
        %v783 = vshrl.u32 %v523, 16
        %v785 = vrot.slane %v783, 7
        %v786 = vshll.u32 %v523, 16
        %v788 = vor.u32 %v785, %v786
        %v789 = vrot.slane %v785, 4
        %v791 = vshrl.u32 %v524, 16
        %v793 = vrot.slane %v791, 7
        %v794 = vshll.u32 %v524, 16
        %v796 = vor.u32 %v793, %v794
        %v797 = vsel %vm526, %v789, %v796
        %v798 = vrot.slane %v793, 4
        %s847 = scalar_lea.vmem [#allocation2], 12
        %vm848 = vcmask 27648
        %vm849 = vmand %vm848, %vm317
        %v850 = vld [vmem:[%s847] sm:$0xf]
        %v851 = vsel %vm849, %v533, %v850
        %852 = vst [vmem:[%s847] sm:$0xf] %v851
        %853 = vst.msk [vmem:[%s847 + $0x4] sm:$0xf] %vm251, %v542
        %v854 = vld [vmem:[%s847 + $0x8] sm:$0x1]
        %v855 = vsel %vm262, %v543, %v854
        %856 = vst [vmem:[%s847 + $0x8] sm:$0x1] %v855
        %v857 = vld [vmem:[%s847 + $0xc] sm:$0xf]
        %v858 = vsel %vm849, %v550, %v857
        %859 = vst [vmem:[%s847 + $0xc] sm:$0xf] %v858
        %860 = vst.msk [vmem:[%s847 + $0x10] sm:$0xf] %vm251, %v559
        %v861 = vld [vmem:[%s847 + $0x14] sm:$0x1]
        %v862 = vsel %vm262, %v560, %v861
        %863 = vst [vmem:[%s847 + $0x14] sm:$0x1] %v862
        %v864 = vld [vmem:[%s847 + $0x18] sm:$0xf]
        %v865 = vsel %vm849, %v567, %v864
        %866 = vst [vmem:[%s847 + $0x18] sm:$0xf] %v865
        %867 = vst.msk [vmem:[%s847 + $0x1c] sm:$0xf] %vm251, %v576
        %v868 = vld [vmem:[%s847 + $0x20] sm:$0x1]
        %v869 = vsel %vm262, %v577, %v868
        %870 = vst [vmem:[%s847 + $0x20] sm:$0x1] %v869
        %v871 = vld [vmem:[%s847 + $0x24] sm:$0xf]
        %v872 = vsel %vm849, %v584, %v871
        %873 = vst [vmem:[%s847 + $0x24] sm:$0xf] %v872
        %874 = vst.msk [vmem:[%s847 + $0x28] sm:$0xf] %vm251, %v593
        %v875 = vld [vmem:[%s847 + $0x2c] sm:$0x1]
        %v876 = vsel %vm262, %v594, %v875
        %877 = vst [vmem:[%s847 + $0x2c] sm:$0x1] %v876
        %v878 = vld [vmem:[%s847 + $0x30] sm:$0xf]
        %v879 = vsel %vm849, %v601, %v878
        %880 = vst [vmem:[%s847 + $0x30] sm:$0xf] %v879
        %881 = vst.msk [vmem:[%s847 + $0x34] sm:$0xf] %vm251, %v610
        %v882 = vld [vmem:[%s847 + $0x38] sm:$0x1]
        %v883 = vsel %vm262, %v611, %v882
        %884 = vst [vmem:[%s847 + $0x38] sm:$0x1] %v883
        %v885 = vld [vmem:[%s847 + $0x3c] sm:$0xf]
        %v886 = vsel %vm849, %v618, %v885
        %887 = vst [vmem:[%s847 + $0x3c] sm:$0xf] %v886
        %888 = vst.msk [vmem:[%s847 + $0x40] sm:$0xf] %vm251, %v627
        %v889 = vld [vmem:[%s847 + $0x44] sm:$0x1]
        %v890 = vsel %vm262, %v628, %v889
        %891 = vst [vmem:[%s847 + $0x44] sm:$0x1] %v890
        %v892 = vld [vmem:[%s847 + $0x48] sm:$0xf]
        %v893 = vsel %vm849, %v635, %v892
        %894 = vst [vmem:[%s847 + $0x48] sm:$0xf] %v893
        %895 = vst.msk [vmem:[%s847 + $0x4c] sm:$0xf] %vm251, %v644
        %v896 = vld [vmem:[%s847 + $0x50] sm:$0x1]
        %v897 = vsel %vm262, %v645, %v896
        %898 = vst [vmem:[%s847 + $0x50] sm:$0x1] %v897
        %v899 = vld [vmem:[%s847 + $0x54] sm:$0xf]
        %v900 = vsel %vm849, %v652, %v899
        %901 = vst [vmem:[%s847 + $0x54] sm:$0xf] %v900
        %902 = vst.msk [vmem:[%s847 + $0x58] sm:$0xf] %vm251, %v661
        %v903 = vld [vmem:[%s847 + $0x5c] sm:$0x1]
        %v904 = vsel %vm262, %v662, %v903
        %905 = vst [vmem:[%s847 + $0x5c] sm:$0x1] %v904
        %v906 = vld [vmem:[%s847 + $0x60] sm:$0xf]
        %v907 = vsel %vm849, %v669, %v906
        %908 = vst [vmem:[%s847 + $0x60] sm:$0xf] %v907
        %909 = vst.msk [vmem:[%s847 + $0x64] sm:$0xf] %vm251, %v678
        %v910 = vld [vmem:[%s847 + $0x68] sm:$0x1]
        %v911 = vsel %vm262, %v679, %v910
        %912 = vst [vmem:[%s847 + $0x68] sm:$0x1] %v911
        %v913 = vld [vmem:[%s847 + $0x6c] sm:$0xf]
        %v914 = vsel %vm849, %v686, %v913
        %915 = vst [vmem:[%s847 + $0x6c] sm:$0xf] %v914
        %916 = vst.msk [vmem:[%s847 + $0x70] sm:$0xf] %vm251, %v695
        %v917 = vld [vmem:[%s847 + $0x74] sm:$0x1]
        %v918 = vsel %vm262, %v696, %v917
        %919 = vst [vmem:[%s847 + $0x74] sm:$0x1] %v918
        %v920 = vld [vmem:[%s847 + $0x78] sm:$0xf]
        %v921 = vsel %vm849, %v703, %v920
        %922 = vst [vmem:[%s847 + $0x78] sm:$0xf] %v921
        %923 = vst.msk [vmem:[%s847 + $0x7c] sm:$0xf] %vm251, %v712
        %v924 = vld [vmem:[%s847 + $0x80] sm:$0x1]
        %v925 = vsel %vm262, %v713, %v924
        %926 = vst [vmem:[%s847 + $0x80] sm:$0x1] %v925
        %v927 = vld [vmem:[%s847 + $0x84] sm:$0xf]
        %v928 = vsel %vm849, %v720, %v927
        %929 = vst [vmem:[%s847 + $0x84] sm:$0xf] %v928
        %930 = vst.msk [vmem:[%s847 + $0x88] sm:$0xf] %vm251, %v729
        %v931 = vld [vmem:[%s847 + $0x8c] sm:$0x1]
        %v932 = vsel %vm262, %v730, %v931
        %933 = vst [vmem:[%s847 + $0x8c] sm:$0x1] %v932
        %v934 = vld [vmem:[%s847 + $0x90] sm:$0xf]
        %v935 = vsel %vm849, %v737, %v934
        %936 = vst [vmem:[%s847 + $0x90] sm:$0xf] %v935
        %937 = vst.msk [vmem:[%s847 + $0x94] sm:$0xf] %vm251, %v746
        %v938 = vld [vmem:[%s847 + $0x98] sm:$0x1]
        %v939 = vsel %vm262, %v747, %v938
        %940 = vst [vmem:[%s847 + $0x98] sm:$0x1] %v939
        %v941 = vld [vmem:[%s847 + $0x9c] sm:$0xf]
        %v942 = vsel %vm849, %v754, %v941
        %943 = vst [vmem:[%s847 + $0x9c] sm:$0xf] %v942
        %944 = vst.msk [vmem:[%s847 + $0xa0] sm:$0xf] %vm251, %v763
        %v945 = vld [vmem:[%s847 + $0xa4] sm:$0x1]
        %v946 = vsel %vm262, %v764, %v945
        %947 = vst [vmem:[%s847 + $0xa4] sm:$0x1] %v946
        %v948 = vld [vmem:[%s847 + $0xa8] sm:$0xf]
        %v949 = vsel %vm849, %v771, %v948
        %950 = vst [vmem:[%s847 + $0xa8] sm:$0xf] %v949
        %951 = vst.msk [vmem:[%s847 + $0xac] sm:$0xf] %vm251, %v780
        %v952 = vld [vmem:[%s847 + $0xb0] sm:$0x1]
        %v953 = vsel %vm262, %v781, %v952
        %954 = vst [vmem:[%s847 + $0xb0] sm:$0x1] %v953
        %v955 = vld [vmem:[%s847 + $0xb4] sm:$0xf]
        %v956 = vsel %vm849, %v788, %v955
        %957 = vst [vmem:[%s847 + $0xb4] sm:$0xf] %v956
        %958 = vst.msk [vmem:[%s847 + $0xb8] sm:$0xf] %vm251, %v797
        %v959 = vld [vmem:[%s847 + $0xbc] sm:$0x1]
        %v960 = vsel %vm262, %v798, %v959
        %961 = vst [vmem:[%s847 + $0xbc] sm:$0x1] %v960
        %v962 = vld [vmem:[#allocation2] sm:$0xf]
        %v963 = vld [vmem:[#allocation2 + $0x4] sm:$0xf]
        %v964 = vld [vmem:[#allocation2 + $0xc] sm:$0xf]
        %v965 = vld [vmem:[#allocation2 + $0x10] sm:$0xf]
        %v966 = vld [vmem:[#allocation2 + $0x18] sm:$0xf]
        %v967 = vld [vmem:[#allocation2 + $0x1c] sm:$0xf]
        %v968 = vld [vmem:[#allocation2 + $0x24] sm:$0xf]
        %v969 = vld [vmem:[#allocation2 + $0x28] sm:$0xf]
        %v970 = vld [vmem:[#allocation2 + $0x30] sm:$0xf]
        %v971 = vld [vmem:[#allocation2 + $0x34] sm:$0xf]
        %v972 = vld [vmem:[#allocation2 + $0x3c] sm:$0xf]
        %v973 = vld [vmem:[#allocation2 + $0x40] sm:$0xf]
        %v974 = vld [vmem:[#allocation2 + $0x48] sm:$0xf]
        %v975 = vld [vmem:[#allocation2 + $0x4c] sm:$0xf]
        %v976 = vld [vmem:[#allocation2 + $0x54] sm:$0xf]
        %v977 = vld [vmem:[#allocation2 + $0x58] sm:$0xf]
        %v978 = vld [vmem:[#allocation2 + $0x60] sm:$0xf]
        %v979 = vld [vmem:[#allocation2 + $0x64] sm:$0xf]
        %v980 = vld [vmem:[#allocation2 + $0x6c] sm:$0xf]
        %v981 = vld [vmem:[#allocation2 + $0x70] sm:$0xf]
        %v982 = vld [vmem:[#allocation2 + $0x78] sm:$0xf]
        %v983 = vld [vmem:[#allocation2 + $0x7c] sm:$0xf]
        %v984 = vld [vmem:[#allocation2 + $0x84] sm:$0xf]
        %v985 = vld [vmem:[#allocation2 + $0x88] sm:$0xf]
        %v986 = vld [vmem:[#allocation2 + $0x90] sm:$0xf]
        %v987 = vld [vmem:[#allocation2 + $0x94] sm:$0xf]
        %v988 = vld [vmem:[#allocation2 + $0x9c] sm:$0xf]
        %v989 = vld [vmem:[#allocation2 + $0xa0] sm:$0xf]
        %v990 = vld [vmem:[#allocation2 + $0xa8] sm:$0xf]
        %v991 = vld [vmem:[#allocation2 + $0xac] sm:$0xf]
        %v992 = vld [vmem:[#allocation2 + $0xb4] sm:$0xf]
        %v993 = vld [vmem:[#allocation2 + $0xb8] sm:$0xf]
        %v994 = vld [vmem:[%s1] sm:$0x3]
        %v995 = vld [vmem:[#allocation2 + $0x8] sm:$0x1]
        %v996 = vld [vmem:[#allocation2 + $0x14] sm:$0x1]
        %v997 = vld [vmem:[#allocation2 + $0x20] sm:$0x1]
        %v998 = vld [vmem:[#allocation2 + $0x2c] sm:$0x1]
        %v999 = vld [vmem:[#allocation2 + $0x38] sm:$0x1]
        %v1000 = vld [vmem:[#allocation2 + $0x44] sm:$0x1]
        %v1001 = vld [vmem:[#allocation2 + $0x50] sm:$0x1]
        %v1002 = vld [vmem:[#allocation2 + $0x5c] sm:$0x1]
        %v1003 = vld [vmem:[#allocation2 + $0x68] sm:$0x1]
        %v1004 = vld [vmem:[#allocation2 + $0x74] sm:$0x1]
        %v1005 = vld [vmem:[#allocation2 + $0x80] sm:$0x1]
        %v1006 = vld [vmem:[#allocation2 + $0x8c] sm:$0x1]
        %v1007 = vld [vmem:[#allocation2 + $0x98] sm:$0x1]
        %v1008 = vld [vmem:[#allocation2 + $0xa4] sm:$0x1]
        %v1009 = vld [vmem:[#allocation2 + $0xb0] sm:$0x1]
        %v1010 = vld [vmem:[#allocation2 + $0xbc] sm:$0x1]
        %vm1011 = vsmask.f32 3328
        %vm1012 = vsmask.f32 7440
        %vm1013 = vmor %vm1011, %vm1012
        %v1015 = vshrl.u32 %v962, 16
        %v1017 = vrot.slane %v1015, 4
        %v1018 = vshll.u32 %v962, 16
        %v1020 = vrot.slane %v1018, 5
        %v1021 = vor.u32 %v1017, %v1020
        %v1022 = vrot.slane %v1021, 4
        %v1024 = vshll.u32 %v963, 16
        %v1026 = vrot.slane %v1024, 5
        %v1027 = vsel %vm1013, %v1022, %v1026
        %v1028 = vshrl.u32 %v963, 16
        %v1030 = vrot.slane %v1028, 4
        %v1031 = vor.u32 %v1030, %v1026
        %v1032 = vrot.slane %v1031, 4
        %v1034 = vshll.u32 %v995, 16
        %v1036 = vrot.slane %v1034, 5
        %v1037 = vsel %vm1013, %v1032, %v1036
        %v1039 = vshrl.u32 %v964, 16
        %v1041 = vrot.slane %v1039, 4
        %v1042 = vshll.u32 %v964, 16
        %v1044 = vrot.slane %v1042, 5
        %v1045 = vor.u32 %v1041, %v1044
        %v1046 = vrot.slane %v1045, 4
        %v1048 = vshll.u32 %v965, 16
        %v1050 = vrot.slane %v1048, 5
        %v1051 = vsel %vm1013, %v1046, %v1050
        %v1052 = vshrl.u32 %v965, 16
        %v1054 = vrot.slane %v1052, 4
        %v1055 = vor.u32 %v1054, %v1050
        %v1056 = vrot.slane %v1055, 4
        %v1058 = vshll.u32 %v996, 16
        %v1060 = vrot.slane %v1058, 5
        %v1061 = vsel %vm1013, %v1056, %v1060
        %v1063 = vshrl.u32 %v966, 16
        %v1065 = vrot.slane %v1063, 4
        %v1066 = vshll.u32 %v966, 16
        %v1068 = vrot.slane %v1066, 5
        %v1069 = vor.u32 %v1065, %v1068
        %v1070 = vrot.slane %v1069, 4
        %v1072 = vshll.u32 %v967, 16
        %v1074 = vrot.slane %v1072, 5
        %v1075 = vsel %vm1013, %v1070, %v1074
        %v1076 = vshrl.u32 %v967, 16
        %v1078 = vrot.slane %v1076, 4
        %v1079 = vor.u32 %v1078, %v1074
        %v1080 = vrot.slane %v1079, 4
        %v1082 = vshll.u32 %v997, 16
        %v1084 = vrot.slane %v1082, 5
        %v1085 = vsel %vm1013, %v1080, %v1084
        %v1087 = vshrl.u32 %v968, 16
        %v1089 = vrot.slane %v1087, 4
        %v1090 = vshll.u32 %v968, 16
        %v1092 = vrot.slane %v1090, 5
        %v1093 = vor.u32 %v1089, %v1092
        %v1094 = vrot.slane %v1093, 4
        %v1096 = vshll.u32 %v969, 16
        %v1098 = vrot.slane %v1096, 5
        %v1099 = vsel %vm1013, %v1094, %v1098
        %v1100 = vshrl.u32 %v969, 16
        %v1102 = vrot.slane %v1100, 4
        %v1103 = vor.u32 %v1102, %v1098
        %v1104 = vrot.slane %v1103, 4
        %v1106 = vshll.u32 %v998, 16
        %v1108 = vrot.slane %v1106, 5
        %v1109 = vsel %vm1013, %v1104, %v1108
        %v1111 = vshrl.u32 %v970, 16
        %v1113 = vrot.slane %v1111, 4
        %v1114 = vshll.u32 %v970, 16
        %v1116 = vrot.slane %v1114, 5
        %v1117 = vor.u32 %v1113, %v1116
        %v1118 = vrot.slane %v1117, 4
        %v1120 = vshll.u32 %v971, 16
        %v1122 = vrot.slane %v1120, 5
        %v1123 = vsel %vm1013, %v1118, %v1122
        %v1124 = vshrl.u32 %v971, 16
        %v1126 = vrot.slane %v1124, 4
        %v1127 = vor.u32 %v1126, %v1122
        %v1128 = vrot.slane %v1127, 4
        %v1130 = vshll.u32 %v999, 16
        %v1132 = vrot.slane %v1130, 5
        %v1133 = vsel %vm1013, %v1128, %v1132
        %v1135 = vshrl.u32 %v972, 16
        %v1137 = vrot.slane %v1135, 4
        %v1138 = vshll.u32 %v972, 16
        %v1140 = vrot.slane %v1138, 5
        %v1141 = vor.u32 %v1137, %v1140
        %v1142 = vrot.slane %v1141, 4
        %v1144 = vshll.u32 %v973, 16
        %v1146 = vrot.slane %v1144, 5
        %v1147 = vsel %vm1013, %v1142, %v1146
        %v1148 = vshrl.u32 %v973, 16
        %v1150 = vrot.slane %v1148, 4
        %v1151 = vor.u32 %v1150, %v1146
        %v1152 = vrot.slane %v1151, 4
        %v1154 = vshll.u32 %v1000, 16
        %v1156 = vrot.slane %v1154, 5
        %v1157 = vsel %vm1013, %v1152, %v1156
        %v1159 = vshrl.u32 %v974, 16
        %v1161 = vrot.slane %v1159, 4
        %v1162 = vshll.u32 %v974, 16
        %v1164 = vrot.slane %v1162, 5
        %v1165 = vor.u32 %v1161, %v1164
        %v1166 = vrot.slane %v1165, 4
        %v1168 = vshll.u32 %v975, 16
        %v1170 = vrot.slane %v1168, 5
        %v1171 = vsel %vm1013, %v1166, %v1170
        %v1172 = vshrl.u32 %v975, 16
        %v1174 = vrot.slane %v1172, 4
        %v1175 = vor.u32 %v1174, %v1170
        %v1176 = vrot.slane %v1175, 4
        %v1178 = vshll.u32 %v1001, 16
        %v1180 = vrot.slane %v1178, 5
        %v1181 = vsel %vm1013, %v1176, %v1180
        %v1183 = vshrl.u32 %v976, 16
        %v1185 = vrot.slane %v1183, 4
        %v1186 = vshll.u32 %v976, 16
        %v1188 = vrot.slane %v1186, 5
        %v1189 = vor.u32 %v1185, %v1188
        %v1190 = vrot.slane %v1189, 4
        %v1192 = vshll.u32 %v977, 16
        %v1194 = vrot.slane %v1192, 5
        %v1195 = vsel %vm1013, %v1190, %v1194
        %v1196 = vshrl.u32 %v977, 16
        %v1198 = vrot.slane %v1196, 4
        %v1199 = vor.u32 %v1198, %v1194
        %v1200 = vrot.slane %v1199, 4
        %v1202 = vshll.u32 %v1002, 16
        %v1204 = vrot.slane %v1202, 5
        %v1205 = vsel %vm1013, %v1200, %v1204
        %v1207 = vshrl.u32 %v978, 16
        %v1209 = vrot.slane %v1207, 4
        %v1210 = vshll.u32 %v978, 16
        %v1212 = vrot.slane %v1210, 5
        %v1213 = vor.u32 %v1209, %v1212
        %v1214 = vrot.slane %v1213, 4
        %v1216 = vshll.u32 %v979, 16
        %v1218 = vrot.slane %v1216, 5
        %v1219 = vsel %vm1013, %v1214, %v1218
        %v1220 = vshrl.u32 %v979, 16
        %v1222 = vrot.slane %v1220, 4
        %v1223 = vor.u32 %v1222, %v1218
        %v1224 = vrot.slane %v1223, 4
        %v1226 = vshll.u32 %v1003, 16
        %v1228 = vrot.slane %v1226, 5
        %v1229 = vsel %vm1013, %v1224, %v1228
        %v1231 = vshrl.u32 %v980, 16
        %v1233 = vrot.slane %v1231, 4
        %v1234 = vshll.u32 %v980, 16
        %v1236 = vrot.slane %v1234, 5
        %v1237 = vor.u32 %v1233, %v1236
        %v1238 = vrot.slane %v1237, 4
        %v1240 = vshll.u32 %v981, 16
        %v1242 = vrot.slane %v1240, 5
        %v1243 = vsel %vm1013, %v1238, %v1242
        %v1244 = vshrl.u32 %v981, 16
        %v1246 = vrot.slane %v1244, 4
        %v1247 = vor.u32 %v1246, %v1242
        %v1248 = vrot.slane %v1247, 4
        %v1250 = vshll.u32 %v1004, 16
        %v1252 = vrot.slane %v1250, 5
        %v1253 = vsel %vm1013, %v1248, %v1252
        %v1255 = vshrl.u32 %v982, 16
        %v1257 = vrot.slane %v1255, 4
        %v1258 = vshll.u32 %v982, 16
        %v1260 = vrot.slane %v1258, 5
        %v1261 = vor.u32 %v1257, %v1260
        %v1262 = vrot.slane %v1261, 4
        %v1264 = vshll.u32 %v983, 16
        %v1266 = vrot.slane %v1264, 5
        %v1267 = vsel %vm1013, %v1262, %v1266
        %v1268 = vshrl.u32 %v983, 16
        %v1270 = vrot.slane %v1268, 4
        %v1271 = vor.u32 %v1270, %v1266
        %v1272 = vrot.slane %v1271, 4
        %v1274 = vshll.u32 %v1005, 16
        %v1276 = vrot.slane %v1274, 5
        %v1277 = vsel %vm1013, %v1272, %v1276
        %v1279 = vshrl.u32 %v984, 16
        %v1281 = vrot.slane %v1279, 4
        %v1282 = vshll.u32 %v984, 16
        %v1284 = vrot.slane %v1282, 5
        %v1285 = vor.u32 %v1281, %v1284
        %v1286 = vrot.slane %v1285, 4
        %v1288 = vshll.u32 %v985, 16
        %v1290 = vrot.slane %v1288, 5
        %v1291 = vsel %vm1013, %v1286, %v1290
        %v1292 = vshrl.u32 %v985, 16
        %v1294 = vrot.slane %v1292, 4
        %v1295 = vor.u32 %v1294, %v1290
        %v1296 = vrot.slane %v1295, 4
        %v1298 = vshll.u32 %v1006, 16
        %v1300 = vrot.slane %v1298, 5
        %v1301 = vsel %vm1013, %v1296, %v1300
        %v1303 = vshrl.u32 %v986, 16
        %v1305 = vrot.slane %v1303, 4
        %v1306 = vshll.u32 %v986, 16
        %v1308 = vrot.slane %v1306, 5
        %v1309 = vor.u32 %v1305, %v1308
        %v1310 = vrot.slane %v1309, 4
        %v1312 = vshll.u32 %v987, 16
        %v1314 = vrot.slane %v1312, 5
        %v1315 = vsel %vm1013, %v1310, %v1314
        %v1316 = vshrl.u32 %v987, 16
        %v1318 = vrot.slane %v1316, 4
        %v1319 = vor.u32 %v1318, %v1314
        %v1320 = vrot.slane %v1319, 4
        %v1322 = vshll.u32 %v1007, 16
        %v1324 = vrot.slane %v1322, 5
        %v1325 = vsel %vm1013, %v1320, %v1324
        %v1327 = vshrl.u32 %v988, 16
        %v1329 = vrot.slane %v1327, 4
        %v1330 = vshll.u32 %v988, 16
        %v1332 = vrot.slane %v1330, 5
        %v1333 = vor.u32 %v1329, %v1332
        %v1334 = vrot.slane %v1333, 4
        %v1336 = vshll.u32 %v989, 16
        %v1338 = vrot.slane %v1336, 5
        %v1339 = vsel %vm1013, %v1334, %v1338
        %v1340 = vshrl.u32 %v989, 16
        %v1342 = vrot.slane %v1340, 4
        %v1343 = vor.u32 %v1342, %v1338
        %v1344 = vrot.slane %v1343, 4
        %v1346 = vshll.u32 %v1008, 16
        %v1348 = vrot.slane %v1346, 5
        %v1349 = vsel %vm1013, %v1344, %v1348
        %v1351 = vshrl.u32 %v990, 16
        %v1353 = vrot.slane %v1351, 4
        %v1354 = vshll.u32 %v990, 16
        %v1356 = vrot.slane %v1354, 5
        %v1357 = vor.u32 %v1353, %v1356
        %v1358 = vrot.slane %v1357, 4
        %v1360 = vshll.u32 %v991, 16
        %v1362 = vrot.slane %v1360, 5
        %v1363 = vsel %vm1013, %v1358, %v1362
        %v1364 = vshrl.u32 %v991, 16
        %v1366 = vrot.slane %v1364, 4
        %v1367 = vor.u32 %v1366, %v1362
        %v1368 = vrot.slane %v1367, 4
        %v1370 = vshll.u32 %v1009, 16
        %v1372 = vrot.slane %v1370, 5
        %v1373 = vsel %vm1013, %v1368, %v1372
        %v1375 = vshrl.u32 %v992, 16
        %v1377 = vrot.slane %v1375, 4
        %v1378 = vshll.u32 %v992, 16
        %v1380 = vrot.slane %v1378, 5
        %v1381 = vor.u32 %v1377, %v1380
        %v1382 = vrot.slane %v1381, 4
        %v1384 = vshll.u32 %v993, 16
        %v1386 = vrot.slane %v1384, 5
        %v1387 = vsel %vm1013, %v1382, %v1386
        %v1388 = vshrl.u32 %v993, 16
        %v1390 = vrot.slane %v1388, 4
        %v1391 = vor.u32 %v1390, %v1386
        %v1392 = vrot.slane %v1391, 4
        %v1394 = vshll.u32 %v1010, 16
        %v1396 = vrot.slane %v1394, 5
        %v1397 = vsel %vm1013, %v1392, %v1396
        %s1398 = scalar_lea.vmem %s1, 2
        %v1399 = vld [vmem:[%s1398] sm:$0x3]
        %v1400 = vunpack.c.l.b16 %v1027
        %v1401 = vunpack.c.l.b16 %v1037
        %v1402 = vunpack.c.l.b16 %v1051
        %v1403 = vunpack.c.l.b16 %v1061
        %v1404 = vunpack.c.l.b16 %v1075
        %v1405 = vunpack.c.l.b16 %v1085
        %v1406 = vunpack.c.l.b16 %v1099
        %v1407 = vunpack.c.l.b16 %v1109
        %v1408 = vunpack.c.l.b16 %v1123
        %v1409 = vunpack.c.l.b16 %v1133
        %v1410 = vunpack.c.l.b16 %v1147
        %v1411 = vunpack.c.l.b16 %v1157
        %v1412 = vunpack.c.l.b16 %v1171
        %v1413 = vunpack.c.l.b16 %v1181
        %v1414 = vunpack.c.l.b16 %v1195
        %v1415 = vunpack.c.l.b16 %v1205
        %v1416 = vunpack.c.l.b16 %v1219
        %v1417 = vunpack.c.l.b16 %v1229
        %v1418 = vunpack.c.l.b16 %v1243
        %v1419 = vunpack.c.l.b16 %v1253
        %v1420 = vunpack.c.l.b16 %v1267
        %v1421 = vunpack.c.l.b16 %v1277
        %v1422 = vunpack.c.l.b16 %v1291
        %v1423 = vunpack.c.l.b16 %v1301
        %v1424 = vunpack.c.l.b16 %v1315
        %v1425 = vunpack.c.l.b16 %v1325
        %v1426 = vunpack.c.l.b16 %v1339
        %v1427 = vunpack.c.l.b16 %v1349
        %v1428 = vunpack.c.l.b16 %v1363
        %v1429 = vunpack.c.l.b16 %v1373
        %v1430 = vunpack.c.l.b16 %v1387
        %v1431 = vunpack.c.l.b16 %v1397
        %v1432 = vpack.c.b16 %v1401, %v1400
        %v1433 = vpack.c.b16 %v1403, %v1402
        %v1434 = vpack.c.b16 %v1405, %v1404
        %v1435 = vpack.c.b16 %v1407, %v1406
        %v1436 = vpack.c.b16 %v1409, %v1408
        %v1437 = vpack.c.b16 %v1411, %v1410
        %v1438 = vpack.c.b16 %v1413, %v1412
        %v1439 = vpack.c.b16 %v1415, %v1414
        %v1440 = vpack.c.b16 %v1417, %v1416
        %v1441 = vpack.c.b16 %v1419, %v1418
        %v1442 = vpack.c.b16 %v1421, %v1420
        %v1443 = vpack.c.b16 %v1423, %v1422
        %v1444 = vpack.c.b16 %v1425, %v1424
        %v1445 = vpack.c.b16 %v1427, %v1426
        %v1446 = vpack.c.b16 %v1429, %v1428
        %v1447 = vpack.c.b16 %v1431, %v1430
        %vm1448 = vcmask 31744
        %v1450 = vsel %vm1448, %v1432, 0
        %v1453 = vsel %vm1448, %v1433, 0
        %v1456 = vsel %vm1448, %v1434, 0
        %v1459 = vsel %vm1448, %v1435, 0
        %v1462 = vsel %vm1448, %v1436, 0
        %v1465 = vsel %vm1448, %v1437, 0
        %v1468 = vsel %vm1448, %v1438, 0
        %v1471 = vsel %vm1448, %v1439, 0
        %v1474 = vsel %vm1448, %v1440, 0
        %v1477 = vsel %vm1448, %v1441, 0
        %v1480 = vsel %vm1448, %v1442, 0
        %v1483 = vsel %vm1448, %v1443, 0
        %v1486 = vsel %vm1448, %v1444, 0
        %v1489 = vsel %vm1448, %v1445, 0
        %v1492 = vsel %vm1448, %v1446, 0
        %v1495 = vsel %vm1448, %v1447, 0
        %vm1497 = vcmask 1041408
        %v1499 = vsel %vm1497, %v1399, 0
        %1501 = vmatprep.subr.bf16.mxu0 0
        %1502 = vmatpush1.bf16.msra.mxu0 0
        %1503 = vmatprep.subr.bf16.mxu0 0
        %1504 = vmatpush1.bf16.msra.mxu0 0
        %1505 = vmatprep.subr.bf16.mxu0 0
        %1506 = vmatpush1.bf16.msra.mxu0 0
        %1507 = vmatprep.subr.bf16.mxu0 0
        %1508 = vmatpush1.bf16.msra.mxu0 0
        %1509 = vmatprep.subr.bf16.mxu0 0
        %1510 = vmatpush1.bf16.msra.mxu0 0
        %1511 = vmatprep.subr.bf16.mxu0 0
        %1512 = vmatpush1.bf16.msra.mxu0 0
        %1513 = vmatprep.subr.bf16.mxu0 0
        %1514 = vmatpush1.bf16.msra.mxu0 0
        %1515 = vmatprep.subr.bf16.mxu0 0
        %1516 = vmatpush1.bf16.msra.mxu0 %v1499
        %1517 = vmatprep.subr.bf16.mxu0 0
        %1518 = vmatpush2.bf16.msra.mxu0 0
        %1519 = vmatprep.subr.bf16.mxu0 0
        %1520 = vmatpush2.bf16.msra.mxu0 0
        %1521 = vmatprep.subr.bf16.mxu0 0
        %1522 = vmatpush2.bf16.msra.mxu0 0
        %1523 = vmatprep.subr.bf16.mxu0 0
        %1524 = vmatpush2.bf16.msra.mxu0 0
        %1525 = vmatprep.subr.bf16.mxu0 0
        %1526 = vmatpush2.bf16.msra.mxu0 0
        %1527 = vmatprep.subr.bf16.mxu0 0
        %1528 = vmatpush2.bf16.msra.mxu0 0
        %1529 = vmatprep.subr.bf16.mxu0 0
        %1530 = vmatpush2.bf16.msra.mxu0 0
        %1531 = vmatprep.subr.bf16.mxu0 0
        %1532 = vmatpush2.bf16.msra.mxu0 0
        %1533 = vmatprep.mubr.bf16.mxu0 0
        %1534 = vmatmul.mubr.bf16.gmra.mxu0 %v1450
        %v1535 = vpop.f32.mrf.mxu0
        %v1536 = vadd.f32 0.0, %v1535
        %v1537 = vpop.f32.mrf.mxu0
        %v1538 = vpop.f32.mrf.mxu0
        %v1539 = vadd.f32 0.0, %v1538
        %v1540 = vpop.f32.mrf.mxu0
        %1541 = vmatprep.mubr.bf16.mxu0 0
        %1542 = vmatmul.mubr.bf16.gmra.mxu0 %v1453
        %v1543 = vpop.f32.mrf.mxu0
        %v1544 = vadd.f32 0.0, %v1543
        %v1545 = vpop.f32.mrf.mxu0
        %v1546 = vpop.f32.mrf.mxu0
        %v1547 = vadd.f32 0.0, %v1546
        %v1548 = vpop.f32.mrf.mxu0
        %1549 = vmatprep.mubr.bf16.mxu0 0
        %1550 = vmatmul.mubr.bf16.gmra.mxu0 %v1456
        %v1551 = vpop.f32.mrf.mxu0
        %v1552 = vadd.f32 0.0, %v1551
        %v1553 = vpop.f32.mrf.mxu0
        %v1554 = vpop.f32.mrf.mxu0
        %v1555 = vadd.f32 0.0, %v1554
        %v1556 = vpop.f32.mrf.mxu0
        %1557 = vmatprep.mubr.bf16.mxu0 0
        %1558 = vmatmul.mubr.bf16.gmra.mxu0 %v1459
        %v1559 = vpop.f32.mrf.mxu0
        %v1560 = vadd.f32 0.0, %v1559
        %v1561 = vpop.f32.mrf.mxu0
        %v1562 = vpop.f32.mrf.mxu0
        %v1563 = vadd.f32 0.0, %v1562
        %v1564 = vpop.f32.mrf.mxu0
        %1565 = vmatprep.mubr.bf16.mxu0 0
        %1566 = vmatmul.mubr.bf16.gmra.mxu0 %v1462
        %v1567 = vpop.f32.mrf.mxu0
        %v1568 = vadd.f32 0.0, %v1567
        %v1569 = vpop.f32.mrf.mxu0
        %v1570 = vpop.f32.mrf.mxu0
        %v1571 = vadd.f32 0.0, %v1570
        %v1572 = vpop.f32.mrf.mxu0
        %1573 = vmatprep.mubr.bf16.mxu0 0
        %1574 = vmatmul.mubr.bf16.gmra.mxu0 %v1465
        %v1575 = vpop.f32.mrf.mxu0
        %v1576 = vadd.f32 0.0, %v1575
        %v1577 = vpop.f32.mrf.mxu0
        %v1578 = vpop.f32.mrf.mxu0
        %v1579 = vadd.f32 0.0, %v1578
        %v1580 = vpop.f32.mrf.mxu0
        %1581 = vmatprep.mubr.bf16.mxu0 0
        %1582 = vmatmul.mubr.bf16.gmra.mxu0 %v1468
        %v1583 = vpop.f32.mrf.mxu0
        %v1584 = vadd.f32 0.0, %v1583
        %v1585 = vpop.f32.mrf.mxu0
        %v1586 = vpop.f32.mrf.mxu0
        %v1587 = vadd.f32 0.0, %v1586
        %v1588 = vpop.f32.mrf.mxu0
        %1589 = vmatprep.mubr.bf16.mxu0 0
        %1590 = vmatmul.mubr.bf16.gmra.mxu0 %v1471
        %v1591 = vpop.f32.mrf.mxu0
        %v1592 = vadd.f32 0.0, %v1591
        %v1593 = vpop.f32.mrf.mxu0
        %v1594 = vpop.f32.mrf.mxu0
        %v1595 = vadd.f32 0.0, %v1594
        %v1596 = vpop.f32.mrf.mxu0
        %1597 = vmatprep.mubr.bf16.mxu0 0
        %1598 = vmatmul.mubr.bf16.gmra.mxu0 %v1474
        %v1599 = vpop.f32.mrf.mxu0
        %v1600 = vadd.f32 0.0, %v1599
        %v1601 = vpop.f32.mrf.mxu0
        %v1602 = vpop.f32.mrf.mxu0
        %v1603 = vadd.f32 0.0, %v1602
        %v1604 = vpop.f32.mrf.mxu0
        %1605 = vmatprep.mubr.bf16.mxu0 0
        %1606 = vmatmul.mubr.bf16.gmra.mxu0 %v1477
        %v1607 = vpop.f32.mrf.mxu0
        %v1608 = vadd.f32 0.0, %v1607
        %v1609 = vpop.f32.mrf.mxu0
        %v1610 = vpop.f32.mrf.mxu0
        %v1611 = vadd.f32 0.0, %v1610
        %v1612 = vpop.f32.mrf.mxu0
        %1613 = vmatprep.mubr.bf16.mxu0 0
        %1614 = vmatmul.mubr.bf16.gmra.mxu0 %v1480
        %v1615 = vpop.f32.mrf.mxu0
        %v1616 = vadd.f32 0.0, %v1615
        %v1617 = vpop.f32.mrf.mxu0
        %v1618 = vpop.f32.mrf.mxu0
        %v1619 = vadd.f32 0.0, %v1618
        %v1620 = vpop.f32.mrf.mxu0
        %1621 = vmatprep.mubr.bf16.mxu0 0
        %1622 = vmatmul.mubr.bf16.gmra.mxu0 %v1483
        %v1623 = vpop.f32.mrf.mxu0
        %v1624 = vadd.f32 0.0, %v1623
        %v1625 = vpop.f32.mrf.mxu0
        %v1626 = vpop.f32.mrf.mxu0
        %v1627 = vadd.f32 0.0, %v1626
        %v1628 = vpop.f32.mrf.mxu0
        %1629 = vmatprep.mubr.bf16.mxu0 0
        %1630 = vmatmul.mubr.bf16.gmra.mxu0 %v1486
        %v1631 = vpop.f32.mrf.mxu0
        %v1632 = vadd.f32 0.0, %v1631
        %v1633 = vpop.f32.mrf.mxu0
        %v1634 = vpop.f32.mrf.mxu0
        %v1635 = vadd.f32 0.0, %v1634
        %v1636 = vpop.f32.mrf.mxu0
        %1637 = vmatprep.mubr.bf16.mxu0 0
        %1638 = vmatmul.mubr.bf16.gmra.mxu0 %v1489
        %v1639 = vpop.f32.mrf.mxu0
        %v1640 = vadd.f32 0.0, %v1639
        %v1641 = vpop.f32.mrf.mxu0
        %v1642 = vpop.f32.mrf.mxu0
        %v1643 = vadd.f32 0.0, %v1642
        %v1644 = vpop.f32.mrf.mxu0
        %1645 = vmatprep.mubr.bf16.mxu0 0
        %1646 = vmatmul.mubr.bf16.gmra.mxu0 %v1492
        %v1647 = vpop.f32.mrf.mxu0
        %v1648 = vadd.f32 0.0, %v1647
        %v1649 = vpop.f32.mrf.mxu0
        %v1650 = vpop.f32.mrf.mxu0
        %v1651 = vadd.f32 0.0, %v1650
        %v1652 = vpop.f32.mrf.mxu0
        %1653 = vmatprep.mubr.bf16.mxu0 0
        %1654 = vmatmul.mubr.bf16.gmra.mxu0 %v1495
        %v1655 = vpop.f32.mrf.mxu0
        %v1656 = vadd.f32 0.0, %v1655
        %v1657 = vpop.f32.mrf.mxu0
        %v1658 = vpop.f32.mrf.mxu0
        %v1659 = vadd.f32 0.0, %v1658
        %v1660 = vpop.f32.mrf.mxu0
        %1661 = vdwg.mxu0
        %v1694 = vunpack.c.l.b16 %v962
        %v1695 = vunpack.c.l.b16 %v963
        %v1696 = vunpack.c.l.b16 %v964
        %v1697 = vunpack.c.l.b16 %v965
        %v1698 = vunpack.c.l.b16 %v966
        %v1699 = vunpack.c.l.b16 %v967
        %v1700 = vunpack.c.l.b16 %v968
        %v1701 = vunpack.c.l.b16 %v969
        %v1702 = vunpack.c.l.b16 %v970
        %v1703 = vunpack.c.l.b16 %v971
        %v1704 = vunpack.c.l.b16 %v972
        %v1705 = vunpack.c.l.b16 %v973
        %v1706 = vunpack.c.l.b16 %v974
        %v1707 = vunpack.c.l.b16 %v975
        %v1708 = vunpack.c.l.b16 %v976
        %v1709 = vunpack.c.l.b16 %v977
        %v1710 = vunpack.c.l.b16 %v978
        %v1711 = vunpack.c.l.b16 %v979
        %v1712 = vunpack.c.l.b16 %v980
        %v1713 = vunpack.c.l.b16 %v981
        %v1714 = vunpack.c.l.b16 %v982
        %v1715 = vunpack.c.l.b16 %v983
        %v1716 = vunpack.c.l.b16 %v984
        %v1717 = vunpack.c.l.b16 %v985
        %v1718 = vunpack.c.l.b16 %v986
        %v1719 = vunpack.c.l.b16 %v987
        %v1720 = vunpack.c.l.b16 %v988
        %v1721 = vunpack.c.l.b16 %v989
        %v1722 = vunpack.c.l.b16 %v990
        %v1723 = vunpack.c.l.b16 %v991
        %v1724 = vunpack.c.l.b16 %v992
        %v1725 = vunpack.c.l.b16 %v993
        %v1726 = vpack.c.b16 %v1695, %v1694
        %v1727 = vpack.c.b16 %v1697, %v1696
        %v1728 = vpack.c.b16 %v1699, %v1698
        %v1729 = vpack.c.b16 %v1701, %v1700
        %v1730 = vpack.c.b16 %v1703, %v1702
        %v1731 = vpack.c.b16 %v1705, %v1704
        %v1732 = vpack.c.b16 %v1707, %v1706
        %v1733 = vpack.c.b16 %v1709, %v1708
        %v1734 = vpack.c.b16 %v1711, %v1710
        %v1735 = vpack.c.b16 %v1713, %v1712
        %v1736 = vpack.c.b16 %v1715, %v1714
        %v1737 = vpack.c.b16 %v1717, %v1716
        %v1738 = vpack.c.b16 %v1719, %v1718
        %v1739 = vpack.c.b16 %v1721, %v1720
        %v1740 = vpack.c.b16 %v1723, %v1722
        %v1741 = vpack.c.b16 %v1725, %v1724
        %v1743 = vsel %vm1448, %v1726, 0
        %v1746 = vsel %vm1448, %v1727, 0
        %v1749 = vsel %vm1448, %v1728, 0
        %v1752 = vsel %vm1448, %v1729, 0
        %v1755 = vsel %vm1448, %v1730, 0
        %v1758 = vsel %vm1448, %v1731, 0
        %v1761 = vsel %vm1448, %v1732, 0
        %v1764 = vsel %vm1448, %v1733, 0
        %v1767 = vsel %vm1448, %v1734, 0
        %v1770 = vsel %vm1448, %v1735, 0
        %v1773 = vsel %vm1448, %v1736, 0
        %v1776 = vsel %vm1448, %v1737, 0
        %v1779 = vsel %vm1448, %v1738, 0
        %v1782 = vsel %vm1448, %v1739, 0
        %v1785 = vsel %vm1448, %v1740, 0
        %v1788 = vsel %vm1448, %v1741, 0
        %v1791 = vsel %vm1497, %v994, 0
        %1793 = vmatprep.subr.bf16.mxu0 0
        %1794 = vmatpush1.bf16.msra.mxu0 0
        %1795 = vmatprep.subr.bf16.mxu0 0
        %1796 = vmatpush1.bf16.msra.mxu0 0
        %1797 = vmatprep.subr.bf16.mxu0 0
        %1798 = vmatpush1.bf16.msra.mxu0 0
        %1799 = vmatprep.subr.bf16.mxu0 0
        %1800 = vmatpush1.bf16.msra.mxu0 0
        %1801 = vmatprep.subr.bf16.mxu0 0
        %1802 = vmatpush1.bf16.msra.mxu0 0
        %1803 = vmatprep.subr.bf16.mxu0 0
        %1804 = vmatpush1.bf16.msra.mxu0 0
        %1805 = vmatprep.subr.bf16.mxu0 0
        %1806 = vmatpush1.bf16.msra.mxu0 0
        %1807 = vmatprep.subr.bf16.mxu0 0
        %1808 = vmatpush1.bf16.msra.mxu0 %v1791
        %1809 = vmatprep.subr.bf16.mxu0 0
        %1810 = vmatpush2.bf16.msra.mxu0 0
        %1811 = vmatprep.subr.bf16.mxu0 0
        %1812 = vmatpush2.bf16.msra.mxu0 0
        %1813 = vmatprep.subr.bf16.mxu0 0
        %1814 = vmatpush2.bf16.msra.mxu0 0
        %1815 = vmatprep.subr.bf16.mxu0 0
        %1816 = vmatpush2.bf16.msra.mxu0 0
        %1817 = vmatprep.subr.bf16.mxu0 0
        %1818 = vmatpush2.bf16.msra.mxu0 0
        %1819 = vmatprep.subr.bf16.mxu0 0
        %1820 = vmatpush2.bf16.msra.mxu0 0
        %1821 = vmatprep.subr.bf16.mxu0 0
        %1822 = vmatpush2.bf16.msra.mxu0 0
        %1823 = vmatprep.subr.bf16.mxu0 0
        %1824 = vmatpush2.bf16.msra.mxu0 0
        %1825 = vmatprep.mubr.bf16.mxu0 0
        %1826 = vmatmul.mubr.bf16.gmra.mxu0 %v1743
        %v1827 = vpop.f32.mrf.mxu0
        %v1828 = vadd.f32 %v1536, %v1827
        %v1829 = vpop.f32.mrf.mxu0
        %v1830 = vpop.f32.mrf.mxu0
        %v1831 = vadd.f32 %v1539, %v1830
        %v1832 = vpop.f32.mrf.mxu0
        %1833 = vmatprep.mubr.bf16.mxu0 0
        %1834 = vmatmul.mubr.bf16.gmra.mxu0 %v1746
        %v1835 = vpop.f32.mrf.mxu0
        %v1836 = vadd.f32 %v1544, %v1835
        %v1837 = vpop.f32.mrf.mxu0
        %v1838 = vpop.f32.mrf.mxu0
        %v1839 = vadd.f32 %v1547, %v1838
        %v1840 = vpop.f32.mrf.mxu0
        %1841 = vmatprep.mubr.bf16.mxu0 0
        %1842 = vmatmul.mubr.bf16.gmra.mxu0 %v1749
        %v1843 = vpop.f32.mrf.mxu0
        %v1844 = vadd.f32 %v1552, %v1843
        %v1845 = vpop.f32.mrf.mxu0
        %v1846 = vpop.f32.mrf.mxu0
        %v1847 = vadd.f32 %v1555, %v1846
        %v1848 = vpop.f32.mrf.mxu0
        %1849 = vmatprep.mubr.bf16.mxu0 0
        %1850 = vmatmul.mubr.bf16.gmra.mxu0 %v1752
        %v1851 = vpop.f32.mrf.mxu0
        %v1852 = vadd.f32 %v1560, %v1851
        %v1853 = vpop.f32.mrf.mxu0
        %v1854 = vpop.f32.mrf.mxu0
        %v1855 = vadd.f32 %v1563, %v1854
        %v1856 = vpop.f32.mrf.mxu0
        %1857 = vmatprep.mubr.bf16.mxu0 0
        %1858 = vmatmul.mubr.bf16.gmra.mxu0 %v1755
        %v1859 = vpop.f32.mrf.mxu0
        %v1860 = vadd.f32 %v1568, %v1859
        %v1861 = vpop.f32.mrf.mxu0
        %v1862 = vpop.f32.mrf.mxu0
        %v1863 = vadd.f32 %v1571, %v1862
        %v1864 = vpop.f32.mrf.mxu0
        %1865 = vmatprep.mubr.bf16.mxu0 0
        %1866 = vmatmul.mubr.bf16.gmra.mxu0 %v1758
        %v1867 = vpop.f32.mrf.mxu0
        %v1868 = vadd.f32 %v1576, %v1867
        %v1869 = vpop.f32.mrf.mxu0
        %v1870 = vpop.f32.mrf.mxu0
        %v1871 = vadd.f32 %v1579, %v1870
        %v1872 = vpop.f32.mrf.mxu0
        %1873 = vmatprep.mubr.bf16.mxu0 0
        %1874 = vmatmul.mubr.bf16.gmra.mxu0 %v1761
        %v1875 = vpop.f32.mrf.mxu0
        %v1876 = vadd.f32 %v1584, %v1875
        %v1877 = vpop.f32.mrf.mxu0
        %v1878 = vpop.f32.mrf.mxu0
        %v1879 = vadd.f32 %v1587, %v1878
        %v1880 = vpop.f32.mrf.mxu0
        %1881 = vmatprep.mubr.bf16.mxu0 0
        %1882 = vmatmul.mubr.bf16.gmra.mxu0 %v1764
        %v1883 = vpop.f32.mrf.mxu0
        %v1884 = vadd.f32 %v1592, %v1883
        %v1885 = vpop.f32.mrf.mxu0
        %v1886 = vpop.f32.mrf.mxu0
        %v1887 = vadd.f32 %v1595, %v1886
        %v1888 = vpop.f32.mrf.mxu0
        %1889 = vmatprep.mubr.bf16.mxu0 0
        %1890 = vmatmul.mubr.bf16.gmra.mxu0 %v1767
        %v1891 = vpop.f32.mrf.mxu0
        %v1892 = vadd.f32 %v1600, %v1891
        %v1893 = vpop.f32.mrf.mxu0
        %v1894 = vpop.f32.mrf.mxu0
        %v1895 = vadd.f32 %v1603, %v1894
        %v1896 = vpop.f32.mrf.mxu0
        %1897 = vmatprep.mubr.bf16.mxu0 0
        %1898 = vmatmul.mubr.bf16.gmra.mxu0 %v1770
        %v1899 = vpop.f32.mrf.mxu0
        %v1900 = vadd.f32 %v1608, %v1899
        %v1901 = vpop.f32.mrf.mxu0
        %v1902 = vpop.f32.mrf.mxu0
        %v1903 = vadd.f32 %v1611, %v1902
        %v1904 = vpop.f32.mrf.mxu0
        %1905 = vmatprep.mubr.bf16.mxu0 0
        %1906 = vmatmul.mubr.bf16.gmra.mxu0 %v1773
        %v1907 = vpop.f32.mrf.mxu0
        %v1908 = vadd.f32 %v1616, %v1907
        %v1909 = vpop.f32.mrf.mxu0
        %v1910 = vpop.f32.mrf.mxu0
        %v1911 = vadd.f32 %v1619, %v1910
        %v1912 = vpop.f32.mrf.mxu0
        %1913 = vmatprep.mubr.bf16.mxu0 0
        %1914 = vmatmul.mubr.bf16.gmra.mxu0 %v1776
        %v1915 = vpop.f32.mrf.mxu0
        %v1916 = vadd.f32 %v1624, %v1915
        %v1917 = vpop.f32.mrf.mxu0
        %v1918 = vpop.f32.mrf.mxu0
        %v1919 = vadd.f32 %v1627, %v1918
        %v1920 = vpop.f32.mrf.mxu0
        %1921 = vmatprep.mubr.bf16.mxu0 0
        %1922 = vmatmul.mubr.bf16.gmra.mxu0 %v1779
        %v1923 = vpop.f32.mrf.mxu0
        %v1924 = vadd.f32 %v1632, %v1923
        %v1925 = vpop.f32.mrf.mxu0
        %v1926 = vpop.f32.mrf.mxu0
        %v1927 = vadd.f32 %v1635, %v1926
        %v1928 = vpop.f32.mrf.mxu0
        %1929 = vmatprep.mubr.bf16.mxu0 0
        %1930 = vmatmul.mubr.bf16.gmra.mxu0 %v1782
        %v1931 = vpop.f32.mrf.mxu0
        %v1932 = vadd.f32 %v1640, %v1931
        %v1933 = vpop.f32.mrf.mxu0
        %v1934 = vpop.f32.mrf.mxu0
        %v1935 = vadd.f32 %v1643, %v1934
        %v1936 = vpop.f32.mrf.mxu0
        %1937 = vmatprep.mubr.bf16.mxu0 0
        %1938 = vmatmul.mubr.bf16.gmra.mxu0 %v1785
        %v1939 = vpop.f32.mrf.mxu0
        %v1940 = vadd.f32 %v1648, %v1939
        %v1941 = vpop.f32.mrf.mxu0
        %v1942 = vpop.f32.mrf.mxu0
        %v1943 = vadd.f32 %v1651, %v1942
        %v1944 = vpop.f32.mrf.mxu0
        %1945 = vmatprep.mubr.bf16.mxu0 0
        %1946 = vmatmul.mubr.bf16.gmra.mxu0 %v1788
        %v1947 = vpop.f32.mrf.mxu0
        %v1948 = vadd.f32 %v1656, %v1947
        %v1949 = vpop.f32.mrf.mxu0
        %v1950 = vpop.f32.mrf.mxu0
        %v1951 = vadd.f32 %v1659, %v1950
        %v1952 = vpop.f32.mrf.mxu0
        %1953 = vdwg.mxu0
        %v1954 = vld [vmem:[#allocation2] sm:$0xe]
        %v1955 = vld [vmem:[#allocation2 + $0xc] sm:$0xe]
        %v1956 = vld [vmem:[#allocation2 + $0x18] sm:$0xe]
        %v1957 = vld [vmem:[#allocation2 + $0x24] sm:$0xe]
        %v1958 = vld [vmem:[#allocation2 + $0x30] sm:$0xe]
        %v1959 = vld [vmem:[#allocation2 + $0x3c] sm:$0xe]
        %v1960 = vld [vmem:[#allocation2 + $0x48] sm:$0xe]
        %v1961 = vld [vmem:[#allocation2 + $0x54] sm:$0xe]
        %v1962 = vld [vmem:[#allocation2 + $0x60] sm:$0xe]
        %v1963 = vld [vmem:[#allocation2 + $0x6c] sm:$0xe]
        %v1964 = vld [vmem:[#allocation2 + $0x78] sm:$0xe]
        %v1965 = vld [vmem:[#allocation2 + $0x84] sm:$0xe]
        %v1966 = vld [vmem:[#allocation2 + $0x90] sm:$0xe]
        %v1967 = vld [vmem:[#allocation2 + $0x9c] sm:$0xe]
        %v1968 = vld [vmem:[#allocation2 + $0xa8] sm:$0xe]
        %v1969 = vld [vmem:[#allocation2 + $0xb4] sm:$0xe]
        %vm2002 = vcmask 1042432
        %vm2003 = vcmask 1046532
        %vm2004 = vmor %vm2002, %vm2003
        %v2005 = vrot.slane %v1954, 5
        %v2006 = vrot.slane %v2005, 4
        %v2007 = vrot.slane %v963, 5
        %v2008 = vsel %vm2004, %v2006, %v2007
        %v2009 = vrot.slane %v2007, 4
        %v2010 = vrot.slane %v995, 5
        %v2011 = vsel %vm2004, %v2009, %v2010
        %v2012 = vrot.slane %v1955, 5
        %v2013 = vrot.slane %v2012, 4
        %v2014 = vrot.slane %v965, 5
        %v2015 = vsel %vm2004, %v2013, %v2014
        %v2016 = vrot.slane %v2014, 4
        %v2017 = vrot.slane %v996, 5
        %v2018 = vsel %vm2004, %v2016, %v2017
        %v2019 = vrot.slane %v1956, 5
        %v2020 = vrot.slane %v2019, 4
        %v2021 = vrot.slane %v967, 5
        %v2022 = vsel %vm2004, %v2020, %v2021
        %v2023 = vrot.slane %v2021, 4
        %v2024 = vrot.slane %v997, 5
        %v2025 = vsel %vm2004, %v2023, %v2024
        %v2026 = vrot.slane %v1957, 5
        %v2027 = vrot.slane %v2026, 4
        %v2028 = vrot.slane %v969, 5
        %v2029 = vsel %vm2004, %v2027, %v2028
        %v2030 = vrot.slane %v2028, 4
        %v2031 = vrot.slane %v998, 5
        %v2032 = vsel %vm2004, %v2030, %v2031
        %v2033 = vrot.slane %v1958, 5
        %v2034 = vrot.slane %v2033, 4
        %v2035 = vrot.slane %v971, 5
        %v2036 = vsel %vm2004, %v2034, %v2035
        %v2037 = vrot.slane %v2035, 4
        %v2038 = vrot.slane %v999, 5
        %v2039 = vsel %vm2004, %v2037, %v2038
        %v2040 = vrot.slane %v1959, 5
        %v2041 = vrot.slane %v2040, 4
        %v2042 = vrot.slane %v973, 5
        %v2043 = vsel %vm2004, %v2041, %v2042
        %v2044 = vrot.slane %v2042, 4
        %v2045 = vrot.slane %v1000, 5
        %v2046 = vsel %vm2004, %v2044, %v2045
        %v2047 = vrot.slane %v1960, 5
        %v2048 = vrot.slane %v2047, 4
        %v2049 = vrot.slane %v975, 5
        %v2050 = vsel %vm2004, %v2048, %v2049
        %v2051 = vrot.slane %v2049, 4
        %v2052 = vrot.slane %v1001, 5
        %v2053 = vsel %vm2004, %v2051, %v2052
        %v2054 = vrot.slane %v1961, 5
        %v2055 = vrot.slane %v2054, 4
        %v2056 = vrot.slane %v977, 5
        %v2057 = vsel %vm2004, %v2055, %v2056
        %v2058 = vrot.slane %v2056, 4
        %v2059 = vrot.slane %v1002, 5
        %v2060 = vsel %vm2004, %v2058, %v2059
        %v2061 = vrot.slane %v1962, 5
        %v2062 = vrot.slane %v2061, 4
        %v2063 = vrot.slane %v979, 5
        %v2064 = vsel %vm2004, %v2062, %v2063
        %v2065 = vrot.slane %v2063, 4
        %v2066 = vrot.slane %v1003, 5
        %v2067 = vsel %vm2004, %v2065, %v2066
        %v2068 = vrot.slane %v1963, 5
        %v2069 = vrot.slane %v2068, 4
        %v2070 = vrot.slane %v981, 5
        %v2071 = vsel %vm2004, %v2069, %v2070
        %v2072 = vrot.slane %v2070, 4
        %v2073 = vrot.slane %v1004, 5
        %v2074 = vsel %vm2004, %v2072, %v2073
        %v2075 = vrot.slane %v1964, 5
        %v2076 = vrot.slane %v2075, 4
        %v2077 = vrot.slane %v983, 5
        %v2078 = vsel %vm2004, %v2076, %v2077
        %v2079 = vrot.slane %v2077, 4
        %v2080 = vrot.slane %v1005, 5
        %v2081 = vsel %vm2004, %v2079, %v2080
        %v2082 = vrot.slane %v1965, 5
        %v2083 = vrot.slane %v2082, 4
        %v2084 = vrot.slane %v985, 5
        %v2085 = vsel %vm2004, %v2083, %v2084
        %v2086 = vrot.slane %v2084, 4
        %v2087 = vrot.slane %v1006, 5
        %v2088 = vsel %vm2004, %v2086, %v2087
        %v2089 = vrot.slane %v1966, 5
        %v2090 = vrot.slane %v2089, 4
        %v2091 = vrot.slane %v987, 5
        %v2092 = vsel %vm2004, %v2090, %v2091
        %v2093 = vrot.slane %v2091, 4
        %v2094 = vrot.slane %v1007, 5
        %v2095 = vsel %vm2004, %v2093, %v2094
        %v2096 = vrot.slane %v1967, 5
        %v2097 = vrot.slane %v2096, 4
        %v2098 = vrot.slane %v989, 5
        %v2099 = vsel %vm2004, %v2097, %v2098
        %v2100 = vrot.slane %v2098, 4
        %v2101 = vrot.slane %v1008, 5
        %v2102 = vsel %vm2004, %v2100, %v2101
        %v2103 = vrot.slane %v1968, 5
        %v2104 = vrot.slane %v2103, 4
        %v2105 = vrot.slane %v991, 5
        %v2106 = vsel %vm2004, %v2104, %v2105
        %v2107 = vrot.slane %v2105, 4
        %v2108 = vrot.slane %v1009, 5
        %v2109 = vsel %vm2004, %v2107, %v2108
        %v2110 = vrot.slane %v1969, 5
        %v2111 = vrot.slane %v2110, 4
        %v2112 = vrot.slane %v993, 5
        %v2113 = vsel %vm2004, %v2111, %v2112
        %v2114 = vrot.slane %v2112, 4
        %v2115 = vrot.slane %v1010, 5
        %v2116 = vsel %vm2004, %v2114, %v2115
        %s2117 = scalar_lea.vmem %s1, 4
        %v2118 = vld [vmem:[%s2117] sm:$0x3]
        %v2119 = vunpack.c.l.b16 %v2008
        %v2120 = vunpack.c.l.b16 %v2011
        %v2121 = vunpack.c.l.b16 %v2015
        %v2122 = vunpack.c.l.b16 %v2018
        %v2123 = vunpack.c.l.b16 %v2022
        %v2124 = vunpack.c.l.b16 %v2025
        %v2125 = vunpack.c.l.b16 %v2029
        %v2126 = vunpack.c.l.b16 %v2032
        %v2127 = vunpack.c.l.b16 %v2036
        %v2128 = vunpack.c.l.b16 %v2039
        %v2129 = vunpack.c.l.b16 %v2043
        %v2130 = vunpack.c.l.b16 %v2046
        %v2131 = vunpack.c.l.b16 %v2050
        %v2132 = vunpack.c.l.b16 %v2053
        %v2133 = vunpack.c.l.b16 %v2057
        %v2134 = vunpack.c.l.b16 %v2060
        %v2135 = vunpack.c.l.b16 %v2064
        %v2136 = vunpack.c.l.b16 %v2067
        %v2137 = vunpack.c.l.b16 %v2071
        %v2138 = vunpack.c.l.b16 %v2074
        %v2139 = vunpack.c.l.b16 %v2078
        %v2140 = vunpack.c.l.b16 %v2081
        %v2141 = vunpack.c.l.b16 %v2085
        %v2142 = vunpack.c.l.b16 %v2088
        %v2143 = vunpack.c.l.b16 %v2092
        %v2144 = vunpack.c.l.b16 %v2095
        %v2145 = vunpack.c.l.b16 %v2099
        %v2146 = vunpack.c.l.b16 %v2102
        %v2147 = vunpack.c.l.b16 %v2106
        %v2148 = vunpack.c.l.b16 %v2109
        %v2149 = vunpack.c.l.b16 %v2113
        %v2150 = vunpack.c.l.b16 %v2116
        %v2151 = vpack.c.b16 %v2120, %v2119
        %v2152 = vpack.c.b16 %v2122, %v2121
        %v2153 = vpack.c.b16 %v2124, %v2123
        %v2154 = vpack.c.b16 %v2126, %v2125
        %v2155 = vpack.c.b16 %v2128, %v2127
        %v2156 = vpack.c.b16 %v2130, %v2129
        %v2157 = vpack.c.b16 %v2132, %v2131
        %v2158 = vpack.c.b16 %v2134, %v2133
        %v2159 = vpack.c.b16 %v2136, %v2135
        %v2160 = vpack.c.b16 %v2138, %v2137
        %v2161 = vpack.c.b16 %v2140, %v2139
        %v2162 = vpack.c.b16 %v2142, %v2141
        %v2163 = vpack.c.b16 %v2144, %v2143
        %v2164 = vpack.c.b16 %v2146, %v2145
        %v2165 = vpack.c.b16 %v2148, %v2147
        %v2166 = vpack.c.b16 %v2150, %v2149
        %v2168 = vsel %vm1448, %v2151, 0
        %v2171 = vsel %vm1448, %v2152, 0
        %v2174 = vsel %vm1448, %v2153, 0
        %v2177 = vsel %vm1448, %v2154, 0
        %v2180 = vsel %vm1448, %v2155, 0
        %v2183 = vsel %vm1448, %v2156, 0
        %v2186 = vsel %vm1448, %v2157, 0
        %v2189 = vsel %vm1448, %v2158, 0
        %v2192 = vsel %vm1448, %v2159, 0
        %v2195 = vsel %vm1448, %v2160, 0
        %v2198 = vsel %vm1448, %v2161, 0
        %v2201 = vsel %vm1448, %v2162, 0
        %v2204 = vsel %vm1448, %v2163, 0
        %v2207 = vsel %vm1448, %v2164, 0
        %v2210 = vsel %vm1448, %v2165, 0
        %v2213 = vsel %vm1448, %v2166, 0
        %v2216 = vsel %vm1497, %v2118, 0
        %2218 = vmatprep.subr.bf16.mxu0 0
        %2219 = vmatpush1.bf16.msra.mxu0 0
        %2220 = vmatprep.subr.bf16.mxu0 0
        %2221 = vmatpush1.bf16.msra.mxu0 0
        %2222 = vmatprep.subr.bf16.mxu0 0
        %2223 = vmatpush1.bf16.msra.mxu0 0
        %2224 = vmatprep.subr.bf16.mxu0 0
        %2225 = vmatpush1.bf16.msra.mxu0 0
        %2226 = vmatprep.subr.bf16.mxu0 0
        %2227 = vmatpush1.bf16.msra.mxu0 0
        %2228 = vmatprep.subr.bf16.mxu0 0
        %2229 = vmatpush1.bf16.msra.mxu0 0
        %2230 = vmatprep.subr.bf16.mxu0 0
        %2231 = vmatpush1.bf16.msra.mxu0 0
        %2232 = vmatprep.subr.bf16.mxu0 0
        %2233 = vmatpush1.bf16.msra.mxu0 %v2216
        %2234 = vmatprep.subr.bf16.mxu0 0
        %2235 = vmatpush2.bf16.msra.mxu0 0
        %2236 = vmatprep.subr.bf16.mxu0 0
        %2237 = vmatpush2.bf16.msra.mxu0 0
        %2238 = vmatprep.subr.bf16.mxu0 0
        %2239 = vmatpush2.bf16.msra.mxu0 0
        %2240 = vmatprep.subr.bf16.mxu0 0
        %2241 = vmatpush2.bf16.msra.mxu0 0
        %2242 = vmatprep.subr.bf16.mxu0 0
        %2243 = vmatpush2.bf16.msra.mxu0 0
        %2244 = vmatprep.subr.bf16.mxu0 0
        %2245 = vmatpush2.bf16.msra.mxu0 0
        %2246 = vmatprep.subr.bf16.mxu0 0
        %2247 = vmatpush2.bf16.msra.mxu0 0
        %2248 = vmatprep.subr.bf16.mxu0 0
        %2249 = vmatpush2.bf16.msra.mxu0 0
        %2250 = vmatprep.mubr.bf16.mxu0 0
        %2251 = vmatmul.mubr.bf16.gmra.mxu0 %v2168
        %v2252 = vpop.f32.mrf.mxu0
        %v2253 = vadd.f32 0.0, %v2252
        %v2254 = vpop.f32.mrf.mxu0
        %v2255 = vpop.f32.mrf.mxu0
        %v2256 = vadd.f32 0.0, %v2255
        %v2257 = vpop.f32.mrf.mxu0
        %2258 = vmatprep.mubr.bf16.mxu0 0
        %2259 = vmatmul.mubr.bf16.gmra.mxu0 %v2171
        %v2260 = vpop.f32.mrf.mxu0
        %v2261 = vadd.f32 0.0, %v2260
        %v2262 = vpop.f32.mrf.mxu0
        %v2263 = vpop.f32.mrf.mxu0
        %v2264 = vadd.f32 0.0, %v2263
        %v2265 = vpop.f32.mrf.mxu0
        %2266 = vmatprep.mubr.bf16.mxu0 0
        %2267 = vmatmul.mubr.bf16.gmra.mxu0 %v2174
        %v2268 = vpop.f32.mrf.mxu0
        %v2269 = vadd.f32 0.0, %v2268
        %v2270 = vpop.f32.mrf.mxu0
        %v2271 = vpop.f32.mrf.mxu0
        %v2272 = vadd.f32 0.0, %v2271
        %v2273 = vpop.f32.mrf.mxu0
        %2274 = vmatprep.mubr.bf16.mxu0 0
        %2275 = vmatmul.mubr.bf16.gmra.mxu0 %v2177
        %v2276 = vpop.f32.mrf.mxu0
        %v2277 = vadd.f32 0.0, %v2276
        %v2278 = vpop.f32.mrf.mxu0
        %v2279 = vpop.f32.mrf.mxu0
        %v2280 = vadd.f32 0.0, %v2279
        %v2281 = vpop.f32.mrf.mxu0
        %2282 = vmatprep.mubr.bf16.mxu0 0
        %2283 = vmatmul.mubr.bf16.gmra.mxu0 %v2180
        %v2284 = vpop.f32.mrf.mxu0
        %v2285 = vadd.f32 0.0, %v2284
        %v2286 = vpop.f32.mrf.mxu0
        %v2287 = vpop.f32.mrf.mxu0
        %v2288 = vadd.f32 0.0, %v2287
        %v2289 = vpop.f32.mrf.mxu0
        %2290 = vmatprep.mubr.bf16.mxu0 0
        %2291 = vmatmul.mubr.bf16.gmra.mxu0 %v2183
        %v2292 = vpop.f32.mrf.mxu0
        %v2293 = vadd.f32 0.0, %v2292
        %v2294 = vpop.f32.mrf.mxu0
        %v2295 = vpop.f32.mrf.mxu0
        %v2296 = vadd.f32 0.0, %v2295
        %v2297 = vpop.f32.mrf.mxu0
        %2298 = vmatprep.mubr.bf16.mxu0 0
        %2299 = vmatmul.mubr.bf16.gmra.mxu0 %v2186
        %v2300 = vpop.f32.mrf.mxu0
        %v2301 = vadd.f32 0.0, %v2300
        %v2302 = vpop.f32.mrf.mxu0
        %v2303 = vpop.f32.mrf.mxu0
        %v2304 = vadd.f32 0.0, %v2303
        %v2305 = vpop.f32.mrf.mxu0
        %2306 = vmatprep.mubr.bf16.mxu0 0
        %2307 = vmatmul.mubr.bf16.gmra.mxu0 %v2189
        %v2308 = vpop.f32.mrf.mxu0
        %v2309 = vadd.f32 0.0, %v2308
        %v2310 = vpop.f32.mrf.mxu0
        %v2311 = vpop.f32.mrf.mxu0
        %v2312 = vadd.f32 0.0, %v2311
        %v2313 = vpop.f32.mrf.mxu0
        %2314 = vmatprep.mubr.bf16.mxu0 0
        %2315 = vmatmul.mubr.bf16.gmra.mxu0 %v2192
        %v2316 = vpop.f32.mrf.mxu0
        %v2317 = vadd.f32 0.0, %v2316
        %v2318 = vpop.f32.mrf.mxu0
        %v2319 = vpop.f32.mrf.mxu0
        %v2320 = vadd.f32 0.0, %v2319
        %v2321 = vpop.f32.mrf.mxu0
        %2322 = vmatprep.mubr.bf16.mxu0 0
        %2323 = vmatmul.mubr.bf16.gmra.mxu0 %v2195
        %v2324 = vpop.f32.mrf.mxu0
        %v2325 = vadd.f32 0.0, %v2324
        %v2326 = vpop.f32.mrf.mxu0
        %v2327 = vpop.f32.mrf.mxu0
        %v2328 = vadd.f32 0.0, %v2327
        %v2329 = vpop.f32.mrf.mxu0
        %2330 = vmatprep.mubr.bf16.mxu0 0
        %2331 = vmatmul.mubr.bf16.gmra.mxu0 %v2198
        %v2332 = vpop.f32.mrf.mxu0
        %v2333 = vadd.f32 0.0, %v2332
        %v2334 = vpop.f32.mrf.mxu0
        %v2335 = vpop.f32.mrf.mxu0
        %v2336 = vadd.f32 0.0, %v2335
        %v2337 = vpop.f32.mrf.mxu0
        %2338 = vmatprep.mubr.bf16.mxu0 0
        %2339 = vmatmul.mubr.bf16.gmra.mxu0 %v2201
        %v2340 = vpop.f32.mrf.mxu0
        %v2341 = vadd.f32 0.0, %v2340
        %v2342 = vpop.f32.mrf.mxu0
        %v2343 = vpop.f32.mrf.mxu0
        %v2344 = vadd.f32 0.0, %v2343
        %v2345 = vpop.f32.mrf.mxu0
        %2346 = vmatprep.mubr.bf16.mxu0 0
        %2347 = vmatmul.mubr.bf16.gmra.mxu0 %v2204
        %v2348 = vpop.f32.mrf.mxu0
        %v2349 = vadd.f32 0.0, %v2348
        %v2350 = vpop.f32.mrf.mxu0
        %v2351 = vpop.f32.mrf.mxu0
        %v2352 = vadd.f32 0.0, %v2351
        %v2353 = vpop.f32.mrf.mxu0
        %2354 = vmatprep.mubr.bf16.mxu0 0
        %2355 = vmatmul.mubr.bf16.gmra.mxu0 %v2207
        %v2356 = vpop.f32.mrf.mxu0
        %v2357 = vadd.f32 0.0, %v2356
        %v2358 = vpop.f32.mrf.mxu0
        %v2359 = vpop.f32.mrf.mxu0
        %v2360 = vadd.f32 0.0, %v2359
        %v2361 = vpop.f32.mrf.mxu0
        %2362 = vmatprep.mubr.bf16.mxu0 0
        %2363 = vmatmul.mubr.bf16.gmra.mxu0 %v2210
        %v2364 = vpop.f32.mrf.mxu0
        %v2365 = vadd.f32 0.0, %v2364
        %v2366 = vpop.f32.mrf.mxu0
        %v2367 = vpop.f32.mrf.mxu0
        %v2368 = vadd.f32 0.0, %v2367
        %v2369 = vpop.f32.mrf.mxu0
        %2370 = vmatprep.mubr.bf16.mxu0 0
        %2371 = vmatmul.mubr.bf16.gmra.mxu0 %v2213
        %v2372 = vpop.f32.mrf.mxu0
        %v2373 = vadd.f32 0.0, %v2372
        %v2374 = vpop.f32.mrf.mxu0
        %v2375 = vpop.f32.mrf.mxu0
        %v2376 = vadd.f32 0.0, %v2375
        %v2377 = vpop.f32.mrf.mxu0
        %2378 = vdwg.mxu0
        %v2379 = vadd.f32 %v1828, %v2253
        %v2380 = vadd.f32 %v1831, %v2256
        %v2381 = vadd.f32 %v1836, %v2261
        %v2382 = vadd.f32 %v1839, %v2264
        %v2383 = vadd.f32 %v1844, %v2269
        %v2384 = vadd.f32 %v1847, %v2272
        %v2385 = vadd.f32 %v1852, %v2277
        %v2386 = vadd.f32 %v1855, %v2280
        %v2387 = vadd.f32 %v1860, %v2285
        %v2388 = vadd.f32 %v1863, %v2288
        %v2389 = vadd.f32 %v1868, %v2293
        %v2390 = vadd.f32 %v1871, %v2296
        %v2391 = vadd.f32 %v1876, %v2301
        %v2392 = vadd.f32 %v1879, %v2304
        %v2393 = vadd.f32 %v1884, %v2309
        %v2394 = vadd.f32 %v1887, %v2312
        %v2395 = vadd.f32 %v1892, %v2317
        %v2396 = vadd.f32 %v1895, %v2320
        %v2397 = vadd.f32 %v1900, %v2325
        %v2398 = vadd.f32 %v1903, %v2328
        %v2399 = vadd.f32 %v1908, %v2333
        %v2400 = vadd.f32 %v1911, %v2336
        %v2401 = vadd.f32 %v1916, %v2341
        %v2402 = vadd.f32 %v1919, %v2344
        %v2403 = vadd.f32 %v1924, %v2349
        %v2404 = vadd.f32 %v1927, %v2352
        %v2405 = vadd.f32 %v1932, %v2357
        %v2406 = vadd.f32 %v1935, %v2360
        %v2407 = vadd.f32 %v1940, %v2365
        %v2408 = vadd.f32 %v1943, %v2368
        %v2409 = vadd.f32 %v1948, %v2373
        %v2410 = vadd.f32 %v1951, %v2376
        %v2411 = vld [vmem:[%s847] sm:$0xf]
        %v2412 = vld [vmem:[%s847 + $0x4] sm:$0xf]
        %v2413 = vld [vmem:[%s847 + $0xc] sm:$0xf]
        %v2414 = vld [vmem:[%s847 + $0x10] sm:$0xf]
        %v2415 = vld [vmem:[%s847 + $0x18] sm:$0xf]
        %v2416 = vld [vmem:[%s847 + $0x1c] sm:$0xf]
        %v2417 = vld [vmem:[%s847 + $0x24] sm:$0xf]
        %v2418 = vld [vmem:[%s847 + $0x28] sm:$0xf]
        %v2419 = vld [vmem:[%s847 + $0x30] sm:$0xf]
        %v2420 = vld [vmem:[%s847 + $0x34] sm:$0xf]
        %v2421 = vld [vmem:[%s847 + $0x3c] sm:$0xf]
        %v2422 = vld [vmem:[%s847 + $0x40] sm:$0xf]
        %v2423 = vld [vmem:[%s847 + $0x48] sm:$0xf]
        %v2424 = vld [vmem:[%s847 + $0x4c] sm:$0xf]
        %v2425 = vld [vmem:[%s847 + $0x54] sm:$0xf]
        %v2426 = vld [vmem:[%s847 + $0x58] sm:$0xf]
        %v2427 = vld [vmem:[%s847 + $0x60] sm:$0xf]
        %v2428 = vld [vmem:[%s847 + $0x64] sm:$0xf]
        %v2429 = vld [vmem:[%s847 + $0x6c] sm:$0xf]
        %v2430 = vld [vmem:[%s847 + $0x70] sm:$0xf]
        %v2431 = vld [vmem:[%s847 + $0x78] sm:$0xf]
        %v2432 = vld [vmem:[%s847 + $0x7c] sm:$0xf]
        %v2433 = vld [vmem:[%s847 + $0x84] sm:$0xf]
        %v2434 = vld [vmem:[%s847 + $0x88] sm:$0xf]
        %v2435 = vld [vmem:[%s847 + $0x90] sm:$0xf]
        %v2436 = vld [vmem:[%s847 + $0x94] sm:$0xf]
        %v2437 = vld [vmem:[%s847 + $0x9c] sm:$0xf]
        %v2438 = vld [vmem:[%s847 + $0xa0] sm:$0xf]
        %v2439 = vld [vmem:[%s847 + $0xa8] sm:$0xf]
        %v2440 = vld [vmem:[%s847 + $0xac] sm:$0xf]
        %v2441 = vld [vmem:[%s847 + $0xb4] sm:$0xf]
        %v2442 = vld [vmem:[%s847 + $0xb8] sm:$0xf]
        %s2443 = scalar_lea.vmem %s1, 6
        %v2444 = vld [vmem:[%s2443] sm:$0x3]
        %v2477 = vunpack.c.l.b16 %v2411
        %v2478 = vunpack.c.l.b16 %v2412
        %v2479 = vunpack.c.l.b16 %v2413
        %v2480 = vunpack.c.l.b16 %v2414
        %v2481 = vunpack.c.l.b16 %v2415
        %v2482 = vunpack.c.l.b16 %v2416
        %v2483 = vunpack.c.l.b16 %v2417
        %v2484 = vunpack.c.l.b16 %v2418
        %v2485 = vunpack.c.l.b16 %v2419
        %v2486 = vunpack.c.l.b16 %v2420
        %v2487 = vunpack.c.l.b16 %v2421
        %v2488 = vunpack.c.l.b16 %v2422
        %v2489 = vunpack.c.l.b16 %v2423
        %v2490 = vunpack.c.l.b16 %v2424
        %v2491 = vunpack.c.l.b16 %v2425
        %v2492 = vunpack.c.l.b16 %v2426
        %v2493 = vunpack.c.l.b16 %v2427
        %v2494 = vunpack.c.l.b16 %v2428
        %v2495 = vunpack.c.l.b16 %v2429
        %v2496 = vunpack.c.l.b16 %v2430
        %v2497 = vunpack.c.l.b16 %v2431
        %v2498 = vunpack.c.l.b16 %v2432
        %v2499 = vunpack.c.l.b16 %v2433
        %v2500 = vunpack.c.l.b16 %v2434
        %v2501 = vunpack.c.l.b16 %v2435
        %v2502 = vunpack.c.l.b16 %v2436
        %v2503 = vunpack.c.l.b16 %v2437
        %v2504 = vunpack.c.l.b16 %v2438
        %v2505 = vunpack.c.l.b16 %v2439
        %v2506 = vunpack.c.l.b16 %v2440
        %v2507 = vunpack.c.l.b16 %v2441
        %v2508 = vunpack.c.l.b16 %v2442
        %v2509 = vpack.c.b16 %v2478, %v2477
        %v2510 = vpack.c.b16 %v2480, %v2479
        %v2511 = vpack.c.b16 %v2482, %v2481
        %v2512 = vpack.c.b16 %v2484, %v2483
        %v2513 = vpack.c.b16 %v2486, %v2485
        %v2514 = vpack.c.b16 %v2488, %v2487
        %v2515 = vpack.c.b16 %v2490, %v2489
        %v2516 = vpack.c.b16 %v2492, %v2491
        %v2517 = vpack.c.b16 %v2494, %v2493
        %v2518 = vpack.c.b16 %v2496, %v2495
        %v2519 = vpack.c.b16 %v2498, %v2497
        %v2520 = vpack.c.b16 %v2500, %v2499
        %v2521 = vpack.c.b16 %v2502, %v2501
        %v2522 = vpack.c.b16 %v2504, %v2503
        %v2523 = vpack.c.b16 %v2506, %v2505
        %v2524 = vpack.c.b16 %v2508, %v2507
        %v2526 = vsel %vm1448, %v2509, 0
        %v2529 = vsel %vm1448, %v2510, 0
        %v2532 = vsel %vm1448, %v2511, 0
        %v2535 = vsel %vm1448, %v2512, 0
        %v2538 = vsel %vm1448, %v2513, 0
        %v2541 = vsel %vm1448, %v2514, 0
        %v2544 = vsel %vm1448, %v2515, 0
        %v2547 = vsel %vm1448, %v2516, 0
        %v2550 = vsel %vm1448, %v2517, 0
        %v2553 = vsel %vm1448, %v2518, 0
        %v2556 = vsel %vm1448, %v2519, 0
        %v2559 = vsel %vm1448, %v2520, 0
        %v2562 = vsel %vm1448, %v2521, 0
        %v2565 = vsel %vm1448, %v2522, 0
        %v2568 = vsel %vm1448, %v2523, 0
        %v2571 = vsel %vm1448, %v2524, 0
        %v2574 = vsel %vm1497, %v2444, 0
        %2576 = vmatprep.subr.bf16.mxu0 0
        %2577 = vmatpush1.bf16.msra.mxu0 0
        %2578 = vmatprep.subr.bf16.mxu0 0
        %2579 = vmatpush1.bf16.msra.mxu0 0
        %2580 = vmatprep.subr.bf16.mxu0 0
        %2581 = vmatpush1.bf16.msra.mxu0 0
        %2582 = vmatprep.subr.bf16.mxu0 0
        %2583 = vmatpush1.bf16.msra.mxu0 0
        %2584 = vmatprep.subr.bf16.mxu0 0
        %2585 = vmatpush1.bf16.msra.mxu0 0
        %2586 = vmatprep.subr.bf16.mxu0 0
        %2587 = vmatpush1.bf16.msra.mxu0 0
        %2588 = vmatprep.subr.bf16.mxu0 0
        %2589 = vmatpush1.bf16.msra.mxu0 0
        %2590 = vmatprep.subr.bf16.mxu0 0
        %2591 = vmatpush1.bf16.msra.mxu0 %v2574
        %2592 = vmatprep.subr.bf16.mxu0 0
        %2593 = vmatpush2.bf16.msra.mxu0 0
        %2594 = vmatprep.subr.bf16.mxu0 0
        %2595 = vmatpush2.bf16.msra.mxu0 0
        %2596 = vmatprep.subr.bf16.mxu0 0
        %2597 = vmatpush2.bf16.msra.mxu0 0
        %2598 = vmatprep.subr.bf16.mxu0 0
        %2599 = vmatpush2.bf16.msra.mxu0 0
        %2600 = vmatprep.subr.bf16.mxu0 0
        %2601 = vmatpush2.bf16.msra.mxu0 0
        %2602 = vmatprep.subr.bf16.mxu0 0
        %2603 = vmatpush2.bf16.msra.mxu0 0
        %2604 = vmatprep.subr.bf16.mxu0 0
        %2605 = vmatpush2.bf16.msra.mxu0 0
        %2606 = vmatprep.subr.bf16.mxu0 0
        %2607 = vmatpush2.bf16.msra.mxu0 0
        %2608 = vmatprep.mubr.bf16.mxu0 0
        %2609 = vmatmul.mubr.bf16.gmra.mxu0 %v2526
        %v2610 = vpop.f32.mrf.mxu0
        %v2611 = vadd.f32 0.0, %v2610
        %v2612 = vpop.f32.mrf.mxu0
        %v2613 = vpop.f32.mrf.mxu0
        %v2614 = vadd.f32 0.0, %v2613
        %v2615 = vpop.f32.mrf.mxu0
        %2616 = vmatprep.mubr.bf16.mxu0 0
        %2617 = vmatmul.mubr.bf16.gmra.mxu0 %v2529
        %v2618 = vpop.f32.mrf.mxu0
        %v2619 = vadd.f32 0.0, %v2618
        %v2620 = vpop.f32.mrf.mxu0
        %v2621 = vpop.f32.mrf.mxu0
        %v2622 = vadd.f32 0.0, %v2621
        %v2623 = vpop.f32.mrf.mxu0
        %2624 = vmatprep.mubr.bf16.mxu0 0
        %2625 = vmatmul.mubr.bf16.gmra.mxu0 %v2532
        %v2626 = vpop.f32.mrf.mxu0
        %v2627 = vadd.f32 0.0, %v2626
        %v2628 = vpop.f32.mrf.mxu0
        %v2629 = vpop.f32.mrf.mxu0
        %v2630 = vadd.f32 0.0, %v2629
        %v2631 = vpop.f32.mrf.mxu0
        %2632 = vmatprep.mubr.bf16.mxu0 0
        %2633 = vmatmul.mubr.bf16.gmra.mxu0 %v2535
        %v2634 = vpop.f32.mrf.mxu0
        %v2635 = vadd.f32 0.0, %v2634
        %v2636 = vpop.f32.mrf.mxu0
        %v2637 = vpop.f32.mrf.mxu0
        %v2638 = vadd.f32 0.0, %v2637
        %v2639 = vpop.f32.mrf.mxu0
        %2640 = vmatprep.mubr.bf16.mxu0 0
        %2641 = vmatmul.mubr.bf16.gmra.mxu0 %v2538
        %v2642 = vpop.f32.mrf.mxu0
        %v2643 = vadd.f32 0.0, %v2642
        %v2644 = vpop.f32.mrf.mxu0
        %v2645 = vpop.f32.mrf.mxu0
        %v2646 = vadd.f32 0.0, %v2645
        %v2647 = vpop.f32.mrf.mxu0
        %2648 = vmatprep.mubr.bf16.mxu0 0
        %2649 = vmatmul.mubr.bf16.gmra.mxu0 %v2541
        %v2650 = vpop.f32.mrf.mxu0
        %v2651 = vadd.f32 0.0, %v2650
        %v2652 = vpop.f32.mrf.mxu0
        %v2653 = vpop.f32.mrf.mxu0
        %v2654 = vadd.f32 0.0, %v2653
        %v2655 = vpop.f32.mrf.mxu0
        %2656 = vmatprep.mubr.bf16.mxu0 0
        %2657 = vmatmul.mubr.bf16.gmra.mxu0 %v2544
        %v2658 = vpop.f32.mrf.mxu0
        %v2659 = vadd.f32 0.0, %v2658
        %v2660 = vpop.f32.mrf.mxu0
        %v2661 = vpop.f32.mrf.mxu0
        %v2662 = vadd.f32 0.0, %v2661
        %v2663 = vpop.f32.mrf.mxu0
        %2664 = vmatprep.mubr.bf16.mxu0 0
        %2665 = vmatmul.mubr.bf16.gmra.mxu0 %v2547
        %v2666 = vpop.f32.mrf.mxu0
        %v2667 = vadd.f32 0.0, %v2666
        %v2668 = vpop.f32.mrf.mxu0
        %v2669 = vpop.f32.mrf.mxu0
        %v2670 = vadd.f32 0.0, %v2669
        %v2671 = vpop.f32.mrf.mxu0
        %2672 = vmatprep.mubr.bf16.mxu0 0
        %2673 = vmatmul.mubr.bf16.gmra.mxu0 %v2550
        %v2674 = vpop.f32.mrf.mxu0
        %v2675 = vadd.f32 0.0, %v2674
        %v2676 = vpop.f32.mrf.mxu0
        %v2677 = vpop.f32.mrf.mxu0
        %v2678 = vadd.f32 0.0, %v2677
        %v2679 = vpop.f32.mrf.mxu0
        %2680 = vmatprep.mubr.bf16.mxu0 0
        %2681 = vmatmul.mubr.bf16.gmra.mxu0 %v2553
        %v2682 = vpop.f32.mrf.mxu0
        %v2683 = vadd.f32 0.0, %v2682
        %v2684 = vpop.f32.mrf.mxu0
        %v2685 = vpop.f32.mrf.mxu0
        %v2686 = vadd.f32 0.0, %v2685
        %v2687 = vpop.f32.mrf.mxu0
        %2688 = vmatprep.mubr.bf16.mxu0 0
        %2689 = vmatmul.mubr.bf16.gmra.mxu0 %v2556
        %v2690 = vpop.f32.mrf.mxu0
        %v2691 = vadd.f32 0.0, %v2690
        %v2692 = vpop.f32.mrf.mxu0
        %v2693 = vpop.f32.mrf.mxu0
        %v2694 = vadd.f32 0.0, %v2693
        %v2695 = vpop.f32.mrf.mxu0
        %2696 = vmatprep.mubr.bf16.mxu0 0
        %2697 = vmatmul.mubr.bf16.gmra.mxu0 %v2559
        %v2698 = vpop.f32.mrf.mxu0
        %v2699 = vadd.f32 0.0, %v2698
        %v2700 = vpop.f32.mrf.mxu0
        %v2701 = vpop.f32.mrf.mxu0
        %v2702 = vadd.f32 0.0, %v2701
        %v2703 = vpop.f32.mrf.mxu0
        %2704 = vmatprep.mubr.bf16.mxu0 0
        %2705 = vmatmul.mubr.bf16.gmra.mxu0 %v2562
        %v2706 = vpop.f32.mrf.mxu0
        %v2707 = vadd.f32 0.0, %v2706
        %v2708 = vpop.f32.mrf.mxu0
        %v2709 = vpop.f32.mrf.mxu0
        %v2710 = vadd.f32 0.0, %v2709
        %v2711 = vpop.f32.mrf.mxu0
        %2712 = vmatprep.mubr.bf16.mxu0 0
        %2713 = vmatmul.mubr.bf16.gmra.mxu0 %v2565
        %v2714 = vpop.f32.mrf.mxu0
        %v2715 = vadd.f32 0.0, %v2714
        %v2716 = vpop.f32.mrf.mxu0
        %v2717 = vpop.f32.mrf.mxu0
        %v2718 = vadd.f32 0.0, %v2717
        %v2719 = vpop.f32.mrf.mxu0
        %2720 = vmatprep.mubr.bf16.mxu0 0
        %2721 = vmatmul.mubr.bf16.gmra.mxu0 %v2568
        %v2722 = vpop.f32.mrf.mxu0
        %v2723 = vadd.f32 0.0, %v2722
        %v2724 = vpop.f32.mrf.mxu0
        %v2725 = vpop.f32.mrf.mxu0
        %v2726 = vadd.f32 0.0, %v2725
        %v2727 = vpop.f32.mrf.mxu0
        %2728 = vmatprep.mubr.bf16.mxu0 0
        %2729 = vmatmul.mubr.bf16.gmra.mxu0 %v2571
        %v2730 = vpop.f32.mrf.mxu0
        %v2731 = vadd.f32 0.0, %v2730
        %v2732 = vpop.f32.mrf.mxu0
        %v2733 = vpop.f32.mrf.mxu0
        %v2734 = vadd.f32 0.0, %v2733
        %v2735 = vpop.f32.mrf.mxu0
        %2736 = vdwg.mxu0
        %v2737 = vadd.f32 %v2379, %v2611
        %v2738 = vadd.f32 %v2380, %v2614
        %v2739 = vadd.f32 %v2381, %v2619
        %v2740 = vadd.f32 %v2382, %v2622
        %v2741 = vadd.f32 %v2383, %v2627
        %v2742 = vadd.f32 %v2384, %v2630
        %v2743 = vadd.f32 %v2385, %v2635
        %v2744 = vadd.f32 %v2386, %v2638
        %v2745 = vadd.f32 %v2387, %v2643
        %v2746 = vadd.f32 %v2388, %v2646
        %v2747 = vadd.f32 %v2389, %v2651
        %v2748 = vadd.f32 %v2390, %v2654
        %v2749 = vadd.f32 %v2391, %v2659
        %v2750 = vadd.f32 %v2392, %v2662
        %v2751 = vadd.f32 %v2393, %v2667
        %v2752 = vadd.f32 %v2394, %v2670
        %v2753 = vadd.f32 %v2395, %v2675
        %v2754 = vadd.f32 %v2396, %v2678
        %v2755 = vadd.f32 %v2397, %v2683
        %v2756 = vadd.f32 %v2398, %v2686
        %v2757 = vadd.f32 %v2399, %v2691
        %v2758 = vadd.f32 %v2400, %v2694
        %v2759 = vadd.f32 %v2401, %v2699
        %v2760 = vadd.f32 %v2402, %v2702
        %v2761 = vadd.f32 %v2403, %v2707
        %v2762 = vadd.f32 %v2404, %v2710
        %v2763 = vadd.f32 %v2405, %v2715
        %v2764 = vadd.f32 %v2406, %v2718
        %v2765 = vadd.f32 %v2407, %v2723
        %v2766 = vadd.f32 %v2408, %v2726
        %v2767 = vadd.f32 %v2409, %v2731
        %v2768 = vadd.f32 %v2410, %v2734
        %v2769 = vld [vmem:[%s847] sm:$0xf]
        %v2770 = vld [vmem:[%s847 + $0x4] sm:$0xf]
        %v2771 = vld [vmem:[%s847 + $0x8] sm:$0x1]
        %v2772 = vld [vmem:[%s847 + $0xc] sm:$0xf]
        %v2773 = vld [vmem:[%s847 + $0x10] sm:$0xf]
        %v2774 = vld [vmem:[%s847 + $0x14] sm:$0x1]
        %v2775 = vld [vmem:[%s847 + $0x18] sm:$0xf]
        %v2776 = vld [vmem:[%s847 + $0x1c] sm:$0xf]
        %v2777 = vld [vmem:[%s847 + $0x20] sm:$0x1]
        %v2778 = vld [vmem:[%s847 + $0x24] sm:$0xf]
        %v2779 = vld [vmem:[%s847 + $0x28] sm:$0xf]
        %v2780 = vld [vmem:[%s847 + $0x2c] sm:$0x1]
        %v2781 = vld [vmem:[%s847 + $0x30] sm:$0xf]
        %v2782 = vld [vmem:[%s847 + $0x34] sm:$0xf]
        %v2783 = vld [vmem:[%s847 + $0x38] sm:$0x1]
        %v2784 = vld [vmem:[%s847 + $0x3c] sm:$0xf]
        %v2785 = vld [vmem:[%s847 + $0x40] sm:$0xf]
        %v2786 = vld [vmem:[%s847 + $0x44] sm:$0x1]
        %v2787 = vld [vmem:[%s847 + $0x48] sm:$0xf]
        %v2788 = vld [vmem:[%s847 + $0x4c] sm:$0xf]
        %v2789 = vld [vmem:[%s847 + $0x50] sm:$0x1]
        %v2790 = vld [vmem:[%s847 + $0x54] sm:$0xf]
        %v2791 = vld [vmem:[%s847 + $0x58] sm:$0xf]
        %v2792 = vld [vmem:[%s847 + $0x5c] sm:$0x1]
        %v2793 = vld [vmem:[%s847 + $0x60] sm:$0xf]
        %v2794 = vld [vmem:[%s847 + $0x64] sm:$0xf]
        %v2795 = vld [vmem:[%s847 + $0x68] sm:$0x1]
        %v2796 = vld [vmem:[%s847 + $0x6c] sm:$0xf]
        %v2797 = vld [vmem:[%s847 + $0x70] sm:$0xf]
        %v2798 = vld [vmem:[%s847 + $0x74] sm:$0x1]
        %v2799 = vld [vmem:[%s847 + $0x78] sm:$0xf]
        %v2800 = vld [vmem:[%s847 + $0x7c] sm:$0xf]
        %v2801 = vld [vmem:[%s847 + $0x80] sm:$0x1]
        %v2802 = vld [vmem:[%s847 + $0x84] sm:$0xf]
        %v2803 = vld [vmem:[%s847 + $0x88] sm:$0xf]
        %v2804 = vld [vmem:[%s847 + $0x8c] sm:$0x1]
        %v2805 = vld [vmem:[%s847 + $0x90] sm:$0xf]
        %v2806 = vld [vmem:[%s847 + $0x94] sm:$0xf]
        %v2807 = vld [vmem:[%s847 + $0x98] sm:$0x1]
        %v2808 = vld [vmem:[%s847 + $0x9c] sm:$0xf]
        %v2809 = vld [vmem:[%s847 + $0xa0] sm:$0xf]
        %v2810 = vld [vmem:[%s847 + $0xa4] sm:$0x1]
        %v2811 = vld [vmem:[%s847 + $0xa8] sm:$0xf]
        %v2812 = vld [vmem:[%s847 + $0xac] sm:$0xf]
        %v2813 = vld [vmem:[%s847 + $0xb0] sm:$0x1]
        %v2814 = vld [vmem:[%s847 + $0xb4] sm:$0xf]
        %v2815 = vld [vmem:[%s847 + $0xb8] sm:$0xf]
        %v2816 = vld [vmem:[%s847 + $0xbc] sm:$0x1]
        %v2818 = vshrl.u32 %v2769, 16
        %v2820 = vrot.slane %v2818, 4
        %v2821 = vshll.u32 %v2769, 16
        %v2823 = vrot.slane %v2821, 5
        %v2824 = vor.u32 %v2820, %v2823
        %v2825 = vrot.slane %v2824, 4
        %v2827 = vshll.u32 %v2770, 16
        %v2829 = vrot.slane %v2827, 5
        %v2830 = vsel %vm1013, %v2825, %v2829
        %v2831 = vshrl.u32 %v2770, 16
        %v2833 = vrot.slane %v2831, 4
        %v2834 = vor.u32 %v2833, %v2829
        %v2835 = vrot.slane %v2834, 4
        %v2837 = vshll.u32 %v2771, 16
        %v2839 = vrot.slane %v2837, 5
        %v2840 = vsel %vm1013, %v2835, %v2839
        %v2842 = vshrl.u32 %v2772, 16
        %v2844 = vrot.slane %v2842, 4
        %v2845 = vshll.u32 %v2772, 16
        %v2847 = vrot.slane %v2845, 5
        %v2848 = vor.u32 %v2844, %v2847
        %v2849 = vrot.slane %v2848, 4
        %v2851 = vshll.u32 %v2773, 16
        %v2853 = vrot.slane %v2851, 5
        %v2854 = vsel %vm1013, %v2849, %v2853
        %v2855 = vshrl.u32 %v2773, 16
        %v2857 = vrot.slane %v2855, 4
        %v2858 = vor.u32 %v2857, %v2853
        %v2859 = vrot.slane %v2858, 4
        %v2861 = vshll.u32 %v2774, 16
        %v2863 = vrot.slane %v2861, 5
        %v2864 = vsel %vm1013, %v2859, %v2863
        %v2866 = vshrl.u32 %v2775, 16
        %v2868 = vrot.slane %v2866, 4
        %v2869 = vshll.u32 %v2775, 16
        %v2871 = vrot.slane %v2869, 5
        %v2872 = vor.u32 %v2868, %v2871
        %v2873 = vrot.slane %v2872, 4
        %v2875 = vshll.u32 %v2776, 16
        %v2877 = vrot.slane %v2875, 5
        %v2878 = vsel %vm1013, %v2873, %v2877
        %v2879 = vshrl.u32 %v2776, 16
        %v2881 = vrot.slane %v2879, 4
        %v2882 = vor.u32 %v2881, %v2877
        %v2883 = vrot.slane %v2882, 4
        %v2885 = vshll.u32 %v2777, 16
        %v2887 = vrot.slane %v2885, 5
        %v2888 = vsel %vm1013, %v2883, %v2887
        %v2890 = vshrl.u32 %v2778, 16
        %v2892 = vrot.slane %v2890, 4
        %v2893 = vshll.u32 %v2778, 16
        %v2895 = vrot.slane %v2893, 5
        %v2896 = vor.u32 %v2892, %v2895
        %v2897 = vrot.slane %v2896, 4
        %v2899 = vshll.u32 %v2779, 16
        %v2901 = vrot.slane %v2899, 5
        %v2902 = vsel %vm1013, %v2897, %v2901
        %v2903 = vshrl.u32 %v2779, 16
        %v2905 = vrot.slane %v2903, 4
        %v2906 = vor.u32 %v2905, %v2901
        %v2907 = vrot.slane %v2906, 4
        %v2909 = vshll.u32 %v2780, 16
        %v2911 = vrot.slane %v2909, 5
        %v2912 = vsel %vm1013, %v2907, %v2911
        %v2914 = vshrl.u32 %v2781, 16
        %v2916 = vrot.slane %v2914, 4
        %v2917 = vshll.u32 %v2781, 16
        %v2919 = vrot.slane %v2917, 5
        %v2920 = vor.u32 %v2916, %v2919
        %v2921 = vrot.slane %v2920, 4
        %v2923 = vshll.u32 %v2782, 16
        %v2925 = vrot.slane %v2923, 5
        %v2926 = vsel %vm1013, %v2921, %v2925
        %v2927 = vshrl.u32 %v2782, 16
        %v2929 = vrot.slane %v2927, 4
        %v2930 = vor.u32 %v2929, %v2925
        %v2931 = vrot.slane %v2930, 4
        %v2933 = vshll.u32 %v2783, 16
        %v2935 = vrot.slane %v2933, 5
        %v2936 = vsel %vm1013, %v2931, %v2935
        %v2938 = vshrl.u32 %v2784, 16
        %v2940 = vrot.slane %v2938, 4
        %v2941 = vshll.u32 %v2784, 16
        %v2943 = vrot.slane %v2941, 5
        %v2944 = vor.u32 %v2940, %v2943
        %v2945 = vrot.slane %v2944, 4
        %v2947 = vshll.u32 %v2785, 16
        %v2949 = vrot.slane %v2947, 5
        %v2950 = vsel %vm1013, %v2945, %v2949
        %v2951 = vshrl.u32 %v2785, 16
        %v2953 = vrot.slane %v2951, 4
        %v2954 = vor.u32 %v2953, %v2949
        %v2955 = vrot.slane %v2954, 4
        %v2957 = vshll.u32 %v2786, 16
        %v2959 = vrot.slane %v2957, 5
        %v2960 = vsel %vm1013, %v2955, %v2959
        %v2962 = vshrl.u32 %v2787, 16
        %v2964 = vrot.slane %v2962, 4
        %v2965 = vshll.u32 %v2787, 16
        %v2967 = vrot.slane %v2965, 5
        %v2968 = vor.u32 %v2964, %v2967
        %v2969 = vrot.slane %v2968, 4
        %v2971 = vshll.u32 %v2788, 16
        %v2973 = vrot.slane %v2971, 5
        %v2974 = vsel %vm1013, %v2969, %v2973
        %v2975 = vshrl.u32 %v2788, 16
        %v2977 = vrot.slane %v2975, 4
        %v2978 = vor.u32 %v2977, %v2973
        %v2979 = vrot.slane %v2978, 4
        %v2981 = vshll.u32 %v2789, 16
        %v2983 = vrot.slane %v2981, 5
        %v2984 = vsel %vm1013, %v2979, %v2983
        %v2986 = vshrl.u32 %v2790, 16
        %v2988 = vrot.slane %v2986, 4
        %v2989 = vshll.u32 %v2790, 16
        %v2991 = vrot.slane %v2989, 5
        %v2992 = vor.u32 %v2988, %v2991
        %v2993 = vrot.slane %v2992, 4
        %v2995 = vshll.u32 %v2791, 16
        %v2997 = vrot.slane %v2995, 5
        %v2998 = vsel %vm1013, %v2993, %v2997
        %v2999 = vshrl.u32 %v2791, 16
        %v3001 = vrot.slane %v2999, 4
        %v3002 = vor.u32 %v3001, %v2997
        %v3003 = vrot.slane %v3002, 4
        %v3005 = vshll.u32 %v2792, 16
        %v3007 = vrot.slane %v3005, 5
        %v3008 = vsel %vm1013, %v3003, %v3007
        %v3010 = vshrl.u32 %v2793, 16
        %v3012 = vrot.slane %v3010, 4
        %v3013 = vshll.u32 %v2793, 16
        %v3015 = vrot.slane %v3013, 5
        %v3016 = vor.u32 %v3012, %v3015
        %v3017 = vrot.slane %v3016, 4
        %v3019 = vshll.u32 %v2794, 16
        %v3021 = vrot.slane %v3019, 5
        %v3022 = vsel %vm1013, %v3017, %v3021
        %v3023 = vshrl.u32 %v2794, 16
        %v3025 = vrot.slane %v3023, 4
        %v3026 = vor.u32 %v3025, %v3021
        %v3027 = vrot.slane %v3026, 4
        %v3029 = vshll.u32 %v2795, 16
        %v3031 = vrot.slane %v3029, 5
        %v3032 = vsel %vm1013, %v3027, %v3031
        %v3034 = vshrl.u32 %v2796, 16
        %v3036 = vrot.slane %v3034, 4
        %v3037 = vshll.u32 %v2796, 16
        %v3039 = vrot.slane %v3037, 5
        %v3040 = vor.u32 %v3036, %v3039
        %v3041 = vrot.slane %v3040, 4
        %v3043 = vshll.u32 %v2797, 16
        %v3045 = vrot.slane %v3043, 5
        %v3046 = vsel %vm1013, %v3041, %v3045
        %v3047 = vshrl.u32 %v2797, 16
        %v3049 = vrot.slane %v3047, 4
        %v3050 = vor.u32 %v3049, %v3045
        %v3051 = vrot.slane %v3050, 4
        %v3053 = vshll.u32 %v2798, 16
        %v3055 = vrot.slane %v3053, 5
        %v3056 = vsel %vm1013, %v3051, %v3055
        %v3058 = vshrl.u32 %v2799, 16
        %v3060 = vrot.slane %v3058, 4
        %v3061 = vshll.u32 %v2799, 16
        %v3063 = vrot.slane %v3061, 5
        %v3064 = vor.u32 %v3060, %v3063
        %v3065 = vrot.slane %v3064, 4
        %v3067 = vshll.u32 %v2800, 16
        %v3069 = vrot.slane %v3067, 5
        %v3070 = vsel %vm1013, %v3065, %v3069
        %v3071 = vshrl.u32 %v2800, 16
        %v3073 = vrot.slane %v3071, 4
        %v3074 = vor.u32 %v3073, %v3069
        %v3075 = vrot.slane %v3074, 4
        %v3077 = vshll.u32 %v2801, 16
        %v3079 = vrot.slane %v3077, 5
        %v3080 = vsel %vm1013, %v3075, %v3079
        %v3082 = vshrl.u32 %v2802, 16
        %v3084 = vrot.slane %v3082, 4
        %v3085 = vshll.u32 %v2802, 16
        %v3087 = vrot.slane %v3085, 5
        %v3088 = vor.u32 %v3084, %v3087
        %v3089 = vrot.slane %v3088, 4
        %v3091 = vshll.u32 %v2803, 16
        %v3093 = vrot.slane %v3091, 5
        %v3094 = vsel %vm1013, %v3089, %v3093
        %v3095 = vshrl.u32 %v2803, 16
        %v3097 = vrot.slane %v3095, 4
        %v3098 = vor.u32 %v3097, %v3093
        %v3099 = vrot.slane %v3098, 4
        %v3101 = vshll.u32 %v2804, 16
        %v3103 = vrot.slane %v3101, 5
        %v3104 = vsel %vm1013, %v3099, %v3103
        %v3106 = vshrl.u32 %v2805, 16
        %v3108 = vrot.slane %v3106, 4
        %v3109 = vshll.u32 %v2805, 16
        %v3111 = vrot.slane %v3109, 5
        %v3112 = vor.u32 %v3108, %v3111
        %v3113 = vrot.slane %v3112, 4
        %v3115 = vshll.u32 %v2806, 16
        %v3117 = vrot.slane %v3115, 5
        %v3118 = vsel %vm1013, %v3113, %v3117
        %v3119 = vshrl.u32 %v2806, 16
        %v3121 = vrot.slane %v3119, 4
        %v3122 = vor.u32 %v3121, %v3117
        %v3123 = vrot.slane %v3122, 4
        %v3125 = vshll.u32 %v2807, 16
        %v3127 = vrot.slane %v3125, 5
        %v3128 = vsel %vm1013, %v3123, %v3127
        %v3130 = vshrl.u32 %v2808, 16
        %v3132 = vrot.slane %v3130, 4
        %v3133 = vshll.u32 %v2808, 16
        %v3135 = vrot.slane %v3133, 5
        %v3136 = vor.u32 %v3132, %v3135
        %v3137 = vrot.slane %v3136, 4
        %v3139 = vshll.u32 %v2809, 16
        %v3141 = vrot.slane %v3139, 5
        %v3142 = vsel %vm1013, %v3137, %v3141
        %v3143 = vshrl.u32 %v2809, 16
        %v3145 = vrot.slane %v3143, 4
        %v3146 = vor.u32 %v3145, %v3141
        %v3147 = vrot.slane %v3146, 4
        %v3149 = vshll.u32 %v2810, 16
        %v3151 = vrot.slane %v3149, 5
        %v3152 = vsel %vm1013, %v3147, %v3151
        %v3154 = vshrl.u32 %v2811, 16
        %v3156 = vrot.slane %v3154, 4
        %v3157 = vshll.u32 %v2811, 16
        %v3159 = vrot.slane %v3157, 5
        %v3160 = vor.u32 %v3156, %v3159
        %v3161 = vrot.slane %v3160, 4
        %v3163 = vshll.u32 %v2812, 16
        %v3165 = vrot.slane %v3163, 5
        %v3166 = vsel %vm1013, %v3161, %v3165
        %v3167 = vshrl.u32 %v2812, 16
        %v3169 = vrot.slane %v3167, 4
        %v3170 = vor.u32 %v3169, %v3165
        %v3171 = vrot.slane %v3170, 4
        %v3173 = vshll.u32 %v2813, 16
        %v3175 = vrot.slane %v3173, 5
        %v3176 = vsel %vm1013, %v3171, %v3175
        %v3178 = vshrl.u32 %v2814, 16
        %v3180 = vrot.slane %v3178, 4
        %v3181 = vshll.u32 %v2814, 16
        %v3183 = vrot.slane %v3181, 5
        %v3184 = vor.u32 %v3180, %v3183
        %v3185 = vrot.slane %v3184, 4
        %v3187 = vshll.u32 %v2815, 16
        %v3189 = vrot.slane %v3187, 5
        %v3190 = vsel %vm1013, %v3185, %v3189
        %v3191 = vshrl.u32 %v2815, 16
        %v3193 = vrot.slane %v3191, 4
        %v3194 = vor.u32 %v3193, %v3189
        %v3195 = vrot.slane %v3194, 4
        %v3197 = vshll.u32 %v2816, 16
        %v3199 = vrot.slane %v3197, 5
        %v3200 = vsel %vm1013, %v3195, %v3199
        %s3201 = scalar_lea.vmem %s1, 8
        %v3202 = vld [vmem:[%s3201] sm:$0x3]
        %v3203 = vunpack.c.l.b16 %v2830
        %v3204 = vunpack.c.l.b16 %v2840
        %v3205 = vunpack.c.l.b16 %v2854
        %v3206 = vunpack.c.l.b16 %v2864
        %v3207 = vunpack.c.l.b16 %v2878
        %v3208 = vunpack.c.l.b16 %v2888
        %v3209 = vunpack.c.l.b16 %v2902
        %v3210 = vunpack.c.l.b16 %v2912
        %v3211 = vunpack.c.l.b16 %v2926
        %v3212 = vunpack.c.l.b16 %v2936
        %v3213 = vunpack.c.l.b16 %v2950
        %v3214 = vunpack.c.l.b16 %v2960
        %v3215 = vunpack.c.l.b16 %v2974
        %v3216 = vunpack.c.l.b16 %v2984
        %v3217 = vunpack.c.l.b16 %v2998
        %v3218 = vunpack.c.l.b16 %v3008
        %v3219 = vunpack.c.l.b16 %v3022
        %v3220 = vunpack.c.l.b16 %v3032
        %v3221 = vunpack.c.l.b16 %v3046
        %v3222 = vunpack.c.l.b16 %v3056
        %v3223 = vunpack.c.l.b16 %v3070
        %v3224 = vunpack.c.l.b16 %v3080
        %v3225 = vunpack.c.l.b16 %v3094
        %v3226 = vunpack.c.l.b16 %v3104
        %v3227 = vunpack.c.l.b16 %v3118
        %v3228 = vunpack.c.l.b16 %v3128
        %v3229 = vunpack.c.l.b16 %v3142
        %v3230 = vunpack.c.l.b16 %v3152
        %v3231 = vunpack.c.l.b16 %v3166
        %v3232 = vunpack.c.l.b16 %v3176
        %v3233 = vunpack.c.l.b16 %v3190
        %v3234 = vunpack.c.l.b16 %v3200
        %v3235 = vpack.c.b16 %v3204, %v3203
        %v3236 = vpack.c.b16 %v3206, %v3205
        %v3237 = vpack.c.b16 %v3208, %v3207
        %v3238 = vpack.c.b16 %v3210, %v3209
        %v3239 = vpack.c.b16 %v3212, %v3211
        %v3240 = vpack.c.b16 %v3214, %v3213
        %v3241 = vpack.c.b16 %v3216, %v3215
        %v3242 = vpack.c.b16 %v3218, %v3217
        %v3243 = vpack.c.b16 %v3220, %v3219
        %v3244 = vpack.c.b16 %v3222, %v3221
        %v3245 = vpack.c.b16 %v3224, %v3223
        %v3246 = vpack.c.b16 %v3226, %v3225
        %v3247 = vpack.c.b16 %v3228, %v3227
        %v3248 = vpack.c.b16 %v3230, %v3229
        %v3249 = vpack.c.b16 %v3232, %v3231
        %v3250 = vpack.c.b16 %v3234, %v3233
        %v3252 = vsel %vm1448, %v3235, 0
        %v3255 = vsel %vm1448, %v3236, 0
        %v3258 = vsel %vm1448, %v3237, 0
        %v3261 = vsel %vm1448, %v3238, 0
        %v3264 = vsel %vm1448, %v3239, 0
        %v3267 = vsel %vm1448, %v3240, 0
        %v3270 = vsel %vm1448, %v3241, 0
        %v3273 = vsel %vm1448, %v3242, 0
        %v3276 = vsel %vm1448, %v3243, 0
        %v3279 = vsel %vm1448, %v3244, 0
        %v3282 = vsel %vm1448, %v3245, 0
        %v3285 = vsel %vm1448, %v3246, 0
        %v3288 = vsel %vm1448, %v3247, 0
        %v3291 = vsel %vm1448, %v3248, 0
        %v3294 = vsel %vm1448, %v3249, 0
        %v3297 = vsel %vm1448, %v3250, 0
        %v3300 = vsel %vm1497, %v3202, 0
        %3302 = vmatprep.subr.bf16.mxu0 0
        %3303 = vmatpush1.bf16.msra.mxu0 0
        %3304 = vmatprep.subr.bf16.mxu0 0
        %3305 = vmatpush1.bf16.msra.mxu0 0
        %3306 = vmatprep.subr.bf16.mxu0 0
        %3307 = vmatpush1.bf16.msra.mxu0 0
        %3308 = vmatprep.subr.bf16.mxu0 0
        %3309 = vmatpush1.bf16.msra.mxu0 0
        %3310 = vmatprep.subr.bf16.mxu0 0
        %3311 = vmatpush1.bf16.msra.mxu0 0
        %3312 = vmatprep.subr.bf16.mxu0 0
        %3313 = vmatpush1.bf16.msra.mxu0 0
        %3314 = vmatprep.subr.bf16.mxu0 0
        %3315 = vmatpush1.bf16.msra.mxu0 0
        %3316 = vmatprep.subr.bf16.mxu0 0
        %3317 = vmatpush1.bf16.msra.mxu0 %v3300
        %3318 = vmatprep.subr.bf16.mxu0 0
        %3319 = vmatpush2.bf16.msra.mxu0 0
        %3320 = vmatprep.subr.bf16.mxu0 0
        %3321 = vmatpush2.bf16.msra.mxu0 0
        %3322 = vmatprep.subr.bf16.mxu0 0
        %3323 = vmatpush2.bf16.msra.mxu0 0
        %3324 = vmatprep.subr.bf16.mxu0 0
        %3325 = vmatpush2.bf16.msra.mxu0 0
        %3326 = vmatprep.subr.bf16.mxu0 0
        %3327 = vmatpush2.bf16.msra.mxu0 0
        %3328 = vmatprep.subr.bf16.mxu0 0
        %3329 = vmatpush2.bf16.msra.mxu0 0
        %3330 = vmatprep.subr.bf16.mxu0 0
        %3331 = vmatpush2.bf16.msra.mxu0 0
        %3332 = vmatprep.subr.bf16.mxu0 0
        %3333 = vmatpush2.bf16.msra.mxu0 0
        %3334 = vmatprep.mubr.bf16.mxu0 0
        %3335 = vmatmul.mubr.bf16.gmra.mxu0 %v3252
        %v3336 = vpop.f32.mrf.mxu0
        %v3337 = vadd.f32 0.0, %v3336
        %v3338 = vpop.f32.mrf.mxu0
        %v3339 = vpop.f32.mrf.mxu0
        %v3340 = vadd.f32 0.0, %v3339
        %v3341 = vpop.f32.mrf.mxu0
        %3342 = vmatprep.mubr.bf16.mxu0 0
        %3343 = vmatmul.mubr.bf16.gmra.mxu0 %v3255
        %v3344 = vpop.f32.mrf.mxu0
        %v3345 = vadd.f32 0.0, %v3344
        %v3346 = vpop.f32.mrf.mxu0
        %v3347 = vpop.f32.mrf.mxu0
        %v3348 = vadd.f32 0.0, %v3347
        %v3349 = vpop.f32.mrf.mxu0
        %3350 = vmatprep.mubr.bf16.mxu0 0
        %3351 = vmatmul.mubr.bf16.gmra.mxu0 %v3258
        %v3352 = vpop.f32.mrf.mxu0
        %v3353 = vadd.f32 0.0, %v3352
        %v3354 = vpop.f32.mrf.mxu0
        %v3355 = vpop.f32.mrf.mxu0
        %v3356 = vadd.f32 0.0, %v3355
        %v3357 = vpop.f32.mrf.mxu0
        %3358 = vmatprep.mubr.bf16.mxu0 0
        %3359 = vmatmul.mubr.bf16.gmra.mxu0 %v3261
        %v3360 = vpop.f32.mrf.mxu0
        %v3361 = vadd.f32 0.0, %v3360
        %v3362 = vpop.f32.mrf.mxu0
        %v3363 = vpop.f32.mrf.mxu0
        %v3364 = vadd.f32 0.0, %v3363
        %v3365 = vpop.f32.mrf.mxu0
        %3366 = vmatprep.mubr.bf16.mxu0 0
        %3367 = vmatmul.mubr.bf16.gmra.mxu0 %v3264
        %v3368 = vpop.f32.mrf.mxu0
        %v3369 = vadd.f32 0.0, %v3368
        %v3370 = vpop.f32.mrf.mxu0
        %v3371 = vpop.f32.mrf.mxu0
        %v3372 = vadd.f32 0.0, %v3371
        %v3373 = vpop.f32.mrf.mxu0
        %3374 = vmatprep.mubr.bf16.mxu0 0
        %3375 = vmatmul.mubr.bf16.gmra.mxu0 %v3267
        %v3376 = vpop.f32.mrf.mxu0
        %v3377 = vadd.f32 0.0, %v3376
        %v3378 = vpop.f32.mrf.mxu0
        %v3379 = vpop.f32.mrf.mxu0
        %v3380 = vadd.f32 0.0, %v3379
        %v3381 = vpop.f32.mrf.mxu0
        %3382 = vmatprep.mubr.bf16.mxu0 0
        %3383 = vmatmul.mubr.bf16.gmra.mxu0 %v3270
        %v3384 = vpop.f32.mrf.mxu0
        %v3385 = vadd.f32 0.0, %v3384
        %v3386 = vpop.f32.mrf.mxu0
        %v3387 = vpop.f32.mrf.mxu0
        %v3388 = vadd.f32 0.0, %v3387
        %v3389 = vpop.f32.mrf.mxu0
        %3390 = vmatprep.mubr.bf16.mxu0 0
        %3391 = vmatmul.mubr.bf16.gmra.mxu0 %v3273
        %v3392 = vpop.f32.mrf.mxu0
        %v3393 = vadd.f32 0.0, %v3392
        %v3394 = vpop.f32.mrf.mxu0
        %v3395 = vpop.f32.mrf.mxu0
        %v3396 = vadd.f32 0.0, %v3395
        %v3397 = vpop.f32.mrf.mxu0
        %3398 = vmatprep.mubr.bf16.mxu0 0
        %3399 = vmatmul.mubr.bf16.gmra.mxu0 %v3276
        %v3400 = vpop.f32.mrf.mxu0
        %v3401 = vadd.f32 0.0, %v3400
        %v3402 = vpop.f32.mrf.mxu0
        %v3403 = vpop.f32.mrf.mxu0
        %v3404 = vadd.f32 0.0, %v3403
        %v3405 = vpop.f32.mrf.mxu0
        %3406 = vmatprep.mubr.bf16.mxu0 0
        %3407 = vmatmul.mubr.bf16.gmra.mxu0 %v3279
        %v3408 = vpop.f32.mrf.mxu0
        %v3409 = vadd.f32 0.0, %v3408
        %v3410 = vpop.f32.mrf.mxu0
        %v3411 = vpop.f32.mrf.mxu0
        %v3412 = vadd.f32 0.0, %v3411
        %v3413 = vpop.f32.mrf.mxu0
        %3414 = vmatprep.mubr.bf16.mxu0 0
        %3415 = vmatmul.mubr.bf16.gmra.mxu0 %v3282
        %v3416 = vpop.f32.mrf.mxu0
        %v3417 = vadd.f32 0.0, %v3416
        %v3418 = vpop.f32.mrf.mxu0
        %v3419 = vpop.f32.mrf.mxu0
        %v3420 = vadd.f32 0.0, %v3419
        %v3421 = vpop.f32.mrf.mxu0
        %3422 = vmatprep.mubr.bf16.mxu0 0
        %3423 = vmatmul.mubr.bf16.gmra.mxu0 %v3285
        %v3424 = vpop.f32.mrf.mxu0
        %v3425 = vadd.f32 0.0, %v3424
        %v3426 = vpop.f32.mrf.mxu0
        %v3427 = vpop.f32.mrf.mxu0
        %v3428 = vadd.f32 0.0, %v3427
        %v3429 = vpop.f32.mrf.mxu0
        %3430 = vmatprep.mubr.bf16.mxu0 0
        %3431 = vmatmul.mubr.bf16.gmra.mxu0 %v3288
        %v3432 = vpop.f32.mrf.mxu0
        %v3433 = vadd.f32 0.0, %v3432
        %v3434 = vpop.f32.mrf.mxu0
        %v3435 = vpop.f32.mrf.mxu0
        %v3436 = vadd.f32 0.0, %v3435
        %v3437 = vpop.f32.mrf.mxu0
        %3438 = vmatprep.mubr.bf16.mxu0 0
        %3439 = vmatmul.mubr.bf16.gmra.mxu0 %v3291
        %v3440 = vpop.f32.mrf.mxu0
        %v3441 = vadd.f32 0.0, %v3440
        %v3442 = vpop.f32.mrf.mxu0
        %v3443 = vpop.f32.mrf.mxu0
        %v3444 = vadd.f32 0.0, %v3443
        %v3445 = vpop.f32.mrf.mxu0
        %3446 = vmatprep.mubr.bf16.mxu0 0
        %3447 = vmatmul.mubr.bf16.gmra.mxu0 %v3294
        %v3448 = vpop.f32.mrf.mxu0
        %v3449 = vadd.f32 0.0, %v3448
        %v3450 = vpop.f32.mrf.mxu0
        %v3451 = vpop.f32.mrf.mxu0
        %v3452 = vadd.f32 0.0, %v3451
        %v3453 = vpop.f32.mrf.mxu0
        %3454 = vmatprep.mubr.bf16.mxu0 0
        %3455 = vmatmul.mubr.bf16.gmra.mxu0 %v3297
        %v3456 = vpop.f32.mrf.mxu0
        %v3457 = vadd.f32 0.0, %v3456
        %v3458 = vpop.f32.mrf.mxu0
        %v3459 = vpop.f32.mrf.mxu0
        %v3460 = vadd.f32 0.0, %v3459
        %v3461 = vpop.f32.mrf.mxu0
        %3462 = vdwg.mxu0
        %v3463 = vadd.f32 %v2737, %v3337
        %v3464 = vadd.f32 %v2738, %v3340
        %v3465 = vadd.f32 %v2739, %v3345
        %v3466 = vadd.f32 %v2740, %v3348
        %v3467 = vadd.f32 %v2741, %v3353
        %v3468 = vadd.f32 %v2742, %v3356
        %v3469 = vadd.f32 %v2743, %v3361
        %v3470 = vadd.f32 %v2744, %v3364
        %v3471 = vadd.f32 %v2745, %v3369
        %v3472 = vadd.f32 %v2746, %v3372
        %v3473 = vadd.f32 %v2747, %v3377
        %v3474 = vadd.f32 %v2748, %v3380
        %v3475 = vadd.f32 %v2749, %v3385
        %v3476 = vadd.f32 %v2750, %v3388
        %v3477 = vadd.f32 %v2751, %v3393
        %v3478 = vadd.f32 %v2752, %v3396
        %v3479 = vadd.f32 %v2753, %v3401
        %v3480 = vadd.f32 %v2754, %v3404
        %v3481 = vadd.f32 %v2755, %v3409
        %v3482 = vadd.f32 %v2756, %v3412
        %v3483 = vadd.f32 %v2757, %v3417
        %v3484 = vadd.f32 %v2758, %v3420
        %v3485 = vadd.f32 %v2759, %v3425
        %v3486 = vadd.f32 %v2760, %v3428
        %v3487 = vadd.f32 %v2761, %v3433
        %v3488 = vadd.f32 %v2762, %v3436
        %v3489 = vadd.f32 %v2763, %v3441
        %v3490 = vadd.f32 %v2764, %v3444
        %v3491 = vadd.f32 %v2765, %v3449
        %v3492 = vadd.f32 %v2766, %v3452
        %v3493 = vadd.f32 %v2767, %v3457
        %v3494 = vadd.f32 %v2768, %v3460
        %v3495 = vld [vmem:[%s847] sm:$0xe]
        %v3496 = vld [vmem:[%s847 + $0xc] sm:$0xe]
        %v3497 = vld [vmem:[%s847 + $0x18] sm:$0xe]
        %v3498 = vld [vmem:[%s847 + $0x24] sm:$0xe]
        %v3499 = vld [vmem:[%s847 + $0x30] sm:$0xe]
        %v3500 = vld [vmem:[%s847 + $0x3c] sm:$0xe]
        %v3501 = vld [vmem:[%s847 + $0x48] sm:$0xe]
        %v3502 = vld [vmem:[%s847 + $0x54] sm:$0xe]
        %v3503 = vld [vmem:[%s847 + $0x60] sm:$0xe]
        %v3504 = vld [vmem:[%s847 + $0x6c] sm:$0xe]
        %v3505 = vld [vmem:[%s847 + $0x78] sm:$0xe]
        %v3506 = vld [vmem:[%s847 + $0x84] sm:$0xe]
        %v3507 = vld [vmem:[%s847 + $0x90] sm:$0xe]
        %v3508 = vld [vmem:[%s847 + $0x9c] sm:$0xe]
        %v3509 = vld [vmem:[%s847 + $0xa8] sm:$0xe]
        %v3510 = vld [vmem:[%s847 + $0xb4] sm:$0xe]
        %v3559 = vrot.slane %v3495, 5
        %v3560 = vrot.slane %v3559, 4
        %v3561 = vrot.slane %v2770, 5
        %v3562 = vsel %vm2004, %v3560, %v3561
        %v3563 = vrot.slane %v3561, 4
        %v3564 = vrot.slane %v2771, 5
        %v3565 = vsel %vm2004, %v3563, %v3564
        %v3566 = vrot.slane %v3496, 5
        %v3567 = vrot.slane %v3566, 4
        %v3568 = vrot.slane %v2773, 5
        %v3569 = vsel %vm2004, %v3567, %v3568
        %v3570 = vrot.slane %v3568, 4
        %v3571 = vrot.slane %v2774, 5
        %v3572 = vsel %vm2004, %v3570, %v3571
        %v3573 = vrot.slane %v3497, 5
        %v3574 = vrot.slane %v3573, 4
        %v3575 = vrot.slane %v2776, 5
        %v3576 = vsel %vm2004, %v3574, %v3575
        %v3577 = vrot.slane %v3575, 4
        %v3578 = vrot.slane %v2777, 5
        %v3579 = vsel %vm2004, %v3577, %v3578
        %v3580 = vrot.slane %v3498, 5
        %v3581 = vrot.slane %v3580, 4
        %v3582 = vrot.slane %v2779, 5
        %v3583 = vsel %vm2004, %v3581, %v3582
        %v3584 = vrot.slane %v3582, 4
        %v3585 = vrot.slane %v2780, 5
        %v3586 = vsel %vm2004, %v3584, %v3585
        %v3587 = vrot.slane %v3499, 5
        %v3588 = vrot.slane %v3587, 4
        %v3589 = vrot.slane %v2782, 5
        %v3590 = vsel %vm2004, %v3588, %v3589
        %v3591 = vrot.slane %v3589, 4
        %v3592 = vrot.slane %v2783, 5
        %v3593 = vsel %vm2004, %v3591, %v3592
        %v3594 = vrot.slane %v3500, 5
        %v3595 = vrot.slane %v3594, 4
        %v3596 = vrot.slane %v2785, 5
        %v3597 = vsel %vm2004, %v3595, %v3596
        %v3598 = vrot.slane %v3596, 4
        %v3599 = vrot.slane %v2786, 5
        %v3600 = vsel %vm2004, %v3598, %v3599
        %v3601 = vrot.slane %v3501, 5
        %v3602 = vrot.slane %v3601, 4
        %v3603 = vrot.slane %v2788, 5
        %v3604 = vsel %vm2004, %v3602, %v3603
        %v3605 = vrot.slane %v3603, 4
        %v3606 = vrot.slane %v2789, 5
        %v3607 = vsel %vm2004, %v3605, %v3606
        %v3608 = vrot.slane %v3502, 5
        %v3609 = vrot.slane %v3608, 4
        %v3610 = vrot.slane %v2791, 5
        %v3611 = vsel %vm2004, %v3609, %v3610
        %v3612 = vrot.slane %v3610, 4
        %v3613 = vrot.slane %v2792, 5
        %v3614 = vsel %vm2004, %v3612, %v3613
        %v3615 = vrot.slane %v3503, 5
        %v3616 = vrot.slane %v3615, 4
        %v3617 = vrot.slane %v2794, 5
        %v3618 = vsel %vm2004, %v3616, %v3617
        %v3619 = vrot.slane %v3617, 4
        %v3620 = vrot.slane %v2795, 5
        %v3621 = vsel %vm2004, %v3619, %v3620
        %v3622 = vrot.slane %v3504, 5
        %v3623 = vrot.slane %v3622, 4
        %v3624 = vrot.slane %v2797, 5
        %v3625 = vsel %vm2004, %v3623, %v3624
        %v3626 = vrot.slane %v3624, 4
        %v3627 = vrot.slane %v2798, 5
        %v3628 = vsel %vm2004, %v3626, %v3627
        %v3629 = vrot.slane %v3505, 5
        %v3630 = vrot.slane %v3629, 4
        %v3631 = vrot.slane %v2800, 5
        %v3632 = vsel %vm2004, %v3630, %v3631
        %v3633 = vrot.slane %v3631, 4
        %v3634 = vrot.slane %v2801, 5
        %v3635 = vsel %vm2004, %v3633, %v3634
        %v3636 = vrot.slane %v3506, 5
        %v3637 = vrot.slane %v3636, 4
        %v3638 = vrot.slane %v2803, 5
        %v3639 = vsel %vm2004, %v3637, %v3638
        %v3640 = vrot.slane %v3638, 4
        %v3641 = vrot.slane %v2804, 5
        %v3642 = vsel %vm2004, %v3640, %v3641
        %v3643 = vrot.slane %v3507, 5
        %v3644 = vrot.slane %v3643, 4
        %v3645 = vrot.slane %v2806, 5
        %v3646 = vsel %vm2004, %v3644, %v3645
        %v3647 = vrot.slane %v3645, 4
        %v3648 = vrot.slane %v2807, 5
        %v3649 = vsel %vm2004, %v3647, %v3648
        %v3650 = vrot.slane %v3508, 5
        %v3651 = vrot.slane %v3650, 4
        %v3652 = vrot.slane %v2809, 5
        %v3653 = vsel %vm2004, %v3651, %v3652
        %v3654 = vrot.slane %v3652, 4
        %v3655 = vrot.slane %v2810, 5
        %v3656 = vsel %vm2004, %v3654, %v3655
        %v3657 = vrot.slane %v3509, 5
        %v3658 = vrot.slane %v3657, 4
        %v3659 = vrot.slane %v2812, 5
        %v3660 = vsel %vm2004, %v3658, %v3659
        %v3661 = vrot.slane %v3659, 4
        %v3662 = vrot.slane %v2813, 5
        %v3663 = vsel %vm2004, %v3661, %v3662
        %v3664 = vrot.slane %v3510, 5
        %v3665 = vrot.slane %v3664, 4
        %v3666 = vrot.slane %v2815, 5
        %v3667 = vsel %vm2004, %v3665, %v3666
        %v3668 = vrot.slane %v3666, 4
        %v3669 = vrot.slane %v2816, 5
        %v3670 = vsel %vm2004, %v3668, %v3669
        %s3671 = scalar_lea.vmem %s1, 10
        %v3672 = vld [vmem:[%s3671] sm:$0x3]
        %v3673 = vunpack.c.l.b16 %v3562
        %v3674 = vunpack.c.l.b16 %v3565
        %v3675 = vunpack.c.l.b16 %v3569
        %v3676 = vunpack.c.l.b16 %v3572
        %v3677 = vunpack.c.l.b16 %v3576
        %v3678 = vunpack.c.l.b16 %v3579
        %v3679 = vunpack.c.l.b16 %v3583
        %v3680 = vunpack.c.l.b16 %v3586
        %v3681 = vunpack.c.l.b16 %v3590
        %v3682 = vunpack.c.l.b16 %v3593
        %v3683 = vunpack.c.l.b16 %v3597
        %v3684 = vunpack.c.l.b16 %v3600
        %v3685 = vunpack.c.l.b16 %v3604
        %v3686 = vunpack.c.l.b16 %v3607
        %v3687 = vunpack.c.l.b16 %v3611
        %v3688 = vunpack.c.l.b16 %v3614
        %v3689 = vunpack.c.l.b16 %v3618
        %v3690 = vunpack.c.l.b16 %v3621
        %v3691 = vunpack.c.l.b16 %v3625
        %v3692 = vunpack.c.l.b16 %v3628
        %v3693 = vunpack.c.l.b16 %v3632
        %v3694 = vunpack.c.l.b16 %v3635
        %v3695 = vunpack.c.l.b16 %v3639
        %v3696 = vunpack.c.l.b16 %v3642
        %v3697 = vunpack.c.l.b16 %v3646
        %v3698 = vunpack.c.l.b16 %v3649
        %v3699 = vunpack.c.l.b16 %v3653
        %v3700 = vunpack.c.l.b16 %v3656
        %v3701 = vunpack.c.l.b16 %v3660
        %v3702 = vunpack.c.l.b16 %v3663
        %v3703 = vunpack.c.l.b16 %v3667
        %v3704 = vunpack.c.l.b16 %v3670
        %v3705 = vpack.c.b16 %v3674, %v3673
        %v3706 = vpack.c.b16 %v3676, %v3675
        %v3707 = vpack.c.b16 %v3678, %v3677
        %v3708 = vpack.c.b16 %v3680, %v3679
        %v3709 = vpack.c.b16 %v3682, %v3681
        %v3710 = vpack.c.b16 %v3684, %v3683
        %v3711 = vpack.c.b16 %v3686, %v3685
        %v3712 = vpack.c.b16 %v3688, %v3687
        %v3713 = vpack.c.b16 %v3690, %v3689
        %v3714 = vpack.c.b16 %v3692, %v3691
        %v3715 = vpack.c.b16 %v3694, %v3693
        %v3716 = vpack.c.b16 %v3696, %v3695
        %v3717 = vpack.c.b16 %v3698, %v3697
        %v3718 = vpack.c.b16 %v3700, %v3699
        %v3719 = vpack.c.b16 %v3702, %v3701
        %v3720 = vpack.c.b16 %v3704, %v3703
        %v3722 = vsel %vm1448, %v3705, 0
        %v3725 = vsel %vm1448, %v3706, 0
        %v3728 = vsel %vm1448, %v3707, 0
        %v3731 = vsel %vm1448, %v3708, 0
        %v3734 = vsel %vm1448, %v3709, 0
        %v3737 = vsel %vm1448, %v3710, 0
        %v3740 = vsel %vm1448, %v3711, 0
        %v3743 = vsel %vm1448, %v3712, 0
        %v3746 = vsel %vm1448, %v3713, 0
        %v3749 = vsel %vm1448, %v3714, 0
        %v3752 = vsel %vm1448, %v3715, 0
        %v3755 = vsel %vm1448, %v3716, 0
        %v3758 = vsel %vm1448, %v3717, 0
        %v3761 = vsel %vm1448, %v3718, 0
        %v3764 = vsel %vm1448, %v3719, 0
        %v3767 = vsel %vm1448, %v3720, 0
        %v3770 = vsel %vm1497, %v3672, 0
        %3772 = vmatprep.subr.bf16.mxu0 0
        %3773 = vmatpush1.bf16.msra.mxu0 0
        %3774 = vmatprep.subr.bf16.mxu0 0
        %3775 = vmatpush1.bf16.msra.mxu0 0
        %3776 = vmatprep.subr.bf16.mxu0 0
        %3777 = vmatpush1.bf16.msra.mxu0 0
        %3778 = vmatprep.subr.bf16.mxu0 0
        %3779 = vmatpush1.bf16.msra.mxu0 0
        %3780 = vmatprep.subr.bf16.mxu0 0
        %3781 = vmatpush1.bf16.msra.mxu0 0
        %3782 = vmatprep.subr.bf16.mxu0 0
        %3783 = vmatpush1.bf16.msra.mxu0 0
        %3784 = vmatprep.subr.bf16.mxu0 0
        %3785 = vmatpush1.bf16.msra.mxu0 0
        %3786 = vmatprep.subr.bf16.mxu0 0
        %3787 = vmatpush1.bf16.msra.mxu0 %v3770
        %3788 = vmatprep.subr.bf16.mxu0 0
        %3789 = vmatpush2.bf16.msra.mxu0 0
        %3790 = vmatprep.subr.bf16.mxu0 0
        %3791 = vmatpush2.bf16.msra.mxu0 0
        %3792 = vmatprep.subr.bf16.mxu0 0
        %3793 = vmatpush2.bf16.msra.mxu0 0
        %3794 = vmatprep.subr.bf16.mxu0 0
        %3795 = vmatpush2.bf16.msra.mxu0 0
        %3796 = vmatprep.subr.bf16.mxu0 0
        %3797 = vmatpush2.bf16.msra.mxu0 0
        %3798 = vmatprep.subr.bf16.mxu0 0
        %3799 = vmatpush2.bf16.msra.mxu0 0
        %3800 = vmatprep.subr.bf16.mxu0 0
        %3801 = vmatpush2.bf16.msra.mxu0 0
        %3802 = vmatprep.subr.bf16.mxu0 0
        %3803 = vmatpush2.bf16.msra.mxu0 0
        %3804 = vmatprep.mubr.bf16.mxu0 0
        %3805 = vmatmul.mubr.bf16.gmra.mxu0 %v3722
        %v3806 = vpop.f32.mrf.mxu0
        %v3807 = vadd.f32 0.0, %v3806
        %v3808 = vpop.f32.mrf.mxu0
        %v3809 = vpop.f32.mrf.mxu0
        %v3810 = vadd.f32 0.0, %v3809
        %v3811 = vpop.f32.mrf.mxu0
        %3812 = vmatprep.mubr.bf16.mxu0 0
        %3813 = vmatmul.mubr.bf16.gmra.mxu0 %v3725
        %v3814 = vpop.f32.mrf.mxu0
        %v3815 = vadd.f32 0.0, %v3814
        %v3816 = vpop.f32.mrf.mxu0
        %v3817 = vpop.f32.mrf.mxu0
        %v3818 = vadd.f32 0.0, %v3817
        %v3819 = vpop.f32.mrf.mxu0
        %3820 = vmatprep.mubr.bf16.mxu0 0
        %3821 = vmatmul.mubr.bf16.gmra.mxu0 %v3728
        %v3822 = vpop.f32.mrf.mxu0
        %v3823 = vadd.f32 0.0, %v3822
        %v3824 = vpop.f32.mrf.mxu0
        %v3825 = vpop.f32.mrf.mxu0
        %v3826 = vadd.f32 0.0, %v3825
        %v3827 = vpop.f32.mrf.mxu0
        %3828 = vmatprep.mubr.bf16.mxu0 0
        %3829 = vmatmul.mubr.bf16.gmra.mxu0 %v3731
        %v3830 = vpop.f32.mrf.mxu0
        %v3831 = vadd.f32 0.0, %v3830
        %v3832 = vpop.f32.mrf.mxu0
        %v3833 = vpop.f32.mrf.mxu0
        %v3834 = vadd.f32 0.0, %v3833
        %v3835 = vpop.f32.mrf.mxu0
        %3836 = vmatprep.mubr.bf16.mxu0 0
        %3837 = vmatmul.mubr.bf16.gmra.mxu0 %v3734
        %v3838 = vpop.f32.mrf.mxu0
        %v3839 = vadd.f32 0.0, %v3838
        %v3840 = vpop.f32.mrf.mxu0
        %v3841 = vpop.f32.mrf.mxu0
        %v3842 = vadd.f32 0.0, %v3841
        %v3843 = vpop.f32.mrf.mxu0
        %3844 = vmatprep.mubr.bf16.mxu0 0
        %3845 = vmatmul.mubr.bf16.gmra.mxu0 %v3737
        %v3846 = vpop.f32.mrf.mxu0
        %v3847 = vadd.f32 0.0, %v3846
        %v3848 = vpop.f32.mrf.mxu0
        %v3849 = vpop.f32.mrf.mxu0
        %v3850 = vadd.f32 0.0, %v3849
        %v3851 = vpop.f32.mrf.mxu0
        %3852 = vmatprep.mubr.bf16.mxu0 0
        %3853 = vmatmul.mubr.bf16.gmra.mxu0 %v3740
        %v3854 = vpop.f32.mrf.mxu0
        %v3855 = vadd.f32 0.0, %v3854
        %v3856 = vpop.f32.mrf.mxu0
        %v3857 = vpop.f32.mrf.mxu0
        %v3858 = vadd.f32 0.0, %v3857
        %v3859 = vpop.f32.mrf.mxu0
        %3860 = vmatprep.mubr.bf16.mxu0 0
        %3861 = vmatmul.mubr.bf16.gmra.mxu0 %v3743
        %v3862 = vpop.f32.mrf.mxu0
        %v3863 = vadd.f32 0.0, %v3862
        %v3864 = vpop.f32.mrf.mxu0
        %v3865 = vpop.f32.mrf.mxu0
        %v3866 = vadd.f32 0.0, %v3865
        %v3867 = vpop.f32.mrf.mxu0
        %3868 = vmatprep.mubr.bf16.mxu0 0
        %3869 = vmatmul.mubr.bf16.gmra.mxu0 %v3746
        %v3870 = vpop.f32.mrf.mxu0
        %v3871 = vadd.f32 0.0, %v3870
        %v3872 = vpop.f32.mrf.mxu0
        %v3873 = vpop.f32.mrf.mxu0
        %v3874 = vadd.f32 0.0, %v3873
        %v3875 = vpop.f32.mrf.mxu0
        %3876 = vmatprep.mubr.bf16.mxu0 0
        %3877 = vmatmul.mubr.bf16.gmra.mxu0 %v3749
        %v3878 = vpop.f32.mrf.mxu0
        %v3879 = vadd.f32 0.0, %v3878
        %v3880 = vpop.f32.mrf.mxu0
        %v3881 = vpop.f32.mrf.mxu0
        %v3882 = vadd.f32 0.0, %v3881
        %v3883 = vpop.f32.mrf.mxu0
        %3884 = vmatprep.mubr.bf16.mxu0 0
        %3885 = vmatmul.mubr.bf16.gmra.mxu0 %v3752
        %v3886 = vpop.f32.mrf.mxu0
        %v3887 = vadd.f32 0.0, %v3886
        %v3888 = vpop.f32.mrf.mxu0
        %v3889 = vpop.f32.mrf.mxu0
        %v3890 = vadd.f32 0.0, %v3889
        %v3891 = vpop.f32.mrf.mxu0
        %3892 = vmatprep.mubr.bf16.mxu0 0
        %3893 = vmatmul.mubr.bf16.gmra.mxu0 %v3755
        %v3894 = vpop.f32.mrf.mxu0
        %v3895 = vadd.f32 0.0, %v3894
        %v3896 = vpop.f32.mrf.mxu0
        %v3897 = vpop.f32.mrf.mxu0
        %v3898 = vadd.f32 0.0, %v3897
        %v3899 = vpop.f32.mrf.mxu0
        %3900 = vmatprep.mubr.bf16.mxu0 0
        %3901 = vmatmul.mubr.bf16.gmra.mxu0 %v3758
        %v3902 = vpop.f32.mrf.mxu0
        %v3903 = vadd.f32 0.0, %v3902
        %v3904 = vpop.f32.mrf.mxu0
        %v3905 = vpop.f32.mrf.mxu0
        %v3906 = vadd.f32 0.0, %v3905
        %v3907 = vpop.f32.mrf.mxu0
        %3908 = vmatprep.mubr.bf16.mxu0 0
        %3909 = vmatmul.mubr.bf16.gmra.mxu0 %v3761
        %v3910 = vpop.f32.mrf.mxu0
        %v3911 = vadd.f32 0.0, %v3910
        %v3912 = vpop.f32.mrf.mxu0
        %v3913 = vpop.f32.mrf.mxu0
        %v3914 = vadd.f32 0.0, %v3913
        %v3915 = vpop.f32.mrf.mxu0
        %3916 = vmatprep.mubr.bf16.mxu0 0
        %3917 = vmatmul.mubr.bf16.gmra.mxu0 %v3764
        %v3918 = vpop.f32.mrf.mxu0
        %v3919 = vadd.f32 0.0, %v3918
        %v3920 = vpop.f32.mrf.mxu0
        %v3921 = vpop.f32.mrf.mxu0
        %v3922 = vadd.f32 0.0, %v3921
        %v3923 = vpop.f32.mrf.mxu0
        %3924 = vmatprep.mubr.bf16.mxu0 0
        %3925 = vmatmul.mubr.bf16.gmra.mxu0 %v3767
        %v3926 = vpop.f32.mrf.mxu0
        %v3927 = vadd.f32 0.0, %v3926
        %v3928 = vpop.f32.mrf.mxu0
        %v3929 = vpop.f32.mrf.mxu0
        %v3930 = vadd.f32 0.0, %v3929
        %v3931 = vpop.f32.mrf.mxu0
        %3932 = vdwg.mxu0
        %v3933 = vadd.f32 %v3463, %v3807
        %v3934 = vadd.f32 %v3464, %v3810
        %v3935 = vadd.f32 %v3465, %v3815
        %v3936 = vadd.f32 %v3466, %v3818
        %v3937 = vadd.f32 %v3467, %v3823
        %v3938 = vadd.f32 %v3468, %v3826
        %v3939 = vadd.f32 %v3469, %v3831
        %v3940 = vadd.f32 %v3470, %v3834
        %v3941 = vadd.f32 %v3471, %v3839
        %v3942 = vadd.f32 %v3472, %v3842
        %v3943 = vadd.f32 %v3473, %v3847
        %v3944 = vadd.f32 %v3474, %v3850
        %v3945 = vadd.f32 %v3475, %v3855
        %v3946 = vadd.f32 %v3476, %v3858
        %v3947 = vadd.f32 %v3477, %v3863
        %v3948 = vadd.f32 %v3478, %v3866
        %v3949 = vadd.f32 %v3479, %v3871
        %v3950 = vadd.f32 %v3480, %v3874
        %v3951 = vadd.f32 %v3481, %v3879
        %v3952 = vadd.f32 %v3482, %v3882
        %v3953 = vadd.f32 %v3483, %v3887
        %v3954 = vadd.f32 %v3484, %v3890
        %v3955 = vadd.f32 %v3485, %v3895
        %v3956 = vadd.f32 %v3486, %v3898
        %v3957 = vadd.f32 %v3487, %v3903
        %v3958 = vadd.f32 %v3488, %v3906
        %v3959 = vadd.f32 %v3489, %v3911
        %v3960 = vadd.f32 %v3490, %v3914
        %v3961 = vadd.f32 %v3491, %v3919
        %v3962 = vadd.f32 %v3492, %v3922
        %v3963 = vadd.f32 %v3493, %v3927
        %v3964 = vadd.f32 %v3494, %v3930
        %s3965 = scalar_lea.vmem [#allocation2], 24
        %v3966 = vld [vmem:[%s3965] sm:$0xf]
        %v3967 = vld [vmem:[%s3965 + $0x4] sm:$0xf]
        %v3968 = vld [vmem:[%s3965 + $0xc] sm:$0xf]
        %v3969 = vld [vmem:[%s3965 + $0x10] sm:$0xf]
        %v3970 = vld [vmem:[%s3965 + $0x18] sm:$0xf]
        %v3971 = vld [vmem:[%s3965 + $0x1c] sm:$0xf]
        %v3972 = vld [vmem:[%s3965 + $0x24] sm:$0xf]
        %v3973 = vld [vmem:[%s3965 + $0x28] sm:$0xf]
        %v3974 = vld [vmem:[%s3965 + $0x30] sm:$0xf]
        %v3975 = vld [vmem:[%s3965 + $0x34] sm:$0xf]
        %v3976 = vld [vmem:[%s3965 + $0x3c] sm:$0xf]
        %v3977 = vld [vmem:[%s3965 + $0x40] sm:$0xf]
        %v3978 = vld [vmem:[%s3965 + $0x48] sm:$0xf]
        %v3979 = vld [vmem:[%s3965 + $0x4c] sm:$0xf]
        %v3980 = vld [vmem:[%s3965 + $0x54] sm:$0xf]
        %v3981 = vld [vmem:[%s3965 + $0x58] sm:$0xf]
        %v3982 = vld [vmem:[%s3965 + $0x60] sm:$0xf]
        %v3983 = vld [vmem:[%s3965 + $0x64] sm:$0xf]
        %v3984 = vld [vmem:[%s3965 + $0x6c] sm:$0xf]
        %v3985 = vld [vmem:[%s3965 + $0x70] sm:$0xf]
        %v3986 = vld [vmem:[%s3965 + $0x78] sm:$0xf]
        %v3987 = vld [vmem:[%s3965 + $0x7c] sm:$0xf]
        %v3988 = vld [vmem:[%s3965 + $0x84] sm:$0xf]
        %v3989 = vld [vmem:[%s3965 + $0x88] sm:$0xf]
        %v3990 = vld [vmem:[%s3965 + $0x90] sm:$0xf]
        %v3991 = vld [vmem:[%s3965 + $0x94] sm:$0xf]
        %v3992 = vld [vmem:[%s3965 + $0x9c] sm:$0xf]
        %v3993 = vld [vmem:[%s3965 + $0xa0] sm:$0xf]
        %v3994 = vld [vmem:[%s3965 + $0xa8] sm:$0xf]
        %v3995 = vld [vmem:[%s3965 + $0xac] sm:$0xf]
        %v3996 = vld [vmem:[%s3965 + $0xb4] sm:$0xf]
        %v3997 = vld [vmem:[%s3965 + $0xb8] sm:$0xf]
        %s3998 = scalar_lea.vmem %s1, 12
        %v3999 = vld [vmem:[%s3998] sm:$0x3]
        %v4032 = vunpack.c.l.b16 %v3966
        %v4033 = vunpack.c.l.b16 %v3967
        %v4034 = vunpack.c.l.b16 %v3968
        %v4035 = vunpack.c.l.b16 %v3969
        %v4036 = vunpack.c.l.b16 %v3970
        %v4037 = vunpack.c.l.b16 %v3971
        %v4038 = vunpack.c.l.b16 %v3972
        %v4039 = vunpack.c.l.b16 %v3973
        %v4040 = vunpack.c.l.b16 %v3974
        %v4041 = vunpack.c.l.b16 %v3975
        %v4042 = vunpack.c.l.b16 %v3976
        %v4043 = vunpack.c.l.b16 %v3977
        %v4044 = vunpack.c.l.b16 %v3978
        %v4045 = vunpack.c.l.b16 %v3979
        %v4046 = vunpack.c.l.b16 %v3980
        %v4047 = vunpack.c.l.b16 %v3981
        %v4048 = vunpack.c.l.b16 %v3982
        %v4049 = vunpack.c.l.b16 %v3983
        %v4050 = vunpack.c.l.b16 %v3984
        %v4051 = vunpack.c.l.b16 %v3985
        %v4052 = vunpack.c.l.b16 %v3986
        %v4053 = vunpack.c.l.b16 %v3987
        %v4054 = vunpack.c.l.b16 %v3988
        %v4055 = vunpack.c.l.b16 %v3989
        %v4056 = vunpack.c.l.b16 %v3990
        %v4057 = vunpack.c.l.b16 %v3991
        %v4058 = vunpack.c.l.b16 %v3992
        %v4059 = vunpack.c.l.b16 %v3993
        %v4060 = vunpack.c.l.b16 %v3994
        %v4061 = vunpack.c.l.b16 %v3995
        %v4062 = vunpack.c.l.b16 %v3996
        %v4063 = vunpack.c.l.b16 %v3997
        %v4064 = vpack.c.b16 %v4033, %v4032
        %v4065 = vpack.c.b16 %v4035, %v4034
        %v4066 = vpack.c.b16 %v4037, %v4036
        %v4067 = vpack.c.b16 %v4039, %v4038
        %v4068 = vpack.c.b16 %v4041, %v4040
        %v4069 = vpack.c.b16 %v4043, %v4042
        %v4070 = vpack.c.b16 %v4045, %v4044
        %v4071 = vpack.c.b16 %v4047, %v4046
        %v4072 = vpack.c.b16 %v4049, %v4048
        %v4073 = vpack.c.b16 %v4051, %v4050
        %v4074 = vpack.c.b16 %v4053, %v4052
        %v4075 = vpack.c.b16 %v4055, %v4054
        %v4076 = vpack.c.b16 %v4057, %v4056
        %v4077 = vpack.c.b16 %v4059, %v4058
        %v4078 = vpack.c.b16 %v4061, %v4060
        %v4079 = vpack.c.b16 %v4063, %v4062
        %v4081 = vsel %vm1448, %v4064, 0
        %v4084 = vsel %vm1448, %v4065, 0
        %v4087 = vsel %vm1448, %v4066, 0
        %v4090 = vsel %vm1448, %v4067, 0
        %v4093 = vsel %vm1448, %v4068, 0
        %v4096 = vsel %vm1448, %v4069, 0
        %v4099 = vsel %vm1448, %v4070, 0
        %v4102 = vsel %vm1448, %v4071, 0
        %v4105 = vsel %vm1448, %v4072, 0
        %v4108 = vsel %vm1448, %v4073, 0
        %v4111 = vsel %vm1448, %v4074, 0
        %v4114 = vsel %vm1448, %v4075, 0
        %v4117 = vsel %vm1448, %v4076, 0
        %v4120 = vsel %vm1448, %v4077, 0
        %v4123 = vsel %vm1448, %v4078, 0
        %v4126 = vsel %vm1448, %v4079, 0
        %v4129 = vsel %vm1497, %v3999, 0
        %4131 = vmatprep.subr.bf16.mxu0 0
        %4132 = vmatpush1.bf16.msra.mxu0 0
        %4133 = vmatprep.subr.bf16.mxu0 0
        %4134 = vmatpush1.bf16.msra.mxu0 0
        %4135 = vmatprep.subr.bf16.mxu0 0
        %4136 = vmatpush1.bf16.msra.mxu0 0
        %4137 = vmatprep.subr.bf16.mxu0 0
        %4138 = vmatpush1.bf16.msra.mxu0 0
        %4139 = vmatprep.subr.bf16.mxu0 0
        %4140 = vmatpush1.bf16.msra.mxu0 0
        %4141 = vmatprep.subr.bf16.mxu0 0
        %4142 = vmatpush1.bf16.msra.mxu0 0
        %4143 = vmatprep.subr.bf16.mxu0 0
        %4144 = vmatpush1.bf16.msra.mxu0 0
        %4145 = vmatprep.subr.bf16.mxu0 0
        %4146 = vmatpush1.bf16.msra.mxu0 %v4129
        %4147 = vmatprep.subr.bf16.mxu0 0
        %4148 = vmatpush2.bf16.msra.mxu0 0
        %4149 = vmatprep.subr.bf16.mxu0 0
        %4150 = vmatpush2.bf16.msra.mxu0 0
        %4151 = vmatprep.subr.bf16.mxu0 0
        %4152 = vmatpush2.bf16.msra.mxu0 0
        %4153 = vmatprep.subr.bf16.mxu0 0
        %4154 = vmatpush2.bf16.msra.mxu0 0
        %4155 = vmatprep.subr.bf16.mxu0 0
        %4156 = vmatpush2.bf16.msra.mxu0 0
        %4157 = vmatprep.subr.bf16.mxu0 0
        %4158 = vmatpush2.bf16.msra.mxu0 0
        %4159 = vmatprep.subr.bf16.mxu0 0
        %4160 = vmatpush2.bf16.msra.mxu0 0
        %4161 = vmatprep.subr.bf16.mxu0 0
        %4162 = vmatpush2.bf16.msra.mxu0 0
        %4163 = vmatprep.mubr.bf16.mxu0 0
        %4164 = vmatmul.mubr.bf16.gmra.mxu0 %v4081
        %v4165 = vpop.f32.mrf.mxu0
        %v4166 = vadd.f32 0.0, %v4165
        %v4167 = vpop.f32.mrf.mxu0
        %v4168 = vpop.f32.mrf.mxu0
        %v4169 = vadd.f32 0.0, %v4168
        %v4170 = vpop.f32.mrf.mxu0
        %4171 = vmatprep.mubr.bf16.mxu0 0
        %4172 = vmatmul.mubr.bf16.gmra.mxu0 %v4084
        %v4173 = vpop.f32.mrf.mxu0
        %v4174 = vadd.f32 0.0, %v4173
        %v4175 = vpop.f32.mrf.mxu0
        %v4176 = vpop.f32.mrf.mxu0
        %v4177 = vadd.f32 0.0, %v4176
        %v4178 = vpop.f32.mrf.mxu0
        %4179 = vmatprep.mubr.bf16.mxu0 0
        %4180 = vmatmul.mubr.bf16.gmra.mxu0 %v4087
        %v4181 = vpop.f32.mrf.mxu0
        %v4182 = vadd.f32 0.0, %v4181
        %v4183 = vpop.f32.mrf.mxu0
        %v4184 = vpop.f32.mrf.mxu0
        %v4185 = vadd.f32 0.0, %v4184
        %v4186 = vpop.f32.mrf.mxu0
        %4187 = vmatprep.mubr.bf16.mxu0 0
        %4188 = vmatmul.mubr.bf16.gmra.mxu0 %v4090
        %v4189 = vpop.f32.mrf.mxu0
        %v4190 = vadd.f32 0.0, %v4189
        %v4191 = vpop.f32.mrf.mxu0
        %v4192 = vpop.f32.mrf.mxu0
        %v4193 = vadd.f32 0.0, %v4192
        %v4194 = vpop.f32.mrf.mxu0
        %4195 = vmatprep.mubr.bf16.mxu0 0
        %4196 = vmatmul.mubr.bf16.gmra.mxu0 %v4093
        %v4197 = vpop.f32.mrf.mxu0
        %v4198 = vadd.f32 0.0, %v4197
        %v4199 = vpop.f32.mrf.mxu0
        %v4200 = vpop.f32.mrf.mxu0
        %v4201 = vadd.f32 0.0, %v4200
        %v4202 = vpop.f32.mrf.mxu0
        %4203 = vmatprep.mubr.bf16.mxu0 0
        %4204 = vmatmul.mubr.bf16.gmra.mxu0 %v4096
        %v4205 = vpop.f32.mrf.mxu0
        %v4206 = vadd.f32 0.0, %v4205
        %v4207 = vpop.f32.mrf.mxu0
        %v4208 = vpop.f32.mrf.mxu0
        %v4209 = vadd.f32 0.0, %v4208
        %v4210 = vpop.f32.mrf.mxu0
        %4211 = vmatprep.mubr.bf16.mxu0 0
        %4212 = vmatmul.mubr.bf16.gmra.mxu0 %v4099
        %v4213 = vpop.f32.mrf.mxu0
        %v4214 = vadd.f32 0.0, %v4213
        %v4215 = vpop.f32.mrf.mxu0
        %v4216 = vpop.f32.mrf.mxu0
        %v4217 = vadd.f32 0.0, %v4216
        %v4218 = vpop.f32.mrf.mxu0
        %4219 = vmatprep.mubr.bf16.mxu0 0
        %4220 = vmatmul.mubr.bf16.gmra.mxu0 %v4102
        %v4221 = vpop.f32.mrf.mxu0
        %v4222 = vadd.f32 0.0, %v4221
        %v4223 = vpop.f32.mrf.mxu0
        %v4224 = vpop.f32.mrf.mxu0
        %v4225 = vadd.f32 0.0, %v4224
        %v4226 = vpop.f32.mrf.mxu0
        %4227 = vmatprep.mubr.bf16.mxu0 0
        %4228 = vmatmul.mubr.bf16.gmra.mxu0 %v4105
        %v4229 = vpop.f32.mrf.mxu0
        %v4230 = vadd.f32 0.0, %v4229
        %v4231 = vpop.f32.mrf.mxu0
        %v4232 = vpop.f32.mrf.mxu0
        %v4233 = vadd.f32 0.0, %v4232
        %v4234 = vpop.f32.mrf.mxu0
        %4235 = vmatprep.mubr.bf16.mxu0 0
        %4236 = vmatmul.mubr.bf16.gmra.mxu0 %v4108
        %v4237 = vpop.f32.mrf.mxu0
        %v4238 = vadd.f32 0.0, %v4237
        %v4239 = vpop.f32.mrf.mxu0
        %v4240 = vpop.f32.mrf.mxu0
        %v4241 = vadd.f32 0.0, %v4240
        %v4242 = vpop.f32.mrf.mxu0
        %4243 = vmatprep.mubr.bf16.mxu0 0
        %4244 = vmatmul.mubr.bf16.gmra.mxu0 %v4111
        %v4245 = vpop.f32.mrf.mxu0
        %v4246 = vadd.f32 0.0, %v4245
        %v4247 = vpop.f32.mrf.mxu0
        %v4248 = vpop.f32.mrf.mxu0
        %v4249 = vadd.f32 0.0, %v4248
        %v4250 = vpop.f32.mrf.mxu0
        %4251 = vmatprep.mubr.bf16.mxu0 0
        %4252 = vmatmul.mubr.bf16.gmra.mxu0 %v4114
        %v4253 = vpop.f32.mrf.mxu0
        %v4254 = vadd.f32 0.0, %v4253
        %v4255 = vpop.f32.mrf.mxu0
        %v4256 = vpop.f32.mrf.mxu0
        %v4257 = vadd.f32 0.0, %v4256
        %v4258 = vpop.f32.mrf.mxu0
        %4259 = vmatprep.mubr.bf16.mxu0 0
        %4260 = vmatmul.mubr.bf16.gmra.mxu0 %v4117
        %v4261 = vpop.f32.mrf.mxu0
        %v4262 = vadd.f32 0.0, %v4261
        %v4263 = vpop.f32.mrf.mxu0
        %v4264 = vpop.f32.mrf.mxu0
        %v4265 = vadd.f32 0.0, %v4264
        %v4266 = vpop.f32.mrf.mxu0
        %4267 = vmatprep.mubr.bf16.mxu0 0
        %4268 = vmatmul.mubr.bf16.gmra.mxu0 %v4120
        %v4269 = vpop.f32.mrf.mxu0
        %v4270 = vadd.f32 0.0, %v4269
        %v4271 = vpop.f32.mrf.mxu0
        %v4272 = vpop.f32.mrf.mxu0
        %v4273 = vadd.f32 0.0, %v4272
        %v4274 = vpop.f32.mrf.mxu0
        %4275 = vmatprep.mubr.bf16.mxu0 0
        %4276 = vmatmul.mubr.bf16.gmra.mxu0 %v4123
        %v4277 = vpop.f32.mrf.mxu0
        %v4278 = vadd.f32 0.0, %v4277
        %v4279 = vpop.f32.mrf.mxu0
        %v4280 = vpop.f32.mrf.mxu0
        %v4281 = vadd.f32 0.0, %v4280
        %v4282 = vpop.f32.mrf.mxu0
        %4283 = vmatprep.mubr.bf16.mxu0 0
        %4284 = vmatmul.mubr.bf16.gmra.mxu0 %v4126
        %v4285 = vpop.f32.mrf.mxu0
        %v4286 = vadd.f32 0.0, %v4285
        %v4287 = vpop.f32.mrf.mxu0
        %v4288 = vpop.f32.mrf.mxu0
        %v4289 = vadd.f32 0.0, %v4288
        %v4290 = vpop.f32.mrf.mxu0
        %4291 = vdwg.mxu0
        %v4292 = vadd.f32 %v3933, %v4166
        %v4293 = vadd.f32 %v3934, %v4169
        %v4294 = vadd.f32 %v3935, %v4174
        %v4295 = vadd.f32 %v3936, %v4177
        %v4296 = vadd.f32 %v3937, %v4182
        %v4297 = vadd.f32 %v3938, %v4185
        %v4298 = vadd.f32 %v3939, %v4190
        %v4299 = vadd.f32 %v3940, %v4193
        %v4300 = vadd.f32 %v3941, %v4198
        %v4301 = vadd.f32 %v3942, %v4201
        %v4302 = vadd.f32 %v3943, %v4206
        %v4303 = vadd.f32 %v3944, %v4209
        %v4304 = vadd.f32 %v3945, %v4214
        %v4305 = vadd.f32 %v3946, %v4217
        %v4306 = vadd.f32 %v3947, %v4222
        %v4307 = vadd.f32 %v3948, %v4225
        %v4308 = vadd.f32 %v3949, %v4230
        %v4309 = vadd.f32 %v3950, %v4233
        %v4310 = vadd.f32 %v3951, %v4238
        %v4311 = vadd.f32 %v3952, %v4241
        %v4312 = vadd.f32 %v3953, %v4246
        %v4313 = vadd.f32 %v3954, %v4249
        %v4314 = vadd.f32 %v3955, %v4254
        %v4315 = vadd.f32 %v3956, %v4257
        %v4316 = vadd.f32 %v3957, %v4262
        %v4317 = vadd.f32 %v3958, %v4265
        %v4318 = vadd.f32 %v3959, %v4270
        %v4319 = vadd.f32 %v3960, %v4273
        %v4320 = vadd.f32 %v3961, %v4278
        %v4321 = vadd.f32 %v3962, %v4281
        %v4322 = vadd.f32 %v3963, %v4286
        %v4323 = vadd.f32 %v3964, %v4289
        %v4324 = vld [vmem:[%s3965] sm:$0xf]
        %v4325 = vld [vmem:[%s3965 + $0x4] sm:$0xf]
        %v4326 = vld [vmem:[%s3965 + $0x8] sm:$0x1]
        %v4327 = vld [vmem:[%s3965 + $0xc] sm:$0xf]
        %v4328 = vld [vmem:[%s3965 + $0x10] sm:$0xf]
        %v4329 = vld [vmem:[%s3965 + $0x14] sm:$0x1]
        %v4330 = vld [vmem:[%s3965 + $0x18] sm:$0xf]
        %v4331 = vld [vmem:[%s3965 + $0x1c] sm:$0xf]
        %v4332 = vld [vmem:[%s3965 + $0x20] sm:$0x1]
        %v4333 = vld [vmem:[%s3965 + $0x24] sm:$0xf]
        %v4334 = vld [vmem:[%s3965 + $0x28] sm:$0xf]
        %v4335 = vld [vmem:[%s3965 + $0x2c] sm:$0x1]
        %v4336 = vld [vmem:[%s3965 + $0x30] sm:$0xf]
        %v4337 = vld [vmem:[%s3965 + $0x34] sm:$0xf]
        %v4338 = vld [vmem:[%s3965 + $0x38] sm:$0x1]
        %v4339 = vld [vmem:[%s3965 + $0x3c] sm:$0xf]
        %v4340 = vld [vmem:[%s3965 + $0x40] sm:$0xf]
        %v4341 = vld [vmem:[%s3965 + $0x44] sm:$0x1]
        %v4342 = vld [vmem:[%s3965 + $0x48] sm:$0xf]
        %v4343 = vld [vmem:[%s3965 + $0x4c] sm:$0xf]
        %v4344 = vld [vmem:[%s3965 + $0x50] sm:$0x1]
        %v4345 = vld [vmem:[%s3965 + $0x54] sm:$0xf]
        %v4346 = vld [vmem:[%s3965 + $0x58] sm:$0xf]
        %v4347 = vld [vmem:[%s3965 + $0x5c] sm:$0x1]
        %v4348 = vld [vmem:[%s3965 + $0x60] sm:$0xf]
        %v4349 = vld [vmem:[%s3965 + $0x64] sm:$0xf]
        %v4350 = vld [vmem:[%s3965 + $0x68] sm:$0x1]
        %v4351 = vld [vmem:[%s3965 + $0x6c] sm:$0xf]
        %v4352 = vld [vmem:[%s3965 + $0x70] sm:$0xf]
        %v4353 = vld [vmem:[%s3965 + $0x74] sm:$0x1]
        %v4354 = vld [vmem:[%s3965 + $0x78] sm:$0xf]
        %v4355 = vld [vmem:[%s3965 + $0x7c] sm:$0xf]
        %v4356 = vld [vmem:[%s3965 + $0x80] sm:$0x1]
        %v4357 = vld [vmem:[%s3965 + $0x84] sm:$0xf]
        %v4358 = vld [vmem:[%s3965 + $0x88] sm:$0xf]
        %v4359 = vld [vmem:[%s3965 + $0x8c] sm:$0x1]
        %v4360 = vld [vmem:[%s3965 + $0x90] sm:$0xf]
        %v4361 = vld [vmem:[%s3965 + $0x94] sm:$0xf]
        %v4362 = vld [vmem:[%s3965 + $0x98] sm:$0x1]
        %v4363 = vld [vmem:[%s3965 + $0x9c] sm:$0xf]
        %v4364 = vld [vmem:[%s3965 + $0xa0] sm:$0xf]
        %v4365 = vld [vmem:[%s3965 + $0xa4] sm:$0x1]
        %v4366 = vld [vmem:[%s3965 + $0xa8] sm:$0xf]
        %v4367 = vld [vmem:[%s3965 + $0xac] sm:$0xf]
        %v4368 = vld [vmem:[%s3965 + $0xb0] sm:$0x1]
        %v4369 = vld [vmem:[%s3965 + $0xb4] sm:$0xf]
        %v4370 = vld [vmem:[%s3965 + $0xb8] sm:$0xf]
        %v4371 = vld [vmem:[%s3965 + $0xbc] sm:$0x1]
        %v4373 = vshrl.u32 %v4324, 16
        %v4375 = vrot.slane %v4373, 4
        %v4376 = vshll.u32 %v4324, 16
        %v4378 = vrot.slane %v4376, 5
        %v4379 = vor.u32 %v4375, %v4378
        %v4380 = vrot.slane %v4379, 4
        %v4382 = vshll.u32 %v4325, 16
        %v4384 = vrot.slane %v4382, 5
        %v4385 = vsel %vm1013, %v4380, %v4384
        %v4386 = vshrl.u32 %v4325, 16
        %v4388 = vrot.slane %v4386, 4
        %v4389 = vor.u32 %v4388, %v4384
        %v4390 = vrot.slane %v4389, 4
        %v4392 = vshll.u32 %v4326, 16
        %v4394 = vrot.slane %v4392, 5
        %v4395 = vsel %vm1013, %v4390, %v4394
        %v4397 = vshrl.u32 %v4327, 16
        %v4399 = vrot.slane %v4397, 4
        %v4400 = vshll.u32 %v4327, 16
        %v4402 = vrot.slane %v4400, 5
        %v4403 = vor.u32 %v4399, %v4402
        %v4404 = vrot.slane %v4403, 4
        %v4406 = vshll.u32 %v4328, 16
        %v4408 = vrot.slane %v4406, 5
        %v4409 = vsel %vm1013, %v4404, %v4408
        %v4410 = vshrl.u32 %v4328, 16
        %v4412 = vrot.slane %v4410, 4
        %v4413 = vor.u32 %v4412, %v4408
        %v4414 = vrot.slane %v4413, 4
        %v4416 = vshll.u32 %v4329, 16
        %v4418 = vrot.slane %v4416, 5
        %v4419 = vsel %vm1013, %v4414, %v4418
        %v4421 = vshrl.u32 %v4330, 16
        %v4423 = vrot.slane %v4421, 4
        %v4424 = vshll.u32 %v4330, 16
        %v4426 = vrot.slane %v4424, 5
        %v4427 = vor.u32 %v4423, %v4426
        %v4428 = vrot.slane %v4427, 4
        %v4430 = vshll.u32 %v4331, 16
        %v4432 = vrot.slane %v4430, 5
        %v4433 = vsel %vm1013, %v4428, %v4432
        %v4434 = vshrl.u32 %v4331, 16
        %v4436 = vrot.slane %v4434, 4
        %v4437 = vor.u32 %v4436, %v4432
        %v4438 = vrot.slane %v4437, 4
        %v4440 = vshll.u32 %v4332, 16
        %v4442 = vrot.slane %v4440, 5
        %v4443 = vsel %vm1013, %v4438, %v4442
        %v4445 = vshrl.u32 %v4333, 16
        %v4447 = vrot.slane %v4445, 4
        %v4448 = vshll.u32 %v4333, 16
        %v4450 = vrot.slane %v4448, 5
        %v4451 = vor.u32 %v4447, %v4450
        %v4452 = vrot.slane %v4451, 4
        %v4454 = vshll.u32 %v4334, 16
        %v4456 = vrot.slane %v4454, 5
        %v4457 = vsel %vm1013, %v4452, %v4456
        %v4458 = vshrl.u32 %v4334, 16
        %v4460 = vrot.slane %v4458, 4
        %v4461 = vor.u32 %v4460, %v4456
        %v4462 = vrot.slane %v4461, 4
        %v4464 = vshll.u32 %v4335, 16
        %v4466 = vrot.slane %v4464, 5
        %v4467 = vsel %vm1013, %v4462, %v4466
        %v4469 = vshrl.u32 %v4336, 16
        %v4471 = vrot.slane %v4469, 4
        %v4472 = vshll.u32 %v4336, 16
        %v4474 = vrot.slane %v4472, 5
        %v4475 = vor.u32 %v4471, %v4474
        %v4476 = vrot.slane %v4475, 4
        %v4478 = vshll.u32 %v4337, 16
        %v4480 = vrot.slane %v4478, 5
        %v4481 = vsel %vm1013, %v4476, %v4480
        %v4482 = vshrl.u32 %v4337, 16
        %v4484 = vrot.slane %v4482, 4
        %v4485 = vor.u32 %v4484, %v4480
        %v4486 = vrot.slane %v4485, 4
        %v4488 = vshll.u32 %v4338, 16
        %v4490 = vrot.slane %v4488, 5
        %v4491 = vsel %vm1013, %v4486, %v4490
        %v4493 = vshrl.u32 %v4339, 16
        %v4495 = vrot.slane %v4493, 4
        %v4496 = vshll.u32 %v4339, 16
        %v4498 = vrot.slane %v4496, 5
        %v4499 = vor.u32 %v4495, %v4498
        %v4500 = vrot.slane %v4499, 4
        %v4502 = vshll.u32 %v4340, 16
        %v4504 = vrot.slane %v4502, 5
        %v4505 = vsel %vm1013, %v4500, %v4504
        %v4506 = vshrl.u32 %v4340, 16
        %v4508 = vrot.slane %v4506, 4
        %v4509 = vor.u32 %v4508, %v4504
        %v4510 = vrot.slane %v4509, 4
        %v4512 = vshll.u32 %v4341, 16
        %v4514 = vrot.slane %v4512, 5
        %v4515 = vsel %vm1013, %v4510, %v4514
        %v4517 = vshrl.u32 %v4342, 16
        %v4519 = vrot.slane %v4517, 4
        %v4520 = vshll.u32 %v4342, 16
        %v4522 = vrot.slane %v4520, 5
        %v4523 = vor.u32 %v4519, %v4522
        %v4524 = vrot.slane %v4523, 4
        %v4526 = vshll.u32 %v4343, 16
        %v4528 = vrot.slane %v4526, 5
        %v4529 = vsel %vm1013, %v4524, %v4528
        %v4530 = vshrl.u32 %v4343, 16
        %v4532 = vrot.slane %v4530, 4
        %v4533 = vor.u32 %v4532, %v4528
        %v4534 = vrot.slane %v4533, 4
        %v4536 = vshll.u32 %v4344, 16
        %v4538 = vrot.slane %v4536, 5
        %v4539 = vsel %vm1013, %v4534, %v4538
        %v4541 = vshrl.u32 %v4345, 16
        %v4543 = vrot.slane %v4541, 4
        %v4544 = vshll.u32 %v4345, 16
        %v4546 = vrot.slane %v4544, 5
        %v4547 = vor.u32 %v4543, %v4546
        %v4548 = vrot.slane %v4547, 4
        %v4550 = vshll.u32 %v4346, 16
        %v4552 = vrot.slane %v4550, 5
        %v4553 = vsel %vm1013, %v4548, %v4552
        %v4554 = vshrl.u32 %v4346, 16
        %v4556 = vrot.slane %v4554, 4
        %v4557 = vor.u32 %v4556, %v4552
        %v4558 = vrot.slane %v4557, 4
        %v4560 = vshll.u32 %v4347, 16
        %v4562 = vrot.slane %v4560, 5
        %v4563 = vsel %vm1013, %v4558, %v4562
        %v4565 = vshrl.u32 %v4348, 16
        %v4567 = vrot.slane %v4565, 4
        %v4568 = vshll.u32 %v4348, 16
        %v4570 = vrot.slane %v4568, 5
        %v4571 = vor.u32 %v4567, %v4570
        %v4572 = vrot.slane %v4571, 4
        %v4574 = vshll.u32 %v4349, 16
        %v4576 = vrot.slane %v4574, 5
        %v4577 = vsel %vm1013, %v4572, %v4576
        %v4578 = vshrl.u32 %v4349, 16
        %v4580 = vrot.slane %v4578, 4
        %v4581 = vor.u32 %v4580, %v4576
        %v4582 = vrot.slane %v4581, 4
        %v4584 = vshll.u32 %v4350, 16
        %v4586 = vrot.slane %v4584, 5
        %v4587 = vsel %vm1013, %v4582, %v4586
        %v4589 = vshrl.u32 %v4351, 16
        %v4591 = vrot.slane %v4589, 4
        %v4592 = vshll.u32 %v4351, 16
        %v4594 = vrot.slane %v4592, 5
        %v4595 = vor.u32 %v4591, %v4594
        %v4596 = vrot.slane %v4595, 4
        %v4598 = vshll.u32 %v4352, 16
        %v4600 = vrot.slane %v4598, 5
        %v4601 = vsel %vm1013, %v4596, %v4600
        %v4602 = vshrl.u32 %v4352, 16
        %v4604 = vrot.slane %v4602, 4
        %v4605 = vor.u32 %v4604, %v4600
        %v4606 = vrot.slane %v4605, 4
        %v4608 = vshll.u32 %v4353, 16
        %v4610 = vrot.slane %v4608, 5
        %v4611 = vsel %vm1013, %v4606, %v4610
        %v4613 = vshrl.u32 %v4354, 16
        %v4615 = vrot.slane %v4613, 4
        %v4616 = vshll.u32 %v4354, 16
        %v4618 = vrot.slane %v4616, 5
        %v4619 = vor.u32 %v4615, %v4618
        %v4620 = vrot.slane %v4619, 4
        %v4622 = vshll.u32 %v4355, 16
        %v4624 = vrot.slane %v4622, 5
        %v4625 = vsel %vm1013, %v4620, %v4624
        %v4626 = vshrl.u32 %v4355, 16
        %v4628 = vrot.slane %v4626, 4
        %v4629 = vor.u32 %v4628, %v4624
        %v4630 = vrot.slane %v4629, 4
        %v4632 = vshll.u32 %v4356, 16
        %v4634 = vrot.slane %v4632, 5
        %v4635 = vsel %vm1013, %v4630, %v4634
        %v4637 = vshrl.u32 %v4357, 16
        %v4639 = vrot.slane %v4637, 4
        %v4640 = vshll.u32 %v4357, 16
        %v4642 = vrot.slane %v4640, 5
        %v4643 = vor.u32 %v4639, %v4642
        %v4644 = vrot.slane %v4643, 4
        %v4646 = vshll.u32 %v4358, 16
        %v4648 = vrot.slane %v4646, 5
        %v4649 = vsel %vm1013, %v4644, %v4648
        %v4650 = vshrl.u32 %v4358, 16
        %v4652 = vrot.slane %v4650, 4
        %v4653 = vor.u32 %v4652, %v4648
        %v4654 = vrot.slane %v4653, 4
        %v4656 = vshll.u32 %v4359, 16
        %v4658 = vrot.slane %v4656, 5
        %v4659 = vsel %vm1013, %v4654, %v4658
        %v4661 = vshrl.u32 %v4360, 16
        %v4663 = vrot.slane %v4661, 4
        %v4664 = vshll.u32 %v4360, 16
        %v4666 = vrot.slane %v4664, 5
        %v4667 = vor.u32 %v4663, %v4666
        %v4668 = vrot.slane %v4667, 4
        %v4670 = vshll.u32 %v4361, 16
        %v4672 = vrot.slane %v4670, 5
        %v4673 = vsel %vm1013, %v4668, %v4672
        %v4674 = vshrl.u32 %v4361, 16
        %v4676 = vrot.slane %v4674, 4
        %v4677 = vor.u32 %v4676, %v4672
        %v4678 = vrot.slane %v4677, 4
        %v4680 = vshll.u32 %v4362, 16
        %v4682 = vrot.slane %v4680, 5
        %v4683 = vsel %vm1013, %v4678, %v4682
        %v4685 = vshrl.u32 %v4363, 16
        %v4687 = vrot.slane %v4685, 4
        %v4688 = vshll.u32 %v4363, 16
        %v4690 = vrot.slane %v4688, 5
        %v4691 = vor.u32 %v4687, %v4690
        %v4692 = vrot.slane %v4691, 4
        %v4694 = vshll.u32 %v4364, 16
        %v4696 = vrot.slane %v4694, 5
        %v4697 = vsel %vm1013, %v4692, %v4696
        %v4698 = vshrl.u32 %v4364, 16
        %v4700 = vrot.slane %v4698, 4
        %v4701 = vor.u32 %v4700, %v4696
        %v4702 = vrot.slane %v4701, 4
        %v4704 = vshll.u32 %v4365, 16
        %v4706 = vrot.slane %v4704, 5
        %v4707 = vsel %vm1013, %v4702, %v4706
        %v4709 = vshrl.u32 %v4366, 16
        %v4711 = vrot.slane %v4709, 4
        %v4712 = vshll.u32 %v4366, 16
        %v4714 = vrot.slane %v4712, 5
        %v4715 = vor.u32 %v4711, %v4714
        %v4716 = vrot.slane %v4715, 4
        %v4718 = vshll.u32 %v4367, 16
        %v4720 = vrot.slane %v4718, 5
        %v4721 = vsel %vm1013, %v4716, %v4720
        %v4722 = vshrl.u32 %v4367, 16
        %v4724 = vrot.slane %v4722, 4
        %v4725 = vor.u32 %v4724, %v4720
        %v4726 = vrot.slane %v4725, 4
        %v4728 = vshll.u32 %v4368, 16
        %v4730 = vrot.slane %v4728, 5
        %v4731 = vsel %vm1013, %v4726, %v4730
        %v4733 = vshrl.u32 %v4369, 16
        %v4735 = vrot.slane %v4733, 4
        %v4736 = vshll.u32 %v4369, 16
        %v4738 = vrot.slane %v4736, 5
        %v4739 = vor.u32 %v4735, %v4738
        %v4740 = vrot.slane %v4739, 4
        %v4742 = vshll.u32 %v4370, 16
        %v4744 = vrot.slane %v4742, 5
        %v4745 = vsel %vm1013, %v4740, %v4744
        %v4746 = vshrl.u32 %v4370, 16
        %v4748 = vrot.slane %v4746, 4
        %v4749 = vor.u32 %v4748, %v4744
        %v4750 = vrot.slane %v4749, 4
        %v4752 = vshll.u32 %v4371, 16
        %v4754 = vrot.slane %v4752, 5
        %v4755 = vsel %vm1013, %v4750, %v4754
        %s4756 = scalar_lea.vmem %s1, 14
        %v4757 = vld [vmem:[%s4756] sm:$0x3]
        %v4758 = vunpack.c.l.b16 %v4385
        %v4759 = vunpack.c.l.b16 %v4395
        %v4760 = vunpack.c.l.b16 %v4409
        %v4761 = vunpack.c.l.b16 %v4419
        %v4762 = vunpack.c.l.b16 %v4433
        %v4763 = vunpack.c.l.b16 %v4443
        %v4764 = vunpack.c.l.b16 %v4457
        %v4765 = vunpack.c.l.b16 %v4467
        %v4766 = vunpack.c.l.b16 %v4481
        %v4767 = vunpack.c.l.b16 %v4491
        %v4768 = vunpack.c.l.b16 %v4505
        %v4769 = vunpack.c.l.b16 %v4515
        %v4770 = vunpack.c.l.b16 %v4529
        %v4771 = vunpack.c.l.b16 %v4539
        %v4772 = vunpack.c.l.b16 %v4553
        %v4773 = vunpack.c.l.b16 %v4563
        %v4774 = vunpack.c.l.b16 %v4577
        %v4775 = vunpack.c.l.b16 %v4587
        %v4776 = vunpack.c.l.b16 %v4601
        %v4777 = vunpack.c.l.b16 %v4611
        %v4778 = vunpack.c.l.b16 %v4625
        %v4779 = vunpack.c.l.b16 %v4635
        %v4780 = vunpack.c.l.b16 %v4649
        %v4781 = vunpack.c.l.b16 %v4659
        %v4782 = vunpack.c.l.b16 %v4673
        %v4783 = vunpack.c.l.b16 %v4683
        %v4784 = vunpack.c.l.b16 %v4697
        %v4785 = vunpack.c.l.b16 %v4707
        %v4786 = vunpack.c.l.b16 %v4721
        %v4787 = vunpack.c.l.b16 %v4731
        %v4788 = vunpack.c.l.b16 %v4745
        %v4789 = vunpack.c.l.b16 %v4755
        %v4790 = vpack.c.b16 %v4759, %v4758
        %v4791 = vpack.c.b16 %v4761, %v4760
        %v4792 = vpack.c.b16 %v4763, %v4762
        %v4793 = vpack.c.b16 %v4765, %v4764
        %v4794 = vpack.c.b16 %v4767, %v4766
        %v4795 = vpack.c.b16 %v4769, %v4768
        %v4796 = vpack.c.b16 %v4771, %v4770
        %v4797 = vpack.c.b16 %v4773, %v4772
        %v4798 = vpack.c.b16 %v4775, %v4774
        %v4799 = vpack.c.b16 %v4777, %v4776
        %v4800 = vpack.c.b16 %v4779, %v4778
        %v4801 = vpack.c.b16 %v4781, %v4780
        %v4802 = vpack.c.b16 %v4783, %v4782
        %v4803 = vpack.c.b16 %v4785, %v4784
        %v4804 = vpack.c.b16 %v4787, %v4786
        %v4805 = vpack.c.b16 %v4789, %v4788
        %v4807 = vsel %vm1448, %v4790, 0
        %v4810 = vsel %vm1448, %v4791, 0
        %v4813 = vsel %vm1448, %v4792, 0
        %v4816 = vsel %vm1448, %v4793, 0
        %v4819 = vsel %vm1448, %v4794, 0
        %v4822 = vsel %vm1448, %v4795, 0
        %v4825 = vsel %vm1448, %v4796, 0
        %v4828 = vsel %vm1448, %v4797, 0
        %v4831 = vsel %vm1448, %v4798, 0
        %v4834 = vsel %vm1448, %v4799, 0
        %v4837 = vsel %vm1448, %v4800, 0
        %v4840 = vsel %vm1448, %v4801, 0
        %v4843 = vsel %vm1448, %v4802, 0
        %v4846 = vsel %vm1448, %v4803, 0
        %v4849 = vsel %vm1448, %v4804, 0
        %v4852 = vsel %vm1448, %v4805, 0
        %v4855 = vsel %vm1497, %v4757, 0
        %4857 = vmatprep.subr.bf16.mxu0 0
        %4858 = vmatpush1.bf16.msra.mxu0 0
        %4859 = vmatprep.subr.bf16.mxu0 0
        %4860 = vmatpush1.bf16.msra.mxu0 0
        %4861 = vmatprep.subr.bf16.mxu0 0
        %4862 = vmatpush1.bf16.msra.mxu0 0
        %4863 = vmatprep.subr.bf16.mxu0 0
        %4864 = vmatpush1.bf16.msra.mxu0 0
        %4865 = vmatprep.subr.bf16.mxu0 0
        %4866 = vmatpush1.bf16.msra.mxu0 0
        %4867 = vmatprep.subr.bf16.mxu0 0
        %4868 = vmatpush1.bf16.msra.mxu0 0
        %4869 = vmatprep.subr.bf16.mxu0 0
        %4870 = vmatpush1.bf16.msra.mxu0 0
        %4871 = vmatprep.subr.bf16.mxu0 0
        %4872 = vmatpush1.bf16.msra.mxu0 %v4855
        %4873 = vmatprep.subr.bf16.mxu0 0
        %4874 = vmatpush2.bf16.msra.mxu0 0
        %4875 = vmatprep.subr.bf16.mxu0 0
        %4876 = vmatpush2.bf16.msra.mxu0 0
        %4877 = vmatprep.subr.bf16.mxu0 0
        %4878 = vmatpush2.bf16.msra.mxu0 0
        %4879 = vmatprep.subr.bf16.mxu0 0
        %4880 = vmatpush2.bf16.msra.mxu0 0
        %4881 = vmatprep.subr.bf16.mxu0 0
        %4882 = vmatpush2.bf16.msra.mxu0 0
        %4883 = vmatprep.subr.bf16.mxu0 0
        %4884 = vmatpush2.bf16.msra.mxu0 0
        %4885 = vmatprep.subr.bf16.mxu0 0
        %4886 = vmatpush2.bf16.msra.mxu0 0
        %4887 = vmatprep.subr.bf16.mxu0 0
        %4888 = vmatpush2.bf16.msra.mxu0 0
        %4889 = vmatprep.mubr.bf16.mxu0 0
        %4890 = vmatmul.mubr.bf16.gmra.mxu0 %v4807
        %v4891 = vpop.f32.mrf.mxu0
        %v4892 = vadd.f32 0.0, %v4891
        %v4893 = vpop.f32.mrf.mxu0
        %v4894 = vpop.f32.mrf.mxu0
        %v4895 = vadd.f32 0.0, %v4894
        %v4896 = vpop.f32.mrf.mxu0
        %4897 = vmatprep.mubr.bf16.mxu0 0
        %4898 = vmatmul.mubr.bf16.gmra.mxu0 %v4810
        %v4899 = vpop.f32.mrf.mxu0
        %v4900 = vadd.f32 0.0, %v4899
        %v4901 = vpop.f32.mrf.mxu0
        %v4902 = vpop.f32.mrf.mxu0
        %v4903 = vadd.f32 0.0, %v4902
        %v4904 = vpop.f32.mrf.mxu0
        %4905 = vmatprep.mubr.bf16.mxu0 0
        %4906 = vmatmul.mubr.bf16.gmra.mxu0 %v4813
        %v4907 = vpop.f32.mrf.mxu0
        %v4908 = vadd.f32 0.0, %v4907
        %v4909 = vpop.f32.mrf.mxu0
        %v4910 = vpop.f32.mrf.mxu0
        %v4911 = vadd.f32 0.0, %v4910
        %v4912 = vpop.f32.mrf.mxu0
        %4913 = vmatprep.mubr.bf16.mxu0 0
        %4914 = vmatmul.mubr.bf16.gmra.mxu0 %v4816
        %v4915 = vpop.f32.mrf.mxu0
        %v4916 = vadd.f32 0.0, %v4915
        %v4917 = vpop.f32.mrf.mxu0
        %v4918 = vpop.f32.mrf.mxu0
        %v4919 = vadd.f32 0.0, %v4918
        %v4920 = vpop.f32.mrf.mxu0
        %4921 = vmatprep.mubr.bf16.mxu0 0
        %4922 = vmatmul.mubr.bf16.gmra.mxu0 %v4819
        %v4923 = vpop.f32.mrf.mxu0
        %v4924 = vadd.f32 0.0, %v4923
        %v4925 = vpop.f32.mrf.mxu0
        %v4926 = vpop.f32.mrf.mxu0
        %v4927 = vadd.f32 0.0, %v4926
        %v4928 = vpop.f32.mrf.mxu0
        %4929 = vmatprep.mubr.bf16.mxu0 0
        %4930 = vmatmul.mubr.bf16.gmra.mxu0 %v4822
        %v4931 = vpop.f32.mrf.mxu0
        %v4932 = vadd.f32 0.0, %v4931
        %v4933 = vpop.f32.mrf.mxu0
        %v4934 = vpop.f32.mrf.mxu0
        %v4935 = vadd.f32 0.0, %v4934
        %v4936 = vpop.f32.mrf.mxu0
        %4937 = vmatprep.mubr.bf16.mxu0 0
        %4938 = vmatmul.mubr.bf16.gmra.mxu0 %v4825
        %v4939 = vpop.f32.mrf.mxu0
        %v4940 = vadd.f32 0.0, %v4939
        %v4941 = vpop.f32.mrf.mxu0
        %v4942 = vpop.f32.mrf.mxu0
        %v4943 = vadd.f32 0.0, %v4942
        %v4944 = vpop.f32.mrf.mxu0
        %4945 = vmatprep.mubr.bf16.mxu0 0
        %4946 = vmatmul.mubr.bf16.gmra.mxu0 %v4828
        %v4947 = vpop.f32.mrf.mxu0
        %v4948 = vadd.f32 0.0, %v4947
        %v4949 = vpop.f32.mrf.mxu0
        %v4950 = vpop.f32.mrf.mxu0
        %v4951 = vadd.f32 0.0, %v4950
        %v4952 = vpop.f32.mrf.mxu0
        %4953 = vmatprep.mubr.bf16.mxu0 0
        %4954 = vmatmul.mubr.bf16.gmra.mxu0 %v4831
        %v4955 = vpop.f32.mrf.mxu0
        %v4956 = vadd.f32 0.0, %v4955
        %v4957 = vpop.f32.mrf.mxu0
        %v4958 = vpop.f32.mrf.mxu0
        %v4959 = vadd.f32 0.0, %v4958
        %v4960 = vpop.f32.mrf.mxu0
        %4961 = vmatprep.mubr.bf16.mxu0 0
        %4962 = vmatmul.mubr.bf16.gmra.mxu0 %v4834
        %v4963 = vpop.f32.mrf.mxu0
        %v4964 = vadd.f32 0.0, %v4963
        %v4965 = vpop.f32.mrf.mxu0
        %v4966 = vpop.f32.mrf.mxu0
        %v4967 = vadd.f32 0.0, %v4966
        %v4968 = vpop.f32.mrf.mxu0
        %4969 = vmatprep.mubr.bf16.mxu0 0
        %4970 = vmatmul.mubr.bf16.gmra.mxu0 %v4837
        %v4971 = vpop.f32.mrf.mxu0
        %v4972 = vadd.f32 0.0, %v4971
        %v4973 = vpop.f32.mrf.mxu0
        %v4974 = vpop.f32.mrf.mxu0
        %v4975 = vadd.f32 0.0, %v4974
        %v4976 = vpop.f32.mrf.mxu0
        %4977 = vmatprep.mubr.bf16.mxu0 0
        %4978 = vmatmul.mubr.bf16.gmra.mxu0 %v4840
        %v4979 = vpop.f32.mrf.mxu0
        %v4980 = vadd.f32 0.0, %v4979
        %v4981 = vpop.f32.mrf.mxu0
        %v4982 = vpop.f32.mrf.mxu0
        %v4983 = vadd.f32 0.0, %v4982
        %v4984 = vpop.f32.mrf.mxu0
        %4985 = vmatprep.mubr.bf16.mxu0 0
        %4986 = vmatmul.mubr.bf16.gmra.mxu0 %v4843
        %v4987 = vpop.f32.mrf.mxu0
        %v4988 = vadd.f32 0.0, %v4987
        %v4989 = vpop.f32.mrf.mxu0
        %v4990 = vpop.f32.mrf.mxu0
        %v4991 = vadd.f32 0.0, %v4990
        %v4992 = vpop.f32.mrf.mxu0
        %4993 = vmatprep.mubr.bf16.mxu0 0
        %4994 = vmatmul.mubr.bf16.gmra.mxu0 %v4846
        %v4995 = vpop.f32.mrf.mxu0
        %v4996 = vadd.f32 0.0, %v4995
        %v4997 = vpop.f32.mrf.mxu0
        %v4998 = vpop.f32.mrf.mxu0
        %v4999 = vadd.f32 0.0, %v4998
        %v5000 = vpop.f32.mrf.mxu0
        %5001 = vmatprep.mubr.bf16.mxu0 0
        %5002 = vmatmul.mubr.bf16.gmra.mxu0 %v4849
        %v5003 = vpop.f32.mrf.mxu0
        %v5004 = vadd.f32 0.0, %v5003
        %v5005 = vpop.f32.mrf.mxu0
        %v5006 = vpop.f32.mrf.mxu0
        %v5007 = vadd.f32 0.0, %v5006
        %v5008 = vpop.f32.mrf.mxu0
        %5009 = vmatprep.mubr.bf16.mxu0 0
        %5010 = vmatmul.mubr.bf16.gmra.mxu0 %v4852
        %v5011 = vpop.f32.mrf.mxu0
        %v5012 = vadd.f32 0.0, %v5011
        %v5013 = vpop.f32.mrf.mxu0
        %v5014 = vpop.f32.mrf.mxu0
        %v5015 = vadd.f32 0.0, %v5014
        %v5016 = vpop.f32.mrf.mxu0
        %5017 = vdwg.mxu0
        %v5018 = vadd.f32 %v4292, %v4892
        %v5019 = vadd.f32 %v4293, %v4895
        %v5020 = vadd.f32 %v4294, %v4900
        %v5021 = vadd.f32 %v4295, %v4903
        %v5022 = vadd.f32 %v4296, %v4908
        %v5023 = vadd.f32 %v4297, %v4911
        %v5024 = vadd.f32 %v4298, %v4916
        %v5025 = vadd.f32 %v4299, %v4919
        %v5026 = vadd.f32 %v4300, %v4924
        %v5027 = vadd.f32 %v4301, %v4927
        %v5028 = vadd.f32 %v4302, %v4932
        %v5029 = vadd.f32 %v4303, %v4935
        %v5030 = vadd.f32 %v4304, %v4940
        %v5031 = vadd.f32 %v4305, %v4943
        %v5032 = vadd.f32 %v4306, %v4948
        %v5033 = vadd.f32 %v4307, %v4951
        %v5034 = vadd.f32 %v4308, %v4956
        %v5035 = vadd.f32 %v4309, %v4959
        %v5036 = vadd.f32 %v4310, %v4964
        %v5037 = vadd.f32 %v4311, %v4967
        %v5038 = vadd.f32 %v4312, %v4972
        %v5039 = vadd.f32 %v4313, %v4975
        %v5040 = vadd.f32 %v4314, %v4980
        %v5041 = vadd.f32 %v4315, %v4983
        %v5042 = vadd.f32 %v4316, %v4988
        %v5043 = vadd.f32 %v4317, %v4991
        %v5044 = vadd.f32 %v4318, %v4996
        %v5045 = vadd.f32 %v4319, %v4999
        %v5046 = vadd.f32 %v4320, %v5004
        %v5047 = vadd.f32 %v4321, %v5007
        %v5048 = vadd.f32 %v4322, %v5012
        %v5049 = vadd.f32 %v4323, %v5015
        %v5050 = vld [vmem:[%s3965] sm:$0xe]
        %v5051 = vld [vmem:[%s3965 + $0xc] sm:$0xe]
        %v5052 = vld [vmem:[%s3965 + $0x18] sm:$0xe]
        %v5053 = vld [vmem:[%s3965 + $0x24] sm:$0xe]
        %v5054 = vld [vmem:[%s3965 + $0x30] sm:$0xe]
        %v5055 = vld [vmem:[%s3965 + $0x3c] sm:$0xe]
        %v5056 = vld [vmem:[%s3965 + $0x48] sm:$0xe]
        %v5057 = vld [vmem:[%s3965 + $0x54] sm:$0xe]
        %v5058 = vld [vmem:[%s3965 + $0x60] sm:$0xe]
        %v5059 = vld [vmem:[%s3965 + $0x6c] sm:$0xe]
        %v5060 = vld [vmem:[%s3965 + $0x78] sm:$0xe]
        %v5061 = vld [vmem:[%s3965 + $0x84] sm:$0xe]
        %v5062 = vld [vmem:[%s3965 + $0x90] sm:$0xe]
        %v5063 = vld [vmem:[%s3965 + $0x9c] sm:$0xe]
        %v5064 = vld [vmem:[%s3965 + $0xa8] sm:$0xe]
        %v5065 = vld [vmem:[%s3965 + $0xb4] sm:$0xe]
        %v5114 = vrot.slane %v5050, 5
        %v5115 = vrot.slane %v5114, 4
        %v5116 = vrot.slane %v4325, 5
        %v5117 = vsel %vm2004, %v5115, %v5116
        %v5118 = vrot.slane %v5116, 4
        %v5119 = vrot.slane %v4326, 5
        %v5120 = vsel %vm2004, %v5118, %v5119
        %v5121 = vrot.slane %v5051, 5
        %v5122 = vrot.slane %v5121, 4
        %v5123 = vrot.slane %v4328, 5
        %v5124 = vsel %vm2004, %v5122, %v5123
        %v5125 = vrot.slane %v5123, 4
        %v5126 = vrot.slane %v4329, 5
        %v5127 = vsel %vm2004, %v5125, %v5126
        %v5128 = vrot.slane %v5052, 5
        %v5129 = vrot.slane %v5128, 4
        %v5130 = vrot.slane %v4331, 5
        %v5131 = vsel %vm2004, %v5129, %v5130
        %v5132 = vrot.slane %v5130, 4
        %v5133 = vrot.slane %v4332, 5
        %v5134 = vsel %vm2004, %v5132, %v5133
        %v5135 = vrot.slane %v5053, 5
        %v5136 = vrot.slane %v5135, 4
        %v5137 = vrot.slane %v4334, 5
        %v5138 = vsel %vm2004, %v5136, %v5137
        %v5139 = vrot.slane %v5137, 4
        %v5140 = vrot.slane %v4335, 5
        %v5141 = vsel %vm2004, %v5139, %v5140
        %v5142 = vrot.slane %v5054, 5
        %v5143 = vrot.slane %v5142, 4
        %v5144 = vrot.slane %v4337, 5
        %v5145 = vsel %vm2004, %v5143, %v5144
        %v5146 = vrot.slane %v5144, 4
        %v5147 = vrot.slane %v4338, 5
        %v5148 = vsel %vm2004, %v5146, %v5147
        %v5149 = vrot.slane %v5055, 5
        %v5150 = vrot.slane %v5149, 4
        %v5151 = vrot.slane %v4340, 5
        %v5152 = vsel %vm2004, %v5150, %v5151
        %v5153 = vrot.slane %v5151, 4
        %v5154 = vrot.slane %v4341, 5
        %v5155 = vsel %vm2004, %v5153, %v5154
        %v5156 = vrot.slane %v5056, 5
        %v5157 = vrot.slane %v5156, 4
        %v5158 = vrot.slane %v4343, 5
        %v5159 = vsel %vm2004, %v5157, %v5158
        %v5160 = vrot.slane %v5158, 4
        %v5161 = vrot.slane %v4344, 5
        %v5162 = vsel %vm2004, %v5160, %v5161
        %v5163 = vrot.slane %v5057, 5
        %v5164 = vrot.slane %v5163, 4
        %v5165 = vrot.slane %v4346, 5
        %v5166 = vsel %vm2004, %v5164, %v5165
        %v5167 = vrot.slane %v5165, 4
        %v5168 = vrot.slane %v4347, 5
        %v5169 = vsel %vm2004, %v5167, %v5168
        %v5170 = vrot.slane %v5058, 5
        %v5171 = vrot.slane %v5170, 4
        %v5172 = vrot.slane %v4349, 5
        %v5173 = vsel %vm2004, %v5171, %v5172
        %v5174 = vrot.slane %v5172, 4
        %v5175 = vrot.slane %v4350, 5
        %v5176 = vsel %vm2004, %v5174, %v5175
        %v5177 = vrot.slane %v5059, 5
        %v5178 = vrot.slane %v5177, 4
        %v5179 = vrot.slane %v4352, 5
        %v5180 = vsel %vm2004, %v5178, %v5179
        %v5181 = vrot.slane %v5179, 4
        %v5182 = vrot.slane %v4353, 5
        %v5183 = vsel %vm2004, %v5181, %v5182
        %v5184 = vrot.slane %v5060, 5
        %v5185 = vrot.slane %v5184, 4
        %v5186 = vrot.slane %v4355, 5
        %v5187 = vsel %vm2004, %v5185, %v5186
        %v5188 = vrot.slane %v5186, 4
        %v5189 = vrot.slane %v4356, 5
        %v5190 = vsel %vm2004, %v5188, %v5189
        %v5191 = vrot.slane %v5061, 5
        %v5192 = vrot.slane %v5191, 4
        %v5193 = vrot.slane %v4358, 5
        %v5194 = vsel %vm2004, %v5192, %v5193
        %v5195 = vrot.slane %v5193, 4
        %v5196 = vrot.slane %v4359, 5
        %v5197 = vsel %vm2004, %v5195, %v5196
        %v5198 = vrot.slane %v5062, 5
        %v5199 = vrot.slane %v5198, 4
        %v5200 = vrot.slane %v4361, 5
        %v5201 = vsel %vm2004, %v5199, %v5200
        %v5202 = vrot.slane %v5200, 4
        %v5203 = vrot.slane %v4362, 5
        %v5204 = vsel %vm2004, %v5202, %v5203
        %v5205 = vrot.slane %v5063, 5
        %v5206 = vrot.slane %v5205, 4
        %v5207 = vrot.slane %v4364, 5
        %v5208 = vsel %vm2004, %v5206, %v5207
        %v5209 = vrot.slane %v5207, 4
        %v5210 = vrot.slane %v4365, 5
        %v5211 = vsel %vm2004, %v5209, %v5210
        %v5212 = vrot.slane %v5064, 5
        %v5213 = vrot.slane %v5212, 4
        %v5214 = vrot.slane %v4367, 5
        %v5215 = vsel %vm2004, %v5213, %v5214
        %v5216 = vrot.slane %v5214, 4
        %v5217 = vrot.slane %v4368, 5
        %v5218 = vsel %vm2004, %v5216, %v5217
        %v5219 = vrot.slane %v5065, 5
        %v5220 = vrot.slane %v5219, 4
        %v5221 = vrot.slane %v4370, 5
        %v5222 = vsel %vm2004, %v5220, %v5221
        %v5223 = vrot.slane %v5221, 4
        %v5224 = vrot.slane %v4371, 5
        %v5225 = vsel %vm2004, %v5223, %v5224
        %s5226 = scalar_lea.vmem %s1, 16
        %v5227 = vld [vmem:[%s5226] sm:$0x3]
        %v5228 = vunpack.c.l.b16 %v5117
        %v5229 = vunpack.c.l.b16 %v5120
        %v5230 = vunpack.c.l.b16 %v5124
        %v5231 = vunpack.c.l.b16 %v5127
        %v5232 = vunpack.c.l.b16 %v5131
        %v5233 = vunpack.c.l.b16 %v5134
        %v5234 = vunpack.c.l.b16 %v5138
        %v5235 = vunpack.c.l.b16 %v5141
        %v5236 = vunpack.c.l.b16 %v5145
        %v5237 = vunpack.c.l.b16 %v5148
        %v5238 = vunpack.c.l.b16 %v5152
        %v5239 = vunpack.c.l.b16 %v5155
        %v5240 = vunpack.c.l.b16 %v5159
        %v5241 = vunpack.c.l.b16 %v5162
        %v5242 = vunpack.c.l.b16 %v5166
        %v5243 = vunpack.c.l.b16 %v5169
        %v5244 = vunpack.c.l.b16 %v5173
        %v5245 = vunpack.c.l.b16 %v5176
        %v5246 = vunpack.c.l.b16 %v5180
        %v5247 = vunpack.c.l.b16 %v5183
        %v5248 = vunpack.c.l.b16 %v5187
        %v5249 = vunpack.c.l.b16 %v5190
        %v5250 = vunpack.c.l.b16 %v5194
        %v5251 = vunpack.c.l.b16 %v5197
        %v5252 = vunpack.c.l.b16 %v5201
        %v5253 = vunpack.c.l.b16 %v5204
        %v5254 = vunpack.c.l.b16 %v5208
        %v5255 = vunpack.c.l.b16 %v5211
        %v5256 = vunpack.c.l.b16 %v5215
        %v5257 = vunpack.c.l.b16 %v5218
        %v5258 = vunpack.c.l.b16 %v5222
        %v5259 = vunpack.c.l.b16 %v5225
        %v5260 = vpack.c.b16 %v5229, %v5228
        %v5261 = vpack.c.b16 %v5231, %v5230
        %v5262 = vpack.c.b16 %v5233, %v5232
        %v5263 = vpack.c.b16 %v5235, %v5234
        %v5264 = vpack.c.b16 %v5237, %v5236
        %v5265 = vpack.c.b16 %v5239, %v5238
        %v5266 = vpack.c.b16 %v5241, %v5240
        %v5267 = vpack.c.b16 %v5243, %v5242
        %v5268 = vpack.c.b16 %v5245, %v5244
        %v5269 = vpack.c.b16 %v5247, %v5246
        %v5270 = vpack.c.b16 %v5249, %v5248
        %v5271 = vpack.c.b16 %v5251, %v5250
        %v5272 = vpack.c.b16 %v5253, %v5252
        %v5273 = vpack.c.b16 %v5255, %v5254
        %v5274 = vpack.c.b16 %v5257, %v5256
        %v5275 = vpack.c.b16 %v5259, %v5258
        %v5277 = vsel %vm1448, %v5260, 0
        %v5280 = vsel %vm1448, %v5261, 0
        %v5283 = vsel %vm1448, %v5262, 0
        %v5286 = vsel %vm1448, %v5263, 0
        %v5289 = vsel %vm1448, %v5264, 0
        %v5292 = vsel %vm1448, %v5265, 0
        %v5295 = vsel %vm1448, %v5266, 0
        %v5298 = vsel %vm1448, %v5267, 0
        %v5301 = vsel %vm1448, %v5268, 0
        %v5304 = vsel %vm1448, %v5269, 0
        %v5307 = vsel %vm1448, %v5270, 0
        %v5310 = vsel %vm1448, %v5271, 0
        %v5313 = vsel %vm1448, %v5272, 0
        %v5316 = vsel %vm1448, %v5273, 0
        %v5319 = vsel %vm1448, %v5274, 0
        %v5322 = vsel %vm1448, %v5275, 0
        %v5325 = vsel %vm1497, %v5227, 0
        %5327 = vmatprep.subr.bf16.mxu0 0
        %5328 = vmatpush1.bf16.msra.mxu0 0
        %5329 = vmatprep.subr.bf16.mxu0 0
        %5330 = vmatpush1.bf16.msra.mxu0 0
        %5331 = vmatprep.subr.bf16.mxu0 0
        %5332 = vmatpush1.bf16.msra.mxu0 0
        %5333 = vmatprep.subr.bf16.mxu0 0
        %5334 = vmatpush1.bf16.msra.mxu0 0
        %5335 = vmatprep.subr.bf16.mxu0 0
        %5336 = vmatpush1.bf16.msra.mxu0 0
        %5337 = vmatprep.subr.bf16.mxu0 0
        %5338 = vmatpush1.bf16.msra.mxu0 0
        %5339 = vmatprep.subr.bf16.mxu0 0
        %5340 = vmatpush1.bf16.msra.mxu0 0
        %5341 = vmatprep.subr.bf16.mxu0 0
        %5342 = vmatpush1.bf16.msra.mxu0 %v5325
        %5343 = vmatprep.subr.bf16.mxu0 0
        %5344 = vmatpush2.bf16.msra.mxu0 0
        %5345 = vmatprep.subr.bf16.mxu0 0
        %5346 = vmatpush2.bf16.msra.mxu0 0
        %5347 = vmatprep.subr.bf16.mxu0 0
        %5348 = vmatpush2.bf16.msra.mxu0 0
        %5349 = vmatprep.subr.bf16.mxu0 0
        %5350 = vmatpush2.bf16.msra.mxu0 0
        %5351 = vmatprep.subr.bf16.mxu0 0
        %5352 = vmatpush2.bf16.msra.mxu0 0
        %5353 = vmatprep.subr.bf16.mxu0 0
        %5354 = vmatpush2.bf16.msra.mxu0 0
        %5355 = vmatprep.subr.bf16.mxu0 0
        %5356 = vmatpush2.bf16.msra.mxu0 0
        %5357 = vmatprep.subr.bf16.mxu0 0
        %5358 = vmatpush2.bf16.msra.mxu0 0
        %5359 = vmatprep.mubr.bf16.mxu0 0
        %5360 = vmatmul.mubr.bf16.gmra.mxu0 %v5277
        %v5361 = vpop.f32.mrf.mxu0
        %v5362 = vadd.f32 0.0, %v5361
        %v5363 = vpop.f32.mrf.mxu0
        %v5364 = vpop.f32.mrf.mxu0
        %v5365 = vadd.f32 0.0, %v5364
        %v5366 = vpop.f32.mrf.mxu0
        %5367 = vmatprep.mubr.bf16.mxu0 0
        %5368 = vmatmul.mubr.bf16.gmra.mxu0 %v5280
        %v5369 = vpop.f32.mrf.mxu0
        %v5370 = vadd.f32 0.0, %v5369
        %v5371 = vpop.f32.mrf.mxu0
        %v5372 = vpop.f32.mrf.mxu0
        %v5373 = vadd.f32 0.0, %v5372
        %v5374 = vpop.f32.mrf.mxu0
        %5375 = vmatprep.mubr.bf16.mxu0 0
        %5376 = vmatmul.mubr.bf16.gmra.mxu0 %v5283
        %v5377 = vpop.f32.mrf.mxu0
        %v5378 = vadd.f32 0.0, %v5377
        %v5379 = vpop.f32.mrf.mxu0
        %v5380 = vpop.f32.mrf.mxu0
        %v5381 = vadd.f32 0.0, %v5380
        %v5382 = vpop.f32.mrf.mxu0
        %5383 = vmatprep.mubr.bf16.mxu0 0
        %5384 = vmatmul.mubr.bf16.gmra.mxu0 %v5286
        %v5385 = vpop.f32.mrf.mxu0
        %v5386 = vadd.f32 0.0, %v5385
        %v5387 = vpop.f32.mrf.mxu0
        %v5388 = vpop.f32.mrf.mxu0
        %v5389 = vadd.f32 0.0, %v5388
        %v5390 = vpop.f32.mrf.mxu0
        %5391 = vmatprep.mubr.bf16.mxu0 0
        %5392 = vmatmul.mubr.bf16.gmra.mxu0 %v5289
        %v5393 = vpop.f32.mrf.mxu0
        %v5394 = vadd.f32 0.0, %v5393
        %v5395 = vpop.f32.mrf.mxu0
        %v5396 = vpop.f32.mrf.mxu0
        %v5397 = vadd.f32 0.0, %v5396
        %v5398 = vpop.f32.mrf.mxu0
        %5399 = vmatprep.mubr.bf16.mxu0 0
        %5400 = vmatmul.mubr.bf16.gmra.mxu0 %v5292
        %v5401 = vpop.f32.mrf.mxu0
        %v5402 = vadd.f32 0.0, %v5401
        %v5403 = vpop.f32.mrf.mxu0
        %v5404 = vpop.f32.mrf.mxu0
        %v5405 = vadd.f32 0.0, %v5404
        %v5406 = vpop.f32.mrf.mxu0
        %5407 = vmatprep.mubr.bf16.mxu0 0
        %5408 = vmatmul.mubr.bf16.gmra.mxu0 %v5295
        %v5409 = vpop.f32.mrf.mxu0
        %v5410 = vadd.f32 0.0, %v5409
        %v5411 = vpop.f32.mrf.mxu0
        %v5412 = vpop.f32.mrf.mxu0
        %v5413 = vadd.f32 0.0, %v5412
        %v5414 = vpop.f32.mrf.mxu0
        %5415 = vmatprep.mubr.bf16.mxu0 0
        %5416 = vmatmul.mubr.bf16.gmra.mxu0 %v5298
        %v5417 = vpop.f32.mrf.mxu0
        %v5418 = vadd.f32 0.0, %v5417
        %v5419 = vpop.f32.mrf.mxu0
        %v5420 = vpop.f32.mrf.mxu0
        %v5421 = vadd.f32 0.0, %v5420
        %v5422 = vpop.f32.mrf.mxu0
        %5423 = vmatprep.mubr.bf16.mxu0 0
        %5424 = vmatmul.mubr.bf16.gmra.mxu0 %v5301
        %v5425 = vpop.f32.mrf.mxu0
        %v5426 = vadd.f32 0.0, %v5425
        %v5427 = vpop.f32.mrf.mxu0
        %v5428 = vpop.f32.mrf.mxu0
        %v5429 = vadd.f32 0.0, %v5428
        %v5430 = vpop.f32.mrf.mxu0
        %5431 = vmatprep.mubr.bf16.mxu0 0
        %5432 = vmatmul.mubr.bf16.gmra.mxu0 %v5304
        %v5433 = vpop.f32.mrf.mxu0
        %v5434 = vadd.f32 0.0, %v5433
        %v5435 = vpop.f32.mrf.mxu0
        %v5436 = vpop.f32.mrf.mxu0
        %v5437 = vadd.f32 0.0, %v5436
        %v5438 = vpop.f32.mrf.mxu0
        %5439 = vmatprep.mubr.bf16.mxu0 0
        %5440 = vmatmul.mubr.bf16.gmra.mxu0 %v5307
        %v5441 = vpop.f32.mrf.mxu0
        %v5442 = vadd.f32 0.0, %v5441
        %v5443 = vpop.f32.mrf.mxu0
        %v5444 = vpop.f32.mrf.mxu0
        %v5445 = vadd.f32 0.0, %v5444
        %v5446 = vpop.f32.mrf.mxu0
        %5447 = vmatprep.mubr.bf16.mxu0 0
        %5448 = vmatmul.mubr.bf16.gmra.mxu0 %v5310
        %v5449 = vpop.f32.mrf.mxu0
        %v5450 = vadd.f32 0.0, %v5449
        %v5451 = vpop.f32.mrf.mxu0
        %v5452 = vpop.f32.mrf.mxu0
        %v5453 = vadd.f32 0.0, %v5452
        %v5454 = vpop.f32.mrf.mxu0
        %5455 = vmatprep.mubr.bf16.mxu0 0
        %5456 = vmatmul.mubr.bf16.gmra.mxu0 %v5313
        %v5457 = vpop.f32.mrf.mxu0
        %v5458 = vadd.f32 0.0, %v5457
        %v5459 = vpop.f32.mrf.mxu0
        %v5460 = vpop.f32.mrf.mxu0
        %v5461 = vadd.f32 0.0, %v5460
        %v5462 = vpop.f32.mrf.mxu0
        %5463 = vmatprep.mubr.bf16.mxu0 0
        %5464 = vmatmul.mubr.bf16.gmra.mxu0 %v5316
        %v5465 = vpop.f32.mrf.mxu0
        %v5466 = vadd.f32 0.0, %v5465
        %v5467 = vpop.f32.mrf.mxu0
        %v5468 = vpop.f32.mrf.mxu0
        %v5469 = vadd.f32 0.0, %v5468
        %v5470 = vpop.f32.mrf.mxu0
        %5471 = vmatprep.mubr.bf16.mxu0 0
        %5472 = vmatmul.mubr.bf16.gmra.mxu0 %v5319
        %v5473 = vpop.f32.mrf.mxu0
        %v5474 = vadd.f32 0.0, %v5473
        %v5475 = vpop.f32.mrf.mxu0
        %v5476 = vpop.f32.mrf.mxu0
        %v5477 = vadd.f32 0.0, %v5476
        %v5478 = vpop.f32.mrf.mxu0
        %5479 = vmatprep.mubr.bf16.mxu0 0
        %5480 = vmatmul.mubr.bf16.gmra.mxu0 %v5322
        %v5481 = vpop.f32.mrf.mxu0
        %v5482 = vadd.f32 0.0, %v5481
        %v5483 = vpop.f32.mrf.mxu0
        %v5484 = vpop.f32.mrf.mxu0
        %v5485 = vadd.f32 0.0, %v5484
        %v5486 = vpop.f32.mrf.mxu0
        %5487 = vdwg.mxu0
        %v5488 = vadd.f32 %v5018, %v5362
        %v5489 = vadd.f32 %v5019, %v5365
        %v5490 = vadd.f32 %v5020, %v5370
        %v5491 = vadd.f32 %v5021, %v5373
        %v5492 = vadd.f32 %v5022, %v5378
        %v5493 = vadd.f32 %v5023, %v5381
        %v5494 = vadd.f32 %v5024, %v5386
        %v5495 = vadd.f32 %v5025, %v5389
        %v5496 = vadd.f32 %v5026, %v5394
        %v5497 = vadd.f32 %v5027, %v5397
        %v5498 = vadd.f32 %v5028, %v5402
        %v5499 = vadd.f32 %v5029, %v5405
        %v5500 = vadd.f32 %v5030, %v5410
        %v5501 = vadd.f32 %v5031, %v5413
        %v5502 = vadd.f32 %v5032, %v5418
        %v5503 = vadd.f32 %v5033, %v5421
        %v5504 = vadd.f32 %v5034, %v5426
        %v5505 = vadd.f32 %v5035, %v5429
        %v5506 = vadd.f32 %v5036, %v5434
        %v5507 = vadd.f32 %v5037, %v5437
        %v5508 = vadd.f32 %v5038, %v5442
        %v5509 = vadd.f32 %v5039, %v5445
        %v5510 = vadd.f32 %v5040, %v5450
        %v5511 = vadd.f32 %v5041, %v5453
        %v5512 = vadd.f32 %v5042, %v5458
        %v5513 = vadd.f32 %v5043, %v5461
        %v5514 = vadd.f32 %v5044, %v5466
        %v5515 = vadd.f32 %v5045, %v5469
        %v5516 = vadd.f32 %v5046, %v5474
        %v5517 = vadd.f32 %v5047, %v5477
        %v5518 = vadd.f32 %v5048, %v5482
        %v5519 = vadd.f32 %v5049, %v5485
        %v5520 = vld [vmem:[%s3] sm:$0x1]
        %v5522 = vlaneseq
        %v5523 = vshrl.u32 %v5522, 7
        %v5524 = vsub.s32 0, %v5523
        %v5525 = vrot.slane %v5520, %v5524
        %v5527 = vmul.f32 %v5488, %v5525
        %v5528 = vmul.f32 %v5489, %v5525
        %v5529 = vmul.f32 %v5490, %v5525
        %v5530 = vmul.f32 %v5491, %v5525
        %v5531 = vmul.f32 %v5492, %v5525
        %v5532 = vmul.f32 %v5493, %v5525
        %v5533 = vmul.f32 %v5494, %v5525
        %v5534 = vmul.f32 %v5495, %v5525
        %v5535 = vmul.f32 %v5496, %v5525
        %v5536 = vmul.f32 %v5497, %v5525
        %v5537 = vmul.f32 %v5498, %v5525
        %v5538 = vmul.f32 %v5499, %v5525
        %v5539 = vmul.f32 %v5500, %v5525
        %v5540 = vmul.f32 %v5501, %v5525
        %v5541 = vmul.f32 %v5502, %v5525
        %v5542 = vmul.f32 %v5503, %v5525
        %v5543 = vmul.f32 %v5504, %v5525
        %v5544 = vmul.f32 %v5505, %v5525
        %v5545 = vmul.f32 %v5506, %v5525
        %v5546 = vmul.f32 %v5507, %v5525
        %v5547 = vmul.f32 %v5508, %v5525
        %v5548 = vmul.f32 %v5509, %v5525
        %v5549 = vmul.f32 %v5510, %v5525
        %v5550 = vmul.f32 %v5511, %v5525
        %v5551 = vmul.f32 %v5512, %v5525
        %v5552 = vmul.f32 %v5513, %v5525
        %v5553 = vmul.f32 %v5514, %v5525
        %v5554 = vmul.f32 %v5515, %v5525
        %v5555 = vmul.f32 %v5516, %v5525
        %v5556 = vmul.f32 %v5517, %v5525
        %v5557 = vmul.f32 %v5518, %v5525
        %v5558 = vmul.f32 %v5519, %v5525
        %v5559 = vld [vmem:[%s4] sm:$0x1]
        %v5561 = vlaneseq
        %v5562 = vshrl.u32 %v5561, 7
        %v5563 = vsub.s32 0, %v5562
        %v5564 = vrot.slane %v5559, %v5563
        %v5566 = vadd.f32 %v5527, %v5564
        %v5567 = vadd.f32 %v5528, %v5564
        %v5568 = vadd.f32 %v5529, %v5564
        %v5569 = vadd.f32 %v5530, %v5564
        %v5570 = vadd.f32 %v5531, %v5564
        %v5571 = vadd.f32 %v5532, %v5564
        %v5572 = vadd.f32 %v5533, %v5564
        %v5573 = vadd.f32 %v5534, %v5564
        %v5574 = vadd.f32 %v5535, %v5564
        %v5575 = vadd.f32 %v5536, %v5564
        %v5576 = vadd.f32 %v5537, %v5564
        %v5577 = vadd.f32 %v5538, %v5564
        %v5578 = vadd.f32 %v5539, %v5564
        %v5579 = vadd.f32 %v5540, %v5564
        %v5580 = vadd.f32 %v5541, %v5564
        %v5581 = vadd.f32 %v5542, %v5564
        %v5582 = vadd.f32 %v5543, %v5564
        %v5583 = vadd.f32 %v5544, %v5564
        %v5584 = vadd.f32 %v5545, %v5564
        %v5585 = vadd.f32 %v5546, %v5564
        %v5586 = vadd.f32 %v5547, %v5564
        %v5587 = vadd.f32 %v5548, %v5564
        %v5588 = vadd.f32 %v5549, %v5564
        %v5589 = vadd.f32 %v5550, %v5564
        %v5590 = vadd.f32 %v5551, %v5564
        %v5591 = vadd.f32 %v5552, %v5564
        %v5592 = vadd.f32 %v5553, %v5564
        %v5593 = vadd.f32 %v5554, %v5564
        %v5594 = vadd.f32 %v5555, %v5564
        %v5595 = vadd.f32 %v5556, %v5564
        %v5596 = vadd.f32 %v5557, %v5564
        %v5597 = vadd.f32 %v5558, %v5564
        %v5598 = vmax.f32 %v5566, 0.0
        %v5599 = vmax.f32 %v5567, 0.0
        %v5600 = vmax.f32 %v5568, 0.0
        %v5601 = vmax.f32 %v5569, 0.0
        %v5602 = vmax.f32 %v5570, 0.0
        %v5603 = vmax.f32 %v5571, 0.0
        %v5604 = vmax.f32 %v5572, 0.0
        %v5605 = vmax.f32 %v5573, 0.0
        %v5606 = vmax.f32 %v5574, 0.0
        %v5607 = vmax.f32 %v5575, 0.0
        %v5608 = vmax.f32 %v5576, 0.0
        %v5609 = vmax.f32 %v5577, 0.0
        %v5610 = vmax.f32 %v5578, 0.0
        %v5611 = vmax.f32 %v5579, 0.0
        %v5612 = vmax.f32 %v5580, 0.0
        %v5613 = vmax.f32 %v5581, 0.0
        %v5614 = vmax.f32 %v5582, 0.0
        %v5615 = vmax.f32 %v5583, 0.0
        %v5616 = vmax.f32 %v5584, 0.0
        %v5617 = vmax.f32 %v5585, 0.0
        %v5618 = vmax.f32 %v5586, 0.0
        %v5619 = vmax.f32 %v5587, 0.0
        %v5620 = vmax.f32 %v5588, 0.0
        %v5621 = vmax.f32 %v5589, 0.0
        %v5622 = vmax.f32 %v5590, 0.0
        %v5623 = vmax.f32 %v5591, 0.0
        %v5624 = vmax.f32 %v5592, 0.0
        %v5625 = vmax.f32 %v5593, 0.0
        %v5626 = vmax.f32 %v5594, 0.0
        %v5627 = vmax.f32 %v5595, 0.0
        %v5628 = vmax.f32 %v5596, 0.0
        %v5629 = vmax.f32 %v5597, 0.0
        %v5630 = vpack.c.bf16 %v5599, %v5598
        %v5631 = vpack.c.bf16 %v5601, %v5600
        %v5632 = vpack.c.bf16 %v5603, %v5602
        %v5633 = vpack.c.bf16 %v5605, %v5604
        %v5634 = vpack.c.bf16 %v5607, %v5606
        %v5635 = vpack.c.bf16 %v5609, %v5608
        %v5636 = vpack.c.bf16 %v5611, %v5610
        %v5637 = vpack.c.bf16 %v5613, %v5612
        %v5638 = vpack.c.bf16 %v5615, %v5614
        %v5639 = vpack.c.bf16 %v5617, %v5616
        %v5640 = vpack.c.bf16 %v5619, %v5618
        %v5641 = vpack.c.bf16 %v5621, %v5620
        %v5642 = vpack.c.bf16 %v5623, %v5622
        %v5643 = vpack.c.bf16 %v5625, %v5624
        %v5644 = vpack.c.bf16 %v5627, %v5626
        %v5645 = vpack.c.bf16 %v5629, %v5628
        %v5662 = vunpack.c.l.b16 %v5630
        %v5663 = vunpack.c.h.b16 %v5630
        %v5664 = vunpack.c.l.b16 %v5631
        %v5665 = vunpack.c.h.b16 %v5631
        %v5666 = vunpack.c.l.b16 %v5632
        %v5667 = vunpack.c.h.b16 %v5632
        %v5668 = vunpack.c.l.b16 %v5633
        %v5669 = vunpack.c.h.b16 %v5633
        %v5670 = vunpack.c.l.b16 %v5634
        %v5671 = vunpack.c.h.b16 %v5634
        %v5672 = vunpack.c.l.b16 %v5635
        %v5673 = vunpack.c.h.b16 %v5635
        %v5674 = vunpack.c.l.b16 %v5636
        %v5675 = vunpack.c.h.b16 %v5636
        %v5676 = vunpack.c.l.b16 %v5637
        %v5677 = vunpack.c.h.b16 %v5637
        %v5678 = vunpack.c.l.b16 %v5638
        %v5679 = vunpack.c.h.b16 %v5638
        %v5680 = vunpack.c.l.b16 %v5639
        %v5681 = vunpack.c.h.b16 %v5639
        %v5682 = vunpack.c.l.b16 %v5640
        %v5683 = vunpack.c.h.b16 %v5640
        %v5684 = vunpack.c.l.b16 %v5641
        %v5685 = vunpack.c.h.b16 %v5641
        %v5686 = vunpack.c.l.b16 %v5642
        %v5687 = vunpack.c.h.b16 %v5642
        %v5688 = vunpack.c.l.b16 %v5643
        %v5689 = vunpack.c.h.b16 %v5643
        %v5690 = vunpack.c.l.b16 %v5644
        %v5691 = vunpack.c.h.b16 %v5644
        %v5692 = vunpack.c.l.b16 %v5645
        %v5693 = vunpack.c.h.b16 %v5645
        %v5694 = vpack.c.b16 %v5662, %v5662
        %v5695 = vpack.c.b16 %v5663, %v5663
        %v5696 = vpack.c.b16 %v5664, %v5664
        %v5697 = vpack.c.b16 %v5665, %v5665
        %v5698 = vpack.c.b16 %v5666, %v5666
        %v5699 = vpack.c.b16 %v5667, %v5667
        %v5700 = vpack.c.b16 %v5668, %v5668
        %v5701 = vpack.c.b16 %v5669, %v5669
        %v5702 = vpack.c.b16 %v5670, %v5670
        %v5703 = vpack.c.b16 %v5671, %v5671
        %v5704 = vpack.c.b16 %v5672, %v5672
        %v5705 = vpack.c.b16 %v5673, %v5673
        %v5706 = vpack.c.b16 %v5674, %v5674
        %v5707 = vpack.c.b16 %v5675, %v5675
        %v5708 = vpack.c.b16 %v5676, %v5676
        %v5709 = vpack.c.b16 %v5677, %v5677
        %v5710 = vpack.c.b16 %v5678, %v5678
        %v5711 = vpack.c.b16 %v5679, %v5679
        %v5712 = vpack.c.b16 %v5680, %v5680
        %v5713 = vpack.c.b16 %v5681, %v5681
        %v5714 = vpack.c.b16 %v5682, %v5682
        %v5715 = vpack.c.b16 %v5683, %v5683
        %v5716 = vpack.c.b16 %v5684, %v5684
        %v5717 = vpack.c.b16 %v5685, %v5685
        %v5718 = vpack.c.b16 %v5686, %v5686
        %v5719 = vpack.c.b16 %v5687, %v5687
        %v5720 = vpack.c.b16 %v5688, %v5688
        %v5721 = vpack.c.b16 %v5689, %v5689
        %v5722 = vpack.c.b16 %v5690, %v5690
        %v5723 = vpack.c.b16 %v5691, %v5691
        %v5724 = vpack.c.b16 %v5692, %v5692
        %v5725 = vpack.c.b16 %v5693, %v5693
        %v5727 = vshrl.u32 %v5694, 16
        %v5729 = vrot.slane %v5727, 7
        %v5730 = vshll.u32 %v5694, 16
        %v5732 = vor.u32 %v5729, %v5730
        %v5733 = vrot.slane %v5729, 4
        %v5735 = vshrl.u32 %v5695, 16
        %v5737 = vrot.slane %v5735, 7
        %v5738 = vshll.u32 %v5695, 16
        %v5740 = vor.u32 %v5737, %v5738
        %v5741 = vsel %vm526, %v5733, %v5740
        %v5742 = vrot.slane %v5737, 4
        %v5744 = vshrl.u32 %v5696, 16
        %v5746 = vrot.slane %v5744, 7
        %v5747 = vshll.u32 %v5696, 16
        %v5749 = vor.u32 %v5746, %v5747
        %v5750 = vrot.slane %v5746, 4
        %v5752 = vshrl.u32 %v5697, 16
        %v5754 = vrot.slane %v5752, 7
        %v5755 = vshll.u32 %v5697, 16
        %v5757 = vor.u32 %v5754, %v5755
        %v5758 = vsel %vm526, %v5750, %v5757
        %v5759 = vrot.slane %v5754, 4
        %v5761 = vshrl.u32 %v5698, 16
        %v5763 = vrot.slane %v5761, 7
        %v5764 = vshll.u32 %v5698, 16
        %v5766 = vor.u32 %v5763, %v5764
        %v5767 = vrot.slane %v5763, 4
        %v5769 = vshrl.u32 %v5699, 16
        %v5771 = vrot.slane %v5769, 7
        %v5772 = vshll.u32 %v5699, 16
        %v5774 = vor.u32 %v5771, %v5772
        %v5775 = vsel %vm526, %v5767, %v5774
        %v5776 = vrot.slane %v5771, 4
        %v5778 = vshrl.u32 %v5700, 16
        %v5780 = vrot.slane %v5778, 7
        %v5781 = vshll.u32 %v5700, 16
        %v5783 = vor.u32 %v5780, %v5781
        %v5784 = vrot.slane %v5780, 4
        %v5786 = vshrl.u32 %v5701, 16
        %v5788 = vrot.slane %v5786, 7
        %v5789 = vshll.u32 %v5701, 16
        %v5791 = vor.u32 %v5788, %v5789
        %v5792 = vsel %vm526, %v5784, %v5791
        %v5793 = vrot.slane %v5788, 4
        %v5795 = vshrl.u32 %v5702, 16
        %v5797 = vrot.slane %v5795, 7
        %v5798 = vshll.u32 %v5702, 16
        %v5800 = vor.u32 %v5797, %v5798
        %v5801 = vrot.slane %v5797, 4
        %v5803 = vshrl.u32 %v5703, 16
        %v5805 = vrot.slane %v5803, 7
        %v5806 = vshll.u32 %v5703, 16
        %v5808 = vor.u32 %v5805, %v5806
        %v5809 = vsel %vm526, %v5801, %v5808
        %v5810 = vrot.slane %v5805, 4
        %v5812 = vshrl.u32 %v5704, 16
        %v5814 = vrot.slane %v5812, 7
        %v5815 = vshll.u32 %v5704, 16
        %v5817 = vor.u32 %v5814, %v5815
        %v5818 = vrot.slane %v5814, 4
        %v5820 = vshrl.u32 %v5705, 16
        %v5822 = vrot.slane %v5820, 7
        %v5823 = vshll.u32 %v5705, 16
        %v5825 = vor.u32 %v5822, %v5823
        %v5826 = vsel %vm526, %v5818, %v5825
        %v5827 = vrot.slane %v5822, 4
        %v5829 = vshrl.u32 %v5706, 16
        %v5831 = vrot.slane %v5829, 7
        %v5832 = vshll.u32 %v5706, 16
        %v5834 = vor.u32 %v5831, %v5832
        %v5835 = vrot.slane %v5831, 4
        %v5837 = vshrl.u32 %v5707, 16
        %v5839 = vrot.slane %v5837, 7
        %v5840 = vshll.u32 %v5707, 16
        %v5842 = vor.u32 %v5839, %v5840
        %v5843 = vsel %vm526, %v5835, %v5842
        %v5844 = vrot.slane %v5839, 4
        %v5846 = vshrl.u32 %v5708, 16
        %v5848 = vrot.slane %v5846, 7
        %v5849 = vshll.u32 %v5708, 16
        %v5851 = vor.u32 %v5848, %v5849
        %v5852 = vrot.slane %v5848, 4
        %v5854 = vshrl.u32 %v5709, 16
        %v5856 = vrot.slane %v5854, 7
        %v5857 = vshll.u32 %v5709, 16
        %v5859 = vor.u32 %v5856, %v5857
        %v5860 = vsel %vm526, %v5852, %v5859
        %v5861 = vrot.slane %v5856, 4
        %v5863 = vshrl.u32 %v5710, 16
        %v5865 = vrot.slane %v5863, 7
        %v5866 = vshll.u32 %v5710, 16
        %v5868 = vor.u32 %v5865, %v5866
        %v5869 = vrot.slane %v5865, 4
        %v5871 = vshrl.u32 %v5711, 16
        %v5873 = vrot.slane %v5871, 7
        %v5874 = vshll.u32 %v5711, 16
        %v5876 = vor.u32 %v5873, %v5874
        %v5877 = vsel %vm526, %v5869, %v5876
        %v5878 = vrot.slane %v5873, 4
        %v5880 = vshrl.u32 %v5712, 16
        %v5882 = vrot.slane %v5880, 7
        %v5883 = vshll.u32 %v5712, 16
        %v5885 = vor.u32 %v5882, %v5883
        %v5886 = vrot.slane %v5882, 4
        %v5888 = vshrl.u32 %v5713, 16
        %v5890 = vrot.slane %v5888, 7
        %v5891 = vshll.u32 %v5713, 16
        %v5893 = vor.u32 %v5890, %v5891
        %v5894 = vsel %vm526, %v5886, %v5893
        %v5895 = vrot.slane %v5890, 4
        %v5897 = vshrl.u32 %v5714, 16
        %v5899 = vrot.slane %v5897, 7
        %v5900 = vshll.u32 %v5714, 16
        %v5902 = vor.u32 %v5899, %v5900
        %v5903 = vrot.slane %v5899, 4
        %v5905 = vshrl.u32 %v5715, 16
        %v5907 = vrot.slane %v5905, 7
        %v5908 = vshll.u32 %v5715, 16
        %v5910 = vor.u32 %v5907, %v5908
        %v5911 = vsel %vm526, %v5903, %v5910
        %v5912 = vrot.slane %v5907, 4
        %v5914 = vshrl.u32 %v5716, 16
        %v5916 = vrot.slane %v5914, 7
        %v5917 = vshll.u32 %v5716, 16
        %v5919 = vor.u32 %v5916, %v5917
        %v5920 = vrot.slane %v5916, 4
        %v5922 = vshrl.u32 %v5717, 16
        %v5924 = vrot.slane %v5922, 7
        %v5925 = vshll.u32 %v5717, 16
        %v5927 = vor.u32 %v5924, %v5925
        %v5928 = vsel %vm526, %v5920, %v5927
        %v5929 = vrot.slane %v5924, 4
        %v5931 = vshrl.u32 %v5718, 16
        %v5933 = vrot.slane %v5931, 7
        %v5934 = vshll.u32 %v5718, 16
        %v5936 = vor.u32 %v5933, %v5934
        %v5937 = vrot.slane %v5933, 4
        %v5939 = vshrl.u32 %v5719, 16
        %v5941 = vrot.slane %v5939, 7
        %v5942 = vshll.u32 %v5719, 16
        %v5944 = vor.u32 %v5941, %v5942
        %v5945 = vsel %vm526, %v5937, %v5944
        %v5946 = vrot.slane %v5941, 4
        %v5948 = vshrl.u32 %v5720, 16
        %v5950 = vrot.slane %v5948, 7
        %v5951 = vshll.u32 %v5720, 16
        %v5953 = vor.u32 %v5950, %v5951
        %v5954 = vrot.slane %v5950, 4
        %v5956 = vshrl.u32 %v5721, 16
        %v5958 = vrot.slane %v5956, 7
        %v5959 = vshll.u32 %v5721, 16
        %v5961 = vor.u32 %v5958, %v5959
        %v5962 = vsel %vm526, %v5954, %v5961
        %v5963 = vrot.slane %v5958, 4
        %v5965 = vshrl.u32 %v5722, 16
        %v5967 = vrot.slane %v5965, 7
        %v5968 = vshll.u32 %v5722, 16
        %v5970 = vor.u32 %v5967, %v5968
        %v5971 = vrot.slane %v5967, 4
        %v5973 = vshrl.u32 %v5723, 16
        %v5975 = vrot.slane %v5973, 7
        %v5976 = vshll.u32 %v5723, 16
        %v5978 = vor.u32 %v5975, %v5976
        %v5979 = vsel %vm526, %v5971, %v5978
        %v5980 = vrot.slane %v5975, 4
        %v5982 = vshrl.u32 %v5724, 16
        %v5984 = vrot.slane %v5982, 7
        %v5985 = vshll.u32 %v5724, 16
        %v5987 = vor.u32 %v5984, %v5985
        %v5988 = vrot.slane %v5984, 4
        %v5990 = vshrl.u32 %v5725, 16
        %v5992 = vrot.slane %v5990, 7
        %v5993 = vshll.u32 %v5725, 16
        %v5995 = vor.u32 %v5992, %v5993
        %v5996 = vsel %vm526, %v5988, %v5995
        %v5997 = vrot.slane %v5992, 4
        %s6046 = scalar_lea.vmem [#allocation3], 12
        %vm6047 = vcmask 60416
        %vm6048 = vmand %vm6047, %vm317
        %v6049 = vld [vmem:[%s6046] sm:$0xf]
        %v6050 = vsel %vm6048, %v5732, %v6049
        %6051 = vst [vmem:[%s6046] sm:$0xf] %v6050
        %6052 = vst.msk [vmem:[%s6046 + $0x4] sm:$0xf] %vm373, %v5741
        %v6053 = vld [vmem:[%s6046 + $0x8] sm:$0x1]
        %v6054 = vsel %vm383, %v5742, %v6053
        %6055 = vst [vmem:[%s6046 + $0x8] sm:$0x1] %v6054
        %v6056 = vld [vmem:[%s6046 + $0xc] sm:$0xf]
        %v6057 = vsel %vm6048, %v5749, %v6056
        %6058 = vst [vmem:[%s6046 + $0xc] sm:$0xf] %v6057
        %6059 = vst.msk [vmem:[%s6046 + $0x10] sm:$0xf] %vm373, %v5758
        %v6060 = vld [vmem:[%s6046 + $0x14] sm:$0x1]
        %v6061 = vsel %vm383, %v5759, %v6060
        %6062 = vst [vmem:[%s6046 + $0x14] sm:$0x1] %v6061
        %v6063 = vld [vmem:[%s6046 + $0x18] sm:$0xf]
        %v6064 = vsel %vm6048, %v5766, %v6063
        %6065 = vst [vmem:[%s6046 + $0x18] sm:$0xf] %v6064
        %6066 = vst.msk [vmem:[%s6046 + $0x1c] sm:$0xf] %vm373, %v5775
        %v6067 = vld [vmem:[%s6046 + $0x20] sm:$0x1]
        %v6068 = vsel %vm383, %v5776, %v6067
        %6069 = vst [vmem:[%s6046 + $0x20] sm:$0x1] %v6068
        %v6070 = vld [vmem:[%s6046 + $0x24] sm:$0xf]
        %v6071 = vsel %vm6048, %v5783, %v6070
        %6072 = vst [vmem:[%s6046 + $0x24] sm:$0xf] %v6071
        %6073 = vst.msk [vmem:[%s6046 + $0x28] sm:$0xf] %vm373, %v5792
        %v6074 = vld [vmem:[%s6046 + $0x2c] sm:$0x1]
        %v6075 = vsel %vm383, %v5793, %v6074
        %6076 = vst [vmem:[%s6046 + $0x2c] sm:$0x1] %v6075
        %v6077 = vld [vmem:[%s6046 + $0x30] sm:$0xf]
        %v6078 = vsel %vm6048, %v5800, %v6077
        %6079 = vst [vmem:[%s6046 + $0x30] sm:$0xf] %v6078
        %6080 = vst.msk [vmem:[%s6046 + $0x34] sm:$0xf] %vm373, %v5809
        %v6081 = vld [vmem:[%s6046 + $0x38] sm:$0x1]
        %v6082 = vsel %vm383, %v5810, %v6081
        %6083 = vst [vmem:[%s6046 + $0x38] sm:$0x1] %v6082
        %v6084 = vld [vmem:[%s6046 + $0x3c] sm:$0xf]
        %v6085 = vsel %vm6048, %v5817, %v6084
        %6086 = vst [vmem:[%s6046 + $0x3c] sm:$0xf] %v6085
        %6087 = vst.msk [vmem:[%s6046 + $0x40] sm:$0xf] %vm373, %v5826
        %v6088 = vld [vmem:[%s6046 + $0x44] sm:$0x1]
        %v6089 = vsel %vm383, %v5827, %v6088
        %6090 = vst [vmem:[%s6046 + $0x44] sm:$0x1] %v6089
        %v6091 = vld [vmem:[%s6046 + $0x48] sm:$0xf]
        %v6092 = vsel %vm6048, %v5834, %v6091
        %6093 = vst [vmem:[%s6046 + $0x48] sm:$0xf] %v6092
        %6094 = vst.msk [vmem:[%s6046 + $0x4c] sm:$0xf] %vm373, %v5843
        %v6095 = vld [vmem:[%s6046 + $0x50] sm:$0x1]
        %v6096 = vsel %vm383, %v5844, %v6095
        %6097 = vst [vmem:[%s6046 + $0x50] sm:$0x1] %v6096
        %v6098 = vld [vmem:[%s6046 + $0x54] sm:$0xf]
        %v6099 = vsel %vm6048, %v5851, %v6098
        %6100 = vst [vmem:[%s6046 + $0x54] sm:$0xf] %v6099
        %6101 = vst.msk [vmem:[%s6046 + $0x58] sm:$0xf] %vm373, %v5860
        %v6102 = vld [vmem:[%s6046 + $0x5c] sm:$0x1]
        %v6103 = vsel %vm383, %v5861, %v6102
        %6104 = vst [vmem:[%s6046 + $0x5c] sm:$0x1] %v6103
        %v6105 = vld [vmem:[%s6046 + $0x60] sm:$0xf]
        %v6106 = vsel %vm6048, %v5868, %v6105
        %6107 = vst [vmem:[%s6046 + $0x60] sm:$0xf] %v6106
        %6108 = vst.msk [vmem:[%s6046 + $0x64] sm:$0xf] %vm373, %v5877
        %v6109 = vld [vmem:[%s6046 + $0x68] sm:$0x1]
        %v6110 = vsel %vm383, %v5878, %v6109
        %6111 = vst [vmem:[%s6046 + $0x68] sm:$0x1] %v6110
        %v6112 = vld [vmem:[%s6046 + $0x6c] sm:$0xf]
        %v6113 = vsel %vm6048, %v5885, %v6112
        %6114 = vst [vmem:[%s6046 + $0x6c] sm:$0xf] %v6113
        %6115 = vst.msk [vmem:[%s6046 + $0x70] sm:$0xf] %vm373, %v5894
        %v6116 = vld [vmem:[%s6046 + $0x74] sm:$0x1]
        %v6117 = vsel %vm383, %v5895, %v6116
        %6118 = vst [vmem:[%s6046 + $0x74] sm:$0x1] %v6117
        %v6119 = vld [vmem:[%s6046 + $0x78] sm:$0xf]
        %v6120 = vsel %vm6048, %v5902, %v6119
        %6121 = vst [vmem:[%s6046 + $0x78] sm:$0xf] %v6120
        %6122 = vst.msk [vmem:[%s6046 + $0x7c] sm:$0xf] %vm373, %v5911
        %v6123 = vld [vmem:[%s6046 + $0x80] sm:$0x1]
        %v6124 = vsel %vm383, %v5912, %v6123
        %6125 = vst [vmem:[%s6046 + $0x80] sm:$0x1] %v6124
        %v6126 = vld [vmem:[%s6046 + $0x84] sm:$0xf]
        %v6127 = vsel %vm6048, %v5919, %v6126
        %6128 = vst [vmem:[%s6046 + $0x84] sm:$0xf] %v6127
        %6129 = vst.msk [vmem:[%s6046 + $0x88] sm:$0xf] %vm373, %v5928
        %v6130 = vld [vmem:[%s6046 + $0x8c] sm:$0x1]
        %v6131 = vsel %vm383, %v5929, %v6130
        %6132 = vst [vmem:[%s6046 + $0x8c] sm:$0x1] %v6131
        %v6133 = vld [vmem:[%s6046 + $0x90] sm:$0xf]
        %v6134 = vsel %vm6048, %v5936, %v6133
        %6135 = vst [vmem:[%s6046 + $0x90] sm:$0xf] %v6134
        %6136 = vst.msk [vmem:[%s6046 + $0x94] sm:$0xf] %vm373, %v5945
        %v6137 = vld [vmem:[%s6046 + $0x98] sm:$0x1]
        %v6138 = vsel %vm383, %v5946, %v6137
        %6139 = vst [vmem:[%s6046 + $0x98] sm:$0x1] %v6138
        %v6140 = vld [vmem:[%s6046 + $0x9c] sm:$0xf]
        %v6141 = vsel %vm6048, %v5953, %v6140
        %6142 = vst [vmem:[%s6046 + $0x9c] sm:$0xf] %v6141
        %6143 = vst.msk [vmem:[%s6046 + $0xa0] sm:$0xf] %vm373, %v5962
        %v6144 = vld [vmem:[%s6046 + $0xa4] sm:$0x1]
        %v6145 = vsel %vm383, %v5963, %v6144
        %6146 = vst [vmem:[%s6046 + $0xa4] sm:$0x1] %v6145
        %v6147 = vld [vmem:[%s6046 + $0xa8] sm:$0xf]
        %v6148 = vsel %vm6048, %v5970, %v6147
        %6149 = vst [vmem:[%s6046 + $0xa8] sm:$0xf] %v6148
        %6150 = vst.msk [vmem:[%s6046 + $0xac] sm:$0xf] %vm373, %v5979
        %v6151 = vld [vmem:[%s6046 + $0xb0] sm:$0x1]
        %v6152 = vsel %vm383, %v5980, %v6151
        %6153 = vst [vmem:[%s6046 + $0xb0] sm:$0x1] %v6152
        %v6154 = vld [vmem:[%s6046 + $0xb4] sm:$0xf]
        %v6155 = vsel %vm6048, %v5987, %v6154
        %6156 = vst [vmem:[%s6046 + $0xb4] sm:$0xf] %v6155
        %6157 = vst.msk [vmem:[%s6046 + $0xb8] sm:$0xf] %vm373, %v5996
        %v6158 = vld [vmem:[%s6046 + $0xbc] sm:$0x1]
        %v6159 = vsel %vm383, %v5997, %v6158
        %6160 = vst [vmem:[%s6046 + $0xbc] sm:$0x1] %v6159
        %v6161 = vld [vmem:[#allocation3] sm:$0xf]
        %v6162 = vld [vmem:[#allocation3 + $0x4] sm:$0xf]
        %v6163 = vld [vmem:[#allocation3 + $0xc] sm:$0xf]
        %v6164 = vld [vmem:[#allocation3 + $0x10] sm:$0xf]
        %v6165 = vld [vmem:[#allocation3 + $0x18] sm:$0xf]
        %v6166 = vld [vmem:[#allocation3 + $0x1c] sm:$0xf]
        %v6167 = vld [vmem:[#allocation3 + $0x24] sm:$0xf]
        %v6168 = vld [vmem:[#allocation3 + $0x28] sm:$0xf]
        %v6169 = vld [vmem:[#allocation3 + $0x30] sm:$0xf]
        %v6170 = vld [vmem:[#allocation3 + $0x34] sm:$0xf]
        %v6171 = vld [vmem:[#allocation3 + $0x3c] sm:$0xf]
        %v6172 = vld [vmem:[#allocation3 + $0x40] sm:$0xf]
        %v6173 = vld [vmem:[#allocation3 + $0x48] sm:$0xf]
        %v6174 = vld [vmem:[#allocation3 + $0x4c] sm:$0xf]
        %v6175 = vld [vmem:[#allocation3 + $0x54] sm:$0xf]
        %v6176 = vld [vmem:[#allocation3 + $0x58] sm:$0xf]
        %v6177 = vld [vmem:[#allocation3 + $0x60] sm:$0xf]
        %v6178 = vld [vmem:[#allocation3 + $0x64] sm:$0xf]
        %v6179 = vld [vmem:[#allocation3 + $0x6c] sm:$0xf]
        %v6180 = vld [vmem:[#allocation3 + $0x70] sm:$0xf]
        %v6181 = vld [vmem:[#allocation3 + $0x78] sm:$0xf]
        %v6182 = vld [vmem:[#allocation3 + $0x7c] sm:$0xf]
        %v6183 = vld [vmem:[#allocation3 + $0x84] sm:$0xf]
        %v6184 = vld [vmem:[#allocation3 + $0x88] sm:$0xf]
        %v6185 = vld [vmem:[#allocation3 + $0x90] sm:$0xf]
        %v6186 = vld [vmem:[#allocation3 + $0x94] sm:$0xf]
        %v6187 = vld [vmem:[#allocation3 + $0x9c] sm:$0xf]
        %v6188 = vld [vmem:[#allocation3 + $0xa0] sm:$0xf]
        %v6189 = vld [vmem:[#allocation3 + $0xa8] sm:$0xf]
        %v6190 = vld [vmem:[#allocation3 + $0xac] sm:$0xf]
        %v6191 = vld [vmem:[#allocation3 + $0xb4] sm:$0xf]
        %v6192 = vld [vmem:[#allocation3 + $0xb8] sm:$0xf]
        %v6193 = vld [vmem:[%s2] sm:$0xf]
        %v6194 = vld [vmem:[#allocation3 + $0x8] sm:$0x1]
        %v6195 = vld [vmem:[#allocation3 + $0x14] sm:$0x1]
        %v6196 = vld [vmem:[#allocation3 + $0x20] sm:$0x1]
        %v6197 = vld [vmem:[#allocation3 + $0x2c] sm:$0x1]
        %v6198 = vld [vmem:[#allocation3 + $0x38] sm:$0x1]
        %v6199 = vld [vmem:[#allocation3 + $0x44] sm:$0x1]
        %v6200 = vld [vmem:[#allocation3 + $0x50] sm:$0x1]
        %v6201 = vld [vmem:[#allocation3 + $0x5c] sm:$0x1]
        %v6202 = vld [vmem:[#allocation3 + $0x68] sm:$0x1]
        %v6203 = vld [vmem:[#allocation3 + $0x74] sm:$0x1]
        %v6204 = vld [vmem:[#allocation3 + $0x80] sm:$0x1]
        %v6205 = vld [vmem:[#allocation3 + $0x8c] sm:$0x1]
        %v6206 = vld [vmem:[#allocation3 + $0x98] sm:$0x1]
        %v6207 = vld [vmem:[#allocation3 + $0xa4] sm:$0x1]
        %v6208 = vld [vmem:[#allocation3 + $0xb0] sm:$0x1]
        %v6209 = vld [vmem:[#allocation3 + $0xbc] sm:$0x1]
        %v6211 = vshrl.u32 %v6161, 16
        %v6213 = vrot.slane %v6211, 4
        %v6214 = vshll.u32 %v6161, 16
        %v6216 = vrot.slane %v6214, 5
        %v6217 = vor.u32 %v6213, %v6216
        %v6218 = vrot.slane %v6217, 4
        %v6220 = vshll.u32 %v6162, 16
        %v6222 = vrot.slane %v6220, 5
        %v6223 = vsel %vm1013, %v6218, %v6222
        %v6224 = vshrl.u32 %v6162, 16
        %v6226 = vrot.slane %v6224, 4
        %v6227 = vor.u32 %v6226, %v6222
        %v6228 = vrot.slane %v6227, 4
        %v6230 = vshll.u32 %v6194, 16
        %v6232 = vrot.slane %v6230, 5
        %v6233 = vsel %vm1013, %v6228, %v6232
        %v6235 = vshrl.u32 %v6163, 16
        %v6237 = vrot.slane %v6235, 4
        %v6238 = vshll.u32 %v6163, 16
        %v6240 = vrot.slane %v6238, 5
        %v6241 = vor.u32 %v6237, %v6240
        %v6242 = vrot.slane %v6241, 4
        %v6244 = vshll.u32 %v6164, 16
        %v6246 = vrot.slane %v6244, 5
        %v6247 = vsel %vm1013, %v6242, %v6246
        %v6248 = vshrl.u32 %v6164, 16
        %v6250 = vrot.slane %v6248, 4
        %v6251 = vor.u32 %v6250, %v6246
        %v6252 = vrot.slane %v6251, 4
        %v6254 = vshll.u32 %v6195, 16
        %v6256 = vrot.slane %v6254, 5
        %v6257 = vsel %vm1013, %v6252, %v6256
        %v6259 = vshrl.u32 %v6165, 16
        %v6261 = vrot.slane %v6259, 4
        %v6262 = vshll.u32 %v6165, 16
        %v6264 = vrot.slane %v6262, 5
        %v6265 = vor.u32 %v6261, %v6264
        %v6266 = vrot.slane %v6265, 4
        %v6268 = vshll.u32 %v6166, 16
        %v6270 = vrot.slane %v6268, 5
        %v6271 = vsel %vm1013, %v6266, %v6270
        %v6272 = vshrl.u32 %v6166, 16
        %v6274 = vrot.slane %v6272, 4
        %v6275 = vor.u32 %v6274, %v6270
        %v6276 = vrot.slane %v6275, 4
        %v6278 = vshll.u32 %v6196, 16
        %v6280 = vrot.slane %v6278, 5
        %v6281 = vsel %vm1013, %v6276, %v6280
        %v6283 = vshrl.u32 %v6167, 16
        %v6285 = vrot.slane %v6283, 4
        %v6286 = vshll.u32 %v6167, 16
        %v6288 = vrot.slane %v6286, 5
        %v6289 = vor.u32 %v6285, %v6288
        %v6290 = vrot.slane %v6289, 4
        %v6292 = vshll.u32 %v6168, 16
        %v6294 = vrot.slane %v6292, 5
        %v6295 = vsel %vm1013, %v6290, %v6294
        %v6296 = vshrl.u32 %v6168, 16
        %v6298 = vrot.slane %v6296, 4
        %v6299 = vor.u32 %v6298, %v6294
        %v6300 = vrot.slane %v6299, 4
        %v6302 = vshll.u32 %v6197, 16
        %v6304 = vrot.slane %v6302, 5
        %v6305 = vsel %vm1013, %v6300, %v6304
        %v6307 = vshrl.u32 %v6169, 16
        %v6309 = vrot.slane %v6307, 4
        %v6310 = vshll.u32 %v6169, 16
        %v6312 = vrot.slane %v6310, 5
        %v6313 = vor.u32 %v6309, %v6312
        %v6314 = vrot.slane %v6313, 4
        %v6316 = vshll.u32 %v6170, 16
        %v6318 = vrot.slane %v6316, 5
        %v6319 = vsel %vm1013, %v6314, %v6318
        %v6320 = vshrl.u32 %v6170, 16
        %v6322 = vrot.slane %v6320, 4
        %v6323 = vor.u32 %v6322, %v6318
        %v6324 = vrot.slane %v6323, 4
        %v6326 = vshll.u32 %v6198, 16
        %v6328 = vrot.slane %v6326, 5
        %v6329 = vsel %vm1013, %v6324, %v6328
        %v6331 = vshrl.u32 %v6171, 16
        %v6333 = vrot.slane %v6331, 4
        %v6334 = vshll.u32 %v6171, 16
        %v6336 = vrot.slane %v6334, 5
        %v6337 = vor.u32 %v6333, %v6336
        %v6338 = vrot.slane %v6337, 4
        %v6340 = vshll.u32 %v6172, 16
        %v6342 = vrot.slane %v6340, 5
        %v6343 = vsel %vm1013, %v6338, %v6342
        %v6344 = vshrl.u32 %v6172, 16
        %v6346 = vrot.slane %v6344, 4
        %v6347 = vor.u32 %v6346, %v6342
        %v6348 = vrot.slane %v6347, 4
        %v6350 = vshll.u32 %v6199, 16
        %v6352 = vrot.slane %v6350, 5
        %v6353 = vsel %vm1013, %v6348, %v6352
        %v6355 = vshrl.u32 %v6173, 16
        %v6357 = vrot.slane %v6355, 4
        %v6358 = vshll.u32 %v6173, 16
        %v6360 = vrot.slane %v6358, 5
        %v6361 = vor.u32 %v6357, %v6360
        %v6362 = vrot.slane %v6361, 4
        %v6364 = vshll.u32 %v6174, 16
        %v6366 = vrot.slane %v6364, 5
        %v6367 = vsel %vm1013, %v6362, %v6366
        %v6368 = vshrl.u32 %v6174, 16
        %v6370 = vrot.slane %v6368, 4
        %v6371 = vor.u32 %v6370, %v6366
        %v6372 = vrot.slane %v6371, 4
        %v6374 = vshll.u32 %v6200, 16
        %v6376 = vrot.slane %v6374, 5
        %v6377 = vsel %vm1013, %v6372, %v6376
        %v6379 = vshrl.u32 %v6175, 16
        %v6381 = vrot.slane %v6379, 4
        %v6382 = vshll.u32 %v6175, 16
        %v6384 = vrot.slane %v6382, 5
        %v6385 = vor.u32 %v6381, %v6384
        %v6386 = vrot.slane %v6385, 4
        %v6388 = vshll.u32 %v6176, 16
        %v6390 = vrot.slane %v6388, 5
        %v6391 = vsel %vm1013, %v6386, %v6390
        %v6392 = vshrl.u32 %v6176, 16
        %v6394 = vrot.slane %v6392, 4
        %v6395 = vor.u32 %v6394, %v6390
        %v6396 = vrot.slane %v6395, 4
        %v6398 = vshll.u32 %v6201, 16
        %v6400 = vrot.slane %v6398, 5
        %v6401 = vsel %vm1013, %v6396, %v6400
        %v6403 = vshrl.u32 %v6177, 16
        %v6405 = vrot.slane %v6403, 4
        %v6406 = vshll.u32 %v6177, 16
        %v6408 = vrot.slane %v6406, 5
        %v6409 = vor.u32 %v6405, %v6408
        %v6410 = vrot.slane %v6409, 4
        %v6412 = vshll.u32 %v6178, 16
        %v6414 = vrot.slane %v6412, 5
        %v6415 = vsel %vm1013, %v6410, %v6414
        %v6416 = vshrl.u32 %v6178, 16
        %v6418 = vrot.slane %v6416, 4
        %v6419 = vor.u32 %v6418, %v6414
        %v6420 = vrot.slane %v6419, 4
        %v6422 = vshll.u32 %v6202, 16
        %v6424 = vrot.slane %v6422, 5
        %v6425 = vsel %vm1013, %v6420, %v6424
        %v6427 = vshrl.u32 %v6179, 16
        %v6429 = vrot.slane %v6427, 4
        %v6430 = vshll.u32 %v6179, 16
        %v6432 = vrot.slane %v6430, 5
        %v6433 = vor.u32 %v6429, %v6432
        %v6434 = vrot.slane %v6433, 4
        %v6436 = vshll.u32 %v6180, 16
        %v6438 = vrot.slane %v6436, 5
        %v6439 = vsel %vm1013, %v6434, %v6438
        %v6440 = vshrl.u32 %v6180, 16
        %v6442 = vrot.slane %v6440, 4
        %v6443 = vor.u32 %v6442, %v6438
        %v6444 = vrot.slane %v6443, 4
        %v6446 = vshll.u32 %v6203, 16
        %v6448 = vrot.slane %v6446, 5
        %v6449 = vsel %vm1013, %v6444, %v6448
        %v6451 = vshrl.u32 %v6181, 16
        %v6453 = vrot.slane %v6451, 4
        %v6454 = vshll.u32 %v6181, 16
        %v6456 = vrot.slane %v6454, 5
        %v6457 = vor.u32 %v6453, %v6456
        %v6458 = vrot.slane %v6457, 4
        %v6460 = vshll.u32 %v6182, 16
        %v6462 = vrot.slane %v6460, 5
        %v6463 = vsel %vm1013, %v6458, %v6462
        %v6464 = vshrl.u32 %v6182, 16
        %v6466 = vrot.slane %v6464, 4
        %v6467 = vor.u32 %v6466, %v6462
        %v6468 = vrot.slane %v6467, 4
        %v6470 = vshll.u32 %v6204, 16
        %v6472 = vrot.slane %v6470, 5
        %v6473 = vsel %vm1013, %v6468, %v6472
        %v6475 = vshrl.u32 %v6183, 16
        %v6477 = vrot.slane %v6475, 4
        %v6478 = vshll.u32 %v6183, 16
        %v6480 = vrot.slane %v6478, 5
        %v6481 = vor.u32 %v6477, %v6480
        %v6482 = vrot.slane %v6481, 4
        %v6484 = vshll.u32 %v6184, 16
        %v6486 = vrot.slane %v6484, 5
        %v6487 = vsel %vm1013, %v6482, %v6486
        %v6488 = vshrl.u32 %v6184, 16
        %v6490 = vrot.slane %v6488, 4
        %v6491 = vor.u32 %v6490, %v6486
        %v6492 = vrot.slane %v6491, 4
        %v6494 = vshll.u32 %v6205, 16
        %v6496 = vrot.slane %v6494, 5
        %v6497 = vsel %vm1013, %v6492, %v6496
        %v6499 = vshrl.u32 %v6185, 16
        %v6501 = vrot.slane %v6499, 4
        %v6502 = vshll.u32 %v6185, 16
        %v6504 = vrot.slane %v6502, 5
        %v6505 = vor.u32 %v6501, %v6504
        %v6506 = vrot.slane %v6505, 4
        %v6508 = vshll.u32 %v6186, 16
        %v6510 = vrot.slane %v6508, 5
        %v6511 = vsel %vm1013, %v6506, %v6510
        %v6512 = vshrl.u32 %v6186, 16
        %v6514 = vrot.slane %v6512, 4
        %v6515 = vor.u32 %v6514, %v6510
        %v6516 = vrot.slane %v6515, 4
        %v6518 = vshll.u32 %v6206, 16
        %v6520 = vrot.slane %v6518, 5
        %v6521 = vsel %vm1013, %v6516, %v6520
        %v6523 = vshrl.u32 %v6187, 16
        %v6525 = vrot.slane %v6523, 4
        %v6526 = vshll.u32 %v6187, 16
        %v6528 = vrot.slane %v6526, 5
        %v6529 = vor.u32 %v6525, %v6528
        %v6530 = vrot.slane %v6529, 4
        %v6532 = vshll.u32 %v6188, 16
        %v6534 = vrot.slane %v6532, 5
        %v6535 = vsel %vm1013, %v6530, %v6534
        %v6536 = vshrl.u32 %v6188, 16
        %v6538 = vrot.slane %v6536, 4
        %v6539 = vor.u32 %v6538, %v6534
        %v6540 = vrot.slane %v6539, 4
        %v6542 = vshll.u32 %v6207, 16
        %v6544 = vrot.slane %v6542, 5
        %v6545 = vsel %vm1013, %v6540, %v6544
        %v6547 = vshrl.u32 %v6189, 16
        %v6549 = vrot.slane %v6547, 4
        %v6550 = vshll.u32 %v6189, 16
        %v6552 = vrot.slane %v6550, 5
        %v6553 = vor.u32 %v6549, %v6552
        %v6554 = vrot.slane %v6553, 4
        %v6556 = vshll.u32 %v6190, 16
        %v6558 = vrot.slane %v6556, 5
        %v6559 = vsel %vm1013, %v6554, %v6558
        %v6560 = vshrl.u32 %v6190, 16
        %v6562 = vrot.slane %v6560, 4
        %v6563 = vor.u32 %v6562, %v6558
        %v6564 = vrot.slane %v6563, 4
        %v6566 = vshll.u32 %v6208, 16
        %v6568 = vrot.slane %v6566, 5
        %v6569 = vsel %vm1013, %v6564, %v6568
        %v6571 = vshrl.u32 %v6191, 16
        %v6573 = vrot.slane %v6571, 4
        %v6574 = vshll.u32 %v6191, 16
        %v6576 = vrot.slane %v6574, 5
        %v6577 = vor.u32 %v6573, %v6576
        %v6578 = vrot.slane %v6577, 4
        %v6580 = vshll.u32 %v6192, 16
        %v6582 = vrot.slane %v6580, 5
        %v6583 = vsel %vm1013, %v6578, %v6582
        %v6584 = vshrl.u32 %v6192, 16
        %v6586 = vrot.slane %v6584, 4
        %v6587 = vor.u32 %v6586, %v6582
        %v6588 = vrot.slane %v6587, 4
        %v6590 = vshll.u32 %v6209, 16
        %v6592 = vrot.slane %v6590, 5
        %v6593 = vsel %vm1013, %v6588, %v6592
        %s6594 = scalar_lea.vmem %s2, 4
        %v6595 = vld [vmem:[%s6594] sm:$0xf]
        %v6596 = vunpack.c.l.b16 %v6223
        %v6597 = vunpack.c.l.b16 %v6233
        %v6598 = vunpack.c.l.b16 %v6247
        %v6599 = vunpack.c.l.b16 %v6257
        %v6600 = vunpack.c.l.b16 %v6271
        %v6601 = vunpack.c.l.b16 %v6281
        %v6602 = vunpack.c.l.b16 %v6295
        %v6603 = vunpack.c.l.b16 %v6305
        %v6604 = vunpack.c.l.b16 %v6319
        %v6605 = vunpack.c.l.b16 %v6329
        %v6606 = vunpack.c.l.b16 %v6343
        %v6607 = vunpack.c.l.b16 %v6353
        %v6608 = vunpack.c.l.b16 %v6367
        %v6609 = vunpack.c.l.b16 %v6377
        %v6610 = vunpack.c.l.b16 %v6391
        %v6611 = vunpack.c.l.b16 %v6401
        %v6612 = vunpack.c.l.b16 %v6415
        %v6613 = vunpack.c.l.b16 %v6425
        %v6614 = vunpack.c.l.b16 %v6439
        %v6615 = vunpack.c.l.b16 %v6449
        %v6616 = vunpack.c.l.b16 %v6463
        %v6617 = vunpack.c.l.b16 %v6473
        %v6618 = vunpack.c.l.b16 %v6487
        %v6619 = vunpack.c.l.b16 %v6497
        %v6620 = vunpack.c.l.b16 %v6511
        %v6621 = vunpack.c.l.b16 %v6521
        %v6622 = vunpack.c.l.b16 %v6535
        %v6623 = vunpack.c.l.b16 %v6545
        %v6624 = vunpack.c.l.b16 %v6559
        %v6625 = vunpack.c.l.b16 %v6569
        %v6626 = vunpack.c.l.b16 %v6583
        %v6627 = vunpack.c.l.b16 %v6593
        %v6628 = vpack.c.b16 %v6597, %v6596
        %v6629 = vpack.c.b16 %v6599, %v6598
        %v6630 = vpack.c.b16 %v6601, %v6600
        %v6631 = vpack.c.b16 %v6603, %v6602
        %v6632 = vpack.c.b16 %v6605, %v6604
        %v6633 = vpack.c.b16 %v6607, %v6606
        %v6634 = vpack.c.b16 %v6609, %v6608
        %v6635 = vpack.c.b16 %v6611, %v6610
        %v6636 = vpack.c.b16 %v6613, %v6612
        %v6637 = vpack.c.b16 %v6615, %v6614
        %v6638 = vpack.c.b16 %v6617, %v6616
        %v6639 = vpack.c.b16 %v6619, %v6618
        %v6640 = vpack.c.b16 %v6621, %v6620
        %v6641 = vpack.c.b16 %v6623, %v6622
        %v6642 = vpack.c.b16 %v6625, %v6624
        %v6643 = vpack.c.b16 %v6627, %v6626
        %vm6644 = vcmask 64512
        %v6646 = vsel %vm6644, %v6628, 0
        %v6649 = vsel %vm6644, %v6629, 0
        %v6652 = vsel %vm6644, %v6630, 0
        %v6655 = vsel %vm6644, %v6631, 0
        %v6658 = vsel %vm6644, %v6632, 0
        %v6661 = vsel %vm6644, %v6633, 0
        %v6664 = vsel %vm6644, %v6634, 0
        %v6667 = vsel %vm6644, %v6635, 0
        %v6670 = vsel %vm6644, %v6636, 0
        %v6673 = vsel %vm6644, %v6637, 0
        %v6676 = vsel %vm6644, %v6638, 0
        %v6679 = vsel %vm6644, %v6639, 0
        %v6682 = vsel %vm6644, %v6640, 0
        %v6685 = vsel %vm6644, %v6641, 0
        %v6688 = vsel %vm6644, %v6642, 0
        %v6691 = vsel %vm6644, %v6643, 0
        %vm6693 = vcmask 1043456
        %v6695 = vsel %vm6693, %v6595, 0
        %6697 = vmatprep.subr.bf16.mxu0 0
        %6698 = vmatpush1.bf16.msra.mxu0 0
        %6699 = vmatprep.subr.bf16.mxu0 0
        %6700 = vmatpush1.bf16.msra.mxu0 0
        %6701 = vmatprep.subr.bf16.mxu0 0
        %6702 = vmatpush1.bf16.msra.mxu0 0
        %6703 = vmatprep.subr.bf16.mxu0 0
        %6704 = vmatpush1.bf16.msra.mxu0 0
        %6705 = vmatprep.subr.bf16.mxu0 0
        %6706 = vmatpush1.bf16.msra.mxu0 0
        %6707 = vmatprep.subr.bf16.mxu0 0
        %6708 = vmatpush1.bf16.msra.mxu0 0
        %6709 = vmatprep.subr.bf16.mxu0 0
        %6710 = vmatpush1.bf16.msra.mxu0 0
        %6711 = vmatprep.subr.bf16.mxu0 0
        %6712 = vmatpush1.bf16.msra.mxu0 %v6695
        %6713 = vmatprep.subr.bf16.mxu0 0
        %6714 = vmatpush2.bf16.msra.mxu0 0
        %6715 = vmatprep.subr.bf16.mxu0 0
        %6716 = vmatpush2.bf16.msra.mxu0 0
        %6717 = vmatprep.subr.bf16.mxu0 0
        %6718 = vmatpush2.bf16.msra.mxu0 0
        %6719 = vmatprep.subr.bf16.mxu0 0
        %6720 = vmatpush2.bf16.msra.mxu0 0
        %6721 = vmatprep.subr.bf16.mxu0 0
        %6722 = vmatpush2.bf16.msra.mxu0 0
        %6723 = vmatprep.subr.bf16.mxu0 0
        %6724 = vmatpush2.bf16.msra.mxu0 0
        %6725 = vmatprep.subr.bf16.mxu0 0
        %6726 = vmatpush2.bf16.msra.mxu0 0
        %6727 = vmatprep.subr.bf16.mxu0 0
        %6728 = vmatpush2.bf16.msra.mxu0 0
        %6729 = vmatprep.mubr.bf16.mxu0 0
        %6730 = vmatmul.mubr.bf16.gmra.mxu0 %v6646
        %v6731 = vpop.f32.mrf.mxu0
        %v6732 = vadd.f32 0.0, %v6731
        %v6733 = vpop.f32.mrf.mxu0
        %v6734 = vpop.f32.mrf.mxu0
        %v6735 = vadd.f32 0.0, %v6734
        %v6736 = vpop.f32.mrf.mxu0
        %6737 = vmatprep.mubr.bf16.mxu0 0
        %6738 = vmatmul.mubr.bf16.gmra.mxu0 %v6649
        %v6739 = vpop.f32.mrf.mxu0
        %v6740 = vadd.f32 0.0, %v6739
        %v6741 = vpop.f32.mrf.mxu0
        %v6742 = vpop.f32.mrf.mxu0
        %v6743 = vadd.f32 0.0, %v6742
        %v6744 = vpop.f32.mrf.mxu0
        %6745 = vmatprep.mubr.bf16.mxu0 0
        %6746 = vmatmul.mubr.bf16.gmra.mxu0 %v6652
        %v6747 = vpop.f32.mrf.mxu0
        %v6748 = vadd.f32 0.0, %v6747
        %v6749 = vpop.f32.mrf.mxu0
        %v6750 = vpop.f32.mrf.mxu0
        %v6751 = vadd.f32 0.0, %v6750
        %v6752 = vpop.f32.mrf.mxu0
        %6753 = vmatprep.mubr.bf16.mxu0 0
        %6754 = vmatmul.mubr.bf16.gmra.mxu0 %v6655
        %v6755 = vpop.f32.mrf.mxu0
        %v6756 = vadd.f32 0.0, %v6755
        %v6757 = vpop.f32.mrf.mxu0
        %v6758 = vpop.f32.mrf.mxu0
        %v6759 = vadd.f32 0.0, %v6758
        %v6760 = vpop.f32.mrf.mxu0
        %6761 = vmatprep.mubr.bf16.mxu0 0
        %6762 = vmatmul.mubr.bf16.gmra.mxu0 %v6658
        %v6763 = vpop.f32.mrf.mxu0
        %v6764 = vadd.f32 0.0, %v6763
        %v6765 = vpop.f32.mrf.mxu0
        %v6766 = vpop.f32.mrf.mxu0
        %v6767 = vadd.f32 0.0, %v6766
        %v6768 = vpop.f32.mrf.mxu0
        %6769 = vmatprep.mubr.bf16.mxu0 0
        %6770 = vmatmul.mubr.bf16.gmra.mxu0 %v6661
        %v6771 = vpop.f32.mrf.mxu0
        %v6772 = vadd.f32 0.0, %v6771
        %v6773 = vpop.f32.mrf.mxu0
        %v6774 = vpop.f32.mrf.mxu0
        %v6775 = vadd.f32 0.0, %v6774
        %v6776 = vpop.f32.mrf.mxu0
        %6777 = vmatprep.mubr.bf16.mxu0 0
        %6778 = vmatmul.mubr.bf16.gmra.mxu0 %v6664
        %v6779 = vpop.f32.mrf.mxu0
        %v6780 = vadd.f32 0.0, %v6779
        %v6781 = vpop.f32.mrf.mxu0
        %v6782 = vpop.f32.mrf.mxu0
        %v6783 = vadd.f32 0.0, %v6782
        %v6784 = vpop.f32.mrf.mxu0
        %6785 = vmatprep.mubr.bf16.mxu0 0
        %6786 = vmatmul.mubr.bf16.gmra.mxu0 %v6667
        %v6787 = vpop.f32.mrf.mxu0
        %v6788 = vadd.f32 0.0, %v6787
        %v6789 = vpop.f32.mrf.mxu0
        %v6790 = vpop.f32.mrf.mxu0
        %v6791 = vadd.f32 0.0, %v6790
        %v6792 = vpop.f32.mrf.mxu0
        %6793 = vmatprep.mubr.bf16.mxu0 0
        %6794 = vmatmul.mubr.bf16.gmra.mxu0 %v6670
        %v6795 = vpop.f32.mrf.mxu0
        %v6796 = vadd.f32 0.0, %v6795
        %v6797 = vpop.f32.mrf.mxu0
        %v6798 = vpop.f32.mrf.mxu0
        %v6799 = vadd.f32 0.0, %v6798
        %v6800 = vpop.f32.mrf.mxu0
        %6801 = vmatprep.mubr.bf16.mxu0 0
        %6802 = vmatmul.mubr.bf16.gmra.mxu0 %v6673
        %v6803 = vpop.f32.mrf.mxu0
        %v6804 = vadd.f32 0.0, %v6803
        %v6805 = vpop.f32.mrf.mxu0
        %v6806 = vpop.f32.mrf.mxu0
        %v6807 = vadd.f32 0.0, %v6806
        %v6808 = vpop.f32.mrf.mxu0
        %6809 = vmatprep.mubr.bf16.mxu0 0
        %6810 = vmatmul.mubr.bf16.gmra.mxu0 %v6676
        %v6811 = vpop.f32.mrf.mxu0
        %v6812 = vadd.f32 0.0, %v6811
        %v6813 = vpop.f32.mrf.mxu0
        %v6814 = vpop.f32.mrf.mxu0
        %v6815 = vadd.f32 0.0, %v6814
        %v6816 = vpop.f32.mrf.mxu0
        %6817 = vmatprep.mubr.bf16.mxu0 0
        %6818 = vmatmul.mubr.bf16.gmra.mxu0 %v6679
        %v6819 = vpop.f32.mrf.mxu0
        %v6820 = vadd.f32 0.0, %v6819
        %v6821 = vpop.f32.mrf.mxu0
        %v6822 = vpop.f32.mrf.mxu0
        %v6823 = vadd.f32 0.0, %v6822
        %v6824 = vpop.f32.mrf.mxu0
        %6825 = vmatprep.mubr.bf16.mxu0 0
        %6826 = vmatmul.mubr.bf16.gmra.mxu0 %v6682
        %v6827 = vpop.f32.mrf.mxu0
        %v6828 = vadd.f32 0.0, %v6827
        %v6829 = vpop.f32.mrf.mxu0
        %v6830 = vpop.f32.mrf.mxu0
        %v6831 = vadd.f32 0.0, %v6830
        %v6832 = vpop.f32.mrf.mxu0
        %6833 = vmatprep.mubr.bf16.mxu0 0
        %6834 = vmatmul.mubr.bf16.gmra.mxu0 %v6685
        %v6835 = vpop.f32.mrf.mxu0
        %v6836 = vadd.f32 0.0, %v6835
        %v6837 = vpop.f32.mrf.mxu0
        %v6838 = vpop.f32.mrf.mxu0
        %v6839 = vadd.f32 0.0, %v6838
        %v6840 = vpop.f32.mrf.mxu0
        %6841 = vmatprep.mubr.bf16.mxu0 0
        %6842 = vmatmul.mubr.bf16.gmra.mxu0 %v6688
        %v6843 = vpop.f32.mrf.mxu0
        %v6844 = vadd.f32 0.0, %v6843
        %v6845 = vpop.f32.mrf.mxu0
        %v6846 = vpop.f32.mrf.mxu0
        %v6847 = vadd.f32 0.0, %v6846
        %v6848 = vpop.f32.mrf.mxu0
        %6849 = vmatprep.mubr.bf16.mxu0 0
        %6850 = vmatmul.mubr.bf16.gmra.mxu0 %v6691
        %v6851 = vpop.f32.mrf.mxu0
        %v6852 = vadd.f32 0.0, %v6851
        %v6853 = vpop.f32.mrf.mxu0
        %v6854 = vpop.f32.mrf.mxu0
        %v6855 = vadd.f32 0.0, %v6854
        %v6856 = vpop.f32.mrf.mxu0
        %6857 = vdwg.mxu0
        %v6890 = vunpack.c.l.b16 %v6161
        %v6891 = vunpack.c.l.b16 %v6162
        %v6892 = vunpack.c.l.b16 %v6163
        %v6893 = vunpack.c.l.b16 %v6164
        %v6894 = vunpack.c.l.b16 %v6165
        %v6895 = vunpack.c.l.b16 %v6166
        %v6896 = vunpack.c.l.b16 %v6167
        %v6897 = vunpack.c.l.b16 %v6168
        %v6898 = vunpack.c.l.b16 %v6169
        %v6899 = vunpack.c.l.b16 %v6170
        %v6900 = vunpack.c.l.b16 %v6171
        %v6901 = vunpack.c.l.b16 %v6172
        %v6902 = vunpack.c.l.b16 %v6173
        %v6903 = vunpack.c.l.b16 %v6174
        %v6904 = vunpack.c.l.b16 %v6175
        %v6905 = vunpack.c.l.b16 %v6176
        %v6906 = vunpack.c.l.b16 %v6177
        %v6907 = vunpack.c.l.b16 %v6178
        %v6908 = vunpack.c.l.b16 %v6179
        %v6909 = vunpack.c.l.b16 %v6180
        %v6910 = vunpack.c.l.b16 %v6181
        %v6911 = vunpack.c.l.b16 %v6182
        %v6912 = vunpack.c.l.b16 %v6183
        %v6913 = vunpack.c.l.b16 %v6184
        %v6914 = vunpack.c.l.b16 %v6185
        %v6915 = vunpack.c.l.b16 %v6186
        %v6916 = vunpack.c.l.b16 %v6187
        %v6917 = vunpack.c.l.b16 %v6188
        %v6918 = vunpack.c.l.b16 %v6189
        %v6919 = vunpack.c.l.b16 %v6190
        %v6920 = vunpack.c.l.b16 %v6191
        %v6921 = vunpack.c.l.b16 %v6192
        %v6922 = vpack.c.b16 %v6891, %v6890
        %v6923 = vpack.c.b16 %v6893, %v6892
        %v6924 = vpack.c.b16 %v6895, %v6894
        %v6925 = vpack.c.b16 %v6897, %v6896
        %v6926 = vpack.c.b16 %v6899, %v6898
        %v6927 = vpack.c.b16 %v6901, %v6900
        %v6928 = vpack.c.b16 %v6903, %v6902
        %v6929 = vpack.c.b16 %v6905, %v6904
        %v6930 = vpack.c.b16 %v6907, %v6906
        %v6931 = vpack.c.b16 %v6909, %v6908
        %v6932 = vpack.c.b16 %v6911, %v6910
        %v6933 = vpack.c.b16 %v6913, %v6912
        %v6934 = vpack.c.b16 %v6915, %v6914
        %v6935 = vpack.c.b16 %v6917, %v6916
        %v6936 = vpack.c.b16 %v6919, %v6918
        %v6937 = vpack.c.b16 %v6921, %v6920
        %v6939 = vsel %vm6644, %v6922, 0
        %v6942 = vsel %vm6644, %v6923, 0
        %v6945 = vsel %vm6644, %v6924, 0
        %v6948 = vsel %vm6644, %v6925, 0
        %v6951 = vsel %vm6644, %v6926, 0
        %v6954 = vsel %vm6644, %v6927, 0
        %v6957 = vsel %vm6644, %v6928, 0
        %v6960 = vsel %vm6644, %v6929, 0
        %v6963 = vsel %vm6644, %v6930, 0
        %v6966 = vsel %vm6644, %v6931, 0
        %v6969 = vsel %vm6644, %v6932, 0
        %v6972 = vsel %vm6644, %v6933, 0
        %v6975 = vsel %vm6644, %v6934, 0
        %v6978 = vsel %vm6644, %v6935, 0
        %v6981 = vsel %vm6644, %v6936, 0
        %v6984 = vsel %vm6644, %v6937, 0
        %v6987 = vsel %vm6693, %v6193, 0
        %6989 = vmatprep.subr.bf16.mxu0 0
        %6990 = vmatpush1.bf16.msra.mxu0 0
        %6991 = vmatprep.subr.bf16.mxu0 0
        %6992 = vmatpush1.bf16.msra.mxu0 0
        %6993 = vmatprep.subr.bf16.mxu0 0
        %6994 = vmatpush1.bf16.msra.mxu0 0
        %6995 = vmatprep.subr.bf16.mxu0 0
        %6996 = vmatpush1.bf16.msra.mxu0 0
        %6997 = vmatprep.subr.bf16.mxu0 0
        %6998 = vmatpush1.bf16.msra.mxu0 0
        %6999 = vmatprep.subr.bf16.mxu0 0
        %7000 = vmatpush1.bf16.msra.mxu0 0
        %7001 = vmatprep.subr.bf16.mxu0 0
        %7002 = vmatpush1.bf16.msra.mxu0 0
        %7003 = vmatprep.subr.bf16.mxu0 0
        %7004 = vmatpush1.bf16.msra.mxu0 %v6987
        %7005 = vmatprep.subr.bf16.mxu0 0
        %7006 = vmatpush2.bf16.msra.mxu0 0
        %7007 = vmatprep.subr.bf16.mxu0 0
        %7008 = vmatpush2.bf16.msra.mxu0 0
        %7009 = vmatprep.subr.bf16.mxu0 0
        %7010 = vmatpush2.bf16.msra.mxu0 0
        %7011 = vmatprep.subr.bf16.mxu0 0
        %7012 = vmatpush2.bf16.msra.mxu0 0
        %7013 = vmatprep.subr.bf16.mxu0 0
        %7014 = vmatpush2.bf16.msra.mxu0 0
        %7015 = vmatprep.subr.bf16.mxu0 0
        %7016 = vmatpush2.bf16.msra.mxu0 0
        %7017 = vmatprep.subr.bf16.mxu0 0
        %7018 = vmatpush2.bf16.msra.mxu0 0
        %7019 = vmatprep.subr.bf16.mxu0 0
        %7020 = vmatpush2.bf16.msra.mxu0 0
        %7021 = vmatprep.mubr.bf16.mxu0 0
        %7022 = vmatmul.mubr.bf16.gmra.mxu0 %v6939
        %v7023 = vpop.f32.mrf.mxu0
        %v7024 = vadd.f32 %v6732, %v7023
        %v7025 = vpop.f32.mrf.mxu0
        %v7026 = vpop.f32.mrf.mxu0
        %v7027 = vadd.f32 %v6735, %v7026
        %v7028 = vpop.f32.mrf.mxu0
        %7029 = vmatprep.mubr.bf16.mxu0 0
        %7030 = vmatmul.mubr.bf16.gmra.mxu0 %v6942
        %v7031 = vpop.f32.mrf.mxu0
        %v7032 = vadd.f32 %v6740, %v7031
        %v7033 = vpop.f32.mrf.mxu0
        %v7034 = vpop.f32.mrf.mxu0
        %v7035 = vadd.f32 %v6743, %v7034
        %v7036 = vpop.f32.mrf.mxu0
        %7037 = vmatprep.mubr.bf16.mxu0 0
        %7038 = vmatmul.mubr.bf16.gmra.mxu0 %v6945
        %v7039 = vpop.f32.mrf.mxu0
        %v7040 = vadd.f32 %v6748, %v7039
        %v7041 = vpop.f32.mrf.mxu0
        %v7042 = vpop.f32.mrf.mxu0
        %v7043 = vadd.f32 %v6751, %v7042
        %v7044 = vpop.f32.mrf.mxu0
        %7045 = vmatprep.mubr.bf16.mxu0 0
        %7046 = vmatmul.mubr.bf16.gmra.mxu0 %v6948
        %v7047 = vpop.f32.mrf.mxu0
        %v7048 = vadd.f32 %v6756, %v7047
        %v7049 = vpop.f32.mrf.mxu0
        %v7050 = vpop.f32.mrf.mxu0
        %v7051 = vadd.f32 %v6759, %v7050
        %v7052 = vpop.f32.mrf.mxu0
        %7053 = vmatprep.mubr.bf16.mxu0 0
        %7054 = vmatmul.mubr.bf16.gmra.mxu0 %v6951
        %v7055 = vpop.f32.mrf.mxu0
        %v7056 = vadd.f32 %v6764, %v7055
        %v7057 = vpop.f32.mrf.mxu0
        %v7058 = vpop.f32.mrf.mxu0
        %v7059 = vadd.f32 %v6767, %v7058
        %v7060 = vpop.f32.mrf.mxu0
        %7061 = vmatprep.mubr.bf16.mxu0 0
        %7062 = vmatmul.mubr.bf16.gmra.mxu0 %v6954
        %v7063 = vpop.f32.mrf.mxu0
        %v7064 = vadd.f32 %v6772, %v7063
        %v7065 = vpop.f32.mrf.mxu0
        %v7066 = vpop.f32.mrf.mxu0
        %v7067 = vadd.f32 %v6775, %v7066
        %v7068 = vpop.f32.mrf.mxu0
        %7069 = vmatprep.mubr.bf16.mxu0 0
        %7070 = vmatmul.mubr.bf16.gmra.mxu0 %v6957
        %v7071 = vpop.f32.mrf.mxu0
        %v7072 = vadd.f32 %v6780, %v7071
        %v7073 = vpop.f32.mrf.mxu0
        %v7074 = vpop.f32.mrf.mxu0
        %v7075 = vadd.f32 %v6783, %v7074
        %v7076 = vpop.f32.mrf.mxu0
        %7077 = vmatprep.mubr.bf16.mxu0 0
        %7078 = vmatmul.mubr.bf16.gmra.mxu0 %v6960
        %v7079 = vpop.f32.mrf.mxu0
        %v7080 = vadd.f32 %v6788, %v7079
        %v7081 = vpop.f32.mrf.mxu0
        %v7082 = vpop.f32.mrf.mxu0
        %v7083 = vadd.f32 %v6791, %v7082
        %v7084 = vpop.f32.mrf.mxu0
        %7085 = vmatprep.mubr.bf16.mxu0 0
        %7086 = vmatmul.mubr.bf16.gmra.mxu0 %v6963
        %v7087 = vpop.f32.mrf.mxu0
        %v7088 = vadd.f32 %v6796, %v7087
        %v7089 = vpop.f32.mrf.mxu0
        %v7090 = vpop.f32.mrf.mxu0
        %v7091 = vadd.f32 %v6799, %v7090
        %v7092 = vpop.f32.mrf.mxu0
        %7093 = vmatprep.mubr.bf16.mxu0 0
        %7094 = vmatmul.mubr.bf16.gmra.mxu0 %v6966
        %v7095 = vpop.f32.mrf.mxu0
        %v7096 = vadd.f32 %v6804, %v7095
        %v7097 = vpop.f32.mrf.mxu0
        %v7098 = vpop.f32.mrf.mxu0
        %v7099 = vadd.f32 %v6807, %v7098
        %v7100 = vpop.f32.mrf.mxu0
        %7101 = vmatprep.mubr.bf16.mxu0 0
        %7102 = vmatmul.mubr.bf16.gmra.mxu0 %v6969
        %v7103 = vpop.f32.mrf.mxu0
        %v7104 = vadd.f32 %v6812, %v7103
        %v7105 = vpop.f32.mrf.mxu0
        %v7106 = vpop.f32.mrf.mxu0
        %v7107 = vadd.f32 %v6815, %v7106
        %v7108 = vpop.f32.mrf.mxu0
        %7109 = vmatprep.mubr.bf16.mxu0 0
        %7110 = vmatmul.mubr.bf16.gmra.mxu0 %v6972
        %v7111 = vpop.f32.mrf.mxu0
        %v7112 = vadd.f32 %v6820, %v7111
        %v7113 = vpop.f32.mrf.mxu0
        %v7114 = vpop.f32.mrf.mxu0
        %v7115 = vadd.f32 %v6823, %v7114
        %v7116 = vpop.f32.mrf.mxu0
        %7117 = vmatprep.mubr.bf16.mxu0 0
        %7118 = vmatmul.mubr.bf16.gmra.mxu0 %v6975
        %v7119 = vpop.f32.mrf.mxu0
        %v7120 = vadd.f32 %v6828, %v7119
        %v7121 = vpop.f32.mrf.mxu0
        %v7122 = vpop.f32.mrf.mxu0
        %v7123 = vadd.f32 %v6831, %v7122
        %v7124 = vpop.f32.mrf.mxu0
        %7125 = vmatprep.mubr.bf16.mxu0 0
        %7126 = vmatmul.mubr.bf16.gmra.mxu0 %v6978
        %v7127 = vpop.f32.mrf.mxu0
        %v7128 = vadd.f32 %v6836, %v7127
        %v7129 = vpop.f32.mrf.mxu0
        %v7130 = vpop.f32.mrf.mxu0
        %v7131 = vadd.f32 %v6839, %v7130
        %v7132 = vpop.f32.mrf.mxu0
        %7133 = vmatprep.mubr.bf16.mxu0 0
        %7134 = vmatmul.mubr.bf16.gmra.mxu0 %v6981
        %v7135 = vpop.f32.mrf.mxu0
        %v7136 = vadd.f32 %v6844, %v7135
        %v7137 = vpop.f32.mrf.mxu0
        %v7138 = vpop.f32.mrf.mxu0
        %v7139 = vadd.f32 %v6847, %v7138
        %v7140 = vpop.f32.mrf.mxu0
        %7141 = vmatprep.mubr.bf16.mxu0 0
        %7142 = vmatmul.mubr.bf16.gmra.mxu0 %v6984
        %v7143 = vpop.f32.mrf.mxu0
        %v7144 = vadd.f32 %v6852, %v7143
        %v7145 = vpop.f32.mrf.mxu0
        %v7146 = vpop.f32.mrf.mxu0
        %v7147 = vadd.f32 %v6855, %v7146
        %v7148 = vpop.f32.mrf.mxu0
        %7149 = vdwg.mxu0
        %v7150 = vld [vmem:[#allocation3] sm:$0xe]
        %v7151 = vld [vmem:[#allocation3 + $0xc] sm:$0xe]
        %v7152 = vld [vmem:[#allocation3 + $0x18] sm:$0xe]
        %v7153 = vld [vmem:[#allocation3 + $0x24] sm:$0xe]
        %v7154 = vld [vmem:[#allocation3 + $0x30] sm:$0xe]
        %v7155 = vld [vmem:[#allocation3 + $0x3c] sm:$0xe]
        %v7156 = vld [vmem:[#allocation3 + $0x48] sm:$0xe]
        %v7157 = vld [vmem:[#allocation3 + $0x54] sm:$0xe]
        %v7158 = vld [vmem:[#allocation3 + $0x60] sm:$0xe]
        %v7159 = vld [vmem:[#allocation3 + $0x6c] sm:$0xe]
        %v7160 = vld [vmem:[#allocation3 + $0x78] sm:$0xe]
        %v7161 = vld [vmem:[#allocation3 + $0x84] sm:$0xe]
        %v7162 = vld [vmem:[#allocation3 + $0x90] sm:$0xe]
        %v7163 = vld [vmem:[#allocation3 + $0x9c] sm:$0xe]
        %v7164 = vld [vmem:[#allocation3 + $0xa8] sm:$0xe]
        %v7165 = vld [vmem:[#allocation3 + $0xb4] sm:$0xe]
        %v7198 = vrot.slane %v7150, 5
        %v7199 = vrot.slane %v7198, 4
        %v7200 = vrot.slane %v6162, 5
        %v7201 = vsel %vm2004, %v7199, %v7200
        %v7202 = vrot.slane %v7200, 4
        %v7203 = vrot.slane %v6194, 5
        %v7204 = vsel %vm2004, %v7202, %v7203
        %v7205 = vrot.slane %v7151, 5
        %v7206 = vrot.slane %v7205, 4
        %v7207 = vrot.slane %v6164, 5
        %v7208 = vsel %vm2004, %v7206, %v7207
        %v7209 = vrot.slane %v7207, 4
        %v7210 = vrot.slane %v6195, 5
        %v7211 = vsel %vm2004, %v7209, %v7210
        %v7212 = vrot.slane %v7152, 5
        %v7213 = vrot.slane %v7212, 4
        %v7214 = vrot.slane %v6166, 5
        %v7215 = vsel %vm2004, %v7213, %v7214
        %v7216 = vrot.slane %v7214, 4
        %v7217 = vrot.slane %v6196, 5
        %v7218 = vsel %vm2004, %v7216, %v7217
        %v7219 = vrot.slane %v7153, 5
        %v7220 = vrot.slane %v7219, 4
        %v7221 = vrot.slane %v6168, 5
        %v7222 = vsel %vm2004, %v7220, %v7221
        %v7223 = vrot.slane %v7221, 4
        %v7224 = vrot.slane %v6197, 5
        %v7225 = vsel %vm2004, %v7223, %v7224
        %v7226 = vrot.slane %v7154, 5
        %v7227 = vrot.slane %v7226, 4
        %v7228 = vrot.slane %v6170, 5
        %v7229 = vsel %vm2004, %v7227, %v7228
        %v7230 = vrot.slane %v7228, 4
        %v7231 = vrot.slane %v6198, 5
        %v7232 = vsel %vm2004, %v7230, %v7231
        %v7233 = vrot.slane %v7155, 5
        %v7234 = vrot.slane %v7233, 4
        %v7235 = vrot.slane %v6172, 5
        %v7236 = vsel %vm2004, %v7234, %v7235
        %v7237 = vrot.slane %v7235, 4
        %v7238 = vrot.slane %v6199, 5
        %v7239 = vsel %vm2004, %v7237, %v7238
        %v7240 = vrot.slane %v7156, 5
        %v7241 = vrot.slane %v7240, 4
        %v7242 = vrot.slane %v6174, 5
        %v7243 = vsel %vm2004, %v7241, %v7242
        %v7244 = vrot.slane %v7242, 4
        %v7245 = vrot.slane %v6200, 5
        %v7246 = vsel %vm2004, %v7244, %v7245
        %v7247 = vrot.slane %v7157, 5
        %v7248 = vrot.slane %v7247, 4
        %v7249 = vrot.slane %v6176, 5
        %v7250 = vsel %vm2004, %v7248, %v7249
        %v7251 = vrot.slane %v7249, 4
        %v7252 = vrot.slane %v6201, 5
        %v7253 = vsel %vm2004, %v7251, %v7252
        %v7254 = vrot.slane %v7158, 5
        %v7255 = vrot.slane %v7254, 4
        %v7256 = vrot.slane %v6178, 5
        %v7257 = vsel %vm2004, %v7255, %v7256
        %v7258 = vrot.slane %v7256, 4
        %v7259 = vrot.slane %v6202, 5
        %v7260 = vsel %vm2004, %v7258, %v7259
        %v7261 = vrot.slane %v7159, 5
        %v7262 = vrot.slane %v7261, 4
        %v7263 = vrot.slane %v6180, 5
        %v7264 = vsel %vm2004, %v7262, %v7263
        %v7265 = vrot.slane %v7263, 4
        %v7266 = vrot.slane %v6203, 5
        %v7267 = vsel %vm2004, %v7265, %v7266
        %v7268 = vrot.slane %v7160, 5
        %v7269 = vrot.slane %v7268, 4
        %v7270 = vrot.slane %v6182, 5
        %v7271 = vsel %vm2004, %v7269, %v7270
        %v7272 = vrot.slane %v7270, 4
        %v7273 = vrot.slane %v6204, 5
        %v7274 = vsel %vm2004, %v7272, %v7273
        %v7275 = vrot.slane %v7161, 5
        %v7276 = vrot.slane %v7275, 4
        %v7277 = vrot.slane %v6184, 5
        %v7278 = vsel %vm2004, %v7276, %v7277
        %v7279 = vrot.slane %v7277, 4
        %v7280 = vrot.slane %v6205, 5
        %v7281 = vsel %vm2004, %v7279, %v7280
        %v7282 = vrot.slane %v7162, 5
        %v7283 = vrot.slane %v7282, 4
        %v7284 = vrot.slane %v6186, 5
        %v7285 = vsel %vm2004, %v7283, %v7284
        %v7286 = vrot.slane %v7284, 4
        %v7287 = vrot.slane %v6206, 5
        %v7288 = vsel %vm2004, %v7286, %v7287
        %v7289 = vrot.slane %v7163, 5
        %v7290 = vrot.slane %v7289, 4
        %v7291 = vrot.slane %v6188, 5
        %v7292 = vsel %vm2004, %v7290, %v7291
        %v7293 = vrot.slane %v7291, 4
        %v7294 = vrot.slane %v6207, 5
        %v7295 = vsel %vm2004, %v7293, %v7294
        %v7296 = vrot.slane %v7164, 5
        %v7297 = vrot.slane %v7296, 4
        %v7298 = vrot.slane %v6190, 5
        %v7299 = vsel %vm2004, %v7297, %v7298
        %v7300 = vrot.slane %v7298, 4
        %v7301 = vrot.slane %v6208, 5
        %v7302 = vsel %vm2004, %v7300, %v7301
        %v7303 = vrot.slane %v7165, 5
        %v7304 = vrot.slane %v7303, 4
        %v7305 = vrot.slane %v6192, 5
        %v7306 = vsel %vm2004, %v7304, %v7305
        %v7307 = vrot.slane %v7305, 4
        %v7308 = vrot.slane %v6209, 5
        %v7309 = vsel %vm2004, %v7307, %v7308
        %s7310 = scalar_lea.vmem %s2, 8
        %v7311 = vld [vmem:[%s7310] sm:$0xf]
        %v7312 = vunpack.c.l.b16 %v7201
        %v7313 = vunpack.c.l.b16 %v7204
        %v7314 = vunpack.c.l.b16 %v7208
        %v7315 = vunpack.c.l.b16 %v7211
        %v7316 = vunpack.c.l.b16 %v7215
        %v7317 = vunpack.c.l.b16 %v7218
        %v7318 = vunpack.c.l.b16 %v7222
        %v7319 = vunpack.c.l.b16 %v7225
        %v7320 = vunpack.c.l.b16 %v7229
        %v7321 = vunpack.c.l.b16 %v7232
        %v7322 = vunpack.c.l.b16 %v7236
        %v7323 = vunpack.c.l.b16 %v7239
        %v7324 = vunpack.c.l.b16 %v7243
        %v7325 = vunpack.c.l.b16 %v7246
        %v7326 = vunpack.c.l.b16 %v7250
        %v7327 = vunpack.c.l.b16 %v7253
        %v7328 = vunpack.c.l.b16 %v7257
        %v7329 = vunpack.c.l.b16 %v7260
        %v7330 = vunpack.c.l.b16 %v7264
        %v7331 = vunpack.c.l.b16 %v7267
        %v7332 = vunpack.c.l.b16 %v7271
        %v7333 = vunpack.c.l.b16 %v7274
        %v7334 = vunpack.c.l.b16 %v7278
        %v7335 = vunpack.c.l.b16 %v7281
        %v7336 = vunpack.c.l.b16 %v7285
        %v7337 = vunpack.c.l.b16 %v7288
        %v7338 = vunpack.c.l.b16 %v7292
        %v7339 = vunpack.c.l.b16 %v7295
        %v7340 = vunpack.c.l.b16 %v7299
        %v7341 = vunpack.c.l.b16 %v7302
        %v7342 = vunpack.c.l.b16 %v7306
        %v7343 = vunpack.c.l.b16 %v7309
        %v7344 = vpack.c.b16 %v7313, %v7312
        %v7345 = vpack.c.b16 %v7315, %v7314
        %v7346 = vpack.c.b16 %v7317, %v7316
        %v7347 = vpack.c.b16 %v7319, %v7318
        %v7348 = vpack.c.b16 %v7321, %v7320
        %v7349 = vpack.c.b16 %v7323, %v7322
        %v7350 = vpack.c.b16 %v7325, %v7324
        %v7351 = vpack.c.b16 %v7327, %v7326
        %v7352 = vpack.c.b16 %v7329, %v7328
        %v7353 = vpack.c.b16 %v7331, %v7330
        %v7354 = vpack.c.b16 %v7333, %v7332
        %v7355 = vpack.c.b16 %v7335, %v7334
        %v7356 = vpack.c.b16 %v7337, %v7336
        %v7357 = vpack.c.b16 %v7339, %v7338
        %v7358 = vpack.c.b16 %v7341, %v7340
        %v7359 = vpack.c.b16 %v7343, %v7342
        %v7361 = vsel %vm6644, %v7344, 0
        %v7364 = vsel %vm6644, %v7345, 0
        %v7367 = vsel %vm6644, %v7346, 0
        %v7370 = vsel %vm6644, %v7347, 0
        %v7373 = vsel %vm6644, %v7348, 0
        %v7376 = vsel %vm6644, %v7349, 0
        %v7379 = vsel %vm6644, %v7350, 0
        %v7382 = vsel %vm6644, %v7351, 0
        %v7385 = vsel %vm6644, %v7352, 0
        %v7388 = vsel %vm6644, %v7353, 0
        %v7391 = vsel %vm6644, %v7354, 0
        %v7394 = vsel %vm6644, %v7355, 0
        %v7397 = vsel %vm6644, %v7356, 0
        %v7400 = vsel %vm6644, %v7357, 0
        %v7403 = vsel %vm6644, %v7358, 0
        %v7406 = vsel %vm6644, %v7359, 0
        %v7409 = vsel %vm6693, %v7311, 0
        %7411 = vmatprep.subr.bf16.mxu0 0
        %7412 = vmatpush1.bf16.msra.mxu0 0
        %7413 = vmatprep.subr.bf16.mxu0 0
        %7414 = vmatpush1.bf16.msra.mxu0 0
        %7415 = vmatprep.subr.bf16.mxu0 0
        %7416 = vmatpush1.bf16.msra.mxu0 0
        %7417 = vmatprep.subr.bf16.mxu0 0
        %7418 = vmatpush1.bf16.msra.mxu0 0
        %7419 = vmatprep.subr.bf16.mxu0 0
        %7420 = vmatpush1.bf16.msra.mxu0 0
        %7421 = vmatprep.subr.bf16.mxu0 0
        %7422 = vmatpush1.bf16.msra.mxu0 0
        %7423 = vmatprep.subr.bf16.mxu0 0
        %7424 = vmatpush1.bf16.msra.mxu0 0
        %7425 = vmatprep.subr.bf16.mxu0 0
        %7426 = vmatpush1.bf16.msra.mxu0 %v7409
        %7427 = vmatprep.subr.bf16.mxu0 0
        %7428 = vmatpush2.bf16.msra.mxu0 0
        %7429 = vmatprep.subr.bf16.mxu0 0
        %7430 = vmatpush2.bf16.msra.mxu0 0
        %7431 = vmatprep.subr.bf16.mxu0 0
        %7432 = vmatpush2.bf16.msra.mxu0 0
        %7433 = vmatprep.subr.bf16.mxu0 0
        %7434 = vmatpush2.bf16.msra.mxu0 0
        %7435 = vmatprep.subr.bf16.mxu0 0
        %7436 = vmatpush2.bf16.msra.mxu0 0
        %7437 = vmatprep.subr.bf16.mxu0 0
        %7438 = vmatpush2.bf16.msra.mxu0 0
        %7439 = vmatprep.subr.bf16.mxu0 0
        %7440 = vmatpush2.bf16.msra.mxu0 0
        %7441 = vmatprep.subr.bf16.mxu0 0
        %7442 = vmatpush2.bf16.msra.mxu0 0
        %7443 = vmatprep.mubr.bf16.mxu0 0
        %7444 = vmatmul.mubr.bf16.gmra.mxu0 %v7361
        %v7445 = vpop.f32.mrf.mxu0
        %v7446 = vadd.f32 0.0, %v7445
        %v7447 = vpop.f32.mrf.mxu0
        %v7448 = vpop.f32.mrf.mxu0
        %v7449 = vadd.f32 0.0, %v7448
        %v7450 = vpop.f32.mrf.mxu0
        %7451 = vmatprep.mubr.bf16.mxu0 0
        %7452 = vmatmul.mubr.bf16.gmra.mxu0 %v7364
        %v7453 = vpop.f32.mrf.mxu0
        %v7454 = vadd.f32 0.0, %v7453
        %v7455 = vpop.f32.mrf.mxu0
        %v7456 = vpop.f32.mrf.mxu0
        %v7457 = vadd.f32 0.0, %v7456
        %v7458 = vpop.f32.mrf.mxu0
        %7459 = vmatprep.mubr.bf16.mxu0 0
        %7460 = vmatmul.mubr.bf16.gmra.mxu0 %v7367
        %v7461 = vpop.f32.mrf.mxu0
        %v7462 = vadd.f32 0.0, %v7461
        %v7463 = vpop.f32.mrf.mxu0
        %v7464 = vpop.f32.mrf.mxu0
        %v7465 = vadd.f32 0.0, %v7464
        %v7466 = vpop.f32.mrf.mxu0
        %7467 = vmatprep.mubr.bf16.mxu0 0
        %7468 = vmatmul.mubr.bf16.gmra.mxu0 %v7370
        %v7469 = vpop.f32.mrf.mxu0
        %v7470 = vadd.f32 0.0, %v7469
        %v7471 = vpop.f32.mrf.mxu0
        %v7472 = vpop.f32.mrf.mxu0
        %v7473 = vadd.f32 0.0, %v7472
        %v7474 = vpop.f32.mrf.mxu0
        %7475 = vmatprep.mubr.bf16.mxu0 0
        %7476 = vmatmul.mubr.bf16.gmra.mxu0 %v7373
        %v7477 = vpop.f32.mrf.mxu0
        %v7478 = vadd.f32 0.0, %v7477
        %v7479 = vpop.f32.mrf.mxu0
        %v7480 = vpop.f32.mrf.mxu0
        %v7481 = vadd.f32 0.0, %v7480
        %v7482 = vpop.f32.mrf.mxu0
        %7483 = vmatprep.mubr.bf16.mxu0 0
        %7484 = vmatmul.mubr.bf16.gmra.mxu0 %v7376
        %v7485 = vpop.f32.mrf.mxu0
        %v7486 = vadd.f32 0.0, %v7485
        %v7487 = vpop.f32.mrf.mxu0
        %v7488 = vpop.f32.mrf.mxu0
        %v7489 = vadd.f32 0.0, %v7488
        %v7490 = vpop.f32.mrf.mxu0
        %7491 = vmatprep.mubr.bf16.mxu0 0
        %7492 = vmatmul.mubr.bf16.gmra.mxu0 %v7379
        %v7493 = vpop.f32.mrf.mxu0
        %v7494 = vadd.f32 0.0, %v7493
        %v7495 = vpop.f32.mrf.mxu0
        %v7496 = vpop.f32.mrf.mxu0
        %v7497 = vadd.f32 0.0, %v7496
        %v7498 = vpop.f32.mrf.mxu0
        %7499 = vmatprep.mubr.bf16.mxu0 0
        %7500 = vmatmul.mubr.bf16.gmra.mxu0 %v7382
        %v7501 = vpop.f32.mrf.mxu0
        %v7502 = vadd.f32 0.0, %v7501
        %v7503 = vpop.f32.mrf.mxu0
        %v7504 = vpop.f32.mrf.mxu0
        %v7505 = vadd.f32 0.0, %v7504
        %v7506 = vpop.f32.mrf.mxu0
        %7507 = vmatprep.mubr.bf16.mxu0 0
        %7508 = vmatmul.mubr.bf16.gmra.mxu0 %v7385
        %v7509 = vpop.f32.mrf.mxu0
        %v7510 = vadd.f32 0.0, %v7509
        %v7511 = vpop.f32.mrf.mxu0
        %v7512 = vpop.f32.mrf.mxu0
        %v7513 = vadd.f32 0.0, %v7512
        %v7514 = vpop.f32.mrf.mxu0
        %7515 = vmatprep.mubr.bf16.mxu0 0
        %7516 = vmatmul.mubr.bf16.gmra.mxu0 %v7388
        %v7517 = vpop.f32.mrf.mxu0
        %v7518 = vadd.f32 0.0, %v7517
        %v7519 = vpop.f32.mrf.mxu0
        %v7520 = vpop.f32.mrf.mxu0
        %v7521 = vadd.f32 0.0, %v7520
        %v7522 = vpop.f32.mrf.mxu0
        %7523 = vmatprep.mubr.bf16.mxu0 0
        %7524 = vmatmul.mubr.bf16.gmra.mxu0 %v7391
        %v7525 = vpop.f32.mrf.mxu0
        %v7526 = vadd.f32 0.0, %v7525
        %v7527 = vpop.f32.mrf.mxu0
        %v7528 = vpop.f32.mrf.mxu0
        %v7529 = vadd.f32 0.0, %v7528
        %v7530 = vpop.f32.mrf.mxu0
        %7531 = vmatprep.mubr.bf16.mxu0 0
        %7532 = vmatmul.mubr.bf16.gmra.mxu0 %v7394
        %v7533 = vpop.f32.mrf.mxu0
        %v7534 = vadd.f32 0.0, %v7533
        %v7535 = vpop.f32.mrf.mxu0
        %v7536 = vpop.f32.mrf.mxu0
        %v7537 = vadd.f32 0.0, %v7536
        %v7538 = vpop.f32.mrf.mxu0
        %7539 = vmatprep.mubr.bf16.mxu0 0
        %7540 = vmatmul.mubr.bf16.gmra.mxu0 %v7397
        %v7541 = vpop.f32.mrf.mxu0
        %v7542 = vadd.f32 0.0, %v7541
        %v7543 = vpop.f32.mrf.mxu0
        %v7544 = vpop.f32.mrf.mxu0
        %v7545 = vadd.f32 0.0, %v7544
        %v7546 = vpop.f32.mrf.mxu0
        %7547 = vmatprep.mubr.bf16.mxu0 0
        %7548 = vmatmul.mubr.bf16.gmra.mxu0 %v7400
        %v7549 = vpop.f32.mrf.mxu0
        %v7550 = vadd.f32 0.0, %v7549
        %v7551 = vpop.f32.mrf.mxu0
        %v7552 = vpop.f32.mrf.mxu0
        %v7553 = vadd.f32 0.0, %v7552
        %v7554 = vpop.f32.mrf.mxu0
        %7555 = vmatprep.mubr.bf16.mxu0 0
        %7556 = vmatmul.mubr.bf16.gmra.mxu0 %v7403
        %v7557 = vpop.f32.mrf.mxu0
        %v7558 = vadd.f32 0.0, %v7557
        %v7559 = vpop.f32.mrf.mxu0
        %v7560 = vpop.f32.mrf.mxu0
        %v7561 = vadd.f32 0.0, %v7560
        %v7562 = vpop.f32.mrf.mxu0
        %7563 = vmatprep.mubr.bf16.mxu0 0
        %7564 = vmatmul.mubr.bf16.gmra.mxu0 %v7406
        %v7565 = vpop.f32.mrf.mxu0
        %v7566 = vadd.f32 0.0, %v7565
        %v7567 = vpop.f32.mrf.mxu0
        %v7568 = vpop.f32.mrf.mxu0
        %v7569 = vadd.f32 0.0, %v7568
        %v7570 = vpop.f32.mrf.mxu0
        %7571 = vdwg.mxu0
        %v7572 = vadd.f32 %v7024, %v7446
        %v7573 = vadd.f32 %v7027, %v7449
        %v7574 = vadd.f32 %v7032, %v7454
        %v7575 = vadd.f32 %v7035, %v7457
        %v7576 = vadd.f32 %v7040, %v7462
        %v7577 = vadd.f32 %v7043, %v7465
        %v7578 = vadd.f32 %v7048, %v7470
        %v7579 = vadd.f32 %v7051, %v7473
        %v7580 = vadd.f32 %v7056, %v7478
        %v7581 = vadd.f32 %v7059, %v7481
        %v7582 = vadd.f32 %v7064, %v7486
        %v7583 = vadd.f32 %v7067, %v7489
        %v7584 = vadd.f32 %v7072, %v7494
        %v7585 = vadd.f32 %v7075, %v7497
        %v7586 = vadd.f32 %v7080, %v7502
        %v7587 = vadd.f32 %v7083, %v7505
        %v7588 = vadd.f32 %v7088, %v7510
        %v7589 = vadd.f32 %v7091, %v7513
        %v7590 = vadd.f32 %v7096, %v7518
        %v7591 = vadd.f32 %v7099, %v7521
        %v7592 = vadd.f32 %v7104, %v7526
        %v7593 = vadd.f32 %v7107, %v7529
        %v7594 = vadd.f32 %v7112, %v7534
        %v7595 = vadd.f32 %v7115, %v7537
        %v7596 = vadd.f32 %v7120, %v7542
        %v7597 = vadd.f32 %v7123, %v7545
        %v7598 = vadd.f32 %v7128, %v7550
        %v7599 = vadd.f32 %v7131, %v7553
        %v7600 = vadd.f32 %v7136, %v7558
        %v7601 = vadd.f32 %v7139, %v7561
        %v7602 = vadd.f32 %v7144, %v7566
        %v7603 = vadd.f32 %v7147, %v7569
        %v7604 = vld [vmem:[%s6046] sm:$0xf]
        %v7605 = vld [vmem:[%s6046 + $0x4] sm:$0xf]
        %v7606 = vld [vmem:[%s6046 + $0xc] sm:$0xf]
        %v7607 = vld [vmem:[%s6046 + $0x10] sm:$0xf]
        %v7608 = vld [vmem:[%s6046 + $0x18] sm:$0xf]
        %v7609 = vld [vmem:[%s6046 + $0x1c] sm:$0xf]
        %v7610 = vld [vmem:[%s6046 + $0x24] sm:$0xf]
        %v7611 = vld [vmem:[%s6046 + $0x28] sm:$0xf]
        %v7612 = vld [vmem:[%s6046 + $0x30] sm:$0xf]
        %v7613 = vld [vmem:[%s6046 + $0x34] sm:$0xf]
        %v7614 = vld [vmem:[%s6046 + $0x3c] sm:$0xf]
        %v7615 = vld [vmem:[%s6046 + $0x40] sm:$0xf]
        %v7616 = vld [vmem:[%s6046 + $0x48] sm:$0xf]
        %v7617 = vld [vmem:[%s6046 + $0x4c] sm:$0xf]
        %v7618 = vld [vmem:[%s6046 + $0x54] sm:$0xf]
        %v7619 = vld [vmem:[%s6046 + $0x58] sm:$0xf]
        %v7620 = vld [vmem:[%s6046 + $0x60] sm:$0xf]
        %v7621 = vld [vmem:[%s6046 + $0x64] sm:$0xf]
        %v7622 = vld [vmem:[%s6046 + $0x6c] sm:$0xf]
        %v7623 = vld [vmem:[%s6046 + $0x70] sm:$0xf]
        %v7624 = vld [vmem:[%s6046 + $0x78] sm:$0xf]
        %v7625 = vld [vmem:[%s6046 + $0x7c] sm:$0xf]
        %v7626 = vld [vmem:[%s6046 + $0x84] sm:$0xf]
        %v7627 = vld [vmem:[%s6046 + $0x88] sm:$0xf]
        %v7628 = vld [vmem:[%s6046 + $0x90] sm:$0xf]
        %v7629 = vld [vmem:[%s6046 + $0x94] sm:$0xf]
        %v7630 = vld [vmem:[%s6046 + $0x9c] sm:$0xf]
        %v7631 = vld [vmem:[%s6046 + $0xa0] sm:$0xf]
        %v7632 = vld [vmem:[%s6046 + $0xa8] sm:$0xf]
        %v7633 = vld [vmem:[%s6046 + $0xac] sm:$0xf]
        %v7634 = vld [vmem:[%s6046 + $0xb4] sm:$0xf]
        %v7635 = vld [vmem:[%s6046 + $0xb8] sm:$0xf]
        %s7636 = scalar_lea.vmem %s2, 12
        %v7637 = vld [vmem:[%s7636] sm:$0xf]
        %v7670 = vunpack.c.l.b16 %v7604
        %v7671 = vunpack.c.l.b16 %v7605
        %v7672 = vunpack.c.l.b16 %v7606
        %v7673 = vunpack.c.l.b16 %v7607
        %v7674 = vunpack.c.l.b16 %v7608
        %v7675 = vunpack.c.l.b16 %v7609
        %v7676 = vunpack.c.l.b16 %v7610
        %v7677 = vunpack.c.l.b16 %v7611
        %v7678 = vunpack.c.l.b16 %v7612
        %v7679 = vunpack.c.l.b16 %v7613
        %v7680 = vunpack.c.l.b16 %v7614
        %v7681 = vunpack.c.l.b16 %v7615
        %v7682 = vunpack.c.l.b16 %v7616
        %v7683 = vunpack.c.l.b16 %v7617
        %v7684 = vunpack.c.l.b16 %v7618
        %v7685 = vunpack.c.l.b16 %v7619
        %v7686 = vunpack.c.l.b16 %v7620
        %v7687 = vunpack.c.l.b16 %v7621
        %v7688 = vunpack.c.l.b16 %v7622
        %v7689 = vunpack.c.l.b16 %v7623
        %v7690 = vunpack.c.l.b16 %v7624
        %v7691 = vunpack.c.l.b16 %v7625
        %v7692 = vunpack.c.l.b16 %v7626
        %v7693 = vunpack.c.l.b16 %v7627
        %v7694 = vunpack.c.l.b16 %v7628
        %v7695 = vunpack.c.l.b16 %v7629
        %v7696 = vunpack.c.l.b16 %v7630
        %v7697 = vunpack.c.l.b16 %v7631
        %v7698 = vunpack.c.l.b16 %v7632
        %v7699 = vunpack.c.l.b16 %v7633
        %v7700 = vunpack.c.l.b16 %v7634
        %v7701 = vunpack.c.l.b16 %v7635
        %v7702 = vpack.c.b16 %v7671, %v7670
        %v7703 = vpack.c.b16 %v7673, %v7672
        %v7704 = vpack.c.b16 %v7675, %v7674
        %v7705 = vpack.c.b16 %v7677, %v7676
        %v7706 = vpack.c.b16 %v7679, %v7678
        %v7707 = vpack.c.b16 %v7681, %v7680
        %v7708 = vpack.c.b16 %v7683, %v7682
        %v7709 = vpack.c.b16 %v7685, %v7684
        %v7710 = vpack.c.b16 %v7687, %v7686
        %v7711 = vpack.c.b16 %v7689, %v7688
        %v7712 = vpack.c.b16 %v7691, %v7690
        %v7713 = vpack.c.b16 %v7693, %v7692
        %v7714 = vpack.c.b16 %v7695, %v7694
        %v7715 = vpack.c.b16 %v7697, %v7696
        %v7716 = vpack.c.b16 %v7699, %v7698
        %v7717 = vpack.c.b16 %v7701, %v7700
        %v7719 = vsel %vm6644, %v7702, 0
        %v7722 = vsel %vm6644, %v7703, 0
        %v7725 = vsel %vm6644, %v7704, 0
        %v7728 = vsel %vm6644, %v7705, 0
        %v7731 = vsel %vm6644, %v7706, 0
        %v7734 = vsel %vm6644, %v7707, 0
        %v7737 = vsel %vm6644, %v7708, 0
        %v7740 = vsel %vm6644, %v7709, 0
        %v7743 = vsel %vm6644, %v7710, 0
        %v7746 = vsel %vm6644, %v7711, 0
        %v7749 = vsel %vm6644, %v7712, 0
        %v7752 = vsel %vm6644, %v7713, 0
        %v7755 = vsel %vm6644, %v7714, 0
        %v7758 = vsel %vm6644, %v7715, 0
        %v7761 = vsel %vm6644, %v7716, 0
        %v7764 = vsel %vm6644, %v7717, 0
        %v7767 = vsel %vm6693, %v7637, 0
        %7769 = vmatprep.subr.bf16.mxu0 0
        %7770 = vmatpush1.bf16.msra.mxu0 0
        %7771 = vmatprep.subr.bf16.mxu0 0
        %7772 = vmatpush1.bf16.msra.mxu0 0
        %7773 = vmatprep.subr.bf16.mxu0 0
        %7774 = vmatpush1.bf16.msra.mxu0 0
        %7775 = vmatprep.subr.bf16.mxu0 0
        %7776 = vmatpush1.bf16.msra.mxu0 0
        %7777 = vmatprep.subr.bf16.mxu0 0
        %7778 = vmatpush1.bf16.msra.mxu0 0
        %7779 = vmatprep.subr.bf16.mxu0 0
        %7780 = vmatpush1.bf16.msra.mxu0 0
        %7781 = vmatprep.subr.bf16.mxu0 0
        %7782 = vmatpush1.bf16.msra.mxu0 0
        %7783 = vmatprep.subr.bf16.mxu0 0
        %7784 = vmatpush1.bf16.msra.mxu0 %v7767
        %7785 = vmatprep.subr.bf16.mxu0 0
        %7786 = vmatpush2.bf16.msra.mxu0 0
        %7787 = vmatprep.subr.bf16.mxu0 0
        %7788 = vmatpush2.bf16.msra.mxu0 0
        %7789 = vmatprep.subr.bf16.mxu0 0
        %7790 = vmatpush2.bf16.msra.mxu0 0
        %7791 = vmatprep.subr.bf16.mxu0 0
        %7792 = vmatpush2.bf16.msra.mxu0 0
        %7793 = vmatprep.subr.bf16.mxu0 0
        %7794 = vmatpush2.bf16.msra.mxu0 0
        %7795 = vmatprep.subr.bf16.mxu0 0
        %7796 = vmatpush2.bf16.msra.mxu0 0
        %7797 = vmatprep.subr.bf16.mxu0 0
        %7798 = vmatpush2.bf16.msra.mxu0 0
        %7799 = vmatprep.subr.bf16.mxu0 0
        %7800 = vmatpush2.bf16.msra.mxu0 0
        %7801 = vmatprep.mubr.bf16.mxu0 0
        %7802 = vmatmul.mubr.bf16.gmra.mxu0 %v7719
        %v7803 = vpop.f32.mrf.mxu0
        %v7804 = vadd.f32 0.0, %v7803
        %v7805 = vpop.f32.mrf.mxu0
        %v7806 = vpop.f32.mrf.mxu0
        %v7807 = vadd.f32 0.0, %v7806
        %v7808 = vpop.f32.mrf.mxu0
        %7809 = vmatprep.mubr.bf16.mxu0 0
        %7810 = vmatmul.mubr.bf16.gmra.mxu0 %v7722
        %v7811 = vpop.f32.mrf.mxu0
        %v7812 = vadd.f32 0.0, %v7811
        %v7813 = vpop.f32.mrf.mxu0
        %v7814 = vpop.f32.mrf.mxu0
        %v7815 = vadd.f32 0.0, %v7814
        %v7816 = vpop.f32.mrf.mxu0
        %7817 = vmatprep.mubr.bf16.mxu0 0
        %7818 = vmatmul.mubr.bf16.gmra.mxu0 %v7725
        %v7819 = vpop.f32.mrf.mxu0
        %v7820 = vadd.f32 0.0, %v7819
        %v7821 = vpop.f32.mrf.mxu0
        %v7822 = vpop.f32.mrf.mxu0
        %v7823 = vadd.f32 0.0, %v7822
        %v7824 = vpop.f32.mrf.mxu0
        %7825 = vmatprep.mubr.bf16.mxu0 0
        %7826 = vmatmul.mubr.bf16.gmra.mxu0 %v7728
        %v7827 = vpop.f32.mrf.mxu0
        %v7828 = vadd.f32 0.0, %v7827
        %v7829 = vpop.f32.mrf.mxu0
        %v7830 = vpop.f32.mrf.mxu0
        %v7831 = vadd.f32 0.0, %v7830
        %v7832 = vpop.f32.mrf.mxu0
        %7833 = vmatprep.mubr.bf16.mxu0 0
        %7834 = vmatmul.mubr.bf16.gmra.mxu0 %v7731
        %v7835 = vpop.f32.mrf.mxu0
        %v7836 = vadd.f32 0.0, %v7835
        %v7837 = vpop.f32.mrf.mxu0
        %v7838 = vpop.f32.mrf.mxu0
        %v7839 = vadd.f32 0.0, %v7838
        %v7840 = vpop.f32.mrf.mxu0
        %7841 = vmatprep.mubr.bf16.mxu0 0
        %7842 = vmatmul.mubr.bf16.gmra.mxu0 %v7734
        %v7843 = vpop.f32.mrf.mxu0
        %v7844 = vadd.f32 0.0, %v7843
        %v7845 = vpop.f32.mrf.mxu0
        %v7846 = vpop.f32.mrf.mxu0
        %v7847 = vadd.f32 0.0, %v7846
        %v7848 = vpop.f32.mrf.mxu0
        %7849 = vmatprep.mubr.bf16.mxu0 0
        %7850 = vmatmul.mubr.bf16.gmra.mxu0 %v7737
        %v7851 = vpop.f32.mrf.mxu0
        %v7852 = vadd.f32 0.0, %v7851
        %v7853 = vpop.f32.mrf.mxu0
        %v7854 = vpop.f32.mrf.mxu0
        %v7855 = vadd.f32 0.0, %v7854
        %v7856 = vpop.f32.mrf.mxu0
        %7857 = vmatprep.mubr.bf16.mxu0 0
        %7858 = vmatmul.mubr.bf16.gmra.mxu0 %v7740
        %v7859 = vpop.f32.mrf.mxu0
        %v7860 = vadd.f32 0.0, %v7859
        %v7861 = vpop.f32.mrf.mxu0
        %v7862 = vpop.f32.mrf.mxu0
        %v7863 = vadd.f32 0.0, %v7862
        %v7864 = vpop.f32.mrf.mxu0
        %7865 = vmatprep.mubr.bf16.mxu0 0
        %7866 = vmatmul.mubr.bf16.gmra.mxu0 %v7743
        %v7867 = vpop.f32.mrf.mxu0
        %v7868 = vadd.f32 0.0, %v7867
        %v7869 = vpop.f32.mrf.mxu0
        %v7870 = vpop.f32.mrf.mxu0
        %v7871 = vadd.f32 0.0, %v7870
        %v7872 = vpop.f32.mrf.mxu0
        %7873 = vmatprep.mubr.bf16.mxu0 0
        %7874 = vmatmul.mubr.bf16.gmra.mxu0 %v7746
        %v7875 = vpop.f32.mrf.mxu0
        %v7876 = vadd.f32 0.0, %v7875
        %v7877 = vpop.f32.mrf.mxu0
        %v7878 = vpop.f32.mrf.mxu0
        %v7879 = vadd.f32 0.0, %v7878
        %v7880 = vpop.f32.mrf.mxu0
        %7881 = vmatprep.mubr.bf16.mxu0 0
        %7882 = vmatmul.mubr.bf16.gmra.mxu0 %v7749
        %v7883 = vpop.f32.mrf.mxu0
        %v7884 = vadd.f32 0.0, %v7883
        %v7885 = vpop.f32.mrf.mxu0
        %v7886 = vpop.f32.mrf.mxu0
        %v7887 = vadd.f32 0.0, %v7886
        %v7888 = vpop.f32.mrf.mxu0
        %7889 = vmatprep.mubr.bf16.mxu0 0
        %7890 = vmatmul.mubr.bf16.gmra.mxu0 %v7752
        %v7891 = vpop.f32.mrf.mxu0
        %v7892 = vadd.f32 0.0, %v7891
        %v7893 = vpop.f32.mrf.mxu0
        %v7894 = vpop.f32.mrf.mxu0
        %v7895 = vadd.f32 0.0, %v7894
        %v7896 = vpop.f32.mrf.mxu0
        %7897 = vmatprep.mubr.bf16.mxu0 0
        %7898 = vmatmul.mubr.bf16.gmra.mxu0 %v7755
        %v7899 = vpop.f32.mrf.mxu0
        %v7900 = vadd.f32 0.0, %v7899
        %v7901 = vpop.f32.mrf.mxu0
        %v7902 = vpop.f32.mrf.mxu0
        %v7903 = vadd.f32 0.0, %v7902
        %v7904 = vpop.f32.mrf.mxu0
        %7905 = vmatprep.mubr.bf16.mxu0 0
        %7906 = vmatmul.mubr.bf16.gmra.mxu0 %v7758
        %v7907 = vpop.f32.mrf.mxu0
        %v7908 = vadd.f32 0.0, %v7907
        %v7909 = vpop.f32.mrf.mxu0
        %v7910 = vpop.f32.mrf.mxu0
        %v7911 = vadd.f32 0.0, %v7910
        %v7912 = vpop.f32.mrf.mxu0
        %7913 = vmatprep.mubr.bf16.mxu0 0
        %7914 = vmatmul.mubr.bf16.gmra.mxu0 %v7761
        %v7915 = vpop.f32.mrf.mxu0
        %v7916 = vadd.f32 0.0, %v7915
        %v7917 = vpop.f32.mrf.mxu0
        %v7918 = vpop.f32.mrf.mxu0
        %v7919 = vadd.f32 0.0, %v7918
        %v7920 = vpop.f32.mrf.mxu0
        %7921 = vmatprep.mubr.bf16.mxu0 0
        %7922 = vmatmul.mubr.bf16.gmra.mxu0 %v7764
        %v7923 = vpop.f32.mrf.mxu0
        %v7924 = vadd.f32 0.0, %v7923
        %v7925 = vpop.f32.mrf.mxu0
        %v7926 = vpop.f32.mrf.mxu0
        %v7927 = vadd.f32 0.0, %v7926
        %v7928 = vpop.f32.mrf.mxu0
        %7929 = vdwg.mxu0
        %v7930 = vadd.f32 %v7572, %v7804
        %v7931 = vadd.f32 %v7573, %v7807
        %v7932 = vadd.f32 %v7574, %v7812
        %v7933 = vadd.f32 %v7575, %v7815
        %v7934 = vadd.f32 %v7576, %v7820
        %v7935 = vadd.f32 %v7577, %v7823
        %v7936 = vadd.f32 %v7578, %v7828
        %v7937 = vadd.f32 %v7579, %v7831
        %v7938 = vadd.f32 %v7580, %v7836
        %v7939 = vadd.f32 %v7581, %v7839
        %v7940 = vadd.f32 %v7582, %v7844
        %v7941 = vadd.f32 %v7583, %v7847
        %v7942 = vadd.f32 %v7584, %v7852
        %v7943 = vadd.f32 %v7585, %v7855
        %v7944 = vadd.f32 %v7586, %v7860
        %v7945 = vadd.f32 %v7587, %v7863
        %v7946 = vadd.f32 %v7588, %v7868
        %v7947 = vadd.f32 %v7589, %v7871
        %v7948 = vadd.f32 %v7590, %v7876
        %v7949 = vadd.f32 %v7591, %v7879
        %v7950 = vadd.f32 %v7592, %v7884
        %v7951 = vadd.f32 %v7593, %v7887
        %v7952 = vadd.f32 %v7594, %v7892
        %v7953 = vadd.f32 %v7595, %v7895
        %v7954 = vadd.f32 %v7596, %v7900
        %v7955 = vadd.f32 %v7597, %v7903
        %v7956 = vadd.f32 %v7598, %v7908
        %v7957 = vadd.f32 %v7599, %v7911
        %v7958 = vadd.f32 %v7600, %v7916
        %v7959 = vadd.f32 %v7601, %v7919
        %v7960 = vadd.f32 %v7602, %v7924
        %v7961 = vadd.f32 %v7603, %v7927
        %v7962 = vld [vmem:[%s6046] sm:$0xf]
        %v7963 = vld [vmem:[%s6046 + $0x4] sm:$0xf]
        %v7964 = vld [vmem:[%s6046 + $0x8] sm:$0x1]
        %v7965 = vld [vmem:[%s6046 + $0xc] sm:$0xf]
        %v7966 = vld [vmem:[%s6046 + $0x10] sm:$0xf]
        %v7967 = vld [vmem:[%s6046 + $0x14] sm:$0x1]
        %v7968 = vld [vmem:[%s6046 + $0x18] sm:$0xf]
        %v7969 = vld [vmem:[%s6046 + $0x1c] sm:$0xf]
        %v7970 = vld [vmem:[%s6046 + $0x20] sm:$0x1]
        %v7971 = vld [vmem:[%s6046 + $0x24] sm:$0xf]
        %v7972 = vld [vmem:[%s6046 + $0x28] sm:$0xf]
        %v7973 = vld [vmem:[%s6046 + $0x2c] sm:$0x1]
        %v7974 = vld [vmem:[%s6046 + $0x30] sm:$0xf]
        %v7975 = vld [vmem:[%s6046 + $0x34] sm:$0xf]
        %v7976 = vld [vmem:[%s6046 + $0x38] sm:$0x1]
        %v7977 = vld [vmem:[%s6046 + $0x3c] sm:$0xf]
        %v7978 = vld [vmem:[%s6046 + $0x40] sm:$0xf]
        %v7979 = vld [vmem:[%s6046 + $0x44] sm:$0x1]
        %v7980 = vld [vmem:[%s6046 + $0x48] sm:$0xf]
        %v7981 = vld [vmem:[%s6046 + $0x4c] sm:$0xf]
        %v7982 = vld [vmem:[%s6046 + $0x50] sm:$0x1]
        %v7983 = vld [vmem:[%s6046 + $0x54] sm:$0xf]
        %v7984 = vld [vmem:[%s6046 + $0x58] sm:$0xf]
        %v7985 = vld [vmem:[%s6046 + $0x5c] sm:$0x1]
        %v7986 = vld [vmem:[%s6046 + $0x60] sm:$0xf]
        %v7987 = vld [vmem:[%s6046 + $0x64] sm:$0xf]
        %v7988 = vld [vmem:[%s6046 + $0x68] sm:$0x1]
        %v7989 = vld [vmem:[%s6046 + $0x6c] sm:$0xf]
        %v7990 = vld [vmem:[%s6046 + $0x70] sm:$0xf]
        %v7991 = vld [vmem:[%s6046 + $0x74] sm:$0x1]
        %v7992 = vld [vmem:[%s6046 + $0x78] sm:$0xf]
        %v7993 = vld [vmem:[%s6046 + $0x7c] sm:$0xf]
        %v7994 = vld [vmem:[%s6046 + $0x80] sm:$0x1]
        %v7995 = vld [vmem:[%s6046 + $0x84] sm:$0xf]
        %v7996 = vld [vmem:[%s6046 + $0x88] sm:$0xf]
        %v7997 = vld [vmem:[%s6046 + $0x8c] sm:$0x1]
        %v7998 = vld [vmem:[%s6046 + $0x90] sm:$0xf]
        %v7999 = vld [vmem:[%s6046 + $0x94] sm:$0xf]
        %v8000 = vld [vmem:[%s6046 + $0x98] sm:$0x1]
        %v8001 = vld [vmem:[%s6046 + $0x9c] sm:$0xf]
        %v8002 = vld [vmem:[%s6046 + $0xa0] sm:$0xf]
        %v8003 = vld [vmem:[%s6046 + $0xa4] sm:$0x1]
        %v8004 = vld [vmem:[%s6046 + $0xa8] sm:$0xf]
        %v8005 = vld [vmem:[%s6046 + $0xac] sm:$0xf]
        %v8006 = vld [vmem:[%s6046 + $0xb0] sm:$0x1]
        %v8007 = vld [vmem:[%s6046 + $0xb4] sm:$0xf]
        %v8008 = vld [vmem:[%s6046 + $0xb8] sm:$0xf]
        %v8009 = vld [vmem:[%s6046 + $0xbc] sm:$0x1]
        %v8011 = vshrl.u32 %v7962, 16
        %v8013 = vrot.slane %v8011, 4
        %v8014 = vshll.u32 %v7962, 16
        %v8016 = vrot.slane %v8014, 5
        %v8017 = vor.u32 %v8013, %v8016
        %v8018 = vrot.slane %v8017, 4
        %v8020 = vshll.u32 %v7963, 16
        %v8022 = vrot.slane %v8020, 5
        %v8023 = vsel %vm1013, %v8018, %v8022
        %v8024 = vshrl.u32 %v7963, 16
        %v8026 = vrot.slane %v8024, 4
        %v8027 = vor.u32 %v8026, %v8022
        %v8028 = vrot.slane %v8027, 4
        %v8030 = vshll.u32 %v7964, 16
        %v8032 = vrot.slane %v8030, 5
        %v8033 = vsel %vm1013, %v8028, %v8032
        %v8035 = vshrl.u32 %v7965, 16
        %v8037 = vrot.slane %v8035, 4
        %v8038 = vshll.u32 %v7965, 16
        %v8040 = vrot.slane %v8038, 5
        %v8041 = vor.u32 %v8037, %v8040
        %v8042 = vrot.slane %v8041, 4
        %v8044 = vshll.u32 %v7966, 16
        %v8046 = vrot.slane %v8044, 5
        %v8047 = vsel %vm1013, %v8042, %v8046
        %v8048 = vshrl.u32 %v7966, 16
        %v8050 = vrot.slane %v8048, 4
        %v8051 = vor.u32 %v8050, %v8046
        %v8052 = vrot.slane %v8051, 4
        %v8054 = vshll.u32 %v7967, 16
        %v8056 = vrot.slane %v8054, 5
        %v8057 = vsel %vm1013, %v8052, %v8056
        %v8059 = vshrl.u32 %v7968, 16
        %v8061 = vrot.slane %v8059, 4
        %v8062 = vshll.u32 %v7968, 16
        %v8064 = vrot.slane %v8062, 5
        %v8065 = vor.u32 %v8061, %v8064
        %v8066 = vrot.slane %v8065, 4
        %v8068 = vshll.u32 %v7969, 16
        %v8070 = vrot.slane %v8068, 5
        %v8071 = vsel %vm1013, %v8066, %v8070
        %v8072 = vshrl.u32 %v7969, 16
        %v8074 = vrot.slane %v8072, 4
        %v8075 = vor.u32 %v8074, %v8070
        %v8076 = vrot.slane %v8075, 4
        %v8078 = vshll.u32 %v7970, 16
        %v8080 = vrot.slane %v8078, 5
        %v8081 = vsel %vm1013, %v8076, %v8080
        %v8083 = vshrl.u32 %v7971, 16
        %v8085 = vrot.slane %v8083, 4
        %v8086 = vshll.u32 %v7971, 16
        %v8088 = vrot.slane %v8086, 5
        %v8089 = vor.u32 %v8085, %v8088
        %v8090 = vrot.slane %v8089, 4
        %v8092 = vshll.u32 %v7972, 16
        %v8094 = vrot.slane %v8092, 5
        %v8095 = vsel %vm1013, %v8090, %v8094
        %v8096 = vshrl.u32 %v7972, 16
        %v8098 = vrot.slane %v8096, 4
        %v8099 = vor.u32 %v8098, %v8094
        %v8100 = vrot.slane %v8099, 4
        %v8102 = vshll.u32 %v7973, 16
        %v8104 = vrot.slane %v8102, 5
        %v8105 = vsel %vm1013, %v8100, %v8104
        %v8107 = vshrl.u32 %v7974, 16
        %v8109 = vrot.slane %v8107, 4
        %v8110 = vshll.u32 %v7974, 16
        %v8112 = vrot.slane %v8110, 5
        %v8113 = vor.u32 %v8109, %v8112
        %v8114 = vrot.slane %v8113, 4
        %v8116 = vshll.u32 %v7975, 16
        %v8118 = vrot.slane %v8116, 5
        %v8119 = vsel %vm1013, %v8114, %v8118
        %v8120 = vshrl.u32 %v7975, 16
        %v8122 = vrot.slane %v8120, 4
        %v8123 = vor.u32 %v8122, %v8118
        %v8124 = vrot.slane %v8123, 4
        %v8126 = vshll.u32 %v7976, 16
        %v8128 = vrot.slane %v8126, 5
        %v8129 = vsel %vm1013, %v8124, %v8128
        %v8131 = vshrl.u32 %v7977, 16
        %v8133 = vrot.slane %v8131, 4
        %v8134 = vshll.u32 %v7977, 16
        %v8136 = vrot.slane %v8134, 5
        %v8137 = vor.u32 %v8133, %v8136
        %v8138 = vrot.slane %v8137, 4
        %v8140 = vshll.u32 %v7978, 16
        %v8142 = vrot.slane %v8140, 5
        %v8143 = vsel %vm1013, %v8138, %v8142
        %v8144 = vshrl.u32 %v7978, 16
        %v8146 = vrot.slane %v8144, 4
        %v8147 = vor.u32 %v8146, %v8142
        %v8148 = vrot.slane %v8147, 4
        %v8150 = vshll.u32 %v7979, 16
        %v8152 = vrot.slane %v8150, 5
        %v8153 = vsel %vm1013, %v8148, %v8152
        %v8155 = vshrl.u32 %v7980, 16
        %v8157 = vrot.slane %v8155, 4
        %v8158 = vshll.u32 %v7980, 16
        %v8160 = vrot.slane %v8158, 5
        %v8161 = vor.u32 %v8157, %v8160
        %v8162 = vrot.slane %v8161, 4
        %v8164 = vshll.u32 %v7981, 16
        %v8166 = vrot.slane %v8164, 5
        %v8167 = vsel %vm1013, %v8162, %v8166
        %v8168 = vshrl.u32 %v7981, 16
        %v8170 = vrot.slane %v8168, 4
        %v8171 = vor.u32 %v8170, %v8166
        %v8172 = vrot.slane %v8171, 4
        %v8174 = vshll.u32 %v7982, 16
        %v8176 = vrot.slane %v8174, 5
        %v8177 = vsel %vm1013, %v8172, %v8176
        %v8179 = vshrl.u32 %v7983, 16
        %v8181 = vrot.slane %v8179, 4
        %v8182 = vshll.u32 %v7983, 16
        %v8184 = vrot.slane %v8182, 5
        %v8185 = vor.u32 %v8181, %v8184
        %v8186 = vrot.slane %v8185, 4
        %v8188 = vshll.u32 %v7984, 16
        %v8190 = vrot.slane %v8188, 5
        %v8191 = vsel %vm1013, %v8186, %v8190
        %v8192 = vshrl.u32 %v7984, 16
        %v8194 = vrot.slane %v8192, 4
        %v8195 = vor.u32 %v8194, %v8190
        %v8196 = vrot.slane %v8195, 4
        %v8198 = vshll.u32 %v7985, 16
        %v8200 = vrot.slane %v8198, 5
        %v8201 = vsel %vm1013, %v8196, %v8200
        %v8203 = vshrl.u32 %v7986, 16
        %v8205 = vrot.slane %v8203, 4
        %v8206 = vshll.u32 %v7986, 16
        %v8208 = vrot.slane %v8206, 5
        %v8209 = vor.u32 %v8205, %v8208
        %v8210 = vrot.slane %v8209, 4
        %v8212 = vshll.u32 %v7987, 16
        %v8214 = vrot.slane %v8212, 5
        %v8215 = vsel %vm1013, %v8210, %v8214
        %v8216 = vshrl.u32 %v7987, 16
        %v8218 = vrot.slane %v8216, 4
        %v8219 = vor.u32 %v8218, %v8214
        %v8220 = vrot.slane %v8219, 4
        %v8222 = vshll.u32 %v7988, 16
        %v8224 = vrot.slane %v8222, 5
        %v8225 = vsel %vm1013, %v8220, %v8224
        %v8227 = vshrl.u32 %v7989, 16
        %v8229 = vrot.slane %v8227, 4
        %v8230 = vshll.u32 %v7989, 16
        %v8232 = vrot.slane %v8230, 5
        %v8233 = vor.u32 %v8229, %v8232
        %v8234 = vrot.slane %v8233, 4
        %v8236 = vshll.u32 %v7990, 16
        %v8238 = vrot.slane %v8236, 5
        %v8239 = vsel %vm1013, %v8234, %v8238
        %v8240 = vshrl.u32 %v7990, 16
        %v8242 = vrot.slane %v8240, 4
        %v8243 = vor.u32 %v8242, %v8238
        %v8244 = vrot.slane %v8243, 4
        %v8246 = vshll.u32 %v7991, 16
        %v8248 = vrot.slane %v8246, 5
        %v8249 = vsel %vm1013, %v8244, %v8248
        %v8251 = vshrl.u32 %v7992, 16
        %v8253 = vrot.slane %v8251, 4
        %v8254 = vshll.u32 %v7992, 16
        %v8256 = vrot.slane %v8254, 5
        %v8257 = vor.u32 %v8253, %v8256
        %v8258 = vrot.slane %v8257, 4
        %v8260 = vshll.u32 %v7993, 16
        %v8262 = vrot.slane %v8260, 5
        %v8263 = vsel %vm1013, %v8258, %v8262
        %v8264 = vshrl.u32 %v7993, 16
        %v8266 = vrot.slane %v8264, 4
        %v8267 = vor.u32 %v8266, %v8262
        %v8268 = vrot.slane %v8267, 4
        %v8270 = vshll.u32 %v7994, 16
        %v8272 = vrot.slane %v8270, 5
        %v8273 = vsel %vm1013, %v8268, %v8272
        %v8275 = vshrl.u32 %v7995, 16
        %v8277 = vrot.slane %v8275, 4
        %v8278 = vshll.u32 %v7995, 16
        %v8280 = vrot.slane %v8278, 5
        %v8281 = vor.u32 %v8277, %v8280
        %v8282 = vrot.slane %v8281, 4
        %v8284 = vshll.u32 %v7996, 16
        %v8286 = vrot.slane %v8284, 5
        %v8287 = vsel %vm1013, %v8282, %v8286
        %v8288 = vshrl.u32 %v7996, 16
        %v8290 = vrot.slane %v8288, 4
        %v8291 = vor.u32 %v8290, %v8286
        %v8292 = vrot.slane %v8291, 4
        %v8294 = vshll.u32 %v7997, 16
        %v8296 = vrot.slane %v8294, 5
        %v8297 = vsel %vm1013, %v8292, %v8296
        %v8299 = vshrl.u32 %v7998, 16
        %v8301 = vrot.slane %v8299, 4
        %v8302 = vshll.u32 %v7998, 16
        %v8304 = vrot.slane %v8302, 5
        %v8305 = vor.u32 %v8301, %v8304
        %v8306 = vrot.slane %v8305, 4
        %v8308 = vshll.u32 %v7999, 16
        %v8310 = vrot.slane %v8308, 5
        %v8311 = vsel %vm1013, %v8306, %v8310
        %v8312 = vshrl.u32 %v7999, 16
        %v8314 = vrot.slane %v8312, 4
        %v8315 = vor.u32 %v8314, %v8310
        %v8316 = vrot.slane %v8315, 4
        %v8318 = vshll.u32 %v8000, 16
        %v8320 = vrot.slane %v8318, 5
        %v8321 = vsel %vm1013, %v8316, %v8320
        %v8323 = vshrl.u32 %v8001, 16
        %v8325 = vrot.slane %v8323, 4
        %v8326 = vshll.u32 %v8001, 16
        %v8328 = vrot.slane %v8326, 5
        %v8329 = vor.u32 %v8325, %v8328
        %v8330 = vrot.slane %v8329, 4
        %v8332 = vshll.u32 %v8002, 16
        %v8334 = vrot.slane %v8332, 5
        %v8335 = vsel %vm1013, %v8330, %v8334
        %v8336 = vshrl.u32 %v8002, 16
        %v8338 = vrot.slane %v8336, 4
        %v8339 = vor.u32 %v8338, %v8334
        %v8340 = vrot.slane %v8339, 4
        %v8342 = vshll.u32 %v8003, 16
        %v8344 = vrot.slane %v8342, 5
        %v8345 = vsel %vm1013, %v8340, %v8344
        %v8347 = vshrl.u32 %v8004, 16
        %v8349 = vrot.slane %v8347, 4
        %v8350 = vshll.u32 %v8004, 16
        %v8352 = vrot.slane %v8350, 5
        %v8353 = vor.u32 %v8349, %v8352
        %v8354 = vrot.slane %v8353, 4
        %v8356 = vshll.u32 %v8005, 16
        %v8358 = vrot.slane %v8356, 5
        %v8359 = vsel %vm1013, %v8354, %v8358
        %v8360 = vshrl.u32 %v8005, 16
        %v8362 = vrot.slane %v8360, 4
        %v8363 = vor.u32 %v8362, %v8358
        %v8364 = vrot.slane %v8363, 4
        %v8366 = vshll.u32 %v8006, 16
        %v8368 = vrot.slane %v8366, 5
        %v8369 = vsel %vm1013, %v8364, %v8368
        %v8371 = vshrl.u32 %v8007, 16
        %v8373 = vrot.slane %v8371, 4
        %v8374 = vshll.u32 %v8007, 16
        %v8376 = vrot.slane %v8374, 5
        %v8377 = vor.u32 %v8373, %v8376
        %v8378 = vrot.slane %v8377, 4
        %v8380 = vshll.u32 %v8008, 16
        %v8382 = vrot.slane %v8380, 5
        %v8383 = vsel %vm1013, %v8378, %v8382
        %v8384 = vshrl.u32 %v8008, 16
        %v8386 = vrot.slane %v8384, 4
        %v8387 = vor.u32 %v8386, %v8382
        %v8388 = vrot.slane %v8387, 4
        %v8390 = vshll.u32 %v8009, 16
        %v8392 = vrot.slane %v8390, 5
        %v8393 = vsel %vm1013, %v8388, %v8392
        %s8394 = scalar_lea.vmem %s2, 16
        %v8395 = vld [vmem:[%s8394] sm:$0xf]
        %v8396 = vunpack.c.l.b16 %v8023
        %v8397 = vunpack.c.l.b16 %v8033
        %v8398 = vunpack.c.l.b16 %v8047
        %v8399 = vunpack.c.l.b16 %v8057
        %v8400 = vunpack.c.l.b16 %v8071
        %v8401 = vunpack.c.l.b16 %v8081
        %v8402 = vunpack.c.l.b16 %v8095
        %v8403 = vunpack.c.l.b16 %v8105
        %v8404 = vunpack.c.l.b16 %v8119
        %v8405 = vunpack.c.l.b16 %v8129
        %v8406 = vunpack.c.l.b16 %v8143
        %v8407 = vunpack.c.l.b16 %v8153
        %v8408 = vunpack.c.l.b16 %v8167
        %v8409 = vunpack.c.l.b16 %v8177
        %v8410 = vunpack.c.l.b16 %v8191
        %v8411 = vunpack.c.l.b16 %v8201
        %v8412 = vunpack.c.l.b16 %v8215
        %v8413 = vunpack.c.l.b16 %v8225
        %v8414 = vunpack.c.l.b16 %v8239
        %v8415 = vunpack.c.l.b16 %v8249
        %v8416 = vunpack.c.l.b16 %v8263
        %v8417 = vunpack.c.l.b16 %v8273
        %v8418 = vunpack.c.l.b16 %v8287
        %v8419 = vunpack.c.l.b16 %v8297
        %v8420 = vunpack.c.l.b16 %v8311
        %v8421 = vunpack.c.l.b16 %v8321
        %v8422 = vunpack.c.l.b16 %v8335
        %v8423 = vunpack.c.l.b16 %v8345
        %v8424 = vunpack.c.l.b16 %v8359
        %v8425 = vunpack.c.l.b16 %v8369
        %v8426 = vunpack.c.l.b16 %v8383
        %v8427 = vunpack.c.l.b16 %v8393
        %v8428 = vpack.c.b16 %v8397, %v8396
        %v8429 = vpack.c.b16 %v8399, %v8398
        %v8430 = vpack.c.b16 %v8401, %v8400
        %v8431 = vpack.c.b16 %v8403, %v8402
        %v8432 = vpack.c.b16 %v8405, %v8404
        %v8433 = vpack.c.b16 %v8407, %v8406
        %v8434 = vpack.c.b16 %v8409, %v8408
        %v8435 = vpack.c.b16 %v8411, %v8410
        %v8436 = vpack.c.b16 %v8413, %v8412
        %v8437 = vpack.c.b16 %v8415, %v8414
        %v8438 = vpack.c.b16 %v8417, %v8416
        %v8439 = vpack.c.b16 %v8419, %v8418
        %v8440 = vpack.c.b16 %v8421, %v8420
        %v8441 = vpack.c.b16 %v8423, %v8422
        %v8442 = vpack.c.b16 %v8425, %v8424
        %v8443 = vpack.c.b16 %v8427, %v8426
        %v8445 = vsel %vm6644, %v8428, 0
        %v8448 = vsel %vm6644, %v8429, 0
        %v8451 = vsel %vm6644, %v8430, 0
        %v8454 = vsel %vm6644, %v8431, 0
        %v8457 = vsel %vm6644, %v8432, 0
        %v8460 = vsel %vm6644, %v8433, 0
        %v8463 = vsel %vm6644, %v8434, 0
        %v8466 = vsel %vm6644, %v8435, 0
        %v8469 = vsel %vm6644, %v8436, 0
        %v8472 = vsel %vm6644, %v8437, 0
        %v8475 = vsel %vm6644, %v8438, 0
        %v8478 = vsel %vm6644, %v8439, 0
        %v8481 = vsel %vm6644, %v8440, 0
        %v8484 = vsel %vm6644, %v8441, 0
        %v8487 = vsel %vm6644, %v8442, 0
        %v8490 = vsel %vm6644, %v8443, 0
        %v8493 = vsel %vm6693, %v8395, 0
        %8495 = vmatprep.subr.bf16.mxu0 0
        %8496 = vmatpush1.bf16.msra.mxu0 0
        %8497 = vmatprep.subr.bf16.mxu0 0
        %8498 = vmatpush1.bf16.msra.mxu0 0
        %8499 = vmatprep.subr.bf16.mxu0 0
        %8500 = vmatpush1.bf16.msra.mxu0 0
        %8501 = vmatprep.subr.bf16.mxu0 0
        %8502 = vmatpush1.bf16.msra.mxu0 0
        %8503 = vmatprep.subr.bf16.mxu0 0
        %8504 = vmatpush1.bf16.msra.mxu0 0
        %8505 = vmatprep.subr.bf16.mxu0 0
        %8506 = vmatpush1.bf16.msra.mxu0 0
        %8507 = vmatprep.subr.bf16.mxu0 0
        %8508 = vmatpush1.bf16.msra.mxu0 0
        %8509 = vmatprep.subr.bf16.mxu0 0
        %8510 = vmatpush1.bf16.msra.mxu0 %v8493
        %8511 = vmatprep.subr.bf16.mxu0 0
        %8512 = vmatpush2.bf16.msra.mxu0 0
        %8513 = vmatprep.subr.bf16.mxu0 0
        %8514 = vmatpush2.bf16.msra.mxu0 0
        %8515 = vmatprep.subr.bf16.mxu0 0
        %8516 = vmatpush2.bf16.msra.mxu0 0
        %8517 = vmatprep.subr.bf16.mxu0 0
        %8518 = vmatpush2.bf16.msra.mxu0 0
        %8519 = vmatprep.subr.bf16.mxu0 0
        %8520 = vmatpush2.bf16.msra.mxu0 0
        %8521 = vmatprep.subr.bf16.mxu0 0
        %8522 = vmatpush2.bf16.msra.mxu0 0
        %8523 = vmatprep.subr.bf16.mxu0 0
        %8524 = vmatpush2.bf16.msra.mxu0 0
        %8525 = vmatprep.subr.bf16.mxu0 0
        %8526 = vmatpush2.bf16.msra.mxu0 0
        %8527 = vmatprep.mubr.bf16.mxu0 0
        %8528 = vmatmul.mubr.bf16.gmra.mxu0 %v8445
        %v8529 = vpop.f32.mrf.mxu0
        %v8530 = vadd.f32 0.0, %v8529
        %v8531 = vpop.f32.mrf.mxu0
        %v8532 = vpop.f32.mrf.mxu0
        %v8533 = vadd.f32 0.0, %v8532
        %v8534 = vpop.f32.mrf.mxu0
        %8535 = vmatprep.mubr.bf16.mxu0 0
        %8536 = vmatmul.mubr.bf16.gmra.mxu0 %v8448
        %v8537 = vpop.f32.mrf.mxu0
        %v8538 = vadd.f32 0.0, %v8537
        %v8539 = vpop.f32.mrf.mxu0
        %v8540 = vpop.f32.mrf.mxu0
        %v8541 = vadd.f32 0.0, %v8540
        %v8542 = vpop.f32.mrf.mxu0
        %8543 = vmatprep.mubr.bf16.mxu0 0
        %8544 = vmatmul.mubr.bf16.gmra.mxu0 %v8451
        %v8545 = vpop.f32.mrf.mxu0
        %v8546 = vadd.f32 0.0, %v8545
        %v8547 = vpop.f32.mrf.mxu0
        %v8548 = vpop.f32.mrf.mxu0
        %v8549 = vadd.f32 0.0, %v8548
        %v8550 = vpop.f32.mrf.mxu0
        %8551 = vmatprep.mubr.bf16.mxu0 0
        %8552 = vmatmul.mubr.bf16.gmra.mxu0 %v8454
        %v8553 = vpop.f32.mrf.mxu0
        %v8554 = vadd.f32 0.0, %v8553
        %v8555 = vpop.f32.mrf.mxu0
        %v8556 = vpop.f32.mrf.mxu0
        %v8557 = vadd.f32 0.0, %v8556
        %v8558 = vpop.f32.mrf.mxu0
        %8559 = vmatprep.mubr.bf16.mxu0 0
        %8560 = vmatmul.mubr.bf16.gmra.mxu0 %v8457
        %v8561 = vpop.f32.mrf.mxu0
        %v8562 = vadd.f32 0.0, %v8561
        %v8563 = vpop.f32.mrf.mxu0
        %v8564 = vpop.f32.mrf.mxu0
        %v8565 = vadd.f32 0.0, %v8564
        %v8566 = vpop.f32.mrf.mxu0
        %8567 = vmatprep.mubr.bf16.mxu0 0
        %8568 = vmatmul.mubr.bf16.gmra.mxu0 %v8460
        %v8569 = vpop.f32.mrf.mxu0
        %v8570 = vadd.f32 0.0, %v8569
        %v8571 = vpop.f32.mrf.mxu0
        %v8572 = vpop.f32.mrf.mxu0
        %v8573 = vadd.f32 0.0, %v8572
        %v8574 = vpop.f32.mrf.mxu0
        %8575 = vmatprep.mubr.bf16.mxu0 0
        %8576 = vmatmul.mubr.bf16.gmra.mxu0 %v8463
        %v8577 = vpop.f32.mrf.mxu0
        %v8578 = vadd.f32 0.0, %v8577
        %v8579 = vpop.f32.mrf.mxu0
        %v8580 = vpop.f32.mrf.mxu0
        %v8581 = vadd.f32 0.0, %v8580
        %v8582 = vpop.f32.mrf.mxu0
        %8583 = vmatprep.mubr.bf16.mxu0 0
        %8584 = vmatmul.mubr.bf16.gmra.mxu0 %v8466
        %v8585 = vpop.f32.mrf.mxu0
        %v8586 = vadd.f32 0.0, %v8585
        %v8587 = vpop.f32.mrf.mxu0
        %v8588 = vpop.f32.mrf.mxu0
        %v8589 = vadd.f32 0.0, %v8588
        %v8590 = vpop.f32.mrf.mxu0
        %8591 = vmatprep.mubr.bf16.mxu0 0
        %8592 = vmatmul.mubr.bf16.gmra.mxu0 %v8469
        %v8593 = vpop.f32.mrf.mxu0
        %v8594 = vadd.f32 0.0, %v8593
        %v8595 = vpop.f32.mrf.mxu0
        %v8596 = vpop.f32.mrf.mxu0
        %v8597 = vadd.f32 0.0, %v8596
        %v8598 = vpop.f32.mrf.mxu0
        %8599 = vmatprep.mubr.bf16.mxu0 0
        %8600 = vmatmul.mubr.bf16.gmra.mxu0 %v8472
        %v8601 = vpop.f32.mrf.mxu0
        %v8602 = vadd.f32 0.0, %v8601
        %v8603 = vpop.f32.mrf.mxu0
        %v8604 = vpop.f32.mrf.mxu0
        %v8605 = vadd.f32 0.0, %v8604
        %v8606 = vpop.f32.mrf.mxu0
        %8607 = vmatprep.mubr.bf16.mxu0 0
        %8608 = vmatmul.mubr.bf16.gmra.mxu0 %v8475
        %v8609 = vpop.f32.mrf.mxu0
        %v8610 = vadd.f32 0.0, %v8609
        %v8611 = vpop.f32.mrf.mxu0
        %v8612 = vpop.f32.mrf.mxu0
        %v8613 = vadd.f32 0.0, %v8612
        %v8614 = vpop.f32.mrf.mxu0
        %8615 = vmatprep.mubr.bf16.mxu0 0
        %8616 = vmatmul.mubr.bf16.gmra.mxu0 %v8478
        %v8617 = vpop.f32.mrf.mxu0
        %v8618 = vadd.f32 0.0, %v8617
        %v8619 = vpop.f32.mrf.mxu0
        %v8620 = vpop.f32.mrf.mxu0
        %v8621 = vadd.f32 0.0, %v8620
        %v8622 = vpop.f32.mrf.mxu0
        %8623 = vmatprep.mubr.bf16.mxu0 0
        %8624 = vmatmul.mubr.bf16.gmra.mxu0 %v8481
        %v8625 = vpop.f32.mrf.mxu0
        %v8626 = vadd.f32 0.0, %v8625
        %v8627 = vpop.f32.mrf.mxu0
        %v8628 = vpop.f32.mrf.mxu0
        %v8629 = vadd.f32 0.0, %v8628
        %v8630 = vpop.f32.mrf.mxu0
        %8631 = vmatprep.mubr.bf16.mxu0 0
        %8632 = vmatmul.mubr.bf16.gmra.mxu0 %v8484
        %v8633 = vpop.f32.mrf.mxu0
        %v8634 = vadd.f32 0.0, %v8633
        %v8635 = vpop.f32.mrf.mxu0
        %v8636 = vpop.f32.mrf.mxu0
        %v8637 = vadd.f32 0.0, %v8636
        %v8638 = vpop.f32.mrf.mxu0
        %8639 = vmatprep.mubr.bf16.mxu0 0
        %8640 = vmatmul.mubr.bf16.gmra.mxu0 %v8487
        %v8641 = vpop.f32.mrf.mxu0
        %v8642 = vadd.f32 0.0, %v8641
        %v8643 = vpop.f32.mrf.mxu0
        %v8644 = vpop.f32.mrf.mxu0
        %v8645 = vadd.f32 0.0, %v8644
        %v8646 = vpop.f32.mrf.mxu0
        %8647 = vmatprep.mubr.bf16.mxu0 0
        %8648 = vmatmul.mubr.bf16.gmra.mxu0 %v8490
        %v8649 = vpop.f32.mrf.mxu0
        %v8650 = vadd.f32 0.0, %v8649
        %v8651 = vpop.f32.mrf.mxu0
        %v8652 = vpop.f32.mrf.mxu0
        %v8653 = vadd.f32 0.0, %v8652
        %v8654 = vpop.f32.mrf.mxu0
        %8655 = vdwg.mxu0
        %v8656 = vadd.f32 %v7930, %v8530
        %v8657 = vadd.f32 %v7931, %v8533
        %v8658 = vadd.f32 %v7932, %v8538
        %v8659 = vadd.f32 %v7933, %v8541
        %v8660 = vadd.f32 %v7934, %v8546
        %v8661 = vadd.f32 %v7935, %v8549
        %v8662 = vadd.f32 %v7936, %v8554
        %v8663 = vadd.f32 %v7937, %v8557
        %v8664 = vadd.f32 %v7938, %v8562
        %v8665 = vadd.f32 %v7939, %v8565
        %v8666 = vadd.f32 %v7940, %v8570
        %v8667 = vadd.f32 %v7941, %v8573
        %v8668 = vadd.f32 %v7942, %v8578
        %v8669 = vadd.f32 %v7943, %v8581
        %v8670 = vadd.f32 %v7944, %v8586
        %v8671 = vadd.f32 %v7945, %v8589
        %v8672 = vadd.f32 %v7946, %v8594
        %v8673 = vadd.f32 %v7947, %v8597
        %v8674 = vadd.f32 %v7948, %v8602
        %v8675 = vadd.f32 %v7949, %v8605
        %v8676 = vadd.f32 %v7950, %v8610
        %v8677 = vadd.f32 %v7951, %v8613
        %v8678 = vadd.f32 %v7952, %v8618
        %v8679 = vadd.f32 %v7953, %v8621
        %v8680 = vadd.f32 %v7954, %v8626
        %v8681 = vadd.f32 %v7955, %v8629
        %v8682 = vadd.f32 %v7956, %v8634
        %v8683 = vadd.f32 %v7957, %v8637
        %v8684 = vadd.f32 %v7958, %v8642
        %v8685 = vadd.f32 %v7959, %v8645
        %v8686 = vadd.f32 %v7960, %v8650
        %v8687 = vadd.f32 %v7961, %v8653
        %v8688 = vld [vmem:[%s6046] sm:$0xe]
        %v8689 = vld [vmem:[%s6046 + $0xc] sm:$0xe]
        %v8690 = vld [vmem:[%s6046 + $0x18] sm:$0xe]
        %v8691 = vld [vmem:[%s6046 + $0x24] sm:$0xe]
        %v8692 = vld [vmem:[%s6046 + $0x30] sm:$0xe]
        %v8693 = vld [vmem:[%s6046 + $0x3c] sm:$0xe]
        %v8694 = vld [vmem:[%s6046 + $0x48] sm:$0xe]
        %v8695 = vld [vmem:[%s6046 + $0x54] sm:$0xe]
        %v8696 = vld [vmem:[%s6046 + $0x60] sm:$0xe]
        %v8697 = vld [vmem:[%s6046 + $0x6c] sm:$0xe]
        %v8698 = vld [vmem:[%s6046 + $0x78] sm:$0xe]
        %v8699 = vld [vmem:[%s6046 + $0x84] sm:$0xe]
        %v8700 = vld [vmem:[%s6046 + $0x90] sm:$0xe]
        %v8701 = vld [vmem:[%s6046 + $0x9c] sm:$0xe]
        %v8702 = vld [vmem:[%s6046 + $0xa8] sm:$0xe]
        %v8703 = vld [vmem:[%s6046 + $0xb4] sm:$0xe]
        %v8752 = vrot.slane %v8688, 5
        %v8753 = vrot.slane %v8752, 4
        %v8754 = vrot.slane %v7963, 5
        %v8755 = vsel %vm2004, %v8753, %v8754
        %v8756 = vrot.slane %v8754, 4
        %v8757 = vrot.slane %v7964, 5
        %v8758 = vsel %vm2004, %v8756, %v8757
        %v8759 = vrot.slane %v8689, 5
        %v8760 = vrot.slane %v8759, 4
        %v8761 = vrot.slane %v7966, 5
        %v8762 = vsel %vm2004, %v8760, %v8761
        %v8763 = vrot.slane %v8761, 4
        %v8764 = vrot.slane %v7967, 5
        %v8765 = vsel %vm2004, %v8763, %v8764
        %v8766 = vrot.slane %v8690, 5
        %v8767 = vrot.slane %v8766, 4
        %v8768 = vrot.slane %v7969, 5
        %v8769 = vsel %vm2004, %v8767, %v8768
        %v8770 = vrot.slane %v8768, 4
        %v8771 = vrot.slane %v7970, 5
        %v8772 = vsel %vm2004, %v8770, %v8771
        %v8773 = vrot.slane %v8691, 5
        %v8774 = vrot.slane %v8773, 4
        %v8775 = vrot.slane %v7972, 5
        %v8776 = vsel %vm2004, %v8774, %v8775
        %v8777 = vrot.slane %v8775, 4
        %v8778 = vrot.slane %v7973, 5
        %v8779 = vsel %vm2004, %v8777, %v8778
        %v8780 = vrot.slane %v8692, 5
        %v8781 = vrot.slane %v8780, 4
        %v8782 = vrot.slane %v7975, 5
        %v8783 = vsel %vm2004, %v8781, %v8782
        %v8784 = vrot.slane %v8782, 4
        %v8785 = vrot.slane %v7976, 5
        %v8786 = vsel %vm2004, %v8784, %v8785
        %v8787 = vrot.slane %v8693, 5
        %v8788 = vrot.slane %v8787, 4
        %v8789 = vrot.slane %v7978, 5
        %v8790 = vsel %vm2004, %v8788, %v8789
        %v8791 = vrot.slane %v8789, 4
        %v8792 = vrot.slane %v7979, 5
        %v8793 = vsel %vm2004, %v8791, %v8792
        %v8794 = vrot.slane %v8694, 5
        %v8795 = vrot.slane %v8794, 4
        %v8796 = vrot.slane %v7981, 5
        %v8797 = vsel %vm2004, %v8795, %v8796
        %v8798 = vrot.slane %v8796, 4
        %v8799 = vrot.slane %v7982, 5
        %v8800 = vsel %vm2004, %v8798, %v8799
        %v8801 = vrot.slane %v8695, 5
        %v8802 = vrot.slane %v8801, 4
        %v8803 = vrot.slane %v7984, 5
        %v8804 = vsel %vm2004, %v8802, %v8803
        %v8805 = vrot.slane %v8803, 4
        %v8806 = vrot.slane %v7985, 5
        %v8807 = vsel %vm2004, %v8805, %v8806
        %v8808 = vrot.slane %v8696, 5
        %v8809 = vrot.slane %v8808, 4
        %v8810 = vrot.slane %v7987, 5
        %v8811 = vsel %vm2004, %v8809, %v8810
        %v8812 = vrot.slane %v8810, 4
        %v8813 = vrot.slane %v7988, 5
        %v8814 = vsel %vm2004, %v8812, %v8813
        %v8815 = vrot.slane %v8697, 5
        %v8816 = vrot.slane %v8815, 4
        %v8817 = vrot.slane %v7990, 5
        %v8818 = vsel %vm2004, %v8816, %v8817
        %v8819 = vrot.slane %v8817, 4
        %v8820 = vrot.slane %v7991, 5
        %v8821 = vsel %vm2004, %v8819, %v8820
        %v8822 = vrot.slane %v8698, 5
        %v8823 = vrot.slane %v8822, 4
        %v8824 = vrot.slane %v7993, 5
        %v8825 = vsel %vm2004, %v8823, %v8824
        %v8826 = vrot.slane %v8824, 4
        %v8827 = vrot.slane %v7994, 5
        %v8828 = vsel %vm2004, %v8826, %v8827
        %v8829 = vrot.slane %v8699, 5
        %v8830 = vrot.slane %v8829, 4
        %v8831 = vrot.slane %v7996, 5
        %v8832 = vsel %vm2004, %v8830, %v8831
        %v8833 = vrot.slane %v8831, 4
        %v8834 = vrot.slane %v7997, 5
        %v8835 = vsel %vm2004, %v8833, %v8834
        %v8836 = vrot.slane %v8700, 5
        %v8837 = vrot.slane %v8836, 4
        %v8838 = vrot.slane %v7999, 5
        %v8839 = vsel %vm2004, %v8837, %v8838
        %v8840 = vrot.slane %v8838, 4
        %v8841 = vrot.slane %v8000, 5
        %v8842 = vsel %vm2004, %v8840, %v8841
        %v8843 = vrot.slane %v8701, 5
        %v8844 = vrot.slane %v8843, 4
        %v8845 = vrot.slane %v8002, 5
        %v8846 = vsel %vm2004, %v8844, %v8845
        %v8847 = vrot.slane %v8845, 4
        %v8848 = vrot.slane %v8003, 5
        %v8849 = vsel %vm2004, %v8847, %v8848
        %v8850 = vrot.slane %v8702, 5
        %v8851 = vrot.slane %v8850, 4
        %v8852 = vrot.slane %v8005, 5
        %v8853 = vsel %vm2004, %v8851, %v8852
        %v8854 = vrot.slane %v8852, 4
        %v8855 = vrot.slane %v8006, 5
        %v8856 = vsel %vm2004, %v8854, %v8855
        %v8857 = vrot.slane %v8703, 5
        %v8858 = vrot.slane %v8857, 4
        %v8859 = vrot.slane %v8008, 5
        %v8860 = vsel %vm2004, %v8858, %v8859
        %v8861 = vrot.slane %v8859, 4
        %v8862 = vrot.slane %v8009, 5
        %v8863 = vsel %vm2004, %v8861, %v8862
        %s8864 = scalar_lea.vmem %s2, 20
        %v8865 = vld [vmem:[%s8864] sm:$0xf]
        %v8866 = vunpack.c.l.b16 %v8755
        %v8867 = vunpack.c.l.b16 %v8758
        %v8868 = vunpack.c.l.b16 %v8762
        %v8869 = vunpack.c.l.b16 %v8765
        %v8870 = vunpack.c.l.b16 %v8769
        %v8871 = vunpack.c.l.b16 %v8772
        %v8872 = vunpack.c.l.b16 %v8776
        %v8873 = vunpack.c.l.b16 %v8779
        %v8874 = vunpack.c.l.b16 %v8783
        %v8875 = vunpack.c.l.b16 %v8786
        %v8876 = vunpack.c.l.b16 %v8790
        %v8877 = vunpack.c.l.b16 %v8793
        %v8878 = vunpack.c.l.b16 %v8797
        %v8879 = vunpack.c.l.b16 %v8800
        %v8880 = vunpack.c.l.b16 %v8804
        %v8881 = vunpack.c.l.b16 %v8807
        %v8882 = vunpack.c.l.b16 %v8811
        %v8883 = vunpack.c.l.b16 %v8814
        %v8884 = vunpack.c.l.b16 %v8818
        %v8885 = vunpack.c.l.b16 %v8821
        %v8886 = vunpack.c.l.b16 %v8825
        %v8887 = vunpack.c.l.b16 %v8828
        %v8888 = vunpack.c.l.b16 %v8832
        %v8889 = vunpack.c.l.b16 %v8835
        %v8890 = vunpack.c.l.b16 %v8839
        %v8891 = vunpack.c.l.b16 %v8842
        %v8892 = vunpack.c.l.b16 %v8846
        %v8893 = vunpack.c.l.b16 %v8849
        %v8894 = vunpack.c.l.b16 %v8853
        %v8895 = vunpack.c.l.b16 %v8856
        %v8896 = vunpack.c.l.b16 %v8860
        %v8897 = vunpack.c.l.b16 %v8863
        %v8898 = vpack.c.b16 %v8867, %v8866
        %v8899 = vpack.c.b16 %v8869, %v8868
        %v8900 = vpack.c.b16 %v8871, %v8870
        %v8901 = vpack.c.b16 %v8873, %v8872
        %v8902 = vpack.c.b16 %v8875, %v8874
        %v8903 = vpack.c.b16 %v8877, %v8876
        %v8904 = vpack.c.b16 %v8879, %v8878
        %v8905 = vpack.c.b16 %v8881, %v8880
        %v8906 = vpack.c.b16 %v8883, %v8882
        %v8907 = vpack.c.b16 %v8885, %v8884
        %v8908 = vpack.c.b16 %v8887, %v8886
        %v8909 = vpack.c.b16 %v8889, %v8888
        %v8910 = vpack.c.b16 %v8891, %v8890
        %v8911 = vpack.c.b16 %v8893, %v8892
        %v8912 = vpack.c.b16 %v8895, %v8894
        %v8913 = vpack.c.b16 %v8897, %v8896
        %v8915 = vsel %vm6644, %v8898, 0
        %v8918 = vsel %vm6644, %v8899, 0
        %v8921 = vsel %vm6644, %v8900, 0
        %v8924 = vsel %vm6644, %v8901, 0
        %v8927 = vsel %vm6644, %v8902, 0
        %v8930 = vsel %vm6644, %v8903, 0
        %v8933 = vsel %vm6644, %v8904, 0
        %v8936 = vsel %vm6644, %v8905, 0
        %v8939 = vsel %vm6644, %v8906, 0
        %v8942 = vsel %vm6644, %v8907, 0
        %v8945 = vsel %vm6644, %v8908, 0
        %v8948 = vsel %vm6644, %v8909, 0
        %v8951 = vsel %vm6644, %v8910, 0
        %v8954 = vsel %vm6644, %v8911, 0
        %v8957 = vsel %vm6644, %v8912, 0
        %v8960 = vsel %vm6644, %v8913, 0
        %v8963 = vsel %vm6693, %v8865, 0
        %8965 = vmatprep.subr.bf16.mxu0 0
        %8966 = vmatpush1.bf16.msra.mxu0 0
        %8967 = vmatprep.subr.bf16.mxu0 0
        %8968 = vmatpush1.bf16.msra.mxu0 0
        %8969 = vmatprep.subr.bf16.mxu0 0
        %8970 = vmatpush1.bf16.msra.mxu0 0
        %8971 = vmatprep.subr.bf16.mxu0 0
        %8972 = vmatpush1.bf16.msra.mxu0 0
        %8973 = vmatprep.subr.bf16.mxu0 0
        %8974 = vmatpush1.bf16.msra.mxu0 0
        %8975 = vmatprep.subr.bf16.mxu0 0
        %8976 = vmatpush1.bf16.msra.mxu0 0
        %8977 = vmatprep.subr.bf16.mxu0 0
        %8978 = vmatpush1.bf16.msra.mxu0 0
        %8979 = vmatprep.subr.bf16.mxu0 0
        %8980 = vmatpush1.bf16.msra.mxu0 %v8963
        %8981 = vmatprep.subr.bf16.mxu0 0
        %8982 = vmatpush2.bf16.msra.mxu0 0
        %8983 = vmatprep.subr.bf16.mxu0 0
        %8984 = vmatpush2.bf16.msra.mxu0 0
        %8985 = vmatprep.subr.bf16.mxu0 0
        %8986 = vmatpush2.bf16.msra.mxu0 0
        %8987 = vmatprep.subr.bf16.mxu0 0
        %8988 = vmatpush2.bf16.msra.mxu0 0
        %8989 = vmatprep.subr.bf16.mxu0 0
        %8990 = vmatpush2.bf16.msra.mxu0 0
        %8991 = vmatprep.subr.bf16.mxu0 0
        %8992 = vmatpush2.bf16.msra.mxu0 0
        %8993 = vmatprep.subr.bf16.mxu0 0
        %8994 = vmatpush2.bf16.msra.mxu0 0
        %8995 = vmatprep.subr.bf16.mxu0 0
        %8996 = vmatpush2.bf16.msra.mxu0 0
        %8997 = vmatprep.mubr.bf16.mxu0 0
        %8998 = vmatmul.mubr.bf16.gmra.mxu0 %v8915
        %v8999 = vpop.f32.mrf.mxu0
        %v9000 = vadd.f32 0.0, %v8999
        %v9001 = vpop.f32.mrf.mxu0
        %v9002 = vpop.f32.mrf.mxu0
        %v9003 = vadd.f32 0.0, %v9002
        %v9004 = vpop.f32.mrf.mxu0
        %9005 = vmatprep.mubr.bf16.mxu0 0
        %9006 = vmatmul.mubr.bf16.gmra.mxu0 %v8918
        %v9007 = vpop.f32.mrf.mxu0
        %v9008 = vadd.f32 0.0, %v9007
        %v9009 = vpop.f32.mrf.mxu0
        %v9010 = vpop.f32.mrf.mxu0
        %v9011 = vadd.f32 0.0, %v9010
        %v9012 = vpop.f32.mrf.mxu0
        %9013 = vmatprep.mubr.bf16.mxu0 0
        %9014 = vmatmul.mubr.bf16.gmra.mxu0 %v8921
        %v9015 = vpop.f32.mrf.mxu0
        %v9016 = vadd.f32 0.0, %v9015
        %v9017 = vpop.f32.mrf.mxu0
        %v9018 = vpop.f32.mrf.mxu0
        %v9019 = vadd.f32 0.0, %v9018
        %v9020 = vpop.f32.mrf.mxu0
        %9021 = vmatprep.mubr.bf16.mxu0 0
        %9022 = vmatmul.mubr.bf16.gmra.mxu0 %v8924
        %v9023 = vpop.f32.mrf.mxu0
        %v9024 = vadd.f32 0.0, %v9023
        %v9025 = vpop.f32.mrf.mxu0
        %v9026 = vpop.f32.mrf.mxu0
        %v9027 = vadd.f32 0.0, %v9026
        %v9028 = vpop.f32.mrf.mxu0
        %9029 = vmatprep.mubr.bf16.mxu0 0
        %9030 = vmatmul.mubr.bf16.gmra.mxu0 %v8927
        %v9031 = vpop.f32.mrf.mxu0
        %v9032 = vadd.f32 0.0, %v9031
        %v9033 = vpop.f32.mrf.mxu0
        %v9034 = vpop.f32.mrf.mxu0
        %v9035 = vadd.f32 0.0, %v9034
        %v9036 = vpop.f32.mrf.mxu0
        %9037 = vmatprep.mubr.bf16.mxu0 0
        %9038 = vmatmul.mubr.bf16.gmra.mxu0 %v8930
        %v9039 = vpop.f32.mrf.mxu0
        %v9040 = vadd.f32 0.0, %v9039
        %v9041 = vpop.f32.mrf.mxu0
        %v9042 = vpop.f32.mrf.mxu0
        %v9043 = vadd.f32 0.0, %v9042
        %v9044 = vpop.f32.mrf.mxu0
        %9045 = vmatprep.mubr.bf16.mxu0 0
        %9046 = vmatmul.mubr.bf16.gmra.mxu0 %v8933
        %v9047 = vpop.f32.mrf.mxu0
        %v9048 = vadd.f32 0.0, %v9047
        %v9049 = vpop.f32.mrf.mxu0
        %v9050 = vpop.f32.mrf.mxu0
        %v9051 = vadd.f32 0.0, %v9050
        %v9052 = vpop.f32.mrf.mxu0
        %9053 = vmatprep.mubr.bf16.mxu0 0
        %9054 = vmatmul.mubr.bf16.gmra.mxu0 %v8936
        %v9055 = vpop.f32.mrf.mxu0
        %v9056 = vadd.f32 0.0, %v9055
        %v9057 = vpop.f32.mrf.mxu0
        %v9058 = vpop.f32.mrf.mxu0
        %v9059 = vadd.f32 0.0, %v9058
        %v9060 = vpop.f32.mrf.mxu0
        %9061 = vmatprep.mubr.bf16.mxu0 0
        %9062 = vmatmul.mubr.bf16.gmra.mxu0 %v8939
        %v9063 = vpop.f32.mrf.mxu0
        %v9064 = vadd.f32 0.0, %v9063
        %v9065 = vpop.f32.mrf.mxu0
        %v9066 = vpop.f32.mrf.mxu0
        %v9067 = vadd.f32 0.0, %v9066
        %v9068 = vpop.f32.mrf.mxu0
        %9069 = vmatprep.mubr.bf16.mxu0 0
        %9070 = vmatmul.mubr.bf16.gmra.mxu0 %v8942
        %v9071 = vpop.f32.mrf.mxu0
        %v9072 = vadd.f32 0.0, %v9071
        %v9073 = vpop.f32.mrf.mxu0
        %v9074 = vpop.f32.mrf.mxu0
        %v9075 = vadd.f32 0.0, %v9074
        %v9076 = vpop.f32.mrf.mxu0
        %9077 = vmatprep.mubr.bf16.mxu0 0
        %9078 = vmatmul.mubr.bf16.gmra.mxu0 %v8945
        %v9079 = vpop.f32.mrf.mxu0
        %v9080 = vadd.f32 0.0, %v9079
        %v9081 = vpop.f32.mrf.mxu0
        %v9082 = vpop.f32.mrf.mxu0
        %v9083 = vadd.f32 0.0, %v9082
        %v9084 = vpop.f32.mrf.mxu0
        %9085 = vmatprep.mubr.bf16.mxu0 0
        %9086 = vmatmul.mubr.bf16.gmra.mxu0 %v8948
        %v9087 = vpop.f32.mrf.mxu0
        %v9088 = vadd.f32 0.0, %v9087
        %v9089 = vpop.f32.mrf.mxu0
        %v9090 = vpop.f32.mrf.mxu0
        %v9091 = vadd.f32 0.0, %v9090
        %v9092 = vpop.f32.mrf.mxu0
        %9093 = vmatprep.mubr.bf16.mxu0 0
        %9094 = vmatmul.mubr.bf16.gmra.mxu0 %v8951
        %v9095 = vpop.f32.mrf.mxu0
        %v9096 = vadd.f32 0.0, %v9095
        %v9097 = vpop.f32.mrf.mxu0
        %v9098 = vpop.f32.mrf.mxu0
        %v9099 = vadd.f32 0.0, %v9098
        %v9100 = vpop.f32.mrf.mxu0
        %9101 = vmatprep.mubr.bf16.mxu0 0
        %9102 = vmatmul.mubr.bf16.gmra.mxu0 %v8954
        %v9103 = vpop.f32.mrf.mxu0
        %v9104 = vadd.f32 0.0, %v9103
        %v9105 = vpop.f32.mrf.mxu0
        %v9106 = vpop.f32.mrf.mxu0
        %v9107 = vadd.f32 0.0, %v9106
        %v9108 = vpop.f32.mrf.mxu0
        %9109 = vmatprep.mubr.bf16.mxu0 0
        %9110 = vmatmul.mubr.bf16.gmra.mxu0 %v8957
        %v9111 = vpop.f32.mrf.mxu0
        %v9112 = vadd.f32 0.0, %v9111
        %v9113 = vpop.f32.mrf.mxu0
        %v9114 = vpop.f32.mrf.mxu0
        %v9115 = vadd.f32 0.0, %v9114
        %v9116 = vpop.f32.mrf.mxu0
        %9117 = vmatprep.mubr.bf16.mxu0 0
        %9118 = vmatmul.mubr.bf16.gmra.mxu0 %v8960
        %v9119 = vpop.f32.mrf.mxu0
        %v9120 = vadd.f32 0.0, %v9119
        %v9121 = vpop.f32.mrf.mxu0
        %v9122 = vpop.f32.mrf.mxu0
        %v9123 = vadd.f32 0.0, %v9122
        %v9124 = vpop.f32.mrf.mxu0
        %9125 = vdwg.mxu0
        %v9126 = vadd.f32 %v8656, %v9000
        %v9127 = vadd.f32 %v8657, %v9003
        %v9128 = vadd.f32 %v8658, %v9008
        %v9129 = vadd.f32 %v8659, %v9011
        %v9130 = vadd.f32 %v8660, %v9016
        %v9131 = vadd.f32 %v8661, %v9019
        %v9132 = vadd.f32 %v8662, %v9024
        %v9133 = vadd.f32 %v8663, %v9027
        %v9134 = vadd.f32 %v8664, %v9032
        %v9135 = vadd.f32 %v8665, %v9035
        %v9136 = vadd.f32 %v8666, %v9040
        %v9137 = vadd.f32 %v8667, %v9043
        %v9138 = vadd.f32 %v8668, %v9048
        %v9139 = vadd.f32 %v8669, %v9051
        %v9140 = vadd.f32 %v8670, %v9056
        %v9141 = vadd.f32 %v8671, %v9059
        %v9142 = vadd.f32 %v8672, %v9064
        %v9143 = vadd.f32 %v8673, %v9067
        %v9144 = vadd.f32 %v8674, %v9072
        %v9145 = vadd.f32 %v8675, %v9075
        %v9146 = vadd.f32 %v8676, %v9080
        %v9147 = vadd.f32 %v8677, %v9083
        %v9148 = vadd.f32 %v8678, %v9088
        %v9149 = vadd.f32 %v8679, %v9091
        %v9150 = vadd.f32 %v8680, %v9096
        %v9151 = vadd.f32 %v8681, %v9099
        %v9152 = vadd.f32 %v8682, %v9104
        %v9153 = vadd.f32 %v8683, %v9107
        %v9154 = vadd.f32 %v8684, %v9112
        %v9155 = vadd.f32 %v8685, %v9115
        %v9156 = vadd.f32 %v8686, %v9120
        %v9157 = vadd.f32 %v8687, %v9123
        %s9158 = scalar_lea.vmem [#allocation3], 24
        %v9159 = vld [vmem:[%s9158] sm:$0xf]
        %v9160 = vld [vmem:[%s9158 + $0x4] sm:$0xf]
        %v9161 = vld [vmem:[%s9158 + $0xc] sm:$0xf]
        %v9162 = vld [vmem:[%s9158 + $0x10] sm:$0xf]
        %v9163 = vld [vmem:[%s9158 + $0x18] sm:$0xf]
        %v9164 = vld [vmem:[%s9158 + $0x1c] sm:$0xf]
        %v9165 = vld [vmem:[%s9158 + $0x24] sm:$0xf]
        %v9166 = vld [vmem:[%s9158 + $0x28] sm:$0xf]
        %v9167 = vld [vmem:[%s9158 + $0x30] sm:$0xf]
        %v9168 = vld [vmem:[%s9158 + $0x34] sm:$0xf]
        %v9169 = vld [vmem:[%s9158 + $0x3c] sm:$0xf]
        %v9170 = vld [vmem:[%s9158 + $0x40] sm:$0xf]
        %v9171 = vld [vmem:[%s9158 + $0x48] sm:$0xf]
        %v9172 = vld [vmem:[%s9158 + $0x4c] sm:$0xf]
        %v9173 = vld [vmem:[%s9158 + $0x54] sm:$0xf]
        %v9174 = vld [vmem:[%s9158 + $0x58] sm:$0xf]
        %v9175 = vld [vmem:[%s9158 + $0x60] sm:$0xf]
        %v9176 = vld [vmem:[%s9158 + $0x64] sm:$0xf]
        %v9177 = vld [vmem:[%s9158 + $0x6c] sm:$0xf]
        %v9178 = vld [vmem:[%s9158 + $0x70] sm:$0xf]
        %v9179 = vld [vmem:[%s9158 + $0x78] sm:$0xf]
        %v9180 = vld [vmem:[%s9158 + $0x7c] sm:$0xf]
        %v9181 = vld [vmem:[%s9158 + $0x84] sm:$0xf]
        %v9182 = vld [vmem:[%s9158 + $0x88] sm:$0xf]
        %v9183 = vld [vmem:[%s9158 + $0x90] sm:$0xf]
        %v9184 = vld [vmem:[%s9158 + $0x94] sm:$0xf]
        %v9185 = vld [vmem:[%s9158 + $0x9c] sm:$0xf]
        %v9186 = vld [vmem:[%s9158 + $0xa0] sm:$0xf]
        %v9187 = vld [vmem:[%s9158 + $0xa8] sm:$0xf]
        %v9188 = vld [vmem:[%s9158 + $0xac] sm:$0xf]
        %v9189 = vld [vmem:[%s9158 + $0xb4] sm:$0xf]
        %v9190 = vld [vmem:[%s9158 + $0xb8] sm:$0xf]
        %s9191 = scalar_lea.vmem %s2, 24
        %v9192 = vld [vmem:[%s9191] sm:$0xf]
        %v9225 = vunpack.c.l.b16 %v9159
        %v9226 = vunpack.c.l.b16 %v9160
        %v9227 = vunpack.c.l.b16 %v9161
        %v9228 = vunpack.c.l.b16 %v9162
        %v9229 = vunpack.c.l.b16 %v9163
        %v9230 = vunpack.c.l.b16 %v9164
        %v9231 = vunpack.c.l.b16 %v9165
        %v9232 = vunpack.c.l.b16 %v9166
        %v9233 = vunpack.c.l.b16 %v9167
        %v9234 = vunpack.c.l.b16 %v9168
        %v9235 = vunpack.c.l.b16 %v9169
        %v9236 = vunpack.c.l.b16 %v9170
        %v9237 = vunpack.c.l.b16 %v9171
        %v9238 = vunpack.c.l.b16 %v9172
        %v9239 = vunpack.c.l.b16 %v9173
        %v9240 = vunpack.c.l.b16 %v9174
        %v9241 = vunpack.c.l.b16 %v9175
        %v9242 = vunpack.c.l.b16 %v9176
        %v9243 = vunpack.c.l.b16 %v9177
        %v9244 = vunpack.c.l.b16 %v9178
        %v9245 = vunpack.c.l.b16 %v9179
        %v9246 = vunpack.c.l.b16 %v9180
        %v9247 = vunpack.c.l.b16 %v9181
        %v9248 = vunpack.c.l.b16 %v9182
        %v9249 = vunpack.c.l.b16 %v9183
        %v9250 = vunpack.c.l.b16 %v9184
        %v9251 = vunpack.c.l.b16 %v9185
        %v9252 = vunpack.c.l.b16 %v9186
        %v9253 = vunpack.c.l.b16 %v9187
        %v9254 = vunpack.c.l.b16 %v9188
        %v9255 = vunpack.c.l.b16 %v9189
        %v9256 = vunpack.c.l.b16 %v9190
        %v9257 = vpack.c.b16 %v9226, %v9225
        %v9258 = vpack.c.b16 %v9228, %v9227
        %v9259 = vpack.c.b16 %v9230, %v9229
        %v9260 = vpack.c.b16 %v9232, %v9231
        %v9261 = vpack.c.b16 %v9234, %v9233
        %v9262 = vpack.c.b16 %v9236, %v9235
        %v9263 = vpack.c.b16 %v9238, %v9237
        %v9264 = vpack.c.b16 %v9240, %v9239
        %v9265 = vpack.c.b16 %v9242, %v9241
        %v9266 = vpack.c.b16 %v9244, %v9243
        %v9267 = vpack.c.b16 %v9246, %v9245
        %v9268 = vpack.c.b16 %v9248, %v9247
        %v9269 = vpack.c.b16 %v9250, %v9249
        %v9270 = vpack.c.b16 %v9252, %v9251
        %v9271 = vpack.c.b16 %v9254, %v9253
        %v9272 = vpack.c.b16 %v9256, %v9255
        %v9274 = vsel %vm6644, %v9257, 0
        %v9277 = vsel %vm6644, %v9258, 0
        %v9280 = vsel %vm6644, %v9259, 0
        %v9283 = vsel %vm6644, %v9260, 0
        %v9286 = vsel %vm6644, %v9261, 0
        %v9289 = vsel %vm6644, %v9262, 0
        %v9292 = vsel %vm6644, %v9263, 0
        %v9295 = vsel %vm6644, %v9264, 0
        %v9298 = vsel %vm6644, %v9265, 0
        %v9301 = vsel %vm6644, %v9266, 0
        %v9304 = vsel %vm6644, %v9267, 0
        %v9307 = vsel %vm6644, %v9268, 0
        %v9310 = vsel %vm6644, %v9269, 0
        %v9313 = vsel %vm6644, %v9270, 0
        %v9316 = vsel %vm6644, %v9271, 0
        %v9319 = vsel %vm6644, %v9272, 0
        %v9322 = vsel %vm6693, %v9192, 0
        %9324 = vmatprep.subr.bf16.mxu0 0
        %9325 = vmatpush1.bf16.msra.mxu0 0
        %9326 = vmatprep.subr.bf16.mxu0 0
        %9327 = vmatpush1.bf16.msra.mxu0 0
        %9328 = vmatprep.subr.bf16.mxu0 0
        %9329 = vmatpush1.bf16.msra.mxu0 0
        %9330 = vmatprep.subr.bf16.mxu0 0
        %9331 = vmatpush1.bf16.msra.mxu0 0
        %9332 = vmatprep.subr.bf16.mxu0 0
        %9333 = vmatpush1.bf16.msra.mxu0 0
        %9334 = vmatprep.subr.bf16.mxu0 0
        %9335 = vmatpush1.bf16.msra.mxu0 0
        %9336 = vmatprep.subr.bf16.mxu0 0
        %9337 = vmatpush1.bf16.msra.mxu0 0
        %9338 = vmatprep.subr.bf16.mxu0 0
        %9339 = vmatpush1.bf16.msra.mxu0 %v9322
        %9340 = vmatprep.subr.bf16.mxu0 0
        %9341 = vmatpush2.bf16.msra.mxu0 0
        %9342 = vmatprep.subr.bf16.mxu0 0
        %9343 = vmatpush2.bf16.msra.mxu0 0
        %9344 = vmatprep.subr.bf16.mxu0 0
        %9345 = vmatpush2.bf16.msra.mxu0 0
        %9346 = vmatprep.subr.bf16.mxu0 0
        %9347 = vmatpush2.bf16.msra.mxu0 0
        %9348 = vmatprep.subr.bf16.mxu0 0
        %9349 = vmatpush2.bf16.msra.mxu0 0
        %9350 = vmatprep.subr.bf16.mxu0 0
        %9351 = vmatpush2.bf16.msra.mxu0 0
        %9352 = vmatprep.subr.bf16.mxu0 0
        %9353 = vmatpush2.bf16.msra.mxu0 0
        %9354 = vmatprep.subr.bf16.mxu0 0
        %9355 = vmatpush2.bf16.msra.mxu0 0
        %9356 = vmatprep.mubr.bf16.mxu0 0
        %9357 = vmatmul.mubr.bf16.gmra.mxu0 %v9274
        %v9358 = vpop.f32.mrf.mxu0
        %v9359 = vadd.f32 0.0, %v9358
        %v9360 = vpop.f32.mrf.mxu0
        %v9361 = vpop.f32.mrf.mxu0
        %v9362 = vadd.f32 0.0, %v9361
        %v9363 = vpop.f32.mrf.mxu0
        %9364 = vmatprep.mubr.bf16.mxu0 0
        %9365 = vmatmul.mubr.bf16.gmra.mxu0 %v9277
        %v9366 = vpop.f32.mrf.mxu0
        %v9367 = vadd.f32 0.0, %v9366
        %v9368 = vpop.f32.mrf.mxu0
        %v9369 = vpop.f32.mrf.mxu0
        %v9370 = vadd.f32 0.0, %v9369
        %v9371 = vpop.f32.mrf.mxu0
        %9372 = vmatprep.mubr.bf16.mxu0 0
        %9373 = vmatmul.mubr.bf16.gmra.mxu0 %v9280
        %v9374 = vpop.f32.mrf.mxu0
        %v9375 = vadd.f32 0.0, %v9374
        %v9376 = vpop.f32.mrf.mxu0
        %v9377 = vpop.f32.mrf.mxu0
        %v9378 = vadd.f32 0.0, %v9377
        %v9379 = vpop.f32.mrf.mxu0
        %9380 = vmatprep.mubr.bf16.mxu0 0
        %9381 = vmatmul.mubr.bf16.gmra.mxu0 %v9283
        %v9382 = vpop.f32.mrf.mxu0
        %v9383 = vadd.f32 0.0, %v9382
        %v9384 = vpop.f32.mrf.mxu0
        %v9385 = vpop.f32.mrf.mxu0
        %v9386 = vadd.f32 0.0, %v9385
        %v9387 = vpop.f32.mrf.mxu0
        %9388 = vmatprep.mubr.bf16.mxu0 0
        %9389 = vmatmul.mubr.bf16.gmra.mxu0 %v9286
        %v9390 = vpop.f32.mrf.mxu0
        %v9391 = vadd.f32 0.0, %v9390
        %v9392 = vpop.f32.mrf.mxu0
        %v9393 = vpop.f32.mrf.mxu0
        %v9394 = vadd.f32 0.0, %v9393
        %v9395 = vpop.f32.mrf.mxu0
        %9396 = vmatprep.mubr.bf16.mxu0 0
        %9397 = vmatmul.mubr.bf16.gmra.mxu0 %v9289
        %v9398 = vpop.f32.mrf.mxu0
        %v9399 = vadd.f32 0.0, %v9398
        %v9400 = vpop.f32.mrf.mxu0
        %v9401 = vpop.f32.mrf.mxu0
        %v9402 = vadd.f32 0.0, %v9401
        %v9403 = vpop.f32.mrf.mxu0
        %9404 = vmatprep.mubr.bf16.mxu0 0
        %9405 = vmatmul.mubr.bf16.gmra.mxu0 %v9292
        %v9406 = vpop.f32.mrf.mxu0
        %v9407 = vadd.f32 0.0, %v9406
        %v9408 = vpop.f32.mrf.mxu0
        %v9409 = vpop.f32.mrf.mxu0
        %v9410 = vadd.f32 0.0, %v9409
        %v9411 = vpop.f32.mrf.mxu0
        %9412 = vmatprep.mubr.bf16.mxu0 0
        %9413 = vmatmul.mubr.bf16.gmra.mxu0 %v9295
        %v9414 = vpop.f32.mrf.mxu0
        %v9415 = vadd.f32 0.0, %v9414
        %v9416 = vpop.f32.mrf.mxu0
        %v9417 = vpop.f32.mrf.mxu0
        %v9418 = vadd.f32 0.0, %v9417
        %v9419 = vpop.f32.mrf.mxu0
        %9420 = vmatprep.mubr.bf16.mxu0 0
        %9421 = vmatmul.mubr.bf16.gmra.mxu0 %v9298
        %v9422 = vpop.f32.mrf.mxu0
        %v9423 = vadd.f32 0.0, %v9422
        %v9424 = vpop.f32.mrf.mxu0
        %v9425 = vpop.f32.mrf.mxu0
        %v9426 = vadd.f32 0.0, %v9425
        %v9427 = vpop.f32.mrf.mxu0
        %9428 = vmatprep.mubr.bf16.mxu0 0
        %9429 = vmatmul.mubr.bf16.gmra.mxu0 %v9301
        %v9430 = vpop.f32.mrf.mxu0
        %v9431 = vadd.f32 0.0, %v9430
        %v9432 = vpop.f32.mrf.mxu0
        %v9433 = vpop.f32.mrf.mxu0
        %v9434 = vadd.f32 0.0, %v9433
        %v9435 = vpop.f32.mrf.mxu0
        %9436 = vmatprep.mubr.bf16.mxu0 0
        %9437 = vmatmul.mubr.bf16.gmra.mxu0 %v9304
        %v9438 = vpop.f32.mrf.mxu0
        %v9439 = vadd.f32 0.0, %v9438
        %v9440 = vpop.f32.mrf.mxu0
        %v9441 = vpop.f32.mrf.mxu0
        %v9442 = vadd.f32 0.0, %v9441
        %v9443 = vpop.f32.mrf.mxu0
        %9444 = vmatprep.mubr.bf16.mxu0 0
        %9445 = vmatmul.mubr.bf16.gmra.mxu0 %v9307
        %v9446 = vpop.f32.mrf.mxu0
        %v9447 = vadd.f32 0.0, %v9446
        %v9448 = vpop.f32.mrf.mxu0
        %v9449 = vpop.f32.mrf.mxu0
        %v9450 = vadd.f32 0.0, %v9449
        %v9451 = vpop.f32.mrf.mxu0
        %9452 = vmatprep.mubr.bf16.mxu0 0
        %9453 = vmatmul.mubr.bf16.gmra.mxu0 %v9310
        %v9454 = vpop.f32.mrf.mxu0
        %v9455 = vadd.f32 0.0, %v9454
        %v9456 = vpop.f32.mrf.mxu0
        %v9457 = vpop.f32.mrf.mxu0
        %v9458 = vadd.f32 0.0, %v9457
        %v9459 = vpop.f32.mrf.mxu0
        %9460 = vmatprep.mubr.bf16.mxu0 0
        %9461 = vmatmul.mubr.bf16.gmra.mxu0 %v9313
        %v9462 = vpop.f32.mrf.mxu0
        %v9463 = vadd.f32 0.0, %v9462
        %v9464 = vpop.f32.mrf.mxu0
        %v9465 = vpop.f32.mrf.mxu0
        %v9466 = vadd.f32 0.0, %v9465
        %v9467 = vpop.f32.mrf.mxu0
        %9468 = vmatprep.mubr.bf16.mxu0 0
        %9469 = vmatmul.mubr.bf16.gmra.mxu0 %v9316
        %v9470 = vpop.f32.mrf.mxu0
        %v9471 = vadd.f32 0.0, %v9470
        %v9472 = vpop.f32.mrf.mxu0
        %v9473 = vpop.f32.mrf.mxu0
        %v9474 = vadd.f32 0.0, %v9473
        %v9475 = vpop.f32.mrf.mxu0
        %9476 = vmatprep.mubr.bf16.mxu0 0
        %9477 = vmatmul.mubr.bf16.gmra.mxu0 %v9319
        %v9478 = vpop.f32.mrf.mxu0
        %v9479 = vadd.f32 0.0, %v9478
        %v9480 = vpop.f32.mrf.mxu0
        %v9481 = vpop.f32.mrf.mxu0
        %v9482 = vadd.f32 0.0, %v9481
        %v9483 = vpop.f32.mrf.mxu0
        %9484 = vdwg.mxu0
        %v9485 = vadd.f32 %v9126, %v9359
        %v9486 = vadd.f32 %v9127, %v9362
        %v9487 = vadd.f32 %v9128, %v9367
        %v9488 = vadd.f32 %v9129, %v9370
        %v9489 = vadd.f32 %v9130, %v9375
        %v9490 = vadd.f32 %v9131, %v9378
        %v9491 = vadd.f32 %v9132, %v9383
        %v9492 = vadd.f32 %v9133, %v9386
        %v9493 = vadd.f32 %v9134, %v9391
        %v9494 = vadd.f32 %v9135, %v9394
        %v9495 = vadd.f32 %v9136, %v9399
        %v9496 = vadd.f32 %v9137, %v9402
        %v9497 = vadd.f32 %v9138, %v9407
        %v9498 = vadd.f32 %v9139, %v9410
        %v9499 = vadd.f32 %v9140, %v9415
        %v9500 = vadd.f32 %v9141, %v9418
        %v9501 = vadd.f32 %v9142, %v9423
        %v9502 = vadd.f32 %v9143, %v9426
        %v9503 = vadd.f32 %v9144, %v9431
        %v9504 = vadd.f32 %v9145, %v9434
        %v9505 = vadd.f32 %v9146, %v9439
        %v9506 = vadd.f32 %v9147, %v9442
        %v9507 = vadd.f32 %v9148, %v9447
        %v9508 = vadd.f32 %v9149, %v9450
        %v9509 = vadd.f32 %v9150, %v9455
        %v9510 = vadd.f32 %v9151, %v9458
        %v9511 = vadd.f32 %v9152, %v9463
        %v9512 = vadd.f32 %v9153, %v9466
        %v9513 = vadd.f32 %v9154, %v9471
        %v9514 = vadd.f32 %v9155, %v9474
        %v9515 = vadd.f32 %v9156, %v9479
        %v9516 = vadd.f32 %v9157, %v9482
        %v9517 = vld [vmem:[%s9158] sm:$0xf]
        %v9518 = vld [vmem:[%s9158 + $0x4] sm:$0xf]
        %v9519 = vld [vmem:[%s9158 + $0x8] sm:$0x1]
        %v9520 = vld [vmem:[%s9158 + $0xc] sm:$0xf]
        %v9521 = vld [vmem:[%s9158 + $0x10] sm:$0xf]
        %v9522 = vld [vmem:[%s9158 + $0x14] sm:$0x1]
        %v9523 = vld [vmem:[%s9158 + $0x18] sm:$0xf]
        %v9524 = vld [vmem:[%s9158 + $0x1c] sm:$0xf]
        %v9525 = vld [vmem:[%s9158 + $0x20] sm:$0x1]
        %v9526 = vld [vmem:[%s9158 + $0x24] sm:$0xf]
        %v9527 = vld [vmem:[%s9158 + $0x28] sm:$0xf]
        %v9528 = vld [vmem:[%s9158 + $0x2c] sm:$0x1]
        %v9529 = vld [vmem:[%s9158 + $0x30] sm:$0xf]
        %v9530 = vld [vmem:[%s9158 + $0x34] sm:$0xf]
        %v9531 = vld [vmem:[%s9158 + $0x38] sm:$0x1]
        %v9532 = vld [vmem:[%s9158 + $0x3c] sm:$0xf]
        %v9533 = vld [vmem:[%s9158 + $0x40] sm:$0xf]
        %v9534 = vld [vmem:[%s9158 + $0x44] sm:$0x1]
        %v9535 = vld [vmem:[%s9158 + $0x48] sm:$0xf]
        %v9536 = vld [vmem:[%s9158 + $0x4c] sm:$0xf]
        %v9537 = vld [vmem:[%s9158 + $0x50] sm:$0x1]
        %v9538 = vld [vmem:[%s9158 + $0x54] sm:$0xf]
        %v9539 = vld [vmem:[%s9158 + $0x58] sm:$0xf]
        %v9540 = vld [vmem:[%s9158 + $0x5c] sm:$0x1]
        %v9541 = vld [vmem:[%s9158 + $0x60] sm:$0xf]
        %v9542 = vld [vmem:[%s9158 + $0x64] sm:$0xf]
        %v9543 = vld [vmem:[%s9158 + $0x68] sm:$0x1]
        %v9544 = vld [vmem:[%s9158 + $0x6c] sm:$0xf]
        %v9545 = vld [vmem:[%s9158 + $0x70] sm:$0xf]
        %v9546 = vld [vmem:[%s9158 + $0x74] sm:$0x1]
        %v9547 = vld [vmem:[%s9158 + $0x78] sm:$0xf]
        %v9548 = vld [vmem:[%s9158 + $0x7c] sm:$0xf]
        %v9549 = vld [vmem:[%s9158 + $0x80] sm:$0x1]
        %v9550 = vld [vmem:[%s9158 + $0x84] sm:$0xf]
        %v9551 = vld [vmem:[%s9158 + $0x88] sm:$0xf]
        %v9552 = vld [vmem:[%s9158 + $0x8c] sm:$0x1]
        %v9553 = vld [vmem:[%s9158 + $0x90] sm:$0xf]
        %v9554 = vld [vmem:[%s9158 + $0x94] sm:$0xf]
        %v9555 = vld [vmem:[%s9158 + $0x98] sm:$0x1]
        %v9556 = vld [vmem:[%s9158 + $0x9c] sm:$0xf]
        %v9557 = vld [vmem:[%s9158 + $0xa0] sm:$0xf]
        %v9558 = vld [vmem:[%s9158 + $0xa4] sm:$0x1]
        %v9559 = vld [vmem:[%s9158 + $0xa8] sm:$0xf]
        %v9560 = vld [vmem:[%s9158 + $0xac] sm:$0xf]
        %v9561 = vld [vmem:[%s9158 + $0xb0] sm:$0x1]
        %v9562 = vld [vmem:[%s9158 + $0xb4] sm:$0xf]
        %v9563 = vld [vmem:[%s9158 + $0xb8] sm:$0xf]
        %v9564 = vld [vmem:[%s9158 + $0xbc] sm:$0x1]
        %v9566 = vshrl.u32 %v9517, 16
        %v9568 = vrot.slane %v9566, 4
        %v9569 = vshll.u32 %v9517, 16
        %v9571 = vrot.slane %v9569, 5
        %v9572 = vor.u32 %v9568, %v9571
        %v9573 = vrot.slane %v9572, 4
        %v9575 = vshll.u32 %v9518, 16
        %v9577 = vrot.slane %v9575, 5
        %v9578 = vsel %vm1013, %v9573, %v9577
        %v9579 = vshrl.u32 %v9518, 16
        %v9581 = vrot.slane %v9579, 4
        %v9582 = vor.u32 %v9581, %v9577
        %v9583 = vrot.slane %v9582, 4
        %v9585 = vshll.u32 %v9519, 16
        %v9587 = vrot.slane %v9585, 5
        %v9588 = vsel %vm1013, %v9583, %v9587
        %v9590 = vshrl.u32 %v9520, 16
        %v9592 = vrot.slane %v9590, 4
        %v9593 = vshll.u32 %v9520, 16
        %v9595 = vrot.slane %v9593, 5
        %v9596 = vor.u32 %v9592, %v9595
        %v9597 = vrot.slane %v9596, 4
        %v9599 = vshll.u32 %v9521, 16
        %v9601 = vrot.slane %v9599, 5
        %v9602 = vsel %vm1013, %v9597, %v9601
        %v9603 = vshrl.u32 %v9521, 16
        %v9605 = vrot.slane %v9603, 4
        %v9606 = vor.u32 %v9605, %v9601
        %v9607 = vrot.slane %v9606, 4
        %v9609 = vshll.u32 %v9522, 16
        %v9611 = vrot.slane %v9609, 5
        %v9612 = vsel %vm1013, %v9607, %v9611
        %v9614 = vshrl.u32 %v9523, 16
        %v9616 = vrot.slane %v9614, 4
        %v9617 = vshll.u32 %v9523, 16
        %v9619 = vrot.slane %v9617, 5
        %v9620 = vor.u32 %v9616, %v9619
        %v9621 = vrot.slane %v9620, 4
        %v9623 = vshll.u32 %v9524, 16
        %v9625 = vrot.slane %v9623, 5
        %v9626 = vsel %vm1013, %v9621, %v9625
        %v9627 = vshrl.u32 %v9524, 16
        %v9629 = vrot.slane %v9627, 4
        %v9630 = vor.u32 %v9629, %v9625
        %v9631 = vrot.slane %v9630, 4
        %v9633 = vshll.u32 %v9525, 16
        %v9635 = vrot.slane %v9633, 5
        %v9636 = vsel %vm1013, %v9631, %v9635
        %v9638 = vshrl.u32 %v9526, 16
        %v9640 = vrot.slane %v9638, 4
        %v9641 = vshll.u32 %v9526, 16
        %v9643 = vrot.slane %v9641, 5
        %v9644 = vor.u32 %v9640, %v9643
        %v9645 = vrot.slane %v9644, 4
        %v9647 = vshll.u32 %v9527, 16
        %v9649 = vrot.slane %v9647, 5
        %v9650 = vsel %vm1013, %v9645, %v9649
        %v9651 = vshrl.u32 %v9527, 16
        %v9653 = vrot.slane %v9651, 4
        %v9654 = vor.u32 %v9653, %v9649
        %v9655 = vrot.slane %v9654, 4
        %v9657 = vshll.u32 %v9528, 16
        %v9659 = vrot.slane %v9657, 5
        %v9660 = vsel %vm1013, %v9655, %v9659
        %v9662 = vshrl.u32 %v9529, 16
        %v9664 = vrot.slane %v9662, 4
        %v9665 = vshll.u32 %v9529, 16
        %v9667 = vrot.slane %v9665, 5
        %v9668 = vor.u32 %v9664, %v9667
        %v9669 = vrot.slane %v9668, 4
        %v9671 = vshll.u32 %v9530, 16
        %v9673 = vrot.slane %v9671, 5
        %v9674 = vsel %vm1013, %v9669, %v9673
        %v9675 = vshrl.u32 %v9530, 16
        %v9677 = vrot.slane %v9675, 4
        %v9678 = vor.u32 %v9677, %v9673
        %v9679 = vrot.slane %v9678, 4
        %v9681 = vshll.u32 %v9531, 16
        %v9683 = vrot.slane %v9681, 5
        %v9684 = vsel %vm1013, %v9679, %v9683
        %v9686 = vshrl.u32 %v9532, 16
        %v9688 = vrot.slane %v9686, 4
        %v9689 = vshll.u32 %v9532, 16
        %v9691 = vrot.slane %v9689, 5
        %v9692 = vor.u32 %v9688, %v9691
        %v9693 = vrot.slane %v9692, 4
        %v9695 = vshll.u32 %v9533, 16
        %v9697 = vrot.slane %v9695, 5
        %v9698 = vsel %vm1013, %v9693, %v9697
        %v9699 = vshrl.u32 %v9533, 16
        %v9701 = vrot.slane %v9699, 4
        %v9702 = vor.u32 %v9701, %v9697
        %v9703 = vrot.slane %v9702, 4
        %v9705 = vshll.u32 %v9534, 16
        %v9707 = vrot.slane %v9705, 5
        %v9708 = vsel %vm1013, %v9703, %v9707
        %v9710 = vshrl.u32 %v9535, 16
        %v9712 = vrot.slane %v9710, 4
        %v9713 = vshll.u32 %v9535, 16
        %v9715 = vrot.slane %v9713, 5
        %v9716 = vor.u32 %v9712, %v9715
        %v9717 = vrot.slane %v9716, 4
        %v9719 = vshll.u32 %v9536, 16
        %v9721 = vrot.slane %v9719, 5
        %v9722 = vsel %vm1013, %v9717, %v9721
        %v9723 = vshrl.u32 %v9536, 16
        %v9725 = vrot.slane %v9723, 4
        %v9726 = vor.u32 %v9725, %v9721
        %v9727 = vrot.slane %v9726, 4
        %v9729 = vshll.u32 %v9537, 16
        %v9731 = vrot.slane %v9729, 5
        %v9732 = vsel %vm1013, %v9727, %v9731
        %v9734 = vshrl.u32 %v9538, 16
        %v9736 = vrot.slane %v9734, 4
        %v9737 = vshll.u32 %v9538, 16
        %v9739 = vrot.slane %v9737, 5
        %v9740 = vor.u32 %v9736, %v9739
        %v9741 = vrot.slane %v9740, 4
        %v9743 = vshll.u32 %v9539, 16
        %v9745 = vrot.slane %v9743, 5
        %v9746 = vsel %vm1013, %v9741, %v9745
        %v9747 = vshrl.u32 %v9539, 16
        %v9749 = vrot.slane %v9747, 4
        %v9750 = vor.u32 %v9749, %v9745
        %v9751 = vrot.slane %v9750, 4
        %v9753 = vshll.u32 %v9540, 16
        %v9755 = vrot.slane %v9753, 5
        %v9756 = vsel %vm1013, %v9751, %v9755
        %v9758 = vshrl.u32 %v9541, 16
        %v9760 = vrot.slane %v9758, 4
        %v9761 = vshll.u32 %v9541, 16
        %v9763 = vrot.slane %v9761, 5
        %v9764 = vor.u32 %v9760, %v9763
        %v9765 = vrot.slane %v9764, 4
        %v9767 = vshll.u32 %v9542, 16
        %v9769 = vrot.slane %v9767, 5
        %v9770 = vsel %vm1013, %v9765, %v9769
        %v9771 = vshrl.u32 %v9542, 16
        %v9773 = vrot.slane %v9771, 4
        %v9774 = vor.u32 %v9773, %v9769
        %v9775 = vrot.slane %v9774, 4
        %v9777 = vshll.u32 %v9543, 16
        %v9779 = vrot.slane %v9777, 5
        %v9780 = vsel %vm1013, %v9775, %v9779
        %v9782 = vshrl.u32 %v9544, 16
        %v9784 = vrot.slane %v9782, 4
        %v9785 = vshll.u32 %v9544, 16
        %v9787 = vrot.slane %v9785, 5
        %v9788 = vor.u32 %v9784, %v9787
        %v9789 = vrot.slane %v9788, 4
        %v9791 = vshll.u32 %v9545, 16
        %v9793 = vrot.slane %v9791, 5
        %v9794 = vsel %vm1013, %v9789, %v9793
        %v9795 = vshrl.u32 %v9545, 16
        %v9797 = vrot.slane %v9795, 4
        %v9798 = vor.u32 %v9797, %v9793
        %v9799 = vrot.slane %v9798, 4
        %v9801 = vshll.u32 %v9546, 16
        %v9803 = vrot.slane %v9801, 5
        %v9804 = vsel %vm1013, %v9799, %v9803
        %v9806 = vshrl.u32 %v9547, 16
        %v9808 = vrot.slane %v9806, 4
        %v9809 = vshll.u32 %v9547, 16
        %v9811 = vrot.slane %v9809, 5
        %v9812 = vor.u32 %v9808, %v9811
        %v9813 = vrot.slane %v9812, 4
        %v9815 = vshll.u32 %v9548, 16
        %v9817 = vrot.slane %v9815, 5
        %v9818 = vsel %vm1013, %v9813, %v9817
        %v9819 = vshrl.u32 %v9548, 16
        %v9821 = vrot.slane %v9819, 4
        %v9822 = vor.u32 %v9821, %v9817
        %v9823 = vrot.slane %v9822, 4
        %v9825 = vshll.u32 %v9549, 16
        %v9827 = vrot.slane %v9825, 5
        %v9828 = vsel %vm1013, %v9823, %v9827
        %v9830 = vshrl.u32 %v9550, 16
        %v9832 = vrot.slane %v9830, 4
        %v9833 = vshll.u32 %v9550, 16
        %v9835 = vrot.slane %v9833, 5
        %v9836 = vor.u32 %v9832, %v9835
        %v9837 = vrot.slane %v9836, 4
        %v9839 = vshll.u32 %v9551, 16
        %v9841 = vrot.slane %v9839, 5
        %v9842 = vsel %vm1013, %v9837, %v9841
        %v9843 = vshrl.u32 %v9551, 16
        %v9845 = vrot.slane %v9843, 4
        %v9846 = vor.u32 %v9845, %v9841
        %v9847 = vrot.slane %v9846, 4
        %v9849 = vshll.u32 %v9552, 16
        %v9851 = vrot.slane %v9849, 5
        %v9852 = vsel %vm1013, %v9847, %v9851
        %v9854 = vshrl.u32 %v9553, 16
        %v9856 = vrot.slane %v9854, 4
        %v9857 = vshll.u32 %v9553, 16
        %v9859 = vrot.slane %v9857, 5
        %v9860 = vor.u32 %v9856, %v9859
        %v9861 = vrot.slane %v9860, 4
        %v9863 = vshll.u32 %v9554, 16
        %v9865 = vrot.slane %v9863, 5
        %v9866 = vsel %vm1013, %v9861, %v9865
        %v9867 = vshrl.u32 %v9554, 16
        %v9869 = vrot.slane %v9867, 4
        %v9870 = vor.u32 %v9869, %v9865
        %v9871 = vrot.slane %v9870, 4
        %v9873 = vshll.u32 %v9555, 16
        %v9875 = vrot.slane %v9873, 5
        %v9876 = vsel %vm1013, %v9871, %v9875
        %v9878 = vshrl.u32 %v9556, 16
        %v9880 = vrot.slane %v9878, 4
        %v9881 = vshll.u32 %v9556, 16
        %v9883 = vrot.slane %v9881, 5
        %v9884 = vor.u32 %v9880, %v9883
        %v9885 = vrot.slane %v9884, 4
        %v9887 = vshll.u32 %v9557, 16
        %v9889 = vrot.slane %v9887, 5
        %v9890 = vsel %vm1013, %v9885, %v9889
        %v9891 = vshrl.u32 %v9557, 16
        %v9893 = vrot.slane %v9891, 4
        %v9894 = vor.u32 %v9893, %v9889
        %v9895 = vrot.slane %v9894, 4
        %v9897 = vshll.u32 %v9558, 16
        %v9899 = vrot.slane %v9897, 5
        %v9900 = vsel %vm1013, %v9895, %v9899
        %v9902 = vshrl.u32 %v9559, 16
        %v9904 = vrot.slane %v9902, 4
        %v9905 = vshll.u32 %v9559, 16
        %v9907 = vrot.slane %v9905, 5
        %v9908 = vor.u32 %v9904, %v9907
        %v9909 = vrot.slane %v9908, 4
        %v9911 = vshll.u32 %v9560, 16
        %v9913 = vrot.slane %v9911, 5
        %v9914 = vsel %vm1013, %v9909, %v9913
        %v9915 = vshrl.u32 %v9560, 16
        %v9917 = vrot.slane %v9915, 4
        %v9918 = vor.u32 %v9917, %v9913
        %v9919 = vrot.slane %v9918, 4
        %v9921 = vshll.u32 %v9561, 16
        %v9923 = vrot.slane %v9921, 5
        %v9924 = vsel %vm1013, %v9919, %v9923
        %v9926 = vshrl.u32 %v9562, 16
        %v9928 = vrot.slane %v9926, 4
        %v9929 = vshll.u32 %v9562, 16
        %v9931 = vrot.slane %v9929, 5
        %v9932 = vor.u32 %v9928, %v9931
        %v9933 = vrot.slane %v9932, 4
        %v9935 = vshll.u32 %v9563, 16
        %v9937 = vrot.slane %v9935, 5
        %v9938 = vsel %vm1013, %v9933, %v9937
        %v9939 = vshrl.u32 %v9563, 16
        %v9941 = vrot.slane %v9939, 4
        %v9942 = vor.u32 %v9941, %v9937
        %v9943 = vrot.slane %v9942, 4
        %v9945 = vshll.u32 %v9564, 16
        %v9947 = vrot.slane %v9945, 5
        %v9948 = vsel %vm1013, %v9943, %v9947
        %s9949 = scalar_lea.vmem %s2, 28
        %v9950 = vld [vmem:[%s9949] sm:$0xf]
        %v9951 = vunpack.c.l.b16 %v9578
        %v9952 = vunpack.c.l.b16 %v9588
        %v9953 = vunpack.c.l.b16 %v9602
        %v9954 = vunpack.c.l.b16 %v9612
        %v9955 = vunpack.c.l.b16 %v9626
        %v9956 = vunpack.c.l.b16 %v9636
        %v9957 = vunpack.c.l.b16 %v9650
        %v9958 = vunpack.c.l.b16 %v9660
        %v9959 = vunpack.c.l.b16 %v9674
        %v9960 = vunpack.c.l.b16 %v9684
        %v9961 = vunpack.c.l.b16 %v9698
        %v9962 = vunpack.c.l.b16 %v9708
        %v9963 = vunpack.c.l.b16 %v9722
        %v9964 = vunpack.c.l.b16 %v9732
        %v9965 = vunpack.c.l.b16 %v9746
        %v9966 = vunpack.c.l.b16 %v9756
        %v9967 = vunpack.c.l.b16 %v9770
        %v9968 = vunpack.c.l.b16 %v9780
        %v9969 = vunpack.c.l.b16 %v9794
        %v9970 = vunpack.c.l.b16 %v9804
        %v9971 = vunpack.c.l.b16 %v9818
        %v9972 = vunpack.c.l.b16 %v9828
        %v9973 = vunpack.c.l.b16 %v9842
        %v9974 = vunpack.c.l.b16 %v9852
        %v9975 = vunpack.c.l.b16 %v9866
        %v9976 = vunpack.c.l.b16 %v9876
        %v9977 = vunpack.c.l.b16 %v9890
        %v9978 = vunpack.c.l.b16 %v9900
        %v9979 = vunpack.c.l.b16 %v9914
        %v9980 = vunpack.c.l.b16 %v9924
        %v9981 = vunpack.c.l.b16 %v9938
        %v9982 = vunpack.c.l.b16 %v9948
        %v9983 = vpack.c.b16 %v9952, %v9951
        %v9984 = vpack.c.b16 %v9954, %v9953
        %v9985 = vpack.c.b16 %v9956, %v9955
        %v9986 = vpack.c.b16 %v9958, %v9957
        %v9987 = vpack.c.b16 %v9960, %v9959
        %v9988 = vpack.c.b16 %v9962, %v9961
        %v9989 = vpack.c.b16 %v9964, %v9963
        %v9990 = vpack.c.b16 %v9966, %v9965
        %v9991 = vpack.c.b16 %v9968, %v9967
        %v9992 = vpack.c.b16 %v9970, %v9969
        %v9993 = vpack.c.b16 %v9972, %v9971
        %v9994 = vpack.c.b16 %v9974, %v9973
        %v9995 = vpack.c.b16 %v9976, %v9975
        %v9996 = vpack.c.b16 %v9978, %v9977
        %v9997 = vpack.c.b16 %v9980, %v9979
        %v9998 = vpack.c.b16 %v9982, %v9981
        %v10000 = vsel %vm6644, %v9983, 0
        %v10003 = vsel %vm6644, %v9984, 0
        %v10006 = vsel %vm6644, %v9985, 0
        %v10009 = vsel %vm6644, %v9986, 0
        %v10012 = vsel %vm6644, %v9987, 0
        %v10015 = vsel %vm6644, %v9988, 0
        %v10018 = vsel %vm6644, %v9989, 0
        %v10021 = vsel %vm6644, %v9990, 0
        %v10024 = vsel %vm6644, %v9991, 0
        %v10027 = vsel %vm6644, %v9992, 0
        %v10030 = vsel %vm6644, %v9993, 0
        %v10033 = vsel %vm6644, %v9994, 0
        %v10036 = vsel %vm6644, %v9995, 0
        %v10039 = vsel %vm6644, %v9996, 0
        %v10042 = vsel %vm6644, %v9997, 0
        %v10045 = vsel %vm6644, %v9998, 0
        %v10048 = vsel %vm6693, %v9950, 0
        %10050 = vmatprep.subr.bf16.mxu0 0
        %10051 = vmatpush1.bf16.msra.mxu0 0
        %10052 = vmatprep.subr.bf16.mxu0 0
        %10053 = vmatpush1.bf16.msra.mxu0 0
        %10054 = vmatprep.subr.bf16.mxu0 0
        %10055 = vmatpush1.bf16.msra.mxu0 0
        %10056 = vmatprep.subr.bf16.mxu0 0
        %10057 = vmatpush1.bf16.msra.mxu0 0
        %10058 = vmatprep.subr.bf16.mxu0 0
        %10059 = vmatpush1.bf16.msra.mxu0 0
        %10060 = vmatprep.subr.bf16.mxu0 0
        %10061 = vmatpush1.bf16.msra.mxu0 0
        %10062 = vmatprep.subr.bf16.mxu0 0
        %10063 = vmatpush1.bf16.msra.mxu0 0
        %10064 = vmatprep.subr.bf16.mxu0 0
        %10065 = vmatpush1.bf16.msra.mxu0 %v10048
        %10066 = vmatprep.subr.bf16.mxu0 0
        %10067 = vmatpush2.bf16.msra.mxu0 0
        %10068 = vmatprep.subr.bf16.mxu0 0
        %10069 = vmatpush2.bf16.msra.mxu0 0
        %10070 = vmatprep.subr.bf16.mxu0 0
        %10071 = vmatpush2.bf16.msra.mxu0 0
        %10072 = vmatprep.subr.bf16.mxu0 0
        %10073 = vmatpush2.bf16.msra.mxu0 0
        %10074 = vmatprep.subr.bf16.mxu0 0
        %10075 = vmatpush2.bf16.msra.mxu0 0
        %10076 = vmatprep.subr.bf16.mxu0 0
        %10077 = vmatpush2.bf16.msra.mxu0 0
        %10078 = vmatprep.subr.bf16.mxu0 0
        %10079 = vmatpush2.bf16.msra.mxu0 0
        %10080 = vmatprep.subr.bf16.mxu0 0
        %10081 = vmatpush2.bf16.msra.mxu0 0
        %10082 = vmatprep.mubr.bf16.mxu0 0
        %10083 = vmatmul.mubr.bf16.gmra.mxu0 %v10000
        %v10084 = vpop.f32.mrf.mxu0
        %v10085 = vadd.f32 0.0, %v10084
        %v10086 = vpop.f32.mrf.mxu0
        %v10087 = vpop.f32.mrf.mxu0
        %v10088 = vadd.f32 0.0, %v10087
        %v10089 = vpop.f32.mrf.mxu0
        %10090 = vmatprep.mubr.bf16.mxu0 0
        %10091 = vmatmul.mubr.bf16.gmra.mxu0 %v10003
        %v10092 = vpop.f32.mrf.mxu0
        %v10093 = vadd.f32 0.0, %v10092
        %v10094 = vpop.f32.mrf.mxu0
        %v10095 = vpop.f32.mrf.mxu0
        %v10096 = vadd.f32 0.0, %v10095
        %v10097 = vpop.f32.mrf.mxu0
        %10098 = vmatprep.mubr.bf16.mxu0 0
        %10099 = vmatmul.mubr.bf16.gmra.mxu0 %v10006
        %v10100 = vpop.f32.mrf.mxu0
        %v10101 = vadd.f32 0.0, %v10100
        %v10102 = vpop.f32.mrf.mxu0
        %v10103 = vpop.f32.mrf.mxu0
        %v10104 = vadd.f32 0.0, %v10103
        %v10105 = vpop.f32.mrf.mxu0
        %10106 = vmatprep.mubr.bf16.mxu0 0
        %10107 = vmatmul.mubr.bf16.gmra.mxu0 %v10009
        %v10108 = vpop.f32.mrf.mxu0
        %v10109 = vadd.f32 0.0, %v10108
        %v10110 = vpop.f32.mrf.mxu0
        %v10111 = vpop.f32.mrf.mxu0
        %v10112 = vadd.f32 0.0, %v10111
        %v10113 = vpop.f32.mrf.mxu0
        %10114 = vmatprep.mubr.bf16.mxu0 0
        %10115 = vmatmul.mubr.bf16.gmra.mxu0 %v10012
        %v10116 = vpop.f32.mrf.mxu0
        %v10117 = vadd.f32 0.0, %v10116
        %v10118 = vpop.f32.mrf.mxu0
        %v10119 = vpop.f32.mrf.mxu0
        %v10120 = vadd.f32 0.0, %v10119
        %v10121 = vpop.f32.mrf.mxu0
        %10122 = vmatprep.mubr.bf16.mxu0 0
        %10123 = vmatmul.mubr.bf16.gmra.mxu0 %v10015
        %v10124 = vpop.f32.mrf.mxu0
        %v10125 = vadd.f32 0.0, %v10124
        %v10126 = vpop.f32.mrf.mxu0
        %v10127 = vpop.f32.mrf.mxu0
        %v10128 = vadd.f32 0.0, %v10127
        %v10129 = vpop.f32.mrf.mxu0
        %10130 = vmatprep.mubr.bf16.mxu0 0
        %10131 = vmatmul.mubr.bf16.gmra.mxu0 %v10018
        %v10132 = vpop.f32.mrf.mxu0
        %v10133 = vadd.f32 0.0, %v10132
        %v10134 = vpop.f32.mrf.mxu0
        %v10135 = vpop.f32.mrf.mxu0
        %v10136 = vadd.f32 0.0, %v10135
        %v10137 = vpop.f32.mrf.mxu0
        %10138 = vmatprep.mubr.bf16.mxu0 0
        %10139 = vmatmul.mubr.bf16.gmra.mxu0 %v10021
        %v10140 = vpop.f32.mrf.mxu0
        %v10141 = vadd.f32 0.0, %v10140
        %v10142 = vpop.f32.mrf.mxu0
        %v10143 = vpop.f32.mrf.mxu0
        %v10144 = vadd.f32 0.0, %v10143
        %v10145 = vpop.f32.mrf.mxu0
        %10146 = vmatprep.mubr.bf16.mxu0 0
        %10147 = vmatmul.mubr.bf16.gmra.mxu0 %v10024
        %v10148 = vpop.f32.mrf.mxu0
        %v10149 = vadd.f32 0.0, %v10148
        %v10150 = vpop.f32.mrf.mxu0
        %v10151 = vpop.f32.mrf.mxu0
        %v10152 = vadd.f32 0.0, %v10151
        %v10153 = vpop.f32.mrf.mxu0
        %10154 = vmatprep.mubr.bf16.mxu0 0
        %10155 = vmatmul.mubr.bf16.gmra.mxu0 %v10027
        %v10156 = vpop.f32.mrf.mxu0
        %v10157 = vadd.f32 0.0, %v10156
        %v10158 = vpop.f32.mrf.mxu0
        %v10159 = vpop.f32.mrf.mxu0
        %v10160 = vadd.f32 0.0, %v10159
        %v10161 = vpop.f32.mrf.mxu0
        %10162 = vmatprep.mubr.bf16.mxu0 0
        %10163 = vmatmul.mubr.bf16.gmra.mxu0 %v10030
        %v10164 = vpop.f32.mrf.mxu0
        %v10165 = vadd.f32 0.0, %v10164
        %v10166 = vpop.f32.mrf.mxu0
        %v10167 = vpop.f32.mrf.mxu0
        %v10168 = vadd.f32 0.0, %v10167
        %v10169 = vpop.f32.mrf.mxu0
        %10170 = vmatprep.mubr.bf16.mxu0 0
        %10171 = vmatmul.mubr.bf16.gmra.mxu0 %v10033
        %v10172 = vpop.f32.mrf.mxu0
        %v10173 = vadd.f32 0.0, %v10172
        %v10174 = vpop.f32.mrf.mxu0
        %v10175 = vpop.f32.mrf.mxu0
        %v10176 = vadd.f32 0.0, %v10175
        %v10177 = vpop.f32.mrf.mxu0
        %10178 = vmatprep.mubr.bf16.mxu0 0
        %10179 = vmatmul.mubr.bf16.gmra.mxu0 %v10036
        %v10180 = vpop.f32.mrf.mxu0
        %v10181 = vadd.f32 0.0, %v10180
        %v10182 = vpop.f32.mrf.mxu0
        %v10183 = vpop.f32.mrf.mxu0
        %v10184 = vadd.f32 0.0, %v10183
        %v10185 = vpop.f32.mrf.mxu0
        %10186 = vmatprep.mubr.bf16.mxu0 0
        %10187 = vmatmul.mubr.bf16.gmra.mxu0 %v10039
        %v10188 = vpop.f32.mrf.mxu0
        %v10189 = vadd.f32 0.0, %v10188
        %v10190 = vpop.f32.mrf.mxu0
        %v10191 = vpop.f32.mrf.mxu0
        %v10192 = vadd.f32 0.0, %v10191
        %v10193 = vpop.f32.mrf.mxu0
        %10194 = vmatprep.mubr.bf16.mxu0 0
        %10195 = vmatmul.mubr.bf16.gmra.mxu0 %v10042
        %v10196 = vpop.f32.mrf.mxu0
        %v10197 = vadd.f32 0.0, %v10196
        %v10198 = vpop.f32.mrf.mxu0
        %v10199 = vpop.f32.mrf.mxu0
        %v10200 = vadd.f32 0.0, %v10199
        %v10201 = vpop.f32.mrf.mxu0
        %10202 = vmatprep.mubr.bf16.mxu0 0
        %10203 = vmatmul.mubr.bf16.gmra.mxu0 %v10045
        %v10204 = vpop.f32.mrf.mxu0
        %v10205 = vadd.f32 0.0, %v10204
        %v10206 = vpop.f32.mrf.mxu0
        %v10207 = vpop.f32.mrf.mxu0
        %v10208 = vadd.f32 0.0, %v10207
        %v10209 = vpop.f32.mrf.mxu0
        %10210 = vdwg.mxu0
        %v10211 = vadd.f32 %v9485, %v10085
        %v10212 = vadd.f32 %v9486, %v10088
        %v10213 = vadd.f32 %v9487, %v10093
        %v10214 = vadd.f32 %v9488, %v10096
        %v10215 = vadd.f32 %v9489, %v10101
        %v10216 = vadd.f32 %v9490, %v10104
        %v10217 = vadd.f32 %v9491, %v10109
        %v10218 = vadd.f32 %v9492, %v10112
        %v10219 = vadd.f32 %v9493, %v10117
        %v10220 = vadd.f32 %v9494, %v10120
        %v10221 = vadd.f32 %v9495, %v10125
        %v10222 = vadd.f32 %v9496, %v10128
        %v10223 = vadd.f32 %v9497, %v10133
        %v10224 = vadd.f32 %v9498, %v10136
        %v10225 = vadd.f32 %v9499, %v10141
        %v10226 = vadd.f32 %v9500, %v10144
        %v10227 = vadd.f32 %v9501, %v10149
        %v10228 = vadd.f32 %v9502, %v10152
        %v10229 = vadd.f32 %v9503, %v10157
        %v10230 = vadd.f32 %v9504, %v10160
        %v10231 = vadd.f32 %v9505, %v10165
        %v10232 = vadd.f32 %v9506, %v10168
        %v10233 = vadd.f32 %v9507, %v10173
        %v10234 = vadd.f32 %v9508, %v10176
        %v10235 = vadd.f32 %v9509, %v10181
        %v10236 = vadd.f32 %v9510, %v10184
        %v10237 = vadd.f32 %v9511, %v10189
        %v10238 = vadd.f32 %v9512, %v10192
        %v10239 = vadd.f32 %v9513, %v10197
        %v10240 = vadd.f32 %v9514, %v10200
        %v10241 = vadd.f32 %v9515, %v10205
        %v10242 = vadd.f32 %v9516, %v10208
        %v10243 = vld [vmem:[%s9158] sm:$0xe]
        %v10244 = vld [vmem:[%s9158 + $0xc] sm:$0xe]
        %v10245 = vld [vmem:[%s9158 + $0x18] sm:$0xe]
        %v10246 = vld [vmem:[%s9158 + $0x24] sm:$0xe]
        %v10247 = vld [vmem:[%s9158 + $0x30] sm:$0xe]
        %v10248 = vld [vmem:[%s9158 + $0x3c] sm:$0xe]
        %v10249 = vld [vmem:[%s9158 + $0x48] sm:$0xe]
        %v10250 = vld [vmem:[%s9158 + $0x54] sm:$0xe]
        %v10251 = vld [vmem:[%s9158 + $0x60] sm:$0xe]
        %v10252 = vld [vmem:[%s9158 + $0x6c] sm:$0xe]
        %v10253 = vld [vmem:[%s9158 + $0x78] sm:$0xe]
        %v10254 = vld [vmem:[%s9158 + $0x84] sm:$0xe]
        %v10255 = vld [vmem:[%s9158 + $0x90] sm:$0xe]
        %v10256 = vld [vmem:[%s9158 + $0x9c] sm:$0xe]
        %v10257 = vld [vmem:[%s9158 + $0xa8] sm:$0xe]
        %v10258 = vld [vmem:[%s9158 + $0xb4] sm:$0xe]
        %v10307 = vrot.slane %v10243, 5
        %v10308 = vrot.slane %v10307, 4
        %v10309 = vrot.slane %v9518, 5
        %v10310 = vsel %vm2004, %v10308, %v10309
        %v10311 = vrot.slane %v10309, 4
        %v10312 = vrot.slane %v9519, 5
        %v10313 = vsel %vm2004, %v10311, %v10312
        %v10314 = vrot.slane %v10244, 5
        %v10315 = vrot.slane %v10314, 4
        %v10316 = vrot.slane %v9521, 5
        %v10317 = vsel %vm2004, %v10315, %v10316
        %v10318 = vrot.slane %v10316, 4
        %v10319 = vrot.slane %v9522, 5
        %v10320 = vsel %vm2004, %v10318, %v10319
        %v10321 = vrot.slane %v10245, 5
        %v10322 = vrot.slane %v10321, 4
        %v10323 = vrot.slane %v9524, 5
        %v10324 = vsel %vm2004, %v10322, %v10323
        %v10325 = vrot.slane %v10323, 4
        %v10326 = vrot.slane %v9525, 5
        %v10327 = vsel %vm2004, %v10325, %v10326
        %v10328 = vrot.slane %v10246, 5
        %v10329 = vrot.slane %v10328, 4
        %v10330 = vrot.slane %v9527, 5
        %v10331 = vsel %vm2004, %v10329, %v10330
        %v10332 = vrot.slane %v10330, 4
        %v10333 = vrot.slane %v9528, 5
        %v10334 = vsel %vm2004, %v10332, %v10333
        %v10335 = vrot.slane %v10247, 5
        %v10336 = vrot.slane %v10335, 4
        %v10337 = vrot.slane %v9530, 5
        %v10338 = vsel %vm2004, %v10336, %v10337
        %v10339 = vrot.slane %v10337, 4
        %v10340 = vrot.slane %v9531, 5
        %v10341 = vsel %vm2004, %v10339, %v10340
        %v10342 = vrot.slane %v10248, 5
        %v10343 = vrot.slane %v10342, 4
        %v10344 = vrot.slane %v9533, 5
        %v10345 = vsel %vm2004, %v10343, %v10344
        %v10346 = vrot.slane %v10344, 4
        %v10347 = vrot.slane %v9534, 5
        %v10348 = vsel %vm2004, %v10346, %v10347
        %v10349 = vrot.slane %v10249, 5
        %v10350 = vrot.slane %v10349, 4
        %v10351 = vrot.slane %v9536, 5
        %v10352 = vsel %vm2004, %v10350, %v10351
        %v10353 = vrot.slane %v10351, 4
        %v10354 = vrot.slane %v9537, 5
        %v10355 = vsel %vm2004, %v10353, %v10354
        %v10356 = vrot.slane %v10250, 5
        %v10357 = vrot.slane %v10356, 4
        %v10358 = vrot.slane %v9539, 5
        %v10359 = vsel %vm2004, %v10357, %v10358
        %v10360 = vrot.slane %v10358, 4
        %v10361 = vrot.slane %v9540, 5
        %v10362 = vsel %vm2004, %v10360, %v10361
        %v10363 = vrot.slane %v10251, 5
        %v10364 = vrot.slane %v10363, 4
        %v10365 = vrot.slane %v9542, 5
        %v10366 = vsel %vm2004, %v10364, %v10365
        %v10367 = vrot.slane %v10365, 4
        %v10368 = vrot.slane %v9543, 5
        %v10369 = vsel %vm2004, %v10367, %v10368
        %v10370 = vrot.slane %v10252, 5
        %v10371 = vrot.slane %v10370, 4
        %v10372 = vrot.slane %v9545, 5
        %v10373 = vsel %vm2004, %v10371, %v10372
        %v10374 = vrot.slane %v10372, 4
        %v10375 = vrot.slane %v9546, 5
        %v10376 = vsel %vm2004, %v10374, %v10375
        %v10377 = vrot.slane %v10253, 5
        %v10378 = vrot.slane %v10377, 4
        %v10379 = vrot.slane %v9548, 5
        %v10380 = vsel %vm2004, %v10378, %v10379
        %v10381 = vrot.slane %v10379, 4
        %v10382 = vrot.slane %v9549, 5
        %v10383 = vsel %vm2004, %v10381, %v10382
        %v10384 = vrot.slane %v10254, 5
        %v10385 = vrot.slane %v10384, 4
        %v10386 = vrot.slane %v9551, 5
        %v10387 = vsel %vm2004, %v10385, %v10386
        %v10388 = vrot.slane %v10386, 4
        %v10389 = vrot.slane %v9552, 5
        %v10390 = vsel %vm2004, %v10388, %v10389
        %v10391 = vrot.slane %v10255, 5
        %v10392 = vrot.slane %v10391, 4
        %v10393 = vrot.slane %v9554, 5
        %v10394 = vsel %vm2004, %v10392, %v10393
        %v10395 = vrot.slane %v10393, 4
        %v10396 = vrot.slane %v9555, 5
        %v10397 = vsel %vm2004, %v10395, %v10396
        %v10398 = vrot.slane %v10256, 5
        %v10399 = vrot.slane %v10398, 4
        %v10400 = vrot.slane %v9557, 5
        %v10401 = vsel %vm2004, %v10399, %v10400
        %v10402 = vrot.slane %v10400, 4
        %v10403 = vrot.slane %v9558, 5
        %v10404 = vsel %vm2004, %v10402, %v10403
        %v10405 = vrot.slane %v10257, 5
        %v10406 = vrot.slane %v10405, 4
        %v10407 = vrot.slane %v9560, 5
        %v10408 = vsel %vm2004, %v10406, %v10407
        %v10409 = vrot.slane %v10407, 4
        %v10410 = vrot.slane %v9561, 5
        %v10411 = vsel %vm2004, %v10409, %v10410
        %v10412 = vrot.slane %v10258, 5
        %v10413 = vrot.slane %v10412, 4
        %v10414 = vrot.slane %v9563, 5
        %v10415 = vsel %vm2004, %v10413, %v10414
        %v10416 = vrot.slane %v10414, 4
        %v10417 = vrot.slane %v9564, 5
        %v10418 = vsel %vm2004, %v10416, %v10417
        %s10419 = scalar_lea.vmem %s2, 32
        %v10420 = vld [vmem:[%s10419] sm:$0xf]
        %v10421 = vunpack.c.l.b16 %v10310
        %v10422 = vunpack.c.l.b16 %v10313
        %v10423 = vunpack.c.l.b16 %v10317
        %v10424 = vunpack.c.l.b16 %v10320
        %v10425 = vunpack.c.l.b16 %v10324
        %v10426 = vunpack.c.l.b16 %v10327
        %v10427 = vunpack.c.l.b16 %v10331
        %v10428 = vunpack.c.l.b16 %v10334
        %v10429 = vunpack.c.l.b16 %v10338
        %v10430 = vunpack.c.l.b16 %v10341
        %v10431 = vunpack.c.l.b16 %v10345
        %v10432 = vunpack.c.l.b16 %v10348
        %v10433 = vunpack.c.l.b16 %v10352
        %v10434 = vunpack.c.l.b16 %v10355
        %v10435 = vunpack.c.l.b16 %v10359
        %v10436 = vunpack.c.l.b16 %v10362
        %v10437 = vunpack.c.l.b16 %v10366
        %v10438 = vunpack.c.l.b16 %v10369
        %v10439 = vunpack.c.l.b16 %v10373
        %v10440 = vunpack.c.l.b16 %v10376
        %v10441 = vunpack.c.l.b16 %v10380
        %v10442 = vunpack.c.l.b16 %v10383
        %v10443 = vunpack.c.l.b16 %v10387
        %v10444 = vunpack.c.l.b16 %v10390
        %v10445 = vunpack.c.l.b16 %v10394
        %v10446 = vunpack.c.l.b16 %v10397
        %v10447 = vunpack.c.l.b16 %v10401
        %v10448 = vunpack.c.l.b16 %v10404
        %v10449 = vunpack.c.l.b16 %v10408
        %v10450 = vunpack.c.l.b16 %v10411
        %v10451 = vunpack.c.l.b16 %v10415
        %v10452 = vunpack.c.l.b16 %v10418
        %v10453 = vpack.c.b16 %v10422, %v10421
        %v10454 = vpack.c.b16 %v10424, %v10423
        %v10455 = vpack.c.b16 %v10426, %v10425
        %v10456 = vpack.c.b16 %v10428, %v10427
        %v10457 = vpack.c.b16 %v10430, %v10429
        %v10458 = vpack.c.b16 %v10432, %v10431
        %v10459 = vpack.c.b16 %v10434, %v10433
        %v10460 = vpack.c.b16 %v10436, %v10435
        %v10461 = vpack.c.b16 %v10438, %v10437
        %v10462 = vpack.c.b16 %v10440, %v10439
        %v10463 = vpack.c.b16 %v10442, %v10441
        %v10464 = vpack.c.b16 %v10444, %v10443
        %v10465 = vpack.c.b16 %v10446, %v10445
        %v10466 = vpack.c.b16 %v10448, %v10447
        %v10467 = vpack.c.b16 %v10450, %v10449
        %v10468 = vpack.c.b16 %v10452, %v10451
        %v10470 = vsel %vm6644, %v10453, 0
        %v10473 = vsel %vm6644, %v10454, 0
        %v10476 = vsel %vm6644, %v10455, 0
        %v10479 = vsel %vm6644, %v10456, 0
        %v10482 = vsel %vm6644, %v10457, 0
        %v10485 = vsel %vm6644, %v10458, 0
        %v10488 = vsel %vm6644, %v10459, 0
        %v10491 = vsel %vm6644, %v10460, 0
        %v10494 = vsel %vm6644, %v10461, 0
        %v10497 = vsel %vm6644, %v10462, 0
        %v10500 = vsel %vm6644, %v10463, 0
        %v10503 = vsel %vm6644, %v10464, 0
        %v10506 = vsel %vm6644, %v10465, 0
        %v10509 = vsel %vm6644, %v10466, 0
        %v10512 = vsel %vm6644, %v10467, 0
        %v10515 = vsel %vm6644, %v10468, 0
        %v10518 = vsel %vm6693, %v10420, 0
        %10520 = vmatprep.subr.bf16.mxu0 0
        %10521 = vmatpush1.bf16.msra.mxu0 0
        %10522 = vmatprep.subr.bf16.mxu0 0
        %10523 = vmatpush1.bf16.msra.mxu0 0
        %10524 = vmatprep.subr.bf16.mxu0 0
        %10525 = vmatpush1.bf16.msra.mxu0 0
        %10526 = vmatprep.subr.bf16.mxu0 0
        %10527 = vmatpush1.bf16.msra.mxu0 0
        %10528 = vmatprep.subr.bf16.mxu0 0
        %10529 = vmatpush1.bf16.msra.mxu0 0
        %10530 = vmatprep.subr.bf16.mxu0 0
        %10531 = vmatpush1.bf16.msra.mxu0 0
        %10532 = vmatprep.subr.bf16.mxu0 0
        %10533 = vmatpush1.bf16.msra.mxu0 0
        %10534 = vmatprep.subr.bf16.mxu0 0
        %10535 = vmatpush1.bf16.msra.mxu0 %v10518
        %10536 = vmatprep.subr.bf16.mxu0 0
        %10537 = vmatpush2.bf16.msra.mxu0 0
        %10538 = vmatprep.subr.bf16.mxu0 0
        %10539 = vmatpush2.bf16.msra.mxu0 0
        %10540 = vmatprep.subr.bf16.mxu0 0
        %10541 = vmatpush2.bf16.msra.mxu0 0
        %10542 = vmatprep.subr.bf16.mxu0 0
        %10543 = vmatpush2.bf16.msra.mxu0 0
        %10544 = vmatprep.subr.bf16.mxu0 0
        %10545 = vmatpush2.bf16.msra.mxu0 0
        %10546 = vmatprep.subr.bf16.mxu0 0
        %10547 = vmatpush2.bf16.msra.mxu0 0
        %10548 = vmatprep.subr.bf16.mxu0 0
        %10549 = vmatpush2.bf16.msra.mxu0 0
        %10550 = vmatprep.subr.bf16.mxu0 0
        %10551 = vmatpush2.bf16.msra.mxu0 0
        %10552 = vmatprep.mubr.bf16.mxu0 0
        %10553 = vmatmul.mubr.bf16.gmra.mxu0 %v10470
        %v10554 = vpop.f32.mrf.mxu0
        %v10555 = vadd.f32 0.0, %v10554
        %v10556 = vpop.f32.mrf.mxu0
        %v10557 = vpop.f32.mrf.mxu0
        %v10558 = vadd.f32 0.0, %v10557
        %v10559 = vpop.f32.mrf.mxu0
        %10560 = vmatprep.mubr.bf16.mxu0 0
        %10561 = vmatmul.mubr.bf16.gmra.mxu0 %v10473
        %v10562 = vpop.f32.mrf.mxu0
        %v10563 = vadd.f32 0.0, %v10562
        %v10564 = vpop.f32.mrf.mxu0
        %v10565 = vpop.f32.mrf.mxu0
        %v10566 = vadd.f32 0.0, %v10565
        %v10567 = vpop.f32.mrf.mxu0
        %10568 = vmatprep.mubr.bf16.mxu0 0
        %10569 = vmatmul.mubr.bf16.gmra.mxu0 %v10476
        %v10570 = vpop.f32.mrf.mxu0
        %v10571 = vadd.f32 0.0, %v10570
        %v10572 = vpop.f32.mrf.mxu0
        %v10573 = vpop.f32.mrf.mxu0
        %v10574 = vadd.f32 0.0, %v10573
        %v10575 = vpop.f32.mrf.mxu0
        %10576 = vmatprep.mubr.bf16.mxu0 0
        %10577 = vmatmul.mubr.bf16.gmra.mxu0 %v10479
        %v10578 = vpop.f32.mrf.mxu0
        %v10579 = vadd.f32 0.0, %v10578
        %v10580 = vpop.f32.mrf.mxu0
        %v10581 = vpop.f32.mrf.mxu0
        %v10582 = vadd.f32 0.0, %v10581
        %v10583 = vpop.f32.mrf.mxu0
        %10584 = vmatprep.mubr.bf16.mxu0 0
        %10585 = vmatmul.mubr.bf16.gmra.mxu0 %v10482
        %v10586 = vpop.f32.mrf.mxu0
        %v10587 = vadd.f32 0.0, %v10586
        %v10588 = vpop.f32.mrf.mxu0
        %v10589 = vpop.f32.mrf.mxu0
        %v10590 = vadd.f32 0.0, %v10589
        %v10591 = vpop.f32.mrf.mxu0
        %10592 = vmatprep.mubr.bf16.mxu0 0
        %10593 = vmatmul.mubr.bf16.gmra.mxu0 %v10485
        %v10594 = vpop.f32.mrf.mxu0
        %v10595 = vadd.f32 0.0, %v10594
        %v10596 = vpop.f32.mrf.mxu0
        %v10597 = vpop.f32.mrf.mxu0
        %v10598 = vadd.f32 0.0, %v10597
        %v10599 = vpop.f32.mrf.mxu0
        %10600 = vmatprep.mubr.bf16.mxu0 0
        %10601 = vmatmul.mubr.bf16.gmra.mxu0 %v10488
        %v10602 = vpop.f32.mrf.mxu0
        %v10603 = vadd.f32 0.0, %v10602
        %v10604 = vpop.f32.mrf.mxu0
        %v10605 = vpop.f32.mrf.mxu0
        %v10606 = vadd.f32 0.0, %v10605
        %v10607 = vpop.f32.mrf.mxu0
        %10608 = vmatprep.mubr.bf16.mxu0 0
        %10609 = vmatmul.mubr.bf16.gmra.mxu0 %v10491
        %v10610 = vpop.f32.mrf.mxu0
        %v10611 = vadd.f32 0.0, %v10610
        %v10612 = vpop.f32.mrf.mxu0
        %v10613 = vpop.f32.mrf.mxu0
        %v10614 = vadd.f32 0.0, %v10613
        %v10615 = vpop.f32.mrf.mxu0
        %10616 = vmatprep.mubr.bf16.mxu0 0
        %10617 = vmatmul.mubr.bf16.gmra.mxu0 %v10494
        %v10618 = vpop.f32.mrf.mxu0
        %v10619 = vadd.f32 0.0, %v10618
        %v10620 = vpop.f32.mrf.mxu0
        %v10621 = vpop.f32.mrf.mxu0
        %v10622 = vadd.f32 0.0, %v10621
        %v10623 = vpop.f32.mrf.mxu0
        %10624 = vmatprep.mubr.bf16.mxu0 0
        %10625 = vmatmul.mubr.bf16.gmra.mxu0 %v10497
        %v10626 = vpop.f32.mrf.mxu0
        %v10627 = vadd.f32 0.0, %v10626
        %v10628 = vpop.f32.mrf.mxu0
        %v10629 = vpop.f32.mrf.mxu0
        %v10630 = vadd.f32 0.0, %v10629
        %v10631 = vpop.f32.mrf.mxu0
        %10632 = vmatprep.mubr.bf16.mxu0 0
        %10633 = vmatmul.mubr.bf16.gmra.mxu0 %v10500
        %v10634 = vpop.f32.mrf.mxu0
        %v10635 = vadd.f32 0.0, %v10634
        %v10636 = vpop.f32.mrf.mxu0
        %v10637 = vpop.f32.mrf.mxu0
        %v10638 = vadd.f32 0.0, %v10637
        %v10639 = vpop.f32.mrf.mxu0
        %10640 = vmatprep.mubr.bf16.mxu0 0
        %10641 = vmatmul.mubr.bf16.gmra.mxu0 %v10503
        %v10642 = vpop.f32.mrf.mxu0
        %v10643 = vadd.f32 0.0, %v10642
        %v10644 = vpop.f32.mrf.mxu0
        %v10645 = vpop.f32.mrf.mxu0
        %v10646 = vadd.f32 0.0, %v10645
        %v10647 = vpop.f32.mrf.mxu0
        %10648 = vmatprep.mubr.bf16.mxu0 0
        %10649 = vmatmul.mubr.bf16.gmra.mxu0 %v10506
        %v10650 = vpop.f32.mrf.mxu0
        %v10651 = vadd.f32 0.0, %v10650
        %v10652 = vpop.f32.mrf.mxu0
        %v10653 = vpop.f32.mrf.mxu0
        %v10654 = vadd.f32 0.0, %v10653
        %v10655 = vpop.f32.mrf.mxu0
        %10656 = vmatprep.mubr.bf16.mxu0 0
        %10657 = vmatmul.mubr.bf16.gmra.mxu0 %v10509
        %v10658 = vpop.f32.mrf.mxu0
        %v10659 = vadd.f32 0.0, %v10658
        %v10660 = vpop.f32.mrf.mxu0
        %v10661 = vpop.f32.mrf.mxu0
        %v10662 = vadd.f32 0.0, %v10661
        %v10663 = vpop.f32.mrf.mxu0
        %10664 = vmatprep.mubr.bf16.mxu0 0
        %10665 = vmatmul.mubr.bf16.gmra.mxu0 %v10512
        %v10666 = vpop.f32.mrf.mxu0
        %v10667 = vadd.f32 0.0, %v10666
        %v10668 = vpop.f32.mrf.mxu0
        %v10669 = vpop.f32.mrf.mxu0
        %v10670 = vadd.f32 0.0, %v10669
        %v10671 = vpop.f32.mrf.mxu0
        %10672 = vmatprep.mubr.bf16.mxu0 0
        %10673 = vmatmul.mubr.bf16.gmra.mxu0 %v10515
        %v10674 = vpop.f32.mrf.mxu0
        %v10675 = vadd.f32 0.0, %v10674
        %v10676 = vpop.f32.mrf.mxu0
        %v10677 = vpop.f32.mrf.mxu0
        %v10678 = vadd.f32 0.0, %v10677
        %v10679 = vpop.f32.mrf.mxu0
        %10680 = vdwg.mxu0
        %v10681 = vadd.f32 %v10211, %v10555
        %v10682 = vadd.f32 %v10212, %v10558
        %v10683 = vadd.f32 %v10213, %v10563
        %v10684 = vadd.f32 %v10214, %v10566
        %v10685 = vadd.f32 %v10215, %v10571
        %v10686 = vadd.f32 %v10216, %v10574
        %v10687 = vadd.f32 %v10217, %v10579
        %v10688 = vadd.f32 %v10218, %v10582
        %v10689 = vadd.f32 %v10219, %v10587
        %v10690 = vadd.f32 %v10220, %v10590
        %v10691 = vadd.f32 %v10221, %v10595
        %v10692 = vadd.f32 %v10222, %v10598
        %v10693 = vadd.f32 %v10223, %v10603
        %v10694 = vadd.f32 %v10224, %v10606
        %v10695 = vadd.f32 %v10225, %v10611
        %v10696 = vadd.f32 %v10226, %v10614
        %v10697 = vadd.f32 %v10227, %v10619
        %v10698 = vadd.f32 %v10228, %v10622
        %v10699 = vadd.f32 %v10229, %v10627
        %v10700 = vadd.f32 %v10230, %v10630
        %v10701 = vadd.f32 %v10231, %v10635
        %v10702 = vadd.f32 %v10232, %v10638
        %v10703 = vadd.f32 %v10233, %v10643
        %v10704 = vadd.f32 %v10234, %v10646
        %v10705 = vadd.f32 %v10235, %v10651
        %v10706 = vadd.f32 %v10236, %v10654
        %v10707 = vadd.f32 %v10237, %v10659
        %v10708 = vadd.f32 %v10238, %v10662
        %v10709 = vadd.f32 %v10239, %v10667
        %v10710 = vadd.f32 %v10240, %v10670
        %v10711 = vadd.f32 %v10241, %v10675
        %v10712 = vadd.f32 %v10242, %v10678
        %v10713 = vld [vmem:[%s3] sm:$0x1]
        %v10715 = vlaneseq
        %v10716 = vshrl.u32 %v10715, 7
        %v10717 = vsub.s32 0, %v10716
        %v10718 = vrot.slane %v10713, %v10717
        %v10720 = vmul.f32 %v10681, %v10718
        %v10721 = vmul.f32 %v10682, %v10718
        %v10722 = vmul.f32 %v10683, %v10718
        %v10723 = vmul.f32 %v10684, %v10718
        %v10724 = vmul.f32 %v10685, %v10718
        %v10725 = vmul.f32 %v10686, %v10718
        %v10726 = vmul.f32 %v10687, %v10718
        %v10727 = vmul.f32 %v10688, %v10718
        %v10728 = vmul.f32 %v10689, %v10718
        %v10729 = vmul.f32 %v10690, %v10718
        %v10730 = vmul.f32 %v10691, %v10718
        %v10731 = vmul.f32 %v10692, %v10718
        %v10732 = vmul.f32 %v10693, %v10718
        %v10733 = vmul.f32 %v10694, %v10718
        %v10734 = vmul.f32 %v10695, %v10718
        %v10735 = vmul.f32 %v10696, %v10718
        %v10736 = vmul.f32 %v10697, %v10718
        %v10737 = vmul.f32 %v10698, %v10718
        %v10738 = vmul.f32 %v10699, %v10718
        %v10739 = vmul.f32 %v10700, %v10718
        %v10740 = vmul.f32 %v10701, %v10718
        %v10741 = vmul.f32 %v10702, %v10718
        %v10742 = vmul.f32 %v10703, %v10718
        %v10743 = vmul.f32 %v10704, %v10718
        %v10744 = vmul.f32 %v10705, %v10718
        %v10745 = vmul.f32 %v10706, %v10718
        %v10746 = vmul.f32 %v10707, %v10718
        %v10747 = vmul.f32 %v10708, %v10718
        %v10748 = vmul.f32 %v10709, %v10718
        %v10749 = vmul.f32 %v10710, %v10718
        %v10750 = vmul.f32 %v10711, %v10718
        %v10751 = vmul.f32 %v10712, %v10718
        %v10752 = vld [vmem:[%s5] sm:$0x1]
        %v10754 = vlaneseq
        %v10755 = vshrl.u32 %v10754, 7
        %v10756 = vsub.s32 0, %v10755
        %v10757 = vrot.slane %v10752, %v10756
        %v10759 = vadd.f32 %v10720, %v10757
        %v10760 = vadd.f32 %v10721, %v10757
        %v10761 = vadd.f32 %v10722, %v10757
        %v10762 = vadd.f32 %v10723, %v10757
        %v10763 = vadd.f32 %v10724, %v10757
        %v10764 = vadd.f32 %v10725, %v10757
        %v10765 = vadd.f32 %v10726, %v10757
        %v10766 = vadd.f32 %v10727, %v10757
        %v10767 = vadd.f32 %v10728, %v10757
        %v10768 = vadd.f32 %v10729, %v10757
        %v10769 = vadd.f32 %v10730, %v10757
        %v10770 = vadd.f32 %v10731, %v10757
        %v10771 = vadd.f32 %v10732, %v10757
        %v10772 = vadd.f32 %v10733, %v10757
        %v10773 = vadd.f32 %v10734, %v10757
        %v10774 = vadd.f32 %v10735, %v10757
        %v10775 = vadd.f32 %v10736, %v10757
        %v10776 = vadd.f32 %v10737, %v10757
        %v10777 = vadd.f32 %v10738, %v10757
        %v10778 = vadd.f32 %v10739, %v10757
        %v10779 = vadd.f32 %v10740, %v10757
        %v10780 = vadd.f32 %v10741, %v10757
        %v10781 = vadd.f32 %v10742, %v10757
        %v10782 = vadd.f32 %v10743, %v10757
        %v10783 = vadd.f32 %v10744, %v10757
        %v10784 = vadd.f32 %v10745, %v10757
        %v10785 = vadd.f32 %v10746, %v10757
        %v10786 = vadd.f32 %v10747, %v10757
        %v10787 = vadd.f32 %v10748, %v10757
        %v10788 = vadd.f32 %v10749, %v10757
        %v10789 = vadd.f32 %v10750, %v10757
        %v10790 = vadd.f32 %v10751, %v10757
        %v10791 = vmax.f32 %v10759, 0.0
        %v10792 = vmax.f32 %v10760, 0.0
        %v10793 = vmax.f32 %v10761, 0.0
        %v10794 = vmax.f32 %v10762, 0.0
        %v10795 = vmax.f32 %v10763, 0.0
        %v10796 = vmax.f32 %v10764, 0.0
        %v10797 = vmax.f32 %v10765, 0.0
        %v10798 = vmax.f32 %v10766, 0.0
        %v10799 = vmax.f32 %v10767, 0.0
        %v10800 = vmax.f32 %v10768, 0.0
        %v10801 = vmax.f32 %v10769, 0.0
        %v10802 = vmax.f32 %v10770, 0.0
        %v10803 = vmax.f32 %v10771, 0.0
        %v10804 = vmax.f32 %v10772, 0.0
        %v10805 = vmax.f32 %v10773, 0.0
        %v10806 = vmax.f32 %v10774, 0.0
        %v10807 = vmax.f32 %v10775, 0.0
        %v10808 = vmax.f32 %v10776, 0.0
        %v10809 = vmax.f32 %v10777, 0.0
        %v10810 = vmax.f32 %v10778, 0.0
        %v10811 = vmax.f32 %v10779, 0.0
        %v10812 = vmax.f32 %v10780, 0.0
        %v10813 = vmax.f32 %v10781, 0.0
        %v10814 = vmax.f32 %v10782, 0.0
        %v10815 = vmax.f32 %v10783, 0.0
        %v10816 = vmax.f32 %v10784, 0.0
        %v10817 = vmax.f32 %v10785, 0.0
        %v10818 = vmax.f32 %v10786, 0.0
        %v10819 = vmax.f32 %v10787, 0.0
        %v10820 = vmax.f32 %v10788, 0.0
        %v10821 = vmax.f32 %v10789, 0.0
        %v10822 = vmax.f32 %v10790, 0.0
        %v10823 = vmax.f32 %v10791, %v10793
        %v10824 = vmax.f32 %v10792, %v10794
        %v10825 = vmax.f32 %v10795, %v10797
        %v10826 = vmax.f32 %v10796, %v10798
        %v10827 = vmax.f32 %v10799, %v10801
        %v10828 = vmax.f32 %v10800, %v10802
        %v10829 = vmax.f32 %v10803, %v10805
        %v10830 = vmax.f32 %v10804, %v10806
        %v10831 = vmax.f32 %v10807, %v10809
        %v10832 = vmax.f32 %v10808, %v10810
        %v10833 = vmax.f32 %v10811, %v10813
        %v10834 = vmax.f32 %v10812, %v10814
        %v10835 = vmax.f32 %v10815, %v10817
        %v10836 = vmax.f32 %v10816, %v10818
        %v10837 = vmax.f32 %v10819, %v10821
        %v10838 = vmax.f32 %v10820, %v10822
        %v10855 = vcombine.high %v10823, %v10823
        %v10857 = vunpack.c.l.s4 1983009808
        %v10858 = vunpack.c.0.s8 %v10857
        %v10859 = vlaneseq
        %v10860 = vshrl.u32 %v10859, 7
        %v10861 = vsub.s32 %v10858, %v10860
        %v10862 = vrot.slane %v10823, %v10861
        %v10864 = vunpack.c.l.s4 1983009808
        %v10865 = vunpack.c.0.s8 %v10864
        %v10866 = vlaneseq
        %v10867 = vshrl.u32 %v10866, 7
        %v10868 = vsub.s32 %v10865, %v10867
        %v10869 = vrot.slane %v10855, %v10868
        %v10870 = vcombine.high %v10862, %v10862
        %v10871 = vcombine.high %v10869, %v10869
        %v10872 = vcombine.high %v10824, %v10824
        %v10874 = vunpack.c.l.s4 1983009808
        %v10875 = vunpack.c.0.s8 %v10874
        %v10876 = vlaneseq
        %v10877 = vshrl.u32 %v10876, 7
        %v10878 = vsub.s32 %v10875, %v10877
        %v10879 = vrot.slane %v10824, %v10878
        %v10881 = vunpack.c.l.s4 1983009808
        %v10882 = vunpack.c.0.s8 %v10881
        %v10883 = vlaneseq
        %v10884 = vshrl.u32 %v10883, 7
        %v10885 = vsub.s32 %v10882, %v10884
        %v10886 = vrot.slane %v10872, %v10885
        %v10887 = vcombine.high %v10879, %v10879
        %v10888 = vcombine.high %v10886, %v10886
        %v10889 = vcombine.high %v10825, %v10825
        %v10891 = vunpack.c.l.s4 1983009808
        %v10892 = vunpack.c.0.s8 %v10891
        %v10893 = vlaneseq
        %v10894 = vshrl.u32 %v10893, 7
        %v10895 = vsub.s32 %v10892, %v10894
        %v10896 = vrot.slane %v10825, %v10895
        %v10898 = vunpack.c.l.s4 1983009808
        %v10899 = vunpack.c.0.s8 %v10898
        %v10900 = vlaneseq
        %v10901 = vshrl.u32 %v10900, 7
        %v10902 = vsub.s32 %v10899, %v10901
        %v10903 = vrot.slane %v10889, %v10902
        %v10904 = vcombine.high %v10896, %v10896
        %v10905 = vcombine.high %v10903, %v10903
        %v10906 = vcombine.high %v10826, %v10826
        %v10908 = vunpack.c.l.s4 1983009808
        %v10909 = vunpack.c.0.s8 %v10908
        %v10910 = vlaneseq
        %v10911 = vshrl.u32 %v10910, 7
        %v10912 = vsub.s32 %v10909, %v10911
        %v10913 = vrot.slane %v10826, %v10912
        %v10915 = vunpack.c.l.s4 1983009808
        %v10916 = vunpack.c.0.s8 %v10915
        %v10917 = vlaneseq
        %v10918 = vshrl.u32 %v10917, 7
        %v10919 = vsub.s32 %v10916, %v10918
        %v10920 = vrot.slane %v10906, %v10919
        %v10921 = vcombine.high %v10913, %v10913
        %v10922 = vcombine.high %v10920, %v10920
        %v10923 = vcombine.high %v10827, %v10827
        %v10925 = vunpack.c.l.s4 1983009808
        %v10926 = vunpack.c.0.s8 %v10925
        %v10927 = vlaneseq
        %v10928 = vshrl.u32 %v10927, 7
        %v10929 = vsub.s32 %v10926, %v10928
        %v10930 = vrot.slane %v10827, %v10929
        %v10932 = vunpack.c.l.s4 1983009808
        %v10933 = vunpack.c.0.s8 %v10932
        %v10934 = vlaneseq
        %v10935 = vshrl.u32 %v10934, 7
        %v10936 = vsub.s32 %v10933, %v10935
        %v10937 = vrot.slane %v10923, %v10936
        %v10938 = vcombine.high %v10930, %v10930
        %v10939 = vcombine.high %v10937, %v10937
        %v10940 = vcombine.high %v10828, %v10828
        %v10942 = vunpack.c.l.s4 1983009808
        %v10943 = vunpack.c.0.s8 %v10942
        %v10944 = vlaneseq
        %v10945 = vshrl.u32 %v10944, 7
        %v10946 = vsub.s32 %v10943, %v10945
        %v10947 = vrot.slane %v10828, %v10946
        %v10949 = vunpack.c.l.s4 1983009808
        %v10950 = vunpack.c.0.s8 %v10949
        %v10951 = vlaneseq
        %v10952 = vshrl.u32 %v10951, 7
        %v10953 = vsub.s32 %v10950, %v10952
        %v10954 = vrot.slane %v10940, %v10953
        %v10955 = vcombine.high %v10947, %v10947
        %v10956 = vcombine.high %v10954, %v10954
        %v10957 = vcombine.high %v10829, %v10829
        %v10959 = vunpack.c.l.s4 1983009808
        %v10960 = vunpack.c.0.s8 %v10959
        %v10961 = vlaneseq
        %v10962 = vshrl.u32 %v10961, 7
        %v10963 = vsub.s32 %v10960, %v10962
        %v10964 = vrot.slane %v10829, %v10963
        %v10966 = vunpack.c.l.s4 1983009808
        %v10967 = vunpack.c.0.s8 %v10966
        %v10968 = vlaneseq
        %v10969 = vshrl.u32 %v10968, 7
        %v10970 = vsub.s32 %v10967, %v10969
        %v10971 = vrot.slane %v10957, %v10970
        %v10972 = vcombine.high %v10964, %v10964
        %v10973 = vcombine.high %v10971, %v10971
        %v10974 = vcombine.high %v10830, %v10830
        %v10976 = vunpack.c.l.s4 1983009808
        %v10977 = vunpack.c.0.s8 %v10976
        %v10978 = vlaneseq
        %v10979 = vshrl.u32 %v10978, 7
        %v10980 = vsub.s32 %v10977, %v10979
        %v10981 = vrot.slane %v10830, %v10980
        %v10983 = vunpack.c.l.s4 1983009808
        %v10984 = vunpack.c.0.s8 %v10983
        %v10985 = vlaneseq
        %v10986 = vshrl.u32 %v10985, 7
        %v10987 = vsub.s32 %v10984, %v10986
        %v10988 = vrot.slane %v10974, %v10987
        %v10989 = vcombine.high %v10981, %v10981
        %v10990 = vcombine.high %v10988, %v10988
        %v10991 = vcombine.high %v10831, %v10831
        %v10993 = vunpack.c.l.s4 1983009808
        %v10994 = vunpack.c.0.s8 %v10993
        %v10995 = vlaneseq
        %v10996 = vshrl.u32 %v10995, 7
        %v10997 = vsub.s32 %v10994, %v10996
        %v10998 = vrot.slane %v10831, %v10997
        %v11000 = vunpack.c.l.s4 1983009808
        %v11001 = vunpack.c.0.s8 %v11000
        %v11002 = vlaneseq
        %v11003 = vshrl.u32 %v11002, 7
        %v11004 = vsub.s32 %v11001, %v11003
        %v11005 = vrot.slane %v10991, %v11004
        %v11006 = vcombine.high %v10998, %v10998
        %v11007 = vcombine.high %v11005, %v11005
        %v11008 = vcombine.high %v10832, %v10832
        %v11010 = vunpack.c.l.s4 1983009808
        %v11011 = vunpack.c.0.s8 %v11010
        %v11012 = vlaneseq
        %v11013 = vshrl.u32 %v11012, 7
        %v11014 = vsub.s32 %v11011, %v11013
        %v11015 = vrot.slane %v10832, %v11014
        %v11017 = vunpack.c.l.s4 1983009808
        %v11018 = vunpack.c.0.s8 %v11017
        %v11019 = vlaneseq
        %v11020 = vshrl.u32 %v11019, 7
        %v11021 = vsub.s32 %v11018, %v11020
        %v11022 = vrot.slane %v11008, %v11021
        %v11023 = vcombine.high %v11015, %v11015
        %v11024 = vcombine.high %v11022, %v11022
        %v11025 = vcombine.high %v10833, %v10833
        %v11027 = vunpack.c.l.s4 1983009808
        %v11028 = vunpack.c.0.s8 %v11027
        %v11029 = vlaneseq
        %v11030 = vshrl.u32 %v11029, 7
        %v11031 = vsub.s32 %v11028, %v11030
        %v11032 = vrot.slane %v10833, %v11031
        %v11034 = vunpack.c.l.s4 1983009808
        %v11035 = vunpack.c.0.s8 %v11034
        %v11036 = vlaneseq
        %v11037 = vshrl.u32 %v11036, 7
        %v11038 = vsub.s32 %v11035, %v11037
        %v11039 = vrot.slane %v11025, %v11038
        %v11040 = vcombine.high %v11032, %v11032
        %v11041 = vcombine.high %v11039, %v11039
        %v11042 = vcombine.high %v10834, %v10834
        %v11044 = vunpack.c.l.s4 1983009808
        %v11045 = vunpack.c.0.s8 %v11044
        %v11046 = vlaneseq
        %v11047 = vshrl.u32 %v11046, 7
        %v11048 = vsub.s32 %v11045, %v11047
        %v11049 = vrot.slane %v10834, %v11048
        %v11051 = vunpack.c.l.s4 1983009808
        %v11052 = vunpack.c.0.s8 %v11051
        %v11053 = vlaneseq
        %v11054 = vshrl.u32 %v11053, 7
        %v11055 = vsub.s32 %v11052, %v11054
        %v11056 = vrot.slane %v11042, %v11055
        %v11057 = vcombine.high %v11049, %v11049
        %v11058 = vcombine.high %v11056, %v11056
        %v11059 = vcombine.high %v10835, %v10835
        %v11061 = vunpack.c.l.s4 1983009808
        %v11062 = vunpack.c.0.s8 %v11061
        %v11063 = vlaneseq
        %v11064 = vshrl.u32 %v11063, 7
        %v11065 = vsub.s32 %v11062, %v11064
        %v11066 = vrot.slane %v10835, %v11065
        %v11068 = vunpack.c.l.s4 1983009808
        %v11069 = vunpack.c.0.s8 %v11068
        %v11070 = vlaneseq
        %v11071 = vshrl.u32 %v11070, 7
        %v11072 = vsub.s32 %v11069, %v11071
        %v11073 = vrot.slane %v11059, %v11072
        %v11074 = vcombine.high %v11066, %v11066
        %v11075 = vcombine.high %v11073, %v11073
        %v11076 = vcombine.high %v10836, %v10836
        %v11078 = vunpack.c.l.s4 1983009808
        %v11079 = vunpack.c.0.s8 %v11078
        %v11080 = vlaneseq
        %v11081 = vshrl.u32 %v11080, 7
        %v11082 = vsub.s32 %v11079, %v11081
        %v11083 = vrot.slane %v10836, %v11082
        %v11085 = vunpack.c.l.s4 1983009808
        %v11086 = vunpack.c.0.s8 %v11085
        %v11087 = vlaneseq
        %v11088 = vshrl.u32 %v11087, 7
        %v11089 = vsub.s32 %v11086, %v11088
        %v11090 = vrot.slane %v11076, %v11089
        %v11091 = vcombine.high %v11083, %v11083
        %v11092 = vcombine.high %v11090, %v11090
        %v11093 = vcombine.high %v10837, %v10837
        %v11095 = vunpack.c.l.s4 1983009808
        %v11096 = vunpack.c.0.s8 %v11095
        %v11097 = vlaneseq
        %v11098 = vshrl.u32 %v11097, 7
        %v11099 = vsub.s32 %v11096, %v11098
        %v11100 = vrot.slane %v10837, %v11099
        %v11102 = vunpack.c.l.s4 1983009808
        %v11103 = vunpack.c.0.s8 %v11102
        %v11104 = vlaneseq
        %v11105 = vshrl.u32 %v11104, 7
        %v11106 = vsub.s32 %v11103, %v11105
        %v11107 = vrot.slane %v11093, %v11106
        %v11108 = vcombine.high %v11100, %v11100
        %v11109 = vcombine.high %v11107, %v11107
        %v11110 = vcombine.high %v10838, %v10838
        %v11112 = vunpack.c.l.s4 1983009808
        %v11113 = vunpack.c.0.s8 %v11112
        %v11114 = vlaneseq
        %v11115 = vshrl.u32 %v11114, 7
        %v11116 = vsub.s32 %v11113, %v11115
        %v11117 = vrot.slane %v10838, %v11116
        %v11119 = vunpack.c.l.s4 1983009808
        %v11120 = vunpack.c.0.s8 %v11119
        %v11121 = vlaneseq
        %v11122 = vshrl.u32 %v11121, 7
        %v11123 = vsub.s32 %v11120, %v11122
        %v11124 = vrot.slane %v11110, %v11123
        %v11125 = vcombine.high %v11117, %v11117
        %v11126 = vcombine.high %v11124, %v11124
        %v11191 = vrot.slane %v10862, 7
        %v11192 = vrot.slane %v11191, 2
        %v11193 = vrot.slane %v10870, 7
        %v11194 = vrot.slane %v11193, 2
        %v11195 = vrot.slane %v10869, 7
        %v11196 = vrot.slane %v11195, 2
        %v11197 = vrot.slane %v10871, 7
        %v11198 = vrot.slane %v11197, 2
        %v11199 = vrot.slane %v10879, 7
        %v11200 = vrot.slane %v11199, 2
        %v11201 = vrot.slane %v10887, 7
        %v11202 = vrot.slane %v11201, 2
        %v11203 = vrot.slane %v10886, 7
        %v11204 = vrot.slane %v11203, 2
        %v11205 = vrot.slane %v10888, 7
        %v11206 = vrot.slane %v11205, 2
        %v11207 = vrot.slane %v10896, 7
        %v11208 = vrot.slane %v11207, 2
        %v11209 = vrot.slane %v10904, 7
        %v11210 = vrot.slane %v11209, 2
        %v11211 = vrot.slane %v10903, 7
        %v11212 = vrot.slane %v11211, 2
        %v11213 = vrot.slane %v10905, 7
        %v11214 = vrot.slane %v11213, 2
        %v11215 = vrot.slane %v10913, 7
        %v11216 = vrot.slane %v11215, 2
        %v11217 = vrot.slane %v10921, 7
        %v11218 = vrot.slane %v11217, 2
        %v11219 = vrot.slane %v10920, 7
        %v11220 = vrot.slane %v11219, 2
        %v11221 = vrot.slane %v10922, 7
        %v11222 = vrot.slane %v11221, 2
        %v11223 = vrot.slane %v10930, 7
        %v11224 = vrot.slane %v11223, 2
        %v11225 = vrot.slane %v10938, 7
        %v11226 = vrot.slane %v11225, 2
        %v11227 = vrot.slane %v10937, 7
        %v11228 = vrot.slane %v11227, 2
        %v11229 = vrot.slane %v10939, 7
        %v11230 = vrot.slane %v11229, 2
        %v11231 = vrot.slane %v10947, 7
        %v11232 = vrot.slane %v11231, 2
        %v11233 = vrot.slane %v10955, 7
        %v11234 = vrot.slane %v11233, 2
        %v11235 = vrot.slane %v10954, 7
        %v11236 = vrot.slane %v11235, 2
        %v11237 = vrot.slane %v10956, 7
        %v11238 = vrot.slane %v11237, 2
        %v11239 = vrot.slane %v10964, 7
        %v11240 = vrot.slane %v11239, 2
        %v11241 = vrot.slane %v10972, 7
        %v11242 = vrot.slane %v11241, 2
        %v11243 = vrot.slane %v10971, 7
        %v11244 = vrot.slane %v11243, 2
        %v11245 = vrot.slane %v10973, 7
        %v11246 = vrot.slane %v11245, 2
        %v11247 = vrot.slane %v10981, 7
        %v11248 = vrot.slane %v11247, 2
        %v11249 = vrot.slane %v10989, 7
        %v11250 = vrot.slane %v11249, 2
        %v11251 = vrot.slane %v10988, 7
        %v11252 = vrot.slane %v11251, 2
        %v11253 = vrot.slane %v10990, 7
        %v11254 = vrot.slane %v11253, 2
        %v11255 = vrot.slane %v10998, 7
        %v11256 = vrot.slane %v11255, 2
        %v11257 = vrot.slane %v11006, 7
        %v11258 = vrot.slane %v11257, 2
        %v11259 = vrot.slane %v11005, 7
        %v11260 = vrot.slane %v11259, 2
        %v11261 = vrot.slane %v11007, 7
        %v11262 = vrot.slane %v11261, 2
        %v11263 = vrot.slane %v11015, 7
        %v11264 = vrot.slane %v11263, 2
        %v11265 = vrot.slane %v11023, 7
        %v11266 = vrot.slane %v11265, 2
        %v11267 = vrot.slane %v11022, 7
        %v11268 = vrot.slane %v11267, 2
        %v11269 = vrot.slane %v11024, 7
        %v11270 = vrot.slane %v11269, 2
        %v11271 = vrot.slane %v11032, 7
        %v11272 = vrot.slane %v11271, 2
        %v11273 = vrot.slane %v11040, 7
        %v11274 = vrot.slane %v11273, 2
        %v11275 = vrot.slane %v11039, 7
        %v11276 = vrot.slane %v11275, 2
        %v11277 = vrot.slane %v11041, 7
        %v11278 = vrot.slane %v11277, 2
        %v11279 = vrot.slane %v11049, 7
        %v11280 = vrot.slane %v11279, 2
        %v11281 = vrot.slane %v11057, 7
        %v11282 = vrot.slane %v11281, 2
        %v11283 = vrot.slane %v11056, 7
        %v11284 = vrot.slane %v11283, 2
        %v11285 = vrot.slane %v11058, 7
        %v11286 = vrot.slane %v11285, 2
        %v11287 = vrot.slane %v11066, 7
        %v11288 = vrot.slane %v11287, 2
        %v11289 = vrot.slane %v11074, 7
        %v11290 = vrot.slane %v11289, 2
        %v11291 = vrot.slane %v11073, 7
        %v11292 = vrot.slane %v11291, 2
        %v11293 = vrot.slane %v11075, 7
        %v11294 = vrot.slane %v11293, 2
        %v11295 = vrot.slane %v11083, 7
        %v11296 = vrot.slane %v11295, 2
        %v11297 = vrot.slane %v11091, 7
        %v11298 = vrot.slane %v11297, 2
        %v11299 = vrot.slane %v11090, 7
        %v11300 = vrot.slane %v11299, 2
        %v11301 = vrot.slane %v11092, 7
        %v11302 = vrot.slane %v11301, 2
        %v11303 = vrot.slane %v11100, 7
        %v11304 = vrot.slane %v11303, 2
        %v11305 = vrot.slane %v11108, 7
        %v11306 = vrot.slane %v11305, 2
        %v11307 = vrot.slane %v11107, 7
        %v11308 = vrot.slane %v11307, 2
        %v11309 = vrot.slane %v11109, 7
        %v11310 = vrot.slane %v11309, 2
        %v11311 = vrot.slane %v11117, 7
        %v11312 = vrot.slane %v11311, 2
        %v11313 = vrot.slane %v11125, 7
        %v11314 = vrot.slane %v11313, 2
        %v11315 = vrot.slane %v11124, 7
        %v11316 = vrot.slane %v11315, 2
        %v11317 = vrot.slane %v11126, 7
        %v11318 = vrot.slane %v11317, 2
        %v11383 = vmax.f32 %v10862, %v11192
        %v11384 = vmax.f32 %v10870, %v11194
        %v11385 = vmax.f32 %v10869, %v11196
        %v11386 = vmax.f32 %v10871, %v11198
        %v11387 = vmax.f32 %v10879, %v11200
        %v11388 = vmax.f32 %v10887, %v11202
        %v11389 = vmax.f32 %v10886, %v11204
        %v11390 = vmax.f32 %v10888, %v11206
        %v11391 = vmax.f32 %v10896, %v11208
        %v11392 = vmax.f32 %v10904, %v11210
        %v11393 = vmax.f32 %v10903, %v11212
        %v11394 = vmax.f32 %v10905, %v11214
        %v11395 = vmax.f32 %v10913, %v11216
        %v11396 = vmax.f32 %v10921, %v11218
        %v11397 = vmax.f32 %v10920, %v11220
        %v11398 = vmax.f32 %v10922, %v11222
        %v11399 = vmax.f32 %v10930, %v11224
        %v11400 = vmax.f32 %v10938, %v11226
        %v11401 = vmax.f32 %v10937, %v11228
        %v11402 = vmax.f32 %v10939, %v11230
        %v11403 = vmax.f32 %v10947, %v11232
        %v11404 = vmax.f32 %v10955, %v11234
        %v11405 = vmax.f32 %v10954, %v11236
        %v11406 = vmax.f32 %v10956, %v11238
        %v11407 = vmax.f32 %v10964, %v11240
        %v11408 = vmax.f32 %v10972, %v11242
        %v11409 = vmax.f32 %v10971, %v11244
        %v11410 = vmax.f32 %v10973, %v11246
        %v11411 = vmax.f32 %v10981, %v11248
        %v11412 = vmax.f32 %v10989, %v11250
        %v11413 = vmax.f32 %v10988, %v11252
        %v11414 = vmax.f32 %v10990, %v11254
        %v11415 = vmax.f32 %v10998, %v11256
        %v11416 = vmax.f32 %v11006, %v11258
        %v11417 = vmax.f32 %v11005, %v11260
        %v11418 = vmax.f32 %v11007, %v11262
        %v11419 = vmax.f32 %v11015, %v11264
        %v11420 = vmax.f32 %v11023, %v11266
        %v11421 = vmax.f32 %v11022, %v11268
        %v11422 = vmax.f32 %v11024, %v11270
        %v11423 = vmax.f32 %v11032, %v11272
        %v11424 = vmax.f32 %v11040, %v11274
        %v11425 = vmax.f32 %v11039, %v11276
        %v11426 = vmax.f32 %v11041, %v11278
        %v11427 = vmax.f32 %v11049, %v11280
        %v11428 = vmax.f32 %v11057, %v11282
        %v11429 = vmax.f32 %v11056, %v11284
        %v11430 = vmax.f32 %v11058, %v11286
        %v11431 = vmax.f32 %v11066, %v11288
        %v11432 = vmax.f32 %v11074, %v11290
        %v11433 = vmax.f32 %v11073, %v11292
        %v11434 = vmax.f32 %v11075, %v11294
        %v11435 = vmax.f32 %v11083, %v11296
        %v11436 = vmax.f32 %v11091, %v11298
        %v11437 = vmax.f32 %v11090, %v11300
        %v11438 = vmax.f32 %v11092, %v11302
        %v11439 = vmax.f32 %v11100, %v11304
        %v11440 = vmax.f32 %v11108, %v11306
        %v11441 = vmax.f32 %v11107, %v11308
        %v11442 = vmax.f32 %v11109, %v11310
        %v11443 = vmax.f32 %v11117, %v11312
        %v11444 = vmax.f32 %v11125, %v11314
        %v11445 = vmax.f32 %v11124, %v11316
        %v11446 = vmax.f32 %v11126, %v11318
        %vm11511 = vcmask 1044484
        %v11512 = vsel %vm11511, %v11383, %v11383
        %vm11513 = vcmask 1046534
        %v11514 = vsel %vm11513, %v11383, %v11512
        %v11515 = vrot.slane %v11384, 7
        %vm11516 = vcmask 1041409
        %v11517 = vsel %vm11516, %v11515, %v11514
        %vm11518 = vcmask 1043459
        %v11519 = vsel %vm11518, %v11515, %v11517
        %vm11520 = vcmask 1045509
        %v11521 = vsel %vm11520, %v11515, %v11519
        %vm11522 = vcmask 1047559
        %v11523 = vsel %vm11522, %v11515, %v11521
        %v11524 = vsel %vm11511, %v11385, %v11385
        %v11525 = vsel %vm11513, %v11385, %v11524
        %v11526 = vrot.slane %v11386, 7
        %v11527 = vsel %vm11516, %v11526, %v11525
        %v11528 = vsel %vm11518, %v11526, %v11527
        %v11529 = vsel %vm11520, %v11526, %v11528
        %v11530 = vsel %vm11522, %v11526, %v11529
        %v11531 = vsel %vm11511, %v11387, %v11387
        %v11532 = vsel %vm11513, %v11387, %v11531
        %v11533 = vrot.slane %v11388, 7
        %v11534 = vsel %vm11516, %v11533, %v11532
        %v11535 = vsel %vm11518, %v11533, %v11534
        %v11536 = vsel %vm11520, %v11533, %v11535
        %v11537 = vsel %vm11522, %v11533, %v11536
        %v11538 = vsel %vm11511, %v11389, %v11389
        %v11539 = vsel %vm11513, %v11389, %v11538
        %v11540 = vrot.slane %v11390, 7
        %v11541 = vsel %vm11516, %v11540, %v11539
        %v11542 = vsel %vm11518, %v11540, %v11541
        %v11543 = vsel %vm11520, %v11540, %v11542
        %v11544 = vsel %vm11522, %v11540, %v11543
        %v11545 = vsel %vm11511, %v11391, %v11391
        %v11546 = vsel %vm11513, %v11391, %v11545
        %v11547 = vrot.slane %v11392, 7
        %v11548 = vsel %vm11516, %v11547, %v11546
        %v11549 = vsel %vm11518, %v11547, %v11548
        %v11550 = vsel %vm11520, %v11547, %v11549
        %v11551 = vsel %vm11522, %v11547, %v11550
        %v11552 = vsel %vm11511, %v11393, %v11393
        %v11553 = vsel %vm11513, %v11393, %v11552
        %v11554 = vrot.slane %v11394, 7
        %v11555 = vsel %vm11516, %v11554, %v11553
        %v11556 = vsel %vm11518, %v11554, %v11555
        %v11557 = vsel %vm11520, %v11554, %v11556
        %v11558 = vsel %vm11522, %v11554, %v11557
        %v11559 = vsel %vm11511, %v11395, %v11395
        %v11560 = vsel %vm11513, %v11395, %v11559
        %v11561 = vrot.slane %v11396, 7
        %v11562 = vsel %vm11516, %v11561, %v11560
        %v11563 = vsel %vm11518, %v11561, %v11562
        %v11564 = vsel %vm11520, %v11561, %v11563
        %v11565 = vsel %vm11522, %v11561, %v11564
        %v11566 = vsel %vm11511, %v11397, %v11397
        %v11567 = vsel %vm11513, %v11397, %v11566
        %v11568 = vrot.slane %v11398, 7
        %v11569 = vsel %vm11516, %v11568, %v11567
        %v11570 = vsel %vm11518, %v11568, %v11569
        %v11571 = vsel %vm11520, %v11568, %v11570
        %v11572 = vsel %vm11522, %v11568, %v11571
        %v11573 = vsel %vm11511, %v11399, %v11399
        %v11574 = vsel %vm11513, %v11399, %v11573
        %v11575 = vrot.slane %v11400, 7
        %v11576 = vsel %vm11516, %v11575, %v11574
        %v11577 = vsel %vm11518, %v11575, %v11576
        %v11578 = vsel %vm11520, %v11575, %v11577
        %v11579 = vsel %vm11522, %v11575, %v11578
        %v11580 = vsel %vm11511, %v11401, %v11401
        %v11581 = vsel %vm11513, %v11401, %v11580
        %v11582 = vrot.slane %v11402, 7
        %v11583 = vsel %vm11516, %v11582, %v11581
        %v11584 = vsel %vm11518, %v11582, %v11583
        %v11585 = vsel %vm11520, %v11582, %v11584
        %v11586 = vsel %vm11522, %v11582, %v11585
        %v11587 = vsel %vm11511, %v11403, %v11403
        %v11588 = vsel %vm11513, %v11403, %v11587
        %v11589 = vrot.slane %v11404, 7
        %v11590 = vsel %vm11516, %v11589, %v11588
        %v11591 = vsel %vm11518, %v11589, %v11590
        %v11592 = vsel %vm11520, %v11589, %v11591
        %v11593 = vsel %vm11522, %v11589, %v11592
        %v11594 = vsel %vm11511, %v11405, %v11405
        %v11595 = vsel %vm11513, %v11405, %v11594
        %v11596 = vrot.slane %v11406, 7
        %v11597 = vsel %vm11516, %v11596, %v11595
        %v11598 = vsel %vm11518, %v11596, %v11597
        %v11599 = vsel %vm11520, %v11596, %v11598
        %v11600 = vsel %vm11522, %v11596, %v11599
        %v11601 = vsel %vm11511, %v11407, %v11407
        %v11602 = vsel %vm11513, %v11407, %v11601
        %v11603 = vrot.slane %v11408, 7
        %v11604 = vsel %vm11516, %v11603, %v11602
        %v11605 = vsel %vm11518, %v11603, %v11604
        %v11606 = vsel %vm11520, %v11603, %v11605
        %v11607 = vsel %vm11522, %v11603, %v11606
        %v11608 = vsel %vm11511, %v11409, %v11409
        %v11609 = vsel %vm11513, %v11409, %v11608
        %v11610 = vrot.slane %v11410, 7
        %v11611 = vsel %vm11516, %v11610, %v11609
        %v11612 = vsel %vm11518, %v11610, %v11611
        %v11613 = vsel %vm11520, %v11610, %v11612
        %v11614 = vsel %vm11522, %v11610, %v11613
        %v11615 = vsel %vm11511, %v11411, %v11411
        %v11616 = vsel %vm11513, %v11411, %v11615
        %v11617 = vrot.slane %v11412, 7
        %v11618 = vsel %vm11516, %v11617, %v11616
        %v11619 = vsel %vm11518, %v11617, %v11618
        %v11620 = vsel %vm11520, %v11617, %v11619
        %v11621 = vsel %vm11522, %v11617, %v11620
        %v11622 = vsel %vm11511, %v11413, %v11413
        %v11623 = vsel %vm11513, %v11413, %v11622
        %v11624 = vrot.slane %v11414, 7
        %v11625 = vsel %vm11516, %v11624, %v11623
        %v11626 = vsel %vm11518, %v11624, %v11625
        %v11627 = vsel %vm11520, %v11624, %v11626
        %v11628 = vsel %vm11522, %v11624, %v11627
        %v11629 = vsel %vm11511, %v11415, %v11415
        %v11630 = vsel %vm11513, %v11415, %v11629
        %v11631 = vrot.slane %v11416, 7
        %v11632 = vsel %vm11516, %v11631, %v11630
        %v11633 = vsel %vm11518, %v11631, %v11632
        %v11634 = vsel %vm11520, %v11631, %v11633
        %v11635 = vsel %vm11522, %v11631, %v11634
        %v11636 = vsel %vm11511, %v11417, %v11417
        %v11637 = vsel %vm11513, %v11417, %v11636
        %v11638 = vrot.slane %v11418, 7
        %v11639 = vsel %vm11516, %v11638, %v11637
        %v11640 = vsel %vm11518, %v11638, %v11639
        %v11641 = vsel %vm11520, %v11638, %v11640
        %v11642 = vsel %vm11522, %v11638, %v11641
        %v11643 = vsel %vm11511, %v11419, %v11419
        %v11644 = vsel %vm11513, %v11419, %v11643
        %v11645 = vrot.slane %v11420, 7
        %v11646 = vsel %vm11516, %v11645, %v11644
        %v11647 = vsel %vm11518, %v11645, %v11646
        %v11648 = vsel %vm11520, %v11645, %v11647
        %v11649 = vsel %vm11522, %v11645, %v11648
        %v11650 = vsel %vm11511, %v11421, %v11421
        %v11651 = vsel %vm11513, %v11421, %v11650
        %v11652 = vrot.slane %v11422, 7
        %v11653 = vsel %vm11516, %v11652, %v11651
        %v11654 = vsel %vm11518, %v11652, %v11653
        %v11655 = vsel %vm11520, %v11652, %v11654
        %v11656 = vsel %vm11522, %v11652, %v11655
        %v11657 = vsel %vm11511, %v11423, %v11423
        %v11658 = vsel %vm11513, %v11423, %v11657
        %v11659 = vrot.slane %v11424, 7
        %v11660 = vsel %vm11516, %v11659, %v11658
        %v11661 = vsel %vm11518, %v11659, %v11660
        %v11662 = vsel %vm11520, %v11659, %v11661
        %v11663 = vsel %vm11522, %v11659, %v11662
        %v11664 = vsel %vm11511, %v11425, %v11425
        %v11665 = vsel %vm11513, %v11425, %v11664
        %v11666 = vrot.slane %v11426, 7
        %v11667 = vsel %vm11516, %v11666, %v11665
        %v11668 = vsel %vm11518, %v11666, %v11667
        %v11669 = vsel %vm11520, %v11666, %v11668
        %v11670 = vsel %vm11522, %v11666, %v11669
        %v11671 = vsel %vm11511, %v11427, %v11427
        %v11672 = vsel %vm11513, %v11427, %v11671
        %v11673 = vrot.slane %v11428, 7
        %v11674 = vsel %vm11516, %v11673, %v11672
        %v11675 = vsel %vm11518, %v11673, %v11674
        %v11676 = vsel %vm11520, %v11673, %v11675
        %v11677 = vsel %vm11522, %v11673, %v11676
        %v11678 = vsel %vm11511, %v11429, %v11429
        %v11679 = vsel %vm11513, %v11429, %v11678
        %v11680 = vrot.slane %v11430, 7
        %v11681 = vsel %vm11516, %v11680, %v11679
        %v11682 = vsel %vm11518, %v11680, %v11681
        %v11683 = vsel %vm11520, %v11680, %v11682
        %v11684 = vsel %vm11522, %v11680, %v11683
        %v11685 = vsel %vm11511, %v11431, %v11431
        %v11686 = vsel %vm11513, %v11431, %v11685
        %v11687 = vrot.slane %v11432, 7
        %v11688 = vsel %vm11516, %v11687, %v11686
        %v11689 = vsel %vm11518, %v11687, %v11688
        %v11690 = vsel %vm11520, %v11687, %v11689
        %v11691 = vsel %vm11522, %v11687, %v11690
        %v11692 = vsel %vm11511, %v11433, %v11433
        %v11693 = vsel %vm11513, %v11433, %v11692
        %v11694 = vrot.slane %v11434, 7
        %v11695 = vsel %vm11516, %v11694, %v11693
        %v11696 = vsel %vm11518, %v11694, %v11695
        %v11697 = vsel %vm11520, %v11694, %v11696
        %v11698 = vsel %vm11522, %v11694, %v11697
        %v11699 = vsel %vm11511, %v11435, %v11435
        %v11700 = vsel %vm11513, %v11435, %v11699
        %v11701 = vrot.slane %v11436, 7
        %v11702 = vsel %vm11516, %v11701, %v11700
        %v11703 = vsel %vm11518, %v11701, %v11702
        %v11704 = vsel %vm11520, %v11701, %v11703
        %v11705 = vsel %vm11522, %v11701, %v11704
        %v11706 = vsel %vm11511, %v11437, %v11437
        %v11707 = vsel %vm11513, %v11437, %v11706
        %v11708 = vrot.slane %v11438, 7
        %v11709 = vsel %vm11516, %v11708, %v11707
        %v11710 = vsel %vm11518, %v11708, %v11709
        %v11711 = vsel %vm11520, %v11708, %v11710
        %v11712 = vsel %vm11522, %v11708, %v11711
        %v11713 = vsel %vm11511, %v11439, %v11439
        %v11714 = vsel %vm11513, %v11439, %v11713
        %v11715 = vrot.slane %v11440, 7
        %v11716 = vsel %vm11516, %v11715, %v11714
        %v11717 = vsel %vm11518, %v11715, %v11716
        %v11718 = vsel %vm11520, %v11715, %v11717
        %v11719 = vsel %vm11522, %v11715, %v11718
        %v11720 = vsel %vm11511, %v11441, %v11441
        %v11721 = vsel %vm11513, %v11441, %v11720
        %v11722 = vrot.slane %v11442, 7
        %v11723 = vsel %vm11516, %v11722, %v11721
        %v11724 = vsel %vm11518, %v11722, %v11723
        %v11725 = vsel %vm11520, %v11722, %v11724
        %v11726 = vsel %vm11522, %v11722, %v11725
        %v11727 = vsel %vm11511, %v11443, %v11443
        %v11728 = vsel %vm11513, %v11443, %v11727
        %v11729 = vrot.slane %v11444, 7
        %v11730 = vsel %vm11516, %v11729, %v11728
        %v11731 = vsel %vm11518, %v11729, %v11730
        %v11732 = vsel %vm11520, %v11729, %v11731
        %v11733 = vsel %vm11522, %v11729, %v11732
        %v11734 = vsel %vm11511, %v11445, %v11445
        %v11735 = vsel %vm11513, %v11445, %v11734
        %v11736 = vrot.slane %v11446, 7
        %v11737 = vsel %vm11516, %v11736, %v11735
        %v11738 = vsel %vm11518, %v11736, %v11737
        %v11739 = vsel %vm11520, %v11736, %v11738
        %v11740 = vsel %vm11522, %v11736, %v11739
        %v11773 = vcombine.low %v11523, %v11551
        %v11775 = vunpack.c.l.s4 1934713408
        %v11776 = vunpack.c.0.s8 %v11775
        %v11777 = vlaneseq
        %v11778 = vshrl.u32 %v11777, 7
        %v11779 = vsub.s32 %v11776, %v11778
        %v11780 = vrot.slane %v11773, %v11779
        %v11781 = vcombine.high %v11780, 0.0
        %v11782 = vcombine.low %v11579, %v11607
        %v11784 = vunpack.c.l.s4 1934713408
        %v11785 = vunpack.c.0.s8 %v11784
        %v11786 = vlaneseq
        %v11787 = vshrl.u32 %v11786, 7
        %v11788 = vsub.s32 %v11785, %v11787
        %v11789 = vrot.slane %v11782, %v11788
        %v11790 = vcombine.high %v11789, 0.0
        %v11791 = vcombine.low %v11635, %v11663
        %v11793 = vunpack.c.l.s4 1934713408
        %v11794 = vunpack.c.0.s8 %v11793
        %v11795 = vlaneseq
        %v11796 = vshrl.u32 %v11795, 7
        %v11797 = vsub.s32 %v11794, %v11796
        %v11798 = vrot.slane %v11791, %v11797
        %v11799 = vcombine.high %v11798, 0.0
        %v11800 = vcombine.low %v11691, %v11719
        %v11802 = vunpack.c.l.s4 1934713408
        %v11803 = vunpack.c.0.s8 %v11802
        %v11804 = vlaneseq
        %v11805 = vshrl.u32 %v11804, 7
        %v11806 = vsub.s32 %v11803, %v11805
        %v11807 = vrot.slane %v11800, %v11806
        %v11808 = vcombine.high %v11807, 0.0
        %v11809 = vcombine.low %v11530, %v11558
        %v11811 = vunpack.c.l.s4 1934713408
        %v11812 = vunpack.c.0.s8 %v11811
        %v11813 = vlaneseq
        %v11814 = vshrl.u32 %v11813, 7
        %v11815 = vsub.s32 %v11812, %v11814
        %v11816 = vrot.slane %v11809, %v11815
        %v11817 = vcombine.high %v11816, 0.0
        %v11818 = vcombine.low %v11586, %v11614
        %v11820 = vunpack.c.l.s4 1934713408
        %v11821 = vunpack.c.0.s8 %v11820
        %v11822 = vlaneseq
        %v11823 = vshrl.u32 %v11822, 7
        %v11824 = vsub.s32 %v11821, %v11823
        %v11825 = vrot.slane %v11818, %v11824
        %v11826 = vcombine.high %v11825, 0.0
        %v11827 = vcombine.low %v11642, %v11670
        %v11829 = vunpack.c.l.s4 1934713408
        %v11830 = vunpack.c.0.s8 %v11829
        %v11831 = vlaneseq
        %v11832 = vshrl.u32 %v11831, 7
        %v11833 = vsub.s32 %v11830, %v11832
        %v11834 = vrot.slane %v11827, %v11833
        %v11835 = vcombine.high %v11834, 0.0
        %v11836 = vcombine.low %v11698, %v11726
        %v11838 = vunpack.c.l.s4 1934713408
        %v11839 = vunpack.c.0.s8 %v11838
        %v11840 = vlaneseq
        %v11841 = vshrl.u32 %v11840, 7
        %v11842 = vsub.s32 %v11839, %v11841
        %v11843 = vrot.slane %v11836, %v11842
        %v11844 = vcombine.high %v11843, 0.0
        %v11845 = vcombine.low %v11537, %v11565
        %v11847 = vunpack.c.l.s4 1934713408
        %v11848 = vunpack.c.0.s8 %v11847
        %v11849 = vlaneseq
        %v11850 = vshrl.u32 %v11849, 7
        %v11851 = vsub.s32 %v11848, %v11850
        %v11852 = vrot.slane %v11845, %v11851
        %v11853 = vcombine.high %v11852, 0.0
        %v11854 = vcombine.low %v11593, %v11621
        %v11856 = vunpack.c.l.s4 1934713408
        %v11857 = vunpack.c.0.s8 %v11856
        %v11858 = vlaneseq
        %v11859 = vshrl.u32 %v11858, 7
        %v11860 = vsub.s32 %v11857, %v11859
        %v11861 = vrot.slane %v11854, %v11860
        %v11862 = vcombine.high %v11861, 0.0
        %v11863 = vcombine.low %v11649, %v11677
        %v11865 = vunpack.c.l.s4 1934713408
        %v11866 = vunpack.c.0.s8 %v11865
        %v11867 = vlaneseq
        %v11868 = vshrl.u32 %v11867, 7
        %v11869 = vsub.s32 %v11866, %v11868
        %v11870 = vrot.slane %v11863, %v11869
        %v11871 = vcombine.high %v11870, 0.0
        %v11872 = vcombine.low %v11705, %v11733
        %v11874 = vunpack.c.l.s4 1934713408
        %v11875 = vunpack.c.0.s8 %v11874
        %v11876 = vlaneseq
        %v11877 = vshrl.u32 %v11876, 7
        %v11878 = vsub.s32 %v11875, %v11877
        %v11879 = vrot.slane %v11872, %v11878
        %v11880 = vcombine.high %v11879, 0.0
        %v11881 = vcombine.low %v11544, %v11572
        %v11883 = vunpack.c.l.s4 1934713408
        %v11884 = vunpack.c.0.s8 %v11883
        %v11885 = vlaneseq
        %v11886 = vshrl.u32 %v11885, 7
        %v11887 = vsub.s32 %v11884, %v11886
        %v11888 = vrot.slane %v11881, %v11887
        %v11889 = vcombine.high %v11888, 0.0
        %v11890 = vcombine.low %v11600, %v11628
        %v11892 = vunpack.c.l.s4 1934713408
        %v11893 = vunpack.c.0.s8 %v11892
        %v11894 = vlaneseq
        %v11895 = vshrl.u32 %v11894, 7
        %v11896 = vsub.s32 %v11893, %v11895
        %v11897 = vrot.slane %v11890, %v11896
        %v11898 = vcombine.high %v11897, 0.0
        %v11899 = vcombine.low %v11656, %v11684
        %v11901 = vunpack.c.l.s4 1934713408
        %v11902 = vunpack.c.0.s8 %v11901
        %v11903 = vlaneseq
        %v11904 = vshrl.u32 %v11903, 7
        %v11905 = vsub.s32 %v11902, %v11904
        %v11906 = vrot.slane %v11899, %v11905
        %v11907 = vcombine.high %v11906, 0.0
        %v11908 = vcombine.low %v11712, %v11740
        %v11910 = vunpack.c.l.s4 1934713408
        %v11911 = vunpack.c.0.s8 %v11910
        %v11912 = vlaneseq
        %v11913 = vshrl.u32 %v11912, 7
        %v11914 = vsub.s32 %v11911, %v11913
        %v11915 = vrot.slane %v11908, %v11914
        %v11916 = vcombine.high %v11915, 0.0
        %v11921 = vcombine.low %v11780, %v11789
        %v11922 = vcombine.low %v11798, %v11807
        %v11924 = vunpack.c.l.s4 1983009808
        %v11925 = vunpack.c.0.s8 %v11924
        %v11926 = vlaneseq
        %v11927 = vshrl.u32 %v11926, 7
        %v11928 = vsub.s32 %v11925, %v11927
        %v11929 = vrot.slane %v11921, %v11928
        %v11931 = vunpack.c.l.s4 1983009808
        %v11932 = vunpack.c.0.s8 %v11931
        %v11933 = vlaneseq
        %v11934 = vshrl.u32 %v11933, 7
        %v11935 = vsub.s32 %v11932, %v11934
        %v11936 = vrot.slane %v11922, %v11935
        %v11937 = vcombine.low %v11929, %v11936
        %v11943 = vcombine.low %v11781, %v11790
        %v11944 = vcombine.low %v11799, %v11808
        %v11946 = vunpack.c.l.s4 1983009808
        %v11947 = vunpack.c.0.s8 %v11946
        %v11948 = vlaneseq
        %v11949 = vshrl.u32 %v11948, 7
        %v11950 = vsub.s32 %v11947, %v11949
        %v11951 = vrot.slane %v11943, %v11950
        %v11953 = vunpack.c.l.s4 1983009808
        %v11954 = vunpack.c.0.s8 %v11953
        %v11955 = vlaneseq
        %v11956 = vshrl.u32 %v11955, 7
        %v11957 = vsub.s32 %v11954, %v11956
        %v11958 = vrot.slane %v11944, %v11957
        %v11959 = vcombine.low %v11951, %v11958
        %11960 = vrot.lane.b32.xlu0 %v11959, 8
        %v11961 = vpop.permute.xlu0 %11960
        %v11967 = vcombine.low %v11816, %v11825
        %v11968 = vcombine.low %v11834, %v11843
        %v11970 = vunpack.c.l.s4 1983009808
        %v11971 = vunpack.c.0.s8 %v11970
        %v11972 = vlaneseq
        %v11973 = vshrl.u32 %v11972, 7
        %v11974 = vsub.s32 %v11971, %v11973
        %v11975 = vrot.slane %v11967, %v11974
        %v11977 = vunpack.c.l.s4 1983009808
        %v11978 = vunpack.c.0.s8 %v11977
        %v11979 = vlaneseq
        %v11980 = vshrl.u32 %v11979, 7
        %v11981 = vsub.s32 %v11978, %v11980
        %v11982 = vrot.slane %v11968, %v11981
        %v11983 = vcombine.low %v11975, %v11982
        %11984 = vrot.lane.b32.xlu0 %v11983, 16
        %v11985 = vpop.permute.xlu0 %11984
        %v11991 = vcombine.low %v11817, %v11826
        %v11992 = vcombine.low %v11835, %v11844
        %v11994 = vunpack.c.l.s4 1983009808
        %v11995 = vunpack.c.0.s8 %v11994
        %v11996 = vlaneseq
        %v11997 = vshrl.u32 %v11996, 7
        %v11998 = vsub.s32 %v11995, %v11997
        %v11999 = vrot.slane %v11991, %v11998
        %v12001 = vunpack.c.l.s4 1983009808
        %v12002 = vunpack.c.0.s8 %v12001
        %v12003 = vlaneseq
        %v12004 = vshrl.u32 %v12003, 7
        %v12005 = vsub.s32 %v12002, %v12004
        %v12006 = vrot.slane %v11992, %v12005
        %v12007 = vcombine.low %v11999, %v12006
        %12008 = vrot.lane.b32.xlu0 %v12007, 24
        %v12009 = vpop.permute.xlu0 %12008
        %v12015 = vcombine.low %v11852, %v11861
        %v12016 = vcombine.low %v11870, %v11879
        %v12018 = vunpack.c.l.s4 1983009808
        %v12019 = vunpack.c.0.s8 %v12018
        %v12020 = vlaneseq
        %v12021 = vshrl.u32 %v12020, 7
        %v12022 = vsub.s32 %v12019, %v12021
        %v12023 = vrot.slane %v12015, %v12022
        %v12025 = vunpack.c.l.s4 1983009808
        %v12026 = vunpack.c.0.s8 %v12025
        %v12027 = vlaneseq
        %v12028 = vshrl.u32 %v12027, 7
        %v12029 = vsub.s32 %v12026, %v12028
        %v12030 = vrot.slane %v12016, %v12029
        %v12031 = vcombine.low %v12023, %v12030
        %12032 = vrot.lane.b32.xlu0 %v12031, 32
        %v12033 = vpop.permute.xlu0 %12032
        %v12039 = vcombine.low %v11853, %v11862
        %v12040 = vcombine.low %v11871, %v11880
        %v12042 = vunpack.c.l.s4 1983009808
        %v12043 = vunpack.c.0.s8 %v12042
        %v12044 = vlaneseq
        %v12045 = vshrl.u32 %v12044, 7
        %v12046 = vsub.s32 %v12043, %v12045
        %v12047 = vrot.slane %v12039, %v12046
        %v12049 = vunpack.c.l.s4 1983009808
        %v12050 = vunpack.c.0.s8 %v12049
        %v12051 = vlaneseq
        %v12052 = vshrl.u32 %v12051, 7
        %v12053 = vsub.s32 %v12050, %v12052
        %v12054 = vrot.slane %v12040, %v12053
        %v12055 = vcombine.low %v12047, %v12054
        %12056 = vrot.lane.b32.xlu0 %v12055, 40
        %v12057 = vpop.permute.xlu0 %12056
        %v12063 = vcombine.low %v11888, %v11897
        %v12064 = vcombine.low %v11906, %v11915
        %v12066 = vunpack.c.l.s4 1983009808
        %v12067 = vunpack.c.0.s8 %v12066
        %v12068 = vlaneseq
        %v12069 = vshrl.u32 %v12068, 7
        %v12070 = vsub.s32 %v12067, %v12069
        %v12071 = vrot.slane %v12063, %v12070
        %v12073 = vunpack.c.l.s4 1983009808
        %v12074 = vunpack.c.0.s8 %v12073
        %v12075 = vlaneseq
        %v12076 = vshrl.u32 %v12075, 7
        %v12077 = vsub.s32 %v12074, %v12076
        %v12078 = vrot.slane %v12064, %v12077
        %v12079 = vcombine.low %v12071, %v12078
        %12080 = vrot.lane.b32.xlu0 %v12079, 48
        %v12081 = vpop.permute.xlu0 %12080
        %v12087 = vcombine.low %v11889, %v11898
        %v12088 = vcombine.low %v11907, %v11916
        %v12090 = vunpack.c.l.s4 1983009808
        %v12091 = vunpack.c.0.s8 %v12090
        %v12092 = vlaneseq
        %v12093 = vshrl.u32 %v12092, 7
        %v12094 = vsub.s32 %v12091, %v12093
        %v12095 = vrot.slane %v12087, %v12094
        %v12097 = vunpack.c.l.s4 1983009808
        %v12098 = vunpack.c.0.s8 %v12097
        %v12099 = vlaneseq
        %v12100 = vshrl.u32 %v12099, 7
        %v12101 = vsub.s32 %v12098, %v12100
        %v12102 = vrot.slane %v12088, %v12101
        %v12103 = vcombine.low %v12095, %v12102
        %12104 = vrot.lane.b32.xlu0 %v12103, 56
        %v12105 = vpop.permute.xlu0 %12104
        %v12107 = vsel %vm6644, %v11937, %v11961
        %vm12108 = vcmask 130048
        %v12109 = vsel %vm12108, %v12107, %v11985
        %vm12110 = vcmask 195584
        %v12111 = vsel %vm12110, %v12109, %v12009
        %vm12112 = vcmask 261120
        %v12113 = vsel %vm12112, %v12111, %v12033
        %vm12114 = vcmask 326656
        %v12115 = vsel %vm12114, %v12113, %v12057
        %vm12116 = vcmask 392192
        %v12117 = vsel %vm12116, %v12115, %v12081
        %vm12118 = vcmask 457728
        %v12119 = vsel %vm12118, %v12117, %v12105
        %v12120 = vpack.c.bf16 %v12119, %v12119
        %vm12121 = vcmask 519168
        %12122 = vst.msk [vmem:[%s244] sm:$0xf] %vm12121, %v12120
        %s12123 = sand.u32 %s159, 1
        %s12124 = scalar_lea.sflag [#allocation5], %s12123
        %s12125 = sand.u32 %s159, 1
        %s12126 = smul.addr %s12125, 4
        %s12127 = scalar_lea.vmem [#allocation4], %s12126
        // Predicated region
        $region45: #{tpu_custom_call.1} parent=43 // pred_check
          %p12128 = pneg %p169
        $region46: #{tpu_custom_call.1} parent=43 // pred_check_branch
          %12130 = sbr.rel (%p12128) target = $region48
        $region47: #{tpu_custom_call.1} parent=43 // pred_region
          %s12132 = ssub.s32 64, 64
          %12133 = vsyncadd %s12124, %s12132
          %s12134 = smul.addr %s20, 64
          %s12135 = scalar_lea.hbm %s6, %s12134
          %s12137 = sshll.u32 %s12127, 4
          %s12138 = int_to_ptr.vmem [resolvable:$true] %s12137
          %12140 = dma.vmem_to_hbm [thread:$0]  %s12138, 64, %s12135, %s12124
        $region48: #{tpu_custom_call.1} parent=43 // pred_fallthru
          _
      $region44: #{tpu_custom_call.1} parent=5 // pred_fallthru
        _
      %p12141 = scmp.le.s32.totalorder 2, %s15
      // Predicated region
      $region49: #{tpu_custom_call.1} parent=5 // pred_check
        %p12142 = pneg %p12141
      $region50: #{tpu_custom_call.1} parent=5 // pred_check_branch
        %12144 = sbr.rel (%p12142) target = $region52
      $region51: #{tpu_custom_call.1} parent=5 // pred_region
        %s12145 = ssub.s32 %s15, 2
        // Predicated region
        $region53: #{tpu_custom_call.1} parent=51 // pred_check
          %p12146 = pneg %p175
        $region54: #{tpu_custom_call.1} parent=51 // pred_check_branch
          %12148 = sbr.rel (%p12146) target = $region56
        $region55: #{tpu_custom_call.1} parent=51 // pred_region
          %s12149 = sand.u32 %s160, 1
          %s12150 = scalar_lea.sflag [#allocation5], %s12149
          %s12151 = sand.u32 %s160, 1
          %s12152 = smul.addr %s12151, 4
          %s12153 = scalar_lea.vmem [#allocation4], %s12152
          %12154 = dma.done %s12150, 64
        $region56: #{tpu_custom_call.1} parent=51 // pred_fallthru
          _
      $region52: #{tpu_custom_call.1} parent=5 // pred_fallthru
        _
    $region6: #{tpu_custom_call.1} parent=1 // loop_footer
      %s19 = sadd.s32 1, %s15
    $region7: #{tpu_custom_call.1} parent=1 // loop_footer_branch
      %14 = sbr.rel target = $region3
    $region8: #{tpu_custom_call.1} parent=1 // loop_exit
      _
    %12155 = vsyncpa [#allocation5], 1
    %s12156 = scalar_lea.sflag [#allocation5], 1
    %12157 = vsyncpa %s12156, 1

</llo_original>
